<compile_context>
chip_gen: v7x
topology: tpu7x:2x2x1
jax: 0.10.0
libtpu: 0.0.40
codegen_flags: <defaults>
</compile_context>

<pallas_src>
import functools

import jax
import jax.numpy as jnp
from jax.experimental import pallas as pl
from jax.experimental.pallas import tpu as pltpu

# ----------------------------------------------------------------------------
# Static model geometry
# ----------------------------------------------------------------------------
L_IN = 486
K1, K2 = 16, 8                 # conv kernel sizes
C1, C2 = 30, 20                # conv out-channels
C1P, C2P = 32, 32              # channel counts zero-padded to 32 lanes
LC1 = (L_IN - K1) // 2 + 1     # 236 conv1 positions
LP1 = LC1 // 2                 # 118 pooled conv1 positions
LC2 = (LP1 - K2) // 2 + 1      # 56 conv2 positions
LP2 = LC2 // 2                 # 28 pooled conv2 positions (-> 560 features)
NG = 4                         # h1 rows grouped by (position mod 4)
G1 = (LP1 + NG - 1) // NG      # 30 ranks per group (groups 2,3 hold 1 pad rank)
BB = 8                         # samples per grid step (sublane aligned)

# Static sanity check (review note): conv2 windows must never touch the
# zero-padded h1 ranks (only groups 2 and 3 have a pad rank).
for _q in range(NG):
    _max_rank = max((k + s) // NG + (LP2 - 1)
                    for s in (0, 2) for k in range(K2) if (k + s) % NG == _q)
    _valid = len(range(_q, LP1, NG))
    assert _max_rank < _valid, (_q, _max_rank, _valid)


# ----------------------------------------------------------------------------
# Fused Pallas kernel: conv1+BN+ReLU+pool -> conv2+BN+ReLU+pool -> fc1 -> fc2
# ----------------------------------------------------------------------------
def fused_kernel(p1_ref, w1_ref, s1_ref, sh1_ref, w2_ref, s2_ref, sh2_ref,
                 fc1w_ref, fc1b_ref, fc2w_ref, fc2b_ref, out_ref, h1_ref, *, bb):
    """One batch block of `bb` samples.

    p1_ref : (2*NG*G1*bb, K1) conv1 patches, rows ordered (parity, q=j%4, rank, b)
    w1_ref : (K1, C1P)        conv1 weight; s1/sh1: folded BN1(+bias) scale/shift
    w2_ref : (K2*C1P, C2P)    conv2 weight, rows (k, c_in); s2/sh2: folded BN2
    fc1w_ref:(LP2*C2P, H)     fc1 weight rows reordered to (pooled pos l, channel)
    out_ref: (bb, n_class)
    h1_ref : (NG*G1*bb, C1P)  VMEM scratch: pooled conv1, rows (q, rank, b)
    """
    gsz = G1 * bb                 # rows per mod-4 group
    half = NG * gsz               # rows per conv-position parity half of p1
    s1, sh1 = s1_ref[...], sh1_ref[...]

    # --- conv1 + BN + ReLU; MaxPool1d(2) = max over the two conv-position
    #     parities (contiguous row halves).  One mod-4 group per iteration
    #     keeps vreg pressure bounded (4 static iterations, not per-batch).
    for q in range(NG):
        base = q * gsz
        he = jnp.dot(p1_ref[pl.ds(base, gsz), :], w1_ref[...],
                     preferred_element_type=jnp.float32)
        ho = jnp.dot(p1_ref[pl.ds(half + base, gsz), :], w1_ref[...],
                     preferred_element_type=jnp.float32)
        he = jnp.maximum(he * s1 + sh1, 0.0)
        ho = jnp.maximum(ho * s1 + sh1, 0.0)
        h1_ref[pl.ds(base, gsz), :] = jnp.maximum(he, ho)

    # --- conv2 + BN + ReLU as 8 accumulated matmuls per output parity.
    #     Every h1 read is a contiguous, 8-row-aligned slice (no stride-2).
    s2, sh2 = s2_ref[...], sh2_ref[...]

    def conv2_parity(shift):          # shift=0 -> even conv2 pos, 2 -> odd
        acc = jnp.zeros((LP2 * bb, C2P), jnp.float32)
        for k in range(K2):
            j0 = k + shift            # h1 position offset for pooled pos l=0
            qg, m = j0 % NG, j0 // NG
            chunk = h1_ref[pl.ds((qg * G1 + m) * bb, LP2 * bb), :]
            acc = acc + jnp.dot(chunk, w2_ref[pl.ds(k * C1P, C1P), :],
                                preferred_element_type=jnp.float32)
        return jnp.maximum(acc * s2 + sh2, 0.0)

    # MaxPool1d(2): elementwise max of the two parities, zero data movement.
    pooled = jnp.maximum(conv2_parity(0), conv2_parity(2))   # (LP2*bb, C2P)

    # --- fc1 accumulated over the 28 pooled positions (no flatten needed),
    #     then fc2.  All slices are 8/32-row aligned.
    y1 = jnp.zeros((bb, fc1b_ref.shape[1]), jnp.float32)
    for l in range(LP2):
        y1 = y1 + jnp.dot(pooled[l * bb:(l + 1) * bb, :],
                          fc1w_ref[pl.ds(l * C2P, C2P), :],
                          preferred_element_type=jnp.float32)
    y1 = y1 + fc1b_ref[...]
    out_ref[...] = (jnp.dot(y1, fc2w_ref[...],
                            preferred_element_type=jnp.float32) + fc2b_ref[...])


# ----------------------------------------------------------------------------
# Wrapper: patch construction (plain XLA strided slices), pallas_call
# ----------------------------------------------------------------------------
def _conv1_patches(x2d, bb):
    """x2d: (B_pad, L_IN), B_pad % bb == 0 -> (B_pad/bb * 2*NG*G1*bb, K1).

    Row order within each batch block: (parity p, group q=j%4, rank r, b);
    pooled conv1 position j = 4r+q; parity 0/1 -> conv position t = 2j / 2j+1.
    """
    B = x2d.shape[0]
    nblk = B // bb
    span = 4 * (LP1 - 1) + 1                                   # 469

    def taps(par):
        cols = [x2d[:, 2 * par + k: 2 * par + k + span: 4] for k in range(K1)]
        return jnp.stack(cols, axis=-1)                        # (B, 118, K1)

    p = jnp.stack([taps(0), taps(1)], axis=0)                  # (2, B, 118, K1)
    p = jnp.pad(p, ((0, 0), (0, 0), (0, NG * G1 - LP1), (0, 0)))  # j: 118 -> 120
    p = p.reshape(2, nblk, bb, G1, NG, K1)                     # j -> (r, q)
    p = p.transpose(1, 0, 4, 3, 2, 5)                          # (blk, p, q, r, b, K1)
    return p.reshape(nblk * 2 * NG * G1 * bb, K1)


def _forward_pallas(params, x2d, bb=BB):
    B = x2d.shape[0]
    nblk = -(-B // bb)
    b_pad = nblk * bb
    if b_pad != B:
        x2d = jnp.pad(x2d, ((0, b_pad - B), (0, 0)))
    p1 = _conv1_patches(x2d, bb)                               # (nblk*240*bb, K1)

    n_hidden = params["fc1_w"].shape[1]
    n_class = params["fc2_w"].shape[1]
    rows = 2 * NG * G1 * bb

    def const2(shape):
        return pl.BlockSpec(shape, lambda i: (0, 0))

    y = pl.pallas_call(
        functools.partial(fused_kernel, bb=bb),
        out_shape=jax.ShapeDtypeStruct((b_pad, n_class), jnp.float32),
        grid=(nblk,),
        in_specs=[
            pl.BlockSpec((rows, K1), lambda i: (i, 0)),        # p1 (per batch block)
            const2((K1, C1P)), const2((1, C1P)), const2((1, C1P)),
            const2((K2 * C1P, C2P)), const2((1, C2P)), const2((1, C2P)),
            const2((LP2 * C2P, n_hidden)), const2((1, n_hidden)),
            const2((n_hidden, n_class)), const2((1, n_class)),
        ],
        out_specs=pl.BlockSpec((bb, n_class), lambda i: (i, 0)),
        scratch_shapes=[pltpu.VMEM((NG * G1 * bb, C1P), jnp.float32)],
        compiler_params=pltpu.CompilerParams(
            dimension_semantics=("parallel",)),
    )(p1, params["w1"], params["s1"], params["sh1"],
      params["w2"], params["s2"], params["sh2"],
      params["fc1_w"], params["fc1_b"], params["fc2_w"], params["fc2_b"])
    return y[:B]


def cnn1d_forward(params, src, tar=None, training=False):
    """src/tar: (B, 1, 486) PyTorch NCL layout.  Returns (y_src, loss)."""
    x = src[:, 0, :].astype(jnp.float32)
    y = _forward_pallas(params, x)
    loss = jnp.float32(0.0)
    # TODO(synk): training branch adds mmd.mmd_rbf_noaccelerate(src_feat, tar_feat)
    # from an external `mmd` module; eval-mode semantics (loss = 0) implemented.
    return y, loss


# ----------------------------------------------------------------------------
# Parameters (BN eval-mode folded; kernel-ready layouts) + plain-XLA reference
# ----------------------------------------------------------------------------
def init_params(key, n_hidden=60, n_class=3):
    ks = jax.random.split(key, 8)

    def u(k, shape, fan_in):
        bound = 1.0 / jnp.sqrt(fan_in)
        return jax.random.uniform(k, shape, jnp.float32, -bound, bound)

    conv1_w = u(ks[0], (C1, 1, K1), 1 * K1)
    conv1_b = u(ks[1], (C1,), 1 * K1)
    conv2_w = u(ks[2], (C2, C1, K2), C1 * K2)
    conv2_b = u(ks[3], (C2,), C1 * K2)
    fc1_w = u(ks[4], (n_hidden, LP2 * C2), LP2 * C2)
    fc1_b = u(ks[5], (n_hidden,), LP2 * C2)
    fc2_w = u(ks[6], (n_class, n_hidden), n_hidden)
    fc2_b = u(ks[7], (n_class,), n_hidden)

    def bn(c):                      # deterministic, non-trivial eval-mode stats
        i = jnp.arange(c, dtype=jnp.float32)
        return 1.0 + 0.01 * i, 0.02 * i, 0.05 * jnp.sin(i), 1.0 + 0.1 * jnp.cos(i) ** 2

    eps = 1e-5
    g1, be1, m1, v1 = bn(C1)
    g2, be2, m2, v2 = bn(C2)
    scale1 = g1 / jnp.sqrt(v1 + eps)
    shift1 = be1 - scale1 * m1 + scale1 * conv1_b
    scale2 = g2 / jnp.sqrt(v2 + eps)
    shift2 = be2 - scale2 * m2 + scale2 * conv2_b

    w1_mat = jnp.transpose(conv1_w, (2, 1, 0)).reshape(K1, C1)
    w1_mat = jnp.pad(w1_mat, ((0, 0), (0, C1P - C1)))
    w2_mat = jnp.transpose(conv2_w, (2, 1, 0))                 # (K2, C1, C2)
    w2_mat = jnp.pad(w2_mat, ((0, 0), (0, C1P - C1), (0, C2P - C2)))
    w2_mat = w2_mat.reshape(K2 * C1P, C2P)

    # fc1 rows reordered to (pooled position l, padded conv2 channel c); this
    # folds PyTorch's channel-major flatten (c*28+l) into the weight layout.
    fc1_blk = fc1_w.reshape(n_hidden, C2, LP2).transpose(2, 1, 0)   # (28, 20, H)
    fc1_blk = jnp.pad(fc1_blk, ((0, 0), (0, C2P - C2), (0, 0)))
    fc1_blk = fc1_blk.reshape(LP2 * C2P, n_hidden)

    kparams = dict(
        w1=w1_mat,
        s1=jnp.pad(scale1, (0, C1P - C1)).reshape(1, C1P),
        sh1=jnp.pad(shift1, (0, C1P - C1)).reshape(1, C1P),
        w2=w2_mat,
        s2=jnp.pad(scale2, (0, C2P - C2)).reshape(1, C2P),
        sh2=jnp.pad(shift2, (0, C2P - C2)).reshape(1, C2P),
        fc1_w=fc1_blk, fc1_b=fc1_b.reshape(1, n_hidden),
        fc2_w=fc2_w.T, fc2_b=fc2_b.reshape(1, n_class),
    )
    raw = dict(conv1_w=conv1_w, conv1_b=conv1_b, bn1=(g1, be1, m1, v1),
               conv2_w=conv2_w, conv2_b=conv2_b, bn2=(g2, be2, m2, v2),
               fc1_w=fc1_w, fc1_b=fc1_b, fc2_w=fc2_w, fc2_b=fc2_b)
    return kparams, raw


def reference_forward(raw, src):
    x = src.astype(jnp.float32)

    def conv_bn_relu_pool(x, w, b, bnp):
        gamma, beta, mean, var = bnp
        y = jax.lax.conv_general_dilated(
            x, w, window_strides=(2,), padding="VALID",
            dimension_numbers=("NCH", "OIH", "NCH"))
        y = y + b[None, :, None]
        y = (gamma[None, :, None] * (y - mean[None, :, None])
             * jax.lax.rsqrt(var + 1e-5)[None, :, None] + beta[None, :, None])
        y = jnp.maximum(y, 0.0)
        Bn, Cn, Ln = y.shape
        return y[:, :, :(Ln // 2) * 2].reshape(Bn, Cn, Ln // 2, 2).max(axis=-1)

    h = conv_bn_relu_pool(x, raw["conv1_w"], raw["conv1_b"], raw["bn1"])
    h = conv_bn_relu_pool(h, raw["conv2_w"], raw["conv2_b"], raw["bn2"])
    feat = h.reshape(h.shape[0], -1)                  # PyTorch channel-major flatten
    y1 = feat @ raw["fc1_w"].T + raw["fc1_b"]
    return y1 @ raw["fc2_w"].T + raw["fc2_b"]


if __name__ == "__main__":
    key = jax.random.PRNGKey(0)
    k_par, k_src, _ = jax.random.split(key, 3)
    params, raw = init_params(k_par, n_hidden=60, n_class=3)

    for B in (16, 2):        # multi-block grid, and a batch smaller than BB (padding path)
        src = jax.random.normal(jax.random.fold_in(k_src, B), (B, 1, L_IN), jnp.float32)
        y_src, loss = jax.jit(cnn1d_forward)(params, src)
        jax.block_until_ready((y_src, loss))

        y_ref = jax.jit(reference_forward)(raw, src)
        err = float(jnp.max(jnp.abs(y_src - y_ref)))
        assert y_src.shape == (B, 3) and y_src.dtype == jnp.float32
        assert bool(jnp.all(jnp.isfinite(y_src)))
        assert err < 1e-2, (B, err)

    print("KERNEL_OK")
</pallas_src>

<mosaic_0001>
module attributes {stable_mosaic.version = 11 : i64} {
  func.func @fused_kernel(%arg0: i32, %arg1: memref<1920x16xf32, #tpu.memory_space<vmem>>, %arg2: memref<16x32xf32, #tpu.memory_space<vmem>>, %arg3: memref<1x32xf32, #tpu.memory_space<vmem>>, %arg4: memref<1x32xf32, #tpu.memory_space<vmem>>, %arg5: memref<256x32xf32, #tpu.memory_space<vmem>>, %arg6: memref<1x32xf32, #tpu.memory_space<vmem>>, %arg7: memref<1x32xf32, #tpu.memory_space<vmem>>, %arg8: memref<896x60xf32, #tpu.memory_space<vmem>>, %arg9: memref<1x60xf32, #tpu.memory_space<vmem>>, %arg10: memref<60x3xf32, #tpu.memory_space<vmem>>, %arg11: memref<1x3xf32, #tpu.memory_space<vmem>>, %arg12: memref<8x3xf32, #tpu.memory_space<vmem>>, %arg13: memref<960x32xf32, #tpu.memory_space<vmem>>) attributes {dimension_semantics = [#tpu.dimension_semantics<parallel>], iteration_bounds = array<i64: 2>, scalar_prefetch = 0 : i64, scratch_operands = 1 : i64, tpu.core_type = #tpu.core_type<tc>, window_params = [{transform_indices = @transform_0, window_bounds = array<i64: 1920, 16>}, {pipeline_mode = #tpu.pipeline_mode<synchronous>, transform_indices = @transform_1, window_bounds = array<i64: 16, 32>}, {pipeline_mode = #tpu.pipeline_mode<synchronous>, transform_indices = @transform_2, window_bounds = array<i64: 1, 32>}, {pipeline_mode = #tpu.pipeline_mode<synchronous>, transform_indices = @transform_3, window_bounds = array<i64: 1, 32>}, {pipeline_mode = #tpu.pipeline_mode<synchronous>, transform_indices = @transform_4, window_bounds = array<i64: 256, 32>}, {pipeline_mode = #tpu.pipeline_mode<synchronous>, transform_indices = @transform_5, window_bounds = array<i64: 1, 32>}, {pipeline_mode = #tpu.pipeline_mode<synchronous>, transform_indices = @transform_6, window_bounds = array<i64: 1, 32>}, {pipeline_mode = #tpu.pipeline_mode<synchronous>, transform_indices = @transform_7, window_bounds = array<i64: 896, 60>}, {pipeline_mode = #tpu.pipeline_mode<synchronous>, transform_indices = @transform_8, window_bounds = array<i64: 1, 60>}, {pipeline_mode = #tpu.pipeline_mode<synchronous>, transform_indices = @transform_9, window_bounds = array<i64: 60, 3>}, {pipeline_mode = #tpu.pipeline_mode<synchronous>, transform_indices = @transform_10, window_bounds = array<i64: 1, 3>}, {transform_indices = @transform_11, window_bounds = array<i64: 8, 3>}]} {
    %c0 = arith.constant 0 : index
    %c0_0 = arith.constant 0 : index
    %0 = vector.load %arg3[%c0, %c0_0] : memref<1x32xf32, #tpu.memory_space<vmem>>, vector<1x32xf32>
    %c0_1 = arith.constant 0 : index
    %c0_2 = arith.constant 0 : index
    %1 = vector.load %arg4[%c0_1, %c0_2] : memref<1x32xf32, #tpu.memory_space<vmem>>, vector<1x32xf32>
    %c0_3 = arith.constant 0 : index
    %c0_4 = arith.constant 0 : index
    %2 = vector.load %arg1[%c0_3, %c0_4] : memref<1920x16xf32, #tpu.memory_space<vmem>>, vector<240x16xf32>
    %c0_5 = arith.constant 0 : index
    %c0_6 = arith.constant 0 : index
    %3 = vector.load %arg2[%c0_5, %c0_6] : memref<16x32xf32, #tpu.memory_space<vmem>>, vector<16x32xf32>
    %cst = arith.constant dense<0.000000e+00> : vector<240x32xf32>
    %4 = tpu.matmul %2, %3, %cst {dimension_numbers = #tpu.dot_dimension_numbers<[1], [0], [0], [1], [0, 0, 1, 1], [], []>} : vector<240x16xf32>, vector<16x32xf32>, vector<240x32xf32> -> vector<240x32xf32>
    %c960 = arith.constant 960 : index
    %c0_7 = arith.constant 0 : index
    %5 = vector.load %arg1[%c960, %c0_7] : memref<1920x16xf32, #tpu.memory_space<vmem>>, vector<240x16xf32>
    %c0_8 = arith.constant 0 : index
    %c0_9 = arith.constant 0 : index
    %6 = vector.load %arg2[%c0_8, %c0_9] : memref<16x32xf32, #tpu.memory_space<vmem>>, vector<16x32xf32>
    %cst_10 = arith.constant dense<0.000000e+00> : vector<240x32xf32>
    %7 = tpu.matmul %5, %6, %cst_10 {dimension_numbers = #tpu.dot_dimension_numbers<[1], [0], [0], [1], [0, 0, 1, 1], [], []>} : vector<240x16xf32>, vector<16x32xf32>, vector<240x32xf32> -> vector<240x32xf32>
    %8 = vector.broadcast %0 : vector<1x32xf32> to vector<240x32xf32>
    %9 = arith.mulf %4, %8 : vector<240x32xf32>
    %10 = vector.broadcast %1 : vector<1x32xf32> to vector<240x32xf32>
    %11 = arith.addf %9, %10 : vector<240x32xf32>
    %cst_11 = arith.constant 0.000000e+00 : f32
    %12 = vector.broadcast %cst_11 : f32 to vector<240x32xf32>
    %13 = arith.maximumf %11, %12 : vector<240x32xf32>
    %14 = vector.broadcast %0 : vector<1x32xf32> to vector<240x32xf32>
    %15 = arith.mulf %7, %14 : vector<240x32xf32>
    %16 = vector.broadcast %1 : vector<1x32xf32> to vector<240x32xf32>
    %17 = arith.addf %15, %16 : vector<240x32xf32>
    %cst_12 = arith.constant 0.000000e+00 : f32
    %18 = vector.broadcast %cst_12 : f32 to vector<240x32xf32>
    %19 = arith.maximumf %17, %18 : vector<240x32xf32>
    %20 = arith.maximumf %13, %19 : vector<240x32xf32>
    %c0_13 = arith.constant 0 : index
    %c0_14 = arith.constant 0 : index
    %21 = vector.load %arg13[%c0_13, %c0_14] : memref<960x32xf32, #tpu.memory_space<vmem>>, vector<240x32xf32>
    tpu.vector_store %arg13[%c0_13, %c0_14], %20 {strides = array<i32>} : memref<960x32xf32, #tpu.memory_space<vmem>>, vector<240x32xf32>,
    %c240 = arith.constant 240 : index
    %c0_15 = arith.constant 0 : index
    %22 = vector.load %arg1[%c240, %c0_15] : memref<1920x16xf32, #tpu.memory_space<vmem>>, vector<240x16xf32>
    %c0_16 = arith.constant 0 : index
    %c0_17 = arith.constant 0 : index
    %23 = vector.load %arg2[%c0_16, %c0_17] : memref<16x32xf32, #tpu.memory_space<vmem>>, vector<16x32xf32>
    %cst_18 = arith.constant dense<0.000000e+00> : vector<240x32xf32>
    %24 = tpu.matmul %22, %23, %cst_18 {dimension_numbers = #tpu.dot_dimension_numbers<[1], [0], [0], [1], [0, 0, 1, 1], [], []>} : vector<240x16xf32>, vector<16x32xf32>, vector<240x32xf32> -> vector<240x32xf32>
    %c1200 = arith.constant 1200 : index
    %c0_19 = arith.constant 0 : index
    %25 = vector.load %arg1[%c1200, %c0_19] : memref<1920x16xf32, #tpu.memory_space<vmem>>, vector<240x16xf32>
    %c0_20 = arith.constant 0 : index
    %c0_21 = arith.constant 0 : index
    %26 = vector.load %arg2[%c0_20, %c0_21] : memref<16x32xf32, #tpu.memory_space<vmem>>, vector<16x32xf32>
    %cst_22 = arith.constant dense<0.000000e+00> : vector<240x32xf32>
    %27 = tpu.matmul %25, %26, %cst_22 {dimension_numbers = #tpu.dot_dimension_numbers<[1], [0], [0], [1], [0, 0, 1, 1], [], []>} : vector<240x16xf32>, vector<16x32xf32>, vector<240x32xf32> -> vector<240x32xf32>
    %28 = vector.broadcast %0 : vector<1x32xf32> to vector<240x32xf32>
    %29 = arith.mulf %24, %28 : vector<240x32xf32>
    %30 = vector.broadcast %1 : vector<1x32xf32> to vector<240x32xf32>
    %31 = arith.addf %29, %30 : vector<240x32xf32>
    %cst_23 = arith.constant 0.000000e+00 : f32
    %32 = vector.broadcast %cst_23 : f32 to vector<240x32xf32>
    %33 = arith.maximumf %31, %32 : vector<240x32xf32>
    %34 = vector.broadcast %0 : vector<1x32xf32> to vector<240x32xf32>
    %35 = arith.mulf %27, %34 : vector<240x32xf32>
    %36 = vector.broadcast %1 : vector<1x32xf32> to vector<240x32xf32>
    %37 = arith.addf %35, %36 : vector<240x32xf32>
    %cst_24 = arith.constant 0.000000e+00 : f32
    %38 = vector.broadcast %cst_24 : f32 to vector<240x32xf32>
    %39 = arith.maximumf %37, %38 : vector<240x32xf32>
    %40 = arith.maximumf %33, %39 : vector<240x32xf32>
    %c240_25 = arith.constant 240 : index
    %c0_26 = arith.constant 0 : index
    %41 = vector.load %arg13[%c240_25, %c0_26] : memref<960x32xf32, #tpu.memory_space<vmem>>, vector<240x32xf32>
    tpu.vector_store %arg13[%c240_25, %c0_26], %40 {strides = array<i32>} : memref<960x32xf32, #tpu.memory_space<vmem>>, vector<240x32xf32>,
    %c480 = arith.constant 480 : index
    %c0_27 = arith.constant 0 : index
    %42 = vector.load %arg1[%c480, %c0_27] : memref<1920x16xf32, #tpu.memory_space<vmem>>, vector<240x16xf32>
    %c0_28 = arith.constant 0 : index
    %c0_29 = arith.constant 0 : index
    %43 = vector.load %arg2[%c0_28, %c0_29] : memref<16x32xf32, #tpu.memory_space<vmem>>, vector<16x32xf32>
    %cst_30 = arith.constant dense<0.000000e+00> : vector<240x32xf32>
    %44 = tpu.matmul %42, %43, %cst_30 {dimension_numbers = #tpu.dot_dimension_numbers<[1], [0], [0], [1], [0, 0, 1, 1], [], []>} : vector<240x16xf32>, vector<16x32xf32>, vector<240x32xf32> -> vector<240x32xf32>
    %c1440 = arith.constant 1440 : index
    %c0_31 = arith.constant 0 : index
    %45 = vector.load %arg1[%c1440, %c0_31] : memref<1920x16xf32, #tpu.memory_space<vmem>>, vector<240x16xf32>
    %c0_32 = arith.constant 0 : index
    %c0_33 = arith.constant 0 : index
    %46 = vector.load %arg2[%c0_32, %c0_33] : memref<16x32xf32, #tpu.memory_space<vmem>>, vector<16x32xf32>
    %cst_34 = arith.constant dense<0.000000e+00> : vector<240x32xf32>
    %47 = tpu.matmul %45, %46, %cst_34 {dimension_numbers = #tpu.dot_dimension_numbers<[1], [0], [0], [1], [0, 0, 1, 1], [], []>} : vector<240x16xf32>, vector<16x32xf32>, vector<240x32xf32> -> vector<240x32xf32>
    %48 = vector.broadcast %0 : vector<1x32xf32> to vector<240x32xf32>
    %49 = arith.mulf %44, %48 : vector<240x32xf32>
    %50 = vector.broadcast %1 : vector<1x32xf32> to vector<240x32xf32>
    %51 = arith.addf %49, %50 : vector<240x32xf32>
    %cst_35 = arith.constant 0.000000e+00 : f32
    %52 = vector.broadcast %cst_35 : f32 to vector<240x32xf32>
    %53 = arith.maximumf %51, %52 : vector<240x32xf32>
    %54 = vector.broadcast %0 : vector<1x32xf32> to vector<240x32xf32>
    %55 = arith.mulf %47, %54 : vector<240x32xf32>
    %56 = vector.broadcast %1 : vector<1x32xf32> to vector<240x32xf32>
    %57 = arith.addf %55, %56 : vector<240x32xf32>
    %cst_36 = arith.constant 0.000000e+00 : f32
    %58 = vector.broadcast %cst_36 : f32 to vector<240x32xf32>
    %59 = arith.maximumf %57, %58 : vector<240x32xf32>
    %60 = arith.maximumf %53, %59 : vector<240x32xf32>
    %c480_37 = arith.constant 480 : index
    %c0_38 = arith.constant 0 : index
    %61 = vector.load %arg13[%c480_37, %c0_38] : memref<960x32xf32, #tpu.memory_space<vmem>>, vector<240x32xf32>
    tpu.vector_store %arg13[%c480_37, %c0_38], %60 {strides = array<i32>} : memref<960x32xf32, #tpu.memory_space<vmem>>, vector<240x32xf32>,
    %c720 = arith.constant 720 : index
    %c0_39 = arith.constant 0 : index
    %62 = vector.load %arg1[%c720, %c0_39] : memref<1920x16xf32, #tpu.memory_space<vmem>>, vector<240x16xf32>
    %c0_40 = arith.constant 0 : index
    %c0_41 = arith.constant 0 : index
    %63 = vector.load %arg2[%c0_40, %c0_41] : memref<16x32xf32, #tpu.memory_space<vmem>>, vector<16x32xf32>
    %cst_42 = arith.constant dense<0.000000e+00> : vector<240x32xf32>
    %64 = tpu.matmul %62, %63, %cst_42 {dimension_numbers = #tpu.dot_dimension_numbers<[1], [0], [0], [1], [0, 0, 1, 1], [], []>} : vector<240x16xf32>, vector<16x32xf32>, vector<240x32xf32> -> vector<240x32xf32>
    %c1680 = arith.constant 1680 : index
    %c0_43 = arith.constant 0 : index
    %65 = vector.load %arg1[%c1680, %c0_43] : memref<1920x16xf32, #tpu.memory_space<vmem>>, vector<240x16xf32>
    %c0_44 = arith.constant 0 : index
    %c0_45 = arith.constant 0 : index
    %66 = vector.load %arg2[%c0_44, %c0_45] : memref<16x32xf32, #tpu.memory_space<vmem>>, vector<16x32xf32>
    %cst_46 = arith.constant dense<0.000000e+00> : vector<240x32xf32>
    %67 = tpu.matmul %65, %66, %cst_46 {dimension_numbers = #tpu.dot_dimension_numbers<[1], [0], [0], [1], [0, 0, 1, 1], [], []>} : vector<240x16xf32>, vector<16x32xf32>, vector<240x32xf32> -> vector<240x32xf32>
    %68 = vector.broadcast %0 : vector<1x32xf32> to vector<240x32xf32>
    %69 = arith.mulf %64, %68 : vector<240x32xf32>
    %70 = vector.broadcast %1 : vector<1x32xf32> to vector<240x32xf32>
    %71 = arith.addf %69, %70 : vector<240x32xf32>
    %cst_47 = arith.constant 0.000000e+00 : f32
    %72 = vector.broadcast %cst_47 : f32 to vector<240x32xf32>
    %73 = arith.maximumf %71, %72 : vector<240x32xf32>
    %74 = vector.broadcast %0 : vector<1x32xf32> to vector<240x32xf32>
    %75 = arith.mulf %67, %74 : vector<240x32xf32>
    %76 = vector.broadcast %1 : vector<1x32xf32> to vector<240x32xf32>
    %77 = arith.addf %75, %76 : vector<240x32xf32>
    %cst_48 = arith.constant 0.000000e+00 : f32
    %78 = vector.broadcast %cst_48 : f32 to vector<240x32xf32>
    %79 = arith.maximumf %77, %78 : vector<240x32xf32>
    %80 = arith.maximumf %73, %79 : vector<240x32xf32>
    %c720_49 = arith.constant 720 : index
    %c0_50 = arith.constant 0 : index
    %81 = vector.load %arg13[%c720_49, %c0_50] : memref<960x32xf32, #tpu.memory_space<vmem>>, vector<240x32xf32>
    tpu.vector_store %arg13[%c720_49, %c0_50], %80 {strides = array<i32>} : memref<960x32xf32, #tpu.memory_space<vmem>>, vector<240x32xf32>,
    %c0_51 = arith.constant 0 : index
    %c0_52 = arith.constant 0 : index
    %82 = vector.load %arg6[%c0_51, %c0_52] : memref<1x32xf32, #tpu.memory_space<vmem>>, vector<1x32xf32>
    %c0_53 = arith.constant 0 : index
    %c0_54 = arith.constant 0 : index
    %83 = vector.load %arg7[%c0_53, %c0_54] : memref<1x32xf32, #tpu.memory_space<vmem>>, vector<1x32xf32>
    %cst_55 = arith.constant 0.000000e+00 : f32
    %84 = vector.broadcast %cst_55 : f32 to vector<224x32xf32>
    %c0_56 = arith.constant 0 : index
    %c0_57 = arith.constant 0 : index
    %85 = vector.load %arg13[%c0_56, %c0_57] : memref<960x32xf32, #tpu.memory_space<vmem>>, vector<224x32xf32>
    %c0_58 = arith.constant 0 : index
    %c0_59 = arith.constant 0 : index
    %86 = vector.load %arg5[%c0_58, %c0_59] : memref<256x32xf32, #tpu.memory_space<vmem>>, vector<32x32xf32>
    %cst_60 = arith.constant dense<0.000000e+00> : vector<224x32xf32>
    %87 = tpu.matmul %85, %86, %cst_60 {dimension_numbers = #tpu.dot_dimension_numbers<[1], [0], [0], [1], [0, 0, 1, 1], [], []>} : vector<224x32xf32>, vector<32x32xf32>, vector<224x32xf32> -> vector<224x32xf32>
    %88 = arith.addf %84, %87 : vector<224x32xf32>
    %c240_61 = arith.constant 240 : index
    %c0_62 = arith.constant 0 : index
    %89 = vector.load %arg13[%c240_61, %c0_62] : memref<960x32xf32, #tpu.memory_space<vmem>>, vector<224x32xf32>
    %c32 = arith.constant 32 : index
    %c0_63 = arith.constant 0 : index
    %90 = vector.load %arg5[%c32, %c0_63] : memref<256x32xf32, #tpu.memory_space<vmem>>, vector<32x32xf32>
    %cst_64 = arith.constant dense<0.000000e+00> : vector<224x32xf32>
    %91 = tpu.matmul %89, %90, %cst_64 {dimension_numbers = #tpu.dot_dimension_numbers<[1], [0], [0], [1], [0, 0, 1, 1], [], []>} : vector<224x32xf32>, vector<32x32xf32>, vector<224x32xf32> -> vector<224x32xf32>
    %92 = arith.addf %88, %91 : vector<224x32xf32>
    %c480_65 = arith.constant 480 : index
    %c0_66 = arith.constant 0 : index
    %93 = vector.load %arg13[%c480_65, %c0_66] : memref<960x32xf32, #tpu.memory_space<vmem>>, vector<224x32xf32>
    %c64 = arith.constant 64 : index
    %c0_67 = arith.constant 0 : index
    %94 = vector.load %arg5[%c64, %c0_67] : memref<256x32xf32, #tpu.memory_space<vmem>>, vector<32x32xf32>
    %cst_68 = arith.constant dense<0.000000e+00> : vector<224x32xf32>
    %95 = tpu.matmul %93, %94, %cst_68 {dimension_numbers = #tpu.dot_dimension_numbers<[1], [0], [0], [1], [0, 0, 1, 1], [], []>} : vector<224x32xf32>, vector<32x32xf32>, vector<224x32xf32> -> vector<224x32xf32>
    %96 = arith.addf %92, %95 : vector<224x32xf32>
    %c720_69 = arith.constant 720 : index
    %c0_70 = arith.constant 0 : index
    %97 = vector.load %arg13[%c720_69, %c0_70] : memref<960x32xf32, #tpu.memory_space<vmem>>, vector<224x32xf32>
    %c96 = arith.constant 96 : index
    %c0_71 = arith.constant 0 : index
    %98 = vector.load %arg5[%c96, %c0_71] : memref<256x32xf32, #tpu.memory_space<vmem>>, vector<32x32xf32>
    %cst_72 = arith.constant dense<0.000000e+00> : vector<224x32xf32>
    %99 = tpu.matmul %97, %98, %cst_72 {dimension_numbers = #tpu.dot_dimension_numbers<[1], [0], [0], [1], [0, 0, 1, 1], [], []>} : vector<224x32xf32>, vector<32x32xf32>, vector<224x32xf32> -> vector<224x32xf32>
    %100 = arith.addf %96, %99 : vector<224x32xf32>
    %c8 = arith.constant 8 : index
    %c0_73 = arith.constant 0 : index
    %101 = vector.load %arg13[%c8, %c0_73] : memref<960x32xf32, #tpu.memory_space<vmem>>, vector<224x32xf32>
    %c128 = arith.constant 128 : index
    %c0_74 = arith.constant 0 : index
    %102 = vector.load %arg5[%c128, %c0_74] : memref<256x32xf32, #tpu.memory_space<vmem>>, vector<32x32xf32>
    %cst_75 = arith.constant dense<0.000000e+00> : vector<224x32xf32>
    %103 = tpu.matmul %101, %102, %cst_75 {dimension_numbers = #tpu.dot_dimension_numbers<[1], [0], [0], [1], [0, 0, 1, 1], [], []>} : vector<224x32xf32>, vector<32x32xf32>, vector<224x32xf32> -> vector<224x32xf32>
    %104 = arith.addf %100, %103 : vector<224x32xf32>
    %c248 = arith.constant 248 : index
    %c0_76 = arith.constant 0 : index
    %105 = vector.load %arg13[%c248, %c0_76] : memref<960x32xf32, #tpu.memory_space<vmem>>, vector<224x32xf32>
    %c160 = arith.constant 160 : index
    %c0_77 = arith.constant 0 : index
    %106 = vector.load %arg5[%c160, %c0_77] : memref<256x32xf32, #tpu.memory_space<vmem>>, vector<32x32xf32>
    %cst_78 = arith.constant dense<0.000000e+00> : vector<224x32xf32>
    %107 = tpu.matmul %105, %106, %cst_78 {dimension_numbers = #tpu.dot_dimension_numbers<[1], [0], [0], [1], [0, 0, 1, 1], [], []>} : vector<224x32xf32>, vector<32x32xf32>, vector<224x32xf32> -> vector<224x32xf32>
    %108 = arith.addf %104, %107 : vector<224x32xf32>
    %c488 = arith.constant 488 : index
    %c0_79 = arith.constant 0 : index
    %109 = vector.load %arg13[%c488, %c0_79] : memref<960x32xf32, #tpu.memory_space<vmem>>, vector<224x32xf32>
    %c192 = arith.constant 192 : index
    %c0_80 = arith.constant 0 : index
    %110 = vector.load %arg5[%c192, %c0_80] : memref<256x32xf32, #tpu.memory_space<vmem>>, vector<32x32xf32>
    %cst_81 = arith.constant dense<0.000000e+00> : vector<224x32xf32>
    %111 = tpu.matmul %109, %110, %cst_81 {dimension_numbers = #tpu.dot_dimension_numbers<[1], [0], [0], [1], [0, 0, 1, 1], [], []>} : vector<224x32xf32>, vector<32x32xf32>, vector<224x32xf32> -> vector<224x32xf32>
    %112 = arith.addf %108, %111 : vector<224x32xf32>
    %c728 = arith.constant 728 : index
    %c0_82 = arith.constant 0 : index
    %113 = vector.load %arg13[%c728, %c0_82] : memref<960x32xf32, #tpu.memory_space<vmem>>, vector<224x32xf32>
    %c224 = arith.constant 224 : index
    %c0_83 = arith.constant 0 : index
    %114 = vector.load %arg5[%c224, %c0_83] : memref<256x32xf32, #tpu.memory_space<vmem>>, vector<32x32xf32>
    %cst_84 = arith.constant dense<0.000000e+00> : vector<224x32xf32>
    %115 = tpu.matmul %113, %114, %cst_84 {dimension_numbers = #tpu.dot_dimension_numbers<[1], [0], [0], [1], [0, 0, 1, 1], [], []>} : vector<224x32xf32>, vector<32x32xf32>, vector<224x32xf32> -> vector<224x32xf32>
    %116 = arith.addf %112, %115 : vector<224x32xf32>
    %117 = vector.broadcast %82 : vector<1x32xf32> to vector<224x32xf32>
    %118 = arith.mulf %116, %117 : vector<224x32xf32>
    %119 = vector.broadcast %83 : vector<1x32xf32> to vector<224x32xf32>
    %120 = arith.addf %118, %119 : vector<224x32xf32>
    %cst_85 = arith.constant 0.000000e+00 : f32
    %121 = vector.broadcast %cst_85 : f32 to vector<224x32xf32>
    %122 = arith.maximumf %120, %121 : vector<224x32xf32>
    %cst_86 = arith.constant 0.000000e+00 : f32
    %123 = vector.broadcast %cst_86 : f32 to vector<224x32xf32>
    %c480_87 = arith.constant 480 : index
    %c0_88 = arith.constant 0 : index
    %124 = vector.load %arg13[%c480_87, %c0_88] : memref<960x32xf32, #tpu.memory_space<vmem>>, vector<224x32xf32>
    %c0_89 = arith.constant 0 : index
    %c0_90 = arith.constant 0 : index
    %125 = vector.load %arg5[%c0_89, %c0_90] : memref<256x32xf32, #tpu.memory_space<vmem>>, vector<32x32xf32>
    %cst_91 = arith.constant dense<0.000000e+00> : vector<224x32xf32>
    %126 = tpu.matmul %124, %125, %cst_91 {dimension_numbers = #tpu.dot_dimension_numbers<[1], [0], [0], [1], [0, 0, 1, 1], [], []>} : vector<224x32xf32>, vector<32x32xf32>, vector<224x32xf32> -> vector<224x32xf32>
    %127 = arith.addf %123, %126 : vector<224x32xf32>
    %c720_92 = arith.constant 720 : index
    %c0_93 = arith.constant 0 : index
    %128 = vector.load %arg13[%c720_92, %c0_93] : memref<960x32xf32, #tpu.memory_space<vmem>>, vector<224x32xf32>
    %c32_94 = arith.constant 32 : index
    %c0_95 = arith.constant 0 : index
    %129 = vector.load %arg5[%c32_94, %c0_95] : memref<256x32xf32, #tpu.memory_space<vmem>>, vector<32x32xf32>
    %cst_96 = arith.constant dense<0.000000e+00> : vector<224x32xf32>
    %130 = tpu.matmul %128, %129, %cst_96 {dimension_numbers = #tpu.dot_dimension_numbers<[1], [0], [0], [1], [0, 0, 1, 1], [], []>} : vector<224x32xf32>, vector<32x32xf32>, vector<224x32xf32> -> vector<224x32xf32>
    %131 = arith.addf %127, %130 : vector<224x32xf32>
    %c8_97 = arith.constant 8 : index
    %c0_98 = arith.constant 0 : index
    %132 = vector.load %arg13[%c8_97, %c0_98] : memref<960x32xf32, #tpu.memory_space<vmem>>, vector<224x32xf32>
    %c64_99 = arith.constant 64 : index
    %c0_100 = arith.constant 0 : index
    %133 = vector.load %arg5[%c64_99, %c0_100] : memref<256x32xf32, #tpu.memory_space<vmem>>, vector<32x32xf32>
    %cst_101 = arith.constant dense<0.000000e+00> : vector<224x32xf32>
    %134 = tpu.matmul %132, %133, %cst_101 {dimension_numbers = #tpu.dot_dimension_numbers<[1], [0], [0], [1], [0, 0, 1, 1], [], []>} : vector<224x32xf32>, vector<32x32xf32>, vector<224x32xf32> -> vector<224x32xf32>
    %135 = arith.addf %131, %134 : vector<224x32xf32>
    %c248_102 = arith.constant 248 : index
    %c0_103 = arith.constant 0 : index
    %136 = vector.load %arg13[%c248_102, %c0_103] : memref<960x32xf32, #tpu.memory_space<vmem>>, vector<224x32xf32>
    %c96_104 = arith.constant 96 : index
    %c0_105 = arith.constant 0 : index
    %137 = vector.load %arg5[%c96_104, %c0_105] : memref<256x32xf32, #tpu.memory_space<vmem>>, vector<32x32xf32>
    %cst_106 = arith.constant dense<0.000000e+00> : vector<224x32xf32>
    %138 = tpu.matmul %136, %137, %cst_106 {dimension_numbers = #tpu.dot_dimension_numbers<[1], [0], [0], [1], [0, 0, 1, 1], [], []>} : vector<224x32xf32>, vector<32x32xf32>, vector<224x32xf32> -> vector<224x32xf32>
    %139 = arith.addf %135, %138 : vector<224x32xf32>
    %c488_107 = arith.constant 488 : index
    %c0_108 = arith.constant 0 : index
    %140 = vector.load %arg13[%c488_107, %c0_108] : memref<960x32xf32, #tpu.memory_space<vmem>>, vector<224x32xf32>
    %c128_109 = arith.constant 128 : index
    %c0_110 = arith.constant 0 : index
    %141 = vector.load %arg5[%c128_109, %c0_110] : memref<256x32xf32, #tpu.memory_space<vmem>>, vector<32x32xf32>
    %cst_111 = arith.constant dense<0.000000e+00> : vector<224x32xf32>
    %142 = tpu.matmul %140, %141, %cst_111 {dimension_numbers = #tpu.dot_dimension_numbers<[1], [0], [0], [1], [0, 0, 1, 1], [], []>} : vector<224x32xf32>, vector<32x32xf32>, vector<224x32xf32> -> vector<224x32xf32>
    %143 = arith.addf %139, %142 : vector<224x32xf32>
    %c728_112 = arith.constant 728 : index
    %c0_113 = arith.constant 0 : index
    %144 = vector.load %arg13[%c728_112, %c0_113] : memref<960x32xf32, #tpu.memory_space<vmem>>, vector<224x32xf32>
    %c160_114 = arith.constant 160 : index
    %c0_115 = arith.constant 0 : index
    %145 = vector.load %arg5[%c160_114, %c0_115] : memref<256x32xf32, #tpu.memory_space<vmem>>, vector<32x32xf32>
    %cst_116 = arith.constant dense<0.000000e+00> : vector<224x32xf32>
    %146 = tpu.matmul %144, %145, %cst_116 {dimension_numbers = #tpu.dot_dimension_numbers<[1], [0], [0], [1], [0, 0, 1, 1], [], []>} : vector<224x32xf32>, vector<32x32xf32>, vector<224x32xf32> -> vector<224x32xf32>
    %147 = arith.addf %143, %146 : vector<224x32xf32>
    %c16 = arith.constant 16 : index
    %c0_117 = arith.constant 0 : index
    %148 = vector.load %arg13[%c16, %c0_117] : memref<960x32xf32, #tpu.memory_space<vmem>>, vector<224x32xf32>
    %c192_118 = arith.constant 192 : index
    %c0_119 = arith.constant 0 : index
    %149 = vector.load %arg5[%c192_118, %c0_119] : memref<256x32xf32, #tpu.memory_space<vmem>>, vector<32x32xf32>
    %cst_120 = arith.constant dense<0.000000e+00> : vector<224x32xf32>
    %150 = tpu.matmul %148, %149, %cst_120 {dimension_numbers = #tpu.dot_dimension_numbers<[1], [0], [0], [1], [0, 0, 1, 1], [], []>} : vector<224x32xf32>, vector<32x32xf32>, vector<224x32xf32> -> vector<224x32xf32>
    %151 = arith.addf %147, %150 : vector<224x32xf32>
    %c256 = arith.constant 256 : index
    %c0_121 = arith.constant 0 : index
    %152 = vector.load %arg13[%c256, %c0_121] : memref<960x32xf32, #tpu.memory_space<vmem>>, vector<224x32xf32>
    %c224_122 = arith.constant 224 : index
    %c0_123 = arith.constant 0 : index
    %153 = vector.load %arg5[%c224_122, %c0_123] : memref<256x32xf32, #tpu.memory_space<vmem>>, vector<32x32xf32>
    %cst_124 = arith.constant dense<0.000000e+00> : vector<224x32xf32>
    %154 = tpu.matmul %152, %153, %cst_124 {dimension_numbers = #tpu.dot_dimension_numbers<[1], [0], [0], [1], [0, 0, 1, 1], [], []>} : vector<224x32xf32>, vector<32x32xf32>, vector<224x32xf32> -> vector<224x32xf32>
    %155 = arith.addf %151, %154 : vector<224x32xf32>
    %156 = vector.broadcast %82 : vector<1x32xf32> to vector<224x32xf32>
    %157 = arith.mulf %155, %156 : vector<224x32xf32>
    %158 = vector.broadcast %83 : vector<1x32xf32> to vector<224x32xf32>
    %159 = arith.addf %157, %158 : vector<224x32xf32>
    %cst_125 = arith.constant 0.000000e+00 : f32
    %160 = vector.broadcast %cst_125 : f32 to vector<224x32xf32>
    %161 = arith.maximumf %159, %160 : vector<224x32xf32>
    %162 = arith.maximumf %122, %161 : vector<224x32xf32>
    %cst_126 = arith.constant 0.000000e+00 : f32
    %163 = vector.broadcast %cst_126 : f32 to vector<8x60xf32>
    %164 = vector.extract_strided_slice %162 {offsets = [0, 0], sizes = [8, 32], strides = [1, 1]} : vector<224x32xf32> to vector<8x32xf32>
    %c0_127 = arith.constant 0 : index
    %c0_128 = arith.constant 0 : index
    %165 = vector.load %arg8[%c0_127, %c0_128] : memref<896x60xf32, #tpu.memory_space<vmem>>, vector<32x60xf32>
    %cst_129 = arith.constant dense<0.000000e+00> : vector<8x60xf32>
    %166 = tpu.matmul %164, %165, %cst_129 {dimension_numbers = #tpu.dot_dimension_numbers<[1], [0], [0], [1], [0, 0, 1, 1], [], []>} : vector<8x32xf32>, vector<32x60xf32>, vector<8x60xf32> -> vector<8x60xf32>
    %167 = arith.addf %163, %166 : vector<8x60xf32>
    %168 = vector.extract_strided_slice %162 {offsets = [8, 0], sizes = [8, 32], strides = [1, 1]} : vector<224x32xf32> to vector<8x32xf32>
    %c32_130 = arith.constant 32 : index
    %c0_131 = arith.constant 0 : index
    %169 = vector.load %arg8[%c32_130, %c0_131] : memref<896x60xf32, #tpu.memory_space<vmem>>, vector<32x60xf32>
    %cst_132 = arith.constant dense<0.000000e+00> : vector<8x60xf32>
    %170 = tpu.matmul %168, %169, %cst_132 {dimension_numbers = #tpu.dot_dimension_numbers<[1], [0], [0], [1], [0, 0, 1, 1], [], []>} : vector<8x32xf32>, vector<32x60xf32>, vector<8x60xf32> -> vector<8x60xf32>
    %171 = arith.addf %167, %170 : vector<8x60xf32>
    %172 = vector.extract_strided_slice %162 {offsets = [16, 0], sizes = [8, 32], strides = [1, 1]} : vector<224x32xf32> to vector<8x32xf32>
    %c64_133 = arith.constant 64 : index
    %c0_134 = arith.constant 0 : index
    %173 = vector.load %arg8[%c64_133, %c0_134] : memref<896x60xf32, #tpu.memory_space<vmem>>, vector<32x60xf32>
    %cst_135 = arith.constant dense<0.000000e+00> : vector<8x60xf32>
    %174 = tpu.matmul %172, %173, %cst_135 {dimension_numbers = #tpu.dot_dimension_numbers<[1], [0], [0], [1], [0, 0, 1, 1], [], []>} : vector<8x32xf32>, vector<32x60xf32>, vector<8x60xf32> -> vector<8x60xf32>
    %175 = arith.addf %171, %174 : vector<8x60xf32>
    %176 = vector.extract_strided_slice %162 {offsets = [24, 0], sizes = [8, 32], strides = [1, 1]} : vector<224x32xf32> to vector<8x32xf32>
    %c96_136 = arith.constant 96 : index
    %c0_137 = arith.constant 0 : index
    %177 = vector.load %arg8[%c96_136, %c0_137] : memref<896x60xf32, #tpu.memory_space<vmem>>, vector<32x60xf32>
    %cst_138 = arith.constant dense<0.000000e+00> : vector<8x60xf32>
    %178 = tpu.matmul %176, %177, %cst_138 {dimension_numbers = #tpu.dot_dimension_numbers<[1], [0], [0], [1], [0, 0, 1, 1], [], []>} : vector<8x32xf32>, vector<32x60xf32>, vector<8x60xf32> -> vector<8x60xf32>
    %179 = arith.addf %175, %178 : vector<8x60xf32>
    %180 = vector.extract_strided_slice %162 {offsets = [32, 0], sizes = [8, 32], strides = [1, 1]} : vector<224x32xf32> to vector<8x32xf32>
    %c128_139 = arith.constant 128 : index
    %c0_140 = arith.constant 0 : index
    %181 = vector.load %arg8[%c128_139, %c0_140] : memref<896x60xf32, #tpu.memory_space<vmem>>, vector<32x60xf32>
    %cst_141 = arith.constant dense<0.000000e+00> : vector<8x60xf32>
    %182 = tpu.matmul %180, %181, %cst_141 {dimension_numbers = #tpu.dot_dimension_numbers<[1], [0], [0], [1], [0, 0, 1, 1], [], []>} : vector<8x32xf32>, vector<32x60xf32>, vector<8x60xf32> -> vector<8x60xf32>
    %183 = arith.addf %179, %182 : vector<8x60xf32>
    %184 = vector.extract_strided_slice %162 {offsets = [40, 0], sizes = [8, 32], strides = [1, 1]} : vector<224x32xf32> to vector<8x32xf32>
    %c160_142 = arith.constant 160 : index
    %c0_143 = arith.constant 0 : index
    %185 = vector.load %arg8[%c160_142, %c0_143] : memref<896x60xf32, #tpu.memory_space<vmem>>, vector<32x60xf32>
    %cst_144 = arith.constant dense<0.000000e+00> : vector<8x60xf32>
    %186 = tpu.matmul %184, %185, %cst_144 {dimension_numbers = #tpu.dot_dimension_numbers<[1], [0], [0], [1], [0, 0, 1, 1], [], []>} : vector<8x32xf32>, vector<32x60xf32>, vector<8x60xf32> -> vector<8x60xf32>
    %187 = arith.addf %183, %186 : vector<8x60xf32>
    %188 = vector.extract_strided_slice %162 {offsets = [48, 0], sizes = [8, 32], strides = [1, 1]} : vector<224x32xf32> to vector<8x32xf32>
    %c192_145 = arith.constant 192 : index
    %c0_146 = arith.constant 0 : index
    %189 = vector.load %arg8[%c192_145, %c0_146] : memref<896x60xf32, #tpu.memory_space<vmem>>, vector<32x60xf32>
    %cst_147 = arith.constant dense<0.000000e+00> : vector<8x60xf32>
    %190 = tpu.matmul %188, %189, %cst_147 {dimension_numbers = #tpu.dot_dimension_numbers<[1], [0], [0], [1], [0, 0, 1, 1], [], []>} : vector<8x32xf32>, vector<32x60xf32>, vector<8x60xf32> -> vector<8x60xf32>
    %191 = arith.addf %187, %190 : vector<8x60xf32>
    %192 = vector.extract_strided_slice %162 {offsets = [56, 0], sizes = [8, 32], strides = [1, 1]} : vector<224x32xf32> to vector<8x32xf32>
    %c224_148 = arith.constant 224 : index
    %c0_149 = arith.constant 0 : index
    %193 = vector.load %arg8[%c224_148, %c0_149] : memref<896x60xf32, #tpu.memory_space<vmem>>, vector<32x60xf32>
    %cst_150 = arith.constant dense<0.000000e+00> : vector<8x60xf32>
    %194 = tpu.matmul %192, %193, %cst_150 {dimension_numbers = #tpu.dot_dimension_numbers<[1], [0], [0], [1], [0, 0, 1, 1], [], []>} : vector<8x32xf32>, vector<32x60xf32>, vector<8x60xf32> -> vector<8x60xf32>
    %195 = arith.addf %191, %194 : vector<8x60xf32>
    %196 = vector.extract_strided_slice %162 {offsets = [64, 0], sizes = [8, 32], strides = [1, 1]} : vector<224x32xf32> to vector<8x32xf32>
    %c256_151 = arith.constant 256 : index
    %c0_152 = arith.constant 0 : index
    %197 = vector.load %arg8[%c256_151, %c0_152] : memref<896x60xf32, #tpu.memory_space<vmem>>, vector<32x60xf32>
    %cst_153 = arith.constant dense<0.000000e+00> : vector<8x60xf32>
    %198 = tpu.matmul %196, %197, %cst_153 {dimension_numbers = #tpu.dot_dimension_numbers<[1], [0], [0], [1], [0, 0, 1, 1], [], []>} : vector<8x32xf32>, vector<32x60xf32>, vector<8x60xf32> -> vector<8x60xf32>
    %199 = arith.addf %195, %198 : vector<8x60xf32>
    %200 = vector.extract_strided_slice %162 {offsets = [72, 0], sizes = [8, 32], strides = [1, 1]} : vector<224x32xf32> to vector<8x32xf32>
    %c288 = arith.constant 288 : index
    %c0_154 = arith.constant 0 : index
    %201 = vector.load %arg8[%c288, %c0_154] : memref<896x60xf32, #tpu.memory_space<vmem>>, vector<32x60xf32>
    %cst_155 = arith.constant dense<0.000000e+00> : vector<8x60xf32>
    %202 = tpu.matmul %200, %201, %cst_155 {dimension_numbers = #tpu.dot_dimension_numbers<[1], [0], [0], [1], [0, 0, 1, 1], [], []>} : vector<8x32xf32>, vector<32x60xf32>, vector<8x60xf32> -> vector<8x60xf32>
    %203 = arith.addf %199, %202 : vector<8x60xf32>
    %204 = vector.extract_strided_slice %162 {offsets = [80, 0], sizes = [8, 32], strides = [1, 1]} : vector<224x32xf32> to vector<8x32xf32>
    %c320 = arith.constant 320 : index
    %c0_156 = arith.constant 0 : index
    %205 = vector.load %arg8[%c320, %c0_156] : memref<896x60xf32, #tpu.memory_space<vmem>>, vector<32x60xf32>
    %cst_157 = arith.constant dense<0.000000e+00> : vector<8x60xf32>
    %206 = tpu.matmul %204, %205, %cst_157 {dimension_numbers = #tpu.dot_dimension_numbers<[1], [0], [0], [1], [0, 0, 1, 1], [], []>} : vector<8x32xf32>, vector<32x60xf32>, vector<8x60xf32> -> vector<8x60xf32>
    %207 = arith.addf %203, %206 : vector<8x60xf32>
    %208 = vector.extract_strided_slice %162 {offsets = [88, 0], sizes = [8, 32], strides = [1, 1]} : vector<224x32xf32> to vector<8x32xf32>
    %c352 = arith.constant 352 : index
    %c0_158 = arith.constant 0 : index
    %209 = vector.load %arg8[%c352, %c0_158] : memref<896x60xf32, #tpu.memory_space<vmem>>, vector<32x60xf32>
    %cst_159 = arith.constant dense<0.000000e+00> : vector<8x60xf32>
    %210 = tpu.matmul %208, %209, %cst_159 {dimension_numbers = #tpu.dot_dimension_numbers<[1], [0], [0], [1], [0, 0, 1, 1], [], []>} : vector<8x32xf32>, vector<32x60xf32>, vector<8x60xf32> -> vector<8x60xf32>
    %211 = arith.addf %207, %210 : vector<8x60xf32>
    %212 = vector.extract_strided_slice %162 {offsets = [96, 0], sizes = [8, 32], strides = [1, 1]} : vector<224x32xf32> to vector<8x32xf32>
    %c384 = arith.constant 384 : index
    %c0_160 = arith.constant 0 : index
    %213 = vector.load %arg8[%c384, %c0_160] : memref<896x60xf32, #tpu.memory_space<vmem>>, vector<32x60xf32>
    %cst_161 = arith.constant dense<0.000000e+00> : vector<8x60xf32>
    %214 = tpu.matmul %212, %213, %cst_161 {dimension_numbers = #tpu.dot_dimension_numbers<[1], [0], [0], [1], [0, 0, 1, 1], [], []>} : vector<8x32xf32>, vector<32x60xf32>, vector<8x60xf32> -> vector<8x60xf32>
    %215 = arith.addf %211, %214 : vector<8x60xf32>
    %216 = vector.extract_strided_slice %162 {offsets = [104, 0], sizes = [8, 32], strides = [1, 1]} : vector<224x32xf32> to vector<8x32xf32>
    %c416 = arith.constant 416 : index
    %c0_162 = arith.constant 0 : index
    %217 = vector.load %arg8[%c416, %c0_162] : memref<896x60xf32, #tpu.memory_space<vmem>>, vector<32x60xf32>
    %cst_163 = arith.constant dense<0.000000e+00> : vector<8x60xf32>
    %218 = tpu.matmul %216, %217, %cst_163 {dimension_numbers = #tpu.dot_dimension_numbers<[1], [0], [0], [1], [0, 0, 1, 1], [], []>} : vector<8x32xf32>, vector<32x60xf32>, vector<8x60xf32> -> vector<8x60xf32>
    %219 = arith.addf %215, %218 : vector<8x60xf32>
    %220 = vector.extract_strided_slice %162 {offsets = [112, 0], sizes = [8, 32], strides = [1, 1]} : vector<224x32xf32> to vector<8x32xf32>
    %c448 = arith.constant 448 : index
    %c0_164 = arith.constant 0 : index
    %221 = vector.load %arg8[%c448, %c0_164] : memref<896x60xf32, #tpu.memory_space<vmem>>, vector<32x60xf32>
    %cst_165 = arith.constant dense<0.000000e+00> : vector<8x60xf32>
    %222 = tpu.matmul %220, %221, %cst_165 {dimension_numbers = #tpu.dot_dimension_numbers<[1], [0], [0], [1], [0, 0, 1, 1], [], []>} : vector<8x32xf32>, vector<32x60xf32>, vector<8x60xf32> -> vector<8x60xf32>
    %223 = arith.addf %219, %222 : vector<8x60xf32>
    %224 = vector.extract_strided_slice %162 {offsets = [120, 0], sizes = [8, 32], strides = [1, 1]} : vector<224x32xf32> to vector<8x32xf32>
    %c480_166 = arith.constant 480 : index
    %c0_167 = arith.constant 0 : index
    %225 = vector.load %arg8[%c480_166, %c0_167] : memref<896x60xf32, #tpu.memory_space<vmem>>, vector<32x60xf32>
    %cst_168 = arith.constant dense<0.000000e+00> : vector<8x60xf32>
    %226 = tpu.matmul %224, %225, %cst_168 {dimension_numbers = #tpu.dot_dimension_numbers<[1], [0], [0], [1], [0, 0, 1, 1], [], []>} : vector<8x32xf32>, vector<32x60xf32>, vector<8x60xf32> -> vector<8x60xf32>
    %227 = arith.addf %223, %226 : vector<8x60xf32>
    %228 = vector.extract_strided_slice %162 {offsets = [128, 0], sizes = [8, 32], strides = [1, 1]} : vector<224x32xf32> to vector<8x32xf32>
    %c512 = arith.constant 512 : index
    %c0_169 = arith.constant 0 : index
    %229 = vector.load %arg8[%c512, %c0_169] : memref<896x60xf32, #tpu.memory_space<vmem>>, vector<32x60xf32>
    %cst_170 = arith.constant dense<0.000000e+00> : vector<8x60xf32>
    %230 = tpu.matmul %228, %229, %cst_170 {dimension_numbers = #tpu.dot_dimension_numbers<[1], [0], [0], [1], [0, 0, 1, 1], [], []>} : vector<8x32xf32>, vector<32x60xf32>, vector<8x60xf32> -> vector<8x60xf32>
    %231 = arith.addf %227, %230 : vector<8x60xf32>
    %232 = vector.extract_strided_slice %162 {offsets = [136, 0], sizes = [8, 32], strides = [1, 1]} : vector<224x32xf32> to vector<8x32xf32>
    %c544 = arith.constant 544 : index
    %c0_171 = arith.constant 0 : index
    %233 = vector.load %arg8[%c544, %c0_171] : memref<896x60xf32, #tpu.memory_space<vmem>>, vector<32x60xf32>
    %cst_172 = arith.constant dense<0.000000e+00> : vector<8x60xf32>
    %234 = tpu.matmul %232, %233, %cst_172 {dimension_numbers = #tpu.dot_dimension_numbers<[1], [0], [0], [1], [0, 0, 1, 1], [], []>} : vector<8x32xf32>, vector<32x60xf32>, vector<8x60xf32> -> vector<8x60xf32>
    %235 = arith.addf %231, %234 : vector<8x60xf32>
    %236 = vector.extract_strided_slice %162 {offsets = [144, 0], sizes = [8, 32], strides = [1, 1]} : vector<224x32xf32> to vector<8x32xf32>
    %c576 = arith.constant 576 : index
    %c0_173 = arith.constant 0 : index
    %237 = vector.load %arg8[%c576, %c0_173] : memref<896x60xf32, #tpu.memory_space<vmem>>, vector<32x60xf32>
    %cst_174 = arith.constant dense<0.000000e+00> : vector<8x60xf32>
    %238 = tpu.matmul %236, %237, %cst_174 {dimension_numbers = #tpu.dot_dimension_numbers<[1], [0], [0], [1], [0, 0, 1, 1], [], []>} : vector<8x32xf32>, vector<32x60xf32>, vector<8x60xf32> -> vector<8x60xf32>
    %239 = arith.addf %235, %238 : vector<8x60xf32>
    %240 = vector.extract_strided_slice %162 {offsets = [152, 0], sizes = [8, 32], strides = [1, 1]} : vector<224x32xf32> to vector<8x32xf32>
    %c608 = arith.constant 608 : index
    %c0_175 = arith.constant 0 : index
    %241 = vector.load %arg8[%c608, %c0_175] : memref<896x60xf32, #tpu.memory_space<vmem>>, vector<32x60xf32>
    %cst_176 = arith.constant dense<0.000000e+00> : vector<8x60xf32>
    %242 = tpu.matmul %240, %241, %cst_176 {dimension_numbers = #tpu.dot_dimension_numbers<[1], [0], [0], [1], [0, 0, 1, 1], [], []>} : vector<8x32xf32>, vector<32x60xf32>, vector<8x60xf32> -> vector<8x60xf32>
    %243 = arith.addf %239, %242 : vector<8x60xf32>
    %244 = vector.extract_strided_slice %162 {offsets = [160, 0], sizes = [8, 32], strides = [1, 1]} : vector<224x32xf32> to vector<8x32xf32>
    %c640 = arith.constant 640 : index
    %c0_177 = arith.constant 0 : index
    %245 = vector.load %arg8[%c640, %c0_177] : memref<896x60xf32, #tpu.memory_space<vmem>>, vector<32x60xf32>
    %cst_178 = arith.constant dense<0.000000e+00> : vector<8x60xf32>
    %246 = tpu.matmul %244, %245, %cst_178 {dimension_numbers = #tpu.dot_dimension_numbers<[1], [0], [0], [1], [0, 0, 1, 1], [], []>} : vector<8x32xf32>, vector<32x60xf32>, vector<8x60xf32> -> vector<8x60xf32>
    %247 = arith.addf %243, %246 : vector<8x60xf32>
    %248 = vector.extract_strided_slice %162 {offsets = [168, 0], sizes = [8, 32], strides = [1, 1]} : vector<224x32xf32> to vector<8x32xf32>
    %c672 = arith.constant 672 : index
    %c0_179 = arith.constant 0 : index
    %249 = vector.load %arg8[%c672, %c0_179] : memref<896x60xf32, #tpu.memory_space<vmem>>, vector<32x60xf32>
    %cst_180 = arith.constant dense<0.000000e+00> : vector<8x60xf32>
    %250 = tpu.matmul %248, %249, %cst_180 {dimension_numbers = #tpu.dot_dimension_numbers<[1], [0], [0], [1], [0, 0, 1, 1], [], []>} : vector<8x32xf32>, vector<32x60xf32>, vector<8x60xf32> -> vector<8x60xf32>
    %251 = arith.addf %247, %250 : vector<8x60xf32>
    %252 = vector.extract_strided_slice %162 {offsets = [176, 0], sizes = [8, 32], strides = [1, 1]} : vector<224x32xf32> to vector<8x32xf32>
    %c704 = arith.constant 704 : index
    %c0_181 = arith.constant 0 : index
    %253 = vector.load %arg8[%c704, %c0_181] : memref<896x60xf32, #tpu.memory_space<vmem>>, vector<32x60xf32>
    %cst_182 = arith.constant dense<0.000000e+00> : vector<8x60xf32>
    %254 = tpu.matmul %252, %253, %cst_182 {dimension_numbers = #tpu.dot_dimension_numbers<[1], [0], [0], [1], [0, 0, 1, 1], [], []>} : vector<8x32xf32>, vector<32x60xf32>, vector<8x60xf32> -> vector<8x60xf32>
    %255 = arith.addf %251, %254 : vector<8x60xf32>
    %256 = vector.extract_strided_slice %162 {offsets = [184, 0], sizes = [8, 32], strides = [1, 1]} : vector<224x32xf32> to vector<8x32xf32>
    %c736 = arith.constant 736 : index
    %c0_183 = arith.constant 0 : index
    %257 = vector.load %arg8[%c736, %c0_183] : memref<896x60xf32, #tpu.memory_space<vmem>>, vector<32x60xf32>
    %cst_184 = arith.constant dense<0.000000e+00> : vector<8x60xf32>
    %258 = tpu.matmul %256, %257, %cst_184 {dimension_numbers = #tpu.dot_dimension_numbers<[1], [0], [0], [1], [0, 0, 1, 1], [], []>} : vector<8x32xf32>, vector<32x60xf32>, vector<8x60xf32> -> vector<8x60xf32>
    %259 = arith.addf %255, %258 : vector<8x60xf32>
    %260 = vector.extract_strided_slice %162 {offsets = [192, 0], sizes = [8, 32], strides = [1, 1]} : vector<224x32xf32> to vector<8x32xf32>
    %c768 = arith.constant 768 : index
    %c0_185 = arith.constant 0 : index
    %261 = vector.load %arg8[%c768, %c0_185] : memref<896x60xf32, #tpu.memory_space<vmem>>, vector<32x60xf32>
    %cst_186 = arith.constant dense<0.000000e+00> : vector<8x60xf32>
    %262 = tpu.matmul %260, %261, %cst_186 {dimension_numbers = #tpu.dot_dimension_numbers<[1], [0], [0], [1], [0, 0, 1, 1], [], []>} : vector<8x32xf32>, vector<32x60xf32>, vector<8x60xf32> -> vector<8x60xf32>
    %263 = arith.addf %259, %262 : vector<8x60xf32>
    %264 = vector.extract_strided_slice %162 {offsets = [200, 0], sizes = [8, 32], strides = [1, 1]} : vector<224x32xf32> to vector<8x32xf32>
    %c800 = arith.constant 800 : index
    %c0_187 = arith.constant 0 : index
    %265 = vector.load %arg8[%c800, %c0_187] : memref<896x60xf32, #tpu.memory_space<vmem>>, vector<32x60xf32>
    %cst_188 = arith.constant dense<0.000000e+00> : vector<8x60xf32>
    %266 = tpu.matmul %264, %265, %cst_188 {dimension_numbers = #tpu.dot_dimension_numbers<[1], [0], [0], [1], [0, 0, 1, 1], [], []>} : vector<8x32xf32>, vector<32x60xf32>, vector<8x60xf32> -> vector<8x60xf32>
    %267 = arith.addf %263, %266 : vector<8x60xf32>
    %268 = vector.extract_strided_slice %162 {offsets = [208, 0], sizes = [8, 32], strides = [1, 1]} : vector<224x32xf32> to vector<8x32xf32>
    %c832 = arith.constant 832 : index
    %c0_189 = arith.constant 0 : index
    %269 = vector.load %arg8[%c832, %c0_189] : memref<896x60xf32, #tpu.memory_space<vmem>>, vector<32x60xf32>
    %cst_190 = arith.constant dense<0.000000e+00> : vector<8x60xf32>
    %270 = tpu.matmul %268, %269, %cst_190 {dimension_numbers = #tpu.dot_dimension_numbers<[1], [0], [0], [1], [0, 0, 1, 1], [], []>} : vector<8x32xf32>, vector<32x60xf32>, vector<8x60xf32> -> vector<8x60xf32>
    %271 = arith.addf %267, %270 : vector<8x60xf32>
    %272 = vector.extract_strided_slice %162 {offsets = [216, 0], sizes = [8, 32], strides = [1, 1]} : vector<224x32xf32> to vector<8x32xf32>
    %c864 = arith.constant 864 : index
    %c0_191 = arith.constant 0 : index
    %273 = vector.load %arg8[%c864, %c0_191] : memref<896x60xf32, #tpu.memory_space<vmem>>, vector<32x60xf32>
    %cst_192 = arith.constant dense<0.000000e+00> : vector<8x60xf32>
    %274 = tpu.matmul %272, %273, %cst_192 {dimension_numbers = #tpu.dot_dimension_numbers<[1], [0], [0], [1], [0, 0, 1, 1], [], []>} : vector<8x32xf32>, vector<32x60xf32>, vector<8x60xf32> -> vector<8x60xf32>
    %275 = arith.addf %271, %274 : vector<8x60xf32>
    %c0_193 = arith.constant 0 : index
    %c0_194 = arith.constant 0 : index
    %276 = vector.load %arg9[%c0_193, %c0_194] : memref<1x60xf32, #tpu.memory_space<vmem>>, vector<1x60xf32>
    %277 = vector.broadcast %276 : vector<1x60xf32> to vector<8x60xf32>
    %278 = arith.addf %275, %277 : vector<8x60xf32>
    %c0_195 = arith.constant 0 : index
    %c0_196 = arith.constant 0 : index
    %279 = vector.load %arg10[%c0_195, %c0_196] : memref<60x3xf32, #tpu.memory_space<vmem>>, vector<60x3xf32>
    %cst_197 = arith.constant dense<0.000000e+00> : vector<8x3xf32>
    %280 = tpu.matmul %278, %279, %cst_197 {dimension_numbers = #tpu.dot_dimension_numbers<[1], [0], [0], [1], [0, 0, 1, 1], [], []>} : vector<8x60xf32>, vector<60x3xf32>, vector<8x3xf32> -> vector<8x3xf32>
    %c0_198 = arith.constant 0 : index
    %c0_199 = arith.constant 0 : index
    %281 = vector.load %arg11[%c0_198, %c0_199] : memref<1x3xf32, #tpu.memory_space<vmem>>, vector<1x3xf32>
    %282 = vector.broadcast %281 : vector<1x3xf32> to vector<8x3xf32>
    %283 = arith.addf %280, %282 : vector<8x3xf32>
    %c0_200 = arith.constant 0 : index
    %c0_201 = arith.constant 0 : index
    %284 = vector.load %arg12[%c0_200, %c0_201] : memref<8x3xf32, #tpu.memory_space<vmem>>, vector<8x3xf32>
    tpu.vector_store %arg12[%c0_200, %c0_201], %283 {strides = array<i32>} : memref<8x3xf32, #tpu.memory_space<vmem>>, vector<8x3xf32>,
    return
  }
  func.func @transform_0(%arg0: i32) -> (i32, i32) {
    %c0_i32 = arith.constant 0 : i32
    %c0_i32_0 = arith.constant 0 : i32
    return %arg0, %c0_i32 : i32, i32
  }
  func.func @transform_1(%arg0: i32) -> (i32, i32) {
    %c0_i32 = arith.constant 0 : i32
    %c0_i32_0 = arith.constant 0 : i32
    %c0_i32_1 = arith.constant 0 : i32
    return %c0_i32, %c0_i32_0 : i32, i32
  }
  func.func @transform_2(%arg0: i32) -> (i32, i32) {
    %c0_i32 = arith.constant 0 : i32
    %c0_i32_0 = arith.constant 0 : i32
    %c0_i32_1 = arith.constant 0 : i32
    return %c0_i32, %c0_i32_0 : i32, i32
  }
  func.func @transform_3(%arg0: i32) -> (i32, i32) {
    %c0_i32 = arith.constant 0 : i32
    %c0_i32_0 = arith.constant 0 : i32
    %c0_i32_1 = arith.constant 0 : i32
    return %c0_i32, %c0_i32_0 : i32, i32
  }
  func.func @transform_4(%arg0: i32) -> (i32, i32) {
    %c0_i32 = arith.constant 0 : i32
    %c0_i32_0 = arith.constant 0 : i32
    %c0_i32_1 = arith.constant 0 : i32
    return %c0_i32, %c0_i32_0 : i32, i32
  }
  func.func @transform_5(%arg0: i32) -> (i32, i32) {
    %c0_i32 = arith.constant 0 : i32
    %c0_i32_0 = arith.constant 0 : i32
    %c0_i32_1 = arith.constant 0 : i32
    return %c0_i32, %c0_i32_0 : i32, i32
  }
  func.func @transform_6(%arg0: i32) -> (i32, i32) {
    %c0_i32 = arith.constant 0 : i32
    %c0_i32_0 = arith.constant 0 : i32
    %c0_i32_1 = arith.constant 0 : i32
    return %c0_i32, %c0_i32_0 : i32, i32
  }
  func.func @transform_7(%arg0: i32) -> (i32, i32) {
    %c0_i32 = arith.constant 0 : i32
    %c0_i32_0 = arith.constant 0 : i32
    %c0_i32_1 = arith.constant 0 : i32
    return %c0_i32, %c0_i32_0 : i32, i32
  }
  func.func @transform_8(%arg0: i32) -> (i32, i32) {
    %c0_i32 = arith.constant 0 : i32
    %c0_i32_0 = arith.constant 0 : i32
    %c0_i32_1 = arith.constant 0 : i32
    return %c0_i32, %c0_i32_0 : i32, i32
  }
  func.func @transform_9(%arg0: i32) -> (i32, i32) {
    %c0_i32 = arith.constant 0 : i32
    %c0_i32_0 = arith.constant 0 : i32
    %c0_i32_1 = arith.constant 0 : i32
    return %c0_i32, %c0_i32_0 : i32, i32
  }
  func.func @transform_10(%arg0: i32) -> (i32, i32) {
    %c0_i32 = arith.constant 0 : i32
    %c0_i32_0 = arith.constant 0 : i32
    %c0_i32_1 = arith.constant 0 : i32
    return %c0_i32, %c0_i32_0 : i32, i32
  }
  func.func @transform_11(%arg0: i32) -> (i32, i32) {
    %c0_i32 = arith.constant 0 : i32
    %c0_i32_0 = arith.constant 0 : i32
    return %arg0, %c0_i32 : i32, i32
  }
}

</mosaic_0001>

<llo_original>
// kernel: cnn1d_forward.1
$region0: #{cnn1d_forward.1}
  #allocation0 [shape = 'u32[]', space=smem, size = 0x4, offset = 0x4, fixed_abs, tag = 'smem constant byte address 0x4 - core index']
  #allocation1 [shape = 'u32[144,128]{1,0:T(1,128)}', space=vmem, size = 0x12000, scoped, tag = 'internal scratch']
  #allocation2 [shape = 'f32[960,32]{1,0:T(8,128)}', space=vmem, size = 0x78000, scoped, tag = 'scratch operand']
  %s0 = inlined_call_operand.vmem [shape: f32[3840,16], index: 0, kind: input, shape index: {}]
  %s1 = inlined_call_operand.vmem [shape: f32[16,32], index: 1, kind: input, shape index: {}]
  %s2 = inlined_call_operand.vmem [shape: f32[1,32], index: 2, kind: input, shape index: {}]
  %s3 = inlined_call_operand.vmem [shape: f32[1,32], index: 3, kind: input, shape index: {}]
  %s4 = inlined_call_operand.vmem [shape: f32[256,32], index: 4, kind: input, shape index: {}]
  %s5 = inlined_call_operand.vmem [shape: f32[1,32], index: 5, kind: input, shape index: {}]
  %s6 = inlined_call_operand.vmem [shape: f32[1,32], index: 6, kind: input, shape index: {}]
  %s7 = inlined_call_operand.vmem [shape: f32[896,60], index: 7, kind: input, shape index: {}]
  %s8 = inlined_call_operand.vmem [shape: f32[1,60], index: 8, kind: input, shape index: {}]
  %s9 = inlined_call_operand.vmem [shape: f32[60,3], index: 9, kind: input, shape index: {}]
  %s10 = inlined_call_operand.vmem [shape: f32[1,3], index: 10, kind: input, shape index: {}]
  %s11 = inlined_call_operand.vmem [shape: f32[16,3], index: 11, kind: output, shape index: {}]
  %s12 = sld [smem:[#allocation0]]
  $region77: #{cnn1d_forward.1} parent=0
    _
  %s14 = ssub.s32 1, %s12
  %s15 = scalar_select 0, %s14, %s12
  loop: start=0, step=1, limit=4
  $region2: #{cnn1d_forward.1} parent=0 // loop_pre_header
    _
  $region3: #{cnn1d_forward.1} parent=0 // loop_header
    %s17 = sphi 0, %s21
    %p18 = scmp.ge.s32.totalorder %s17, 4
    %s27 = sphi 0, %s29
    %s30 = sphi 0, %s27
    %s31 = sphi 0, %s30
    %s47 = sphi 0, %s31
    %s51 = sphi 0, %s51
    %s53 = sphi 0, %s51
    %s54 = sphi 0, %s53
    %s68 = sphi 0, %s54
    %s72 = sphi 0, %s72
    %s74 = sphi 0, %s72
    %s75 = sphi 0, %s74
    %s89 = sphi 0, %s75
    %s93 = sphi 0, %s93
    %s95 = sphi 0, %s93
    %s96 = sphi 0, %s95
    %s110 = sphi 0, %s96
    %s114 = sphi 0, %s114
    %s116 = sphi 0, %s114
    %s117 = sphi 0, %s116
    %s131 = sphi 0, %s117
    %s135 = sphi 0, %s135
    %s137 = sphi 0, %s135
    %s138 = sphi 0, %s137
    %s152 = sphi 0, %s138
    %s156 = sphi 0, %s156
    %s158 = sphi 0, %s156
    %s159 = sphi 0, %s158
    %s173 = sphi 0, %s159
    %s177 = sphi 0, %s177
    %s179 = sphi 0, %s177
    %s180 = sphi 0, %s179
    %s194 = sphi 0, %s180
    %s198 = sphi 0, %s198
    %s200 = sphi 0, %s198
    %s201 = sphi 0, %s200
    %s215 = sphi 0, %s201
    %s219 = sphi 0, %s219
    %s221 = sphi 0, %s219
    %s222 = sphi 0, %s221
    %s236 = sphi 0, %s222
    %s240 = sphi 0, %s240
    %s242 = sphi 0, %s240
    %s243 = sphi 0, %s242
    %s257 = sphi 0, %s243
    %s263 = sphi 0, %s265
    %s266 = sphi 0, %s263
    %s267 = sphi 0, %s266
    %s283 = sphi 0, %s267
  $region4: #{cnn1d_forward.1} parent=0 // loop_header_branch
    %20 = sbr.rel (%p18) target = $region8
  $region5: #{cnn1d_forward.1} parent=0 // loop_body
    %s22 = ssub.s32 %s17, 1
    %s23 = ssub.s32 %s17, 2
    %s24 = sadd.s32 %s17, 1
    %s25 = ssub.s32 %s17, %s24
    %p26 = scmp.eq.s32.totalorder %s25, 0
    %s28 = sadd.s32 %s27, 1
    %s29 = scalar_select %p26, %s27, %s28
    %p32 = pneg %p26
    %p33 = scmp.eq.s32.totalorder %s17, 1
    %p34 = por %p32, %p33
    %p35 = scmp.ne.s32.totalorder %s27, %s30
    %p36 = scmp.eq.s32.totalorder %s17, 0
    %p37 = por %p35, %p36
    %p38 = scmp.ne.s32.totalorder %s27, %s30
    %p39 = scmp.eq.s32.totalorder %s22, 1
    %p40 = por %p38, %p39
    %p41 = scmp.ne.s32.totalorder %s30, %s31
    %p42 = scmp.eq.s32.totalorder %s22, 0
    %p43 = por %p41, %p42
    %p44 = scmp.ne.s32.totalorder %s30, %s31
    %p45 = scmp.eq.s32.totalorder %s23, 1
    %p46 = por %p44, %p45
    %p48 = scmp.ne.s32.totalorder %s31, %s47
    %p49 = scmp.eq.s32.totalorder %s23, 0
    %p50 = por %p48, %p49
    %s52 = sadd.s32 %s51, 1
    %p55 = scmp.eq.s32.totalorder %s17, 1
    %p56 = scmp.ne.s32.totalorder %s51, %s53
    %p57 = scmp.eq.s32.totalorder %s17, 0
    %p58 = por %p56, %p57
    %p59 = scmp.ne.s32.totalorder %s51, %s53
    %p60 = scmp.eq.s32.totalorder %s22, 1
    %p61 = por %p59, %p60
    %p62 = scmp.ne.s32.totalorder %s53, %s54
    %p63 = scmp.eq.s32.totalorder %s22, 0
    %p64 = por %p62, %p63
    %p65 = scmp.ne.s32.totalorder %s53, %s54
    %p66 = scmp.eq.s32.totalorder %s23, 1
    %p67 = por %p65, %p66
    %p69 = scmp.ne.s32.totalorder %s54, %s68
    %p70 = scmp.eq.s32.totalorder %s23, 0
    %p71 = por %p69, %p70
    %s73 = sadd.s32 %s72, 1
    %p76 = scmp.eq.s32.totalorder %s17, 1
    %p77 = scmp.ne.s32.totalorder %s72, %s74
    %p78 = scmp.eq.s32.totalorder %s17, 0
    %p79 = por %p77, %p78
    %p80 = scmp.ne.s32.totalorder %s72, %s74
    %p81 = scmp.eq.s32.totalorder %s22, 1
    %p82 = por %p80, %p81
    %p83 = scmp.ne.s32.totalorder %s74, %s75
    %p84 = scmp.eq.s32.totalorder %s22, 0
    %p85 = por %p83, %p84
    %p86 = scmp.ne.s32.totalorder %s74, %s75
    %p87 = scmp.eq.s32.totalorder %s23, 1
    %p88 = por %p86, %p87
    %p90 = scmp.ne.s32.totalorder %s75, %s89
    %p91 = scmp.eq.s32.totalorder %s23, 0
    %p92 = por %p90, %p91
    %s94 = sadd.s32 %s93, 1
    %p97 = scmp.eq.s32.totalorder %s17, 1
    %p98 = scmp.ne.s32.totalorder %s93, %s95
    %p99 = scmp.eq.s32.totalorder %s17, 0
    %p100 = por %p98, %p99
    %p101 = scmp.ne.s32.totalorder %s93, %s95
    %p102 = scmp.eq.s32.totalorder %s22, 1
    %p103 = por %p101, %p102
    %p104 = scmp.ne.s32.totalorder %s95, %s96
    %p105 = scmp.eq.s32.totalorder %s22, 0
    %p106 = por %p104, %p105
    %p107 = scmp.ne.s32.totalorder %s95, %s96
    %p108 = scmp.eq.s32.totalorder %s23, 1
    %p109 = por %p107, %p108
    %p111 = scmp.ne.s32.totalorder %s96, %s110
    %p112 = scmp.eq.s32.totalorder %s23, 0
    %p113 = por %p111, %p112
    %s115 = sadd.s32 %s114, 1
    %p118 = scmp.eq.s32.totalorder %s17, 1
    %p119 = scmp.ne.s32.totalorder %s114, %s116
    %p120 = scmp.eq.s32.totalorder %s17, 0
    %p121 = por %p119, %p120
    %p122 = scmp.ne.s32.totalorder %s114, %s116
    %p123 = scmp.eq.s32.totalorder %s22, 1
    %p124 = por %p122, %p123
    %p125 = scmp.ne.s32.totalorder %s116, %s117
    %p126 = scmp.eq.s32.totalorder %s22, 0
    %p127 = por %p125, %p126
    %p128 = scmp.ne.s32.totalorder %s116, %s117
    %p129 = scmp.eq.s32.totalorder %s23, 1
    %p130 = por %p128, %p129
    %p132 = scmp.ne.s32.totalorder %s117, %s131
    %p133 = scmp.eq.s32.totalorder %s23, 0
    %p134 = por %p132, %p133
    %s136 = sadd.s32 %s135, 1
    %p139 = scmp.eq.s32.totalorder %s17, 1
    %p140 = scmp.ne.s32.totalorder %s135, %s137
    %p141 = scmp.eq.s32.totalorder %s17, 0
    %p142 = por %p140, %p141
    %p143 = scmp.ne.s32.totalorder %s135, %s137
    %p144 = scmp.eq.s32.totalorder %s22, 1
    %p145 = por %p143, %p144
    %p146 = scmp.ne.s32.totalorder %s137, %s138
    %p147 = scmp.eq.s32.totalorder %s22, 0
    %p148 = por %p146, %p147
    %p149 = scmp.ne.s32.totalorder %s137, %s138
    %p150 = scmp.eq.s32.totalorder %s23, 1
    %p151 = por %p149, %p150
    %p153 = scmp.ne.s32.totalorder %s138, %s152
    %p154 = scmp.eq.s32.totalorder %s23, 0
    %p155 = por %p153, %p154
    %s157 = sadd.s32 %s156, 1
    %p160 = scmp.eq.s32.totalorder %s17, 1
    %p161 = scmp.ne.s32.totalorder %s156, %s158
    %p162 = scmp.eq.s32.totalorder %s17, 0
    %p163 = por %p161, %p162
    %p164 = scmp.ne.s32.totalorder %s156, %s158
    %p165 = scmp.eq.s32.totalorder %s22, 1
    %p166 = por %p164, %p165
    %p167 = scmp.ne.s32.totalorder %s158, %s159
    %p168 = scmp.eq.s32.totalorder %s22, 0
    %p169 = por %p167, %p168
    %p170 = scmp.ne.s32.totalorder %s158, %s159
    %p171 = scmp.eq.s32.totalorder %s23, 1
    %p172 = por %p170, %p171
    %p174 = scmp.ne.s32.totalorder %s159, %s173
    %p175 = scmp.eq.s32.totalorder %s23, 0
    %p176 = por %p174, %p175
    %s178 = sadd.s32 %s177, 1
    %p181 = scmp.eq.s32.totalorder %s17, 1
    %p182 = scmp.ne.s32.totalorder %s177, %s179
    %p183 = scmp.eq.s32.totalorder %s17, 0
    %p184 = por %p182, %p183
    %p185 = scmp.ne.s32.totalorder %s177, %s179
    %p186 = scmp.eq.s32.totalorder %s22, 1
    %p187 = por %p185, %p186
    %p188 = scmp.ne.s32.totalorder %s179, %s180
    %p189 = scmp.eq.s32.totalorder %s22, 0
    %p190 = por %p188, %p189
    %p191 = scmp.ne.s32.totalorder %s179, %s180
    %p192 = scmp.eq.s32.totalorder %s23, 1
    %p193 = por %p191, %p192
    %p195 = scmp.ne.s32.totalorder %s180, %s194
    %p196 = scmp.eq.s32.totalorder %s23, 0
    %p197 = por %p195, %p196
    %s199 = sadd.s32 %s198, 1
    %p202 = scmp.eq.s32.totalorder %s17, 1
    %p203 = scmp.ne.s32.totalorder %s198, %s200
    %p204 = scmp.eq.s32.totalorder %s17, 0
    %p205 = por %p203, %p204
    %p206 = scmp.ne.s32.totalorder %s198, %s200
    %p207 = scmp.eq.s32.totalorder %s22, 1
    %p208 = por %p206, %p207
    %p209 = scmp.ne.s32.totalorder %s200, %s201
    %p210 = scmp.eq.s32.totalorder %s22, 0
    %p211 = por %p209, %p210
    %p212 = scmp.ne.s32.totalorder %s200, %s201
    %p213 = scmp.eq.s32.totalorder %s23, 1
    %p214 = por %p212, %p213
    %p216 = scmp.ne.s32.totalorder %s201, %s215
    %p217 = scmp.eq.s32.totalorder %s23, 0
    %p218 = por %p216, %p217
    %s220 = sadd.s32 %s219, 1
    %p223 = scmp.eq.s32.totalorder %s17, 1
    %p224 = scmp.ne.s32.totalorder %s219, %s221
    %p225 = scmp.eq.s32.totalorder %s17, 0
    %p226 = por %p224, %p225
    %p227 = scmp.ne.s32.totalorder %s219, %s221
    %p228 = scmp.eq.s32.totalorder %s22, 1
    %p229 = por %p227, %p228
    %p230 = scmp.ne.s32.totalorder %s221, %s222
    %p231 = scmp.eq.s32.totalorder %s22, 0
    %p232 = por %p230, %p231
    %p233 = scmp.ne.s32.totalorder %s221, %s222
    %p234 = scmp.eq.s32.totalorder %s23, 1
    %p235 = por %p233, %p234
    %p237 = scmp.ne.s32.totalorder %s222, %s236
    %p238 = scmp.eq.s32.totalorder %s23, 0
    %p239 = por %p237, %p238
    %s241 = sadd.s32 %s240, 1
    %p244 = scmp.eq.s32.totalorder %s17, 1
    %p245 = scmp.ne.s32.totalorder %s240, %s242
    %p246 = scmp.eq.s32.totalorder %s17, 0
    %p247 = por %p245, %p246
    %p248 = scmp.ne.s32.totalorder %s240, %s242
    %p249 = scmp.eq.s32.totalorder %s22, 1
    %p250 = por %p248, %p249
    %p251 = scmp.ne.s32.totalorder %s242, %s243
    %p252 = scmp.eq.s32.totalorder %s22, 0
    %p253 = por %p251, %p252
    %p254 = scmp.ne.s32.totalorder %s242, %s243
    %p255 = scmp.eq.s32.totalorder %s23, 1
    %p256 = por %p254, %p255
    %p258 = scmp.ne.s32.totalorder %s243, %s257
    %p259 = scmp.eq.s32.totalorder %s23, 0
    %p260 = por %p258, %p259
    %s261 = ssub.s32 %s17, %s24
    %p262 = scmp.eq.s32.totalorder %s261, 0
    %s264 = sadd.s32 %s263, 1
    %s265 = scalar_select %p262, %s263, %s264
    %p268 = pneg %p262
    %p269 = scmp.eq.s32.totalorder %s17, 1
    %p270 = por %p268, %p269
    %p271 = scmp.ne.s32.totalorder %s263, %s266
    %p272 = scmp.eq.s32.totalorder %s17, 0
    %p273 = por %p271, %p272
    %p274 = scmp.ne.s32.totalorder %s263, %s266
    %p275 = scmp.eq.s32.totalorder %s22, 1
    %p276 = por %p274, %p275
    %p277 = scmp.ne.s32.totalorder %s266, %s267
    %p278 = scmp.eq.s32.totalorder %s22, 0
    %p279 = por %p277, %p278
    %p280 = scmp.ne.s32.totalorder %s266, %s267
    %p281 = scmp.eq.s32.totalorder %s23, 1
    %p282 = por %p280, %p281
    %p284 = scmp.ne.s32.totalorder %s267, %s283
    %p285 = scmp.eq.s32.totalorder %s23, 0
    %p286 = por %p284, %p285
    %p287 = scmp.le.s32.totalorder 1, %s17
    %p288 = scmp.lt.s32.totalorder %s17, 3
    %p289 = pnand %p287, %p288
    %p290 = pneg %p289
    // Predicated region
    $region9: #{cnn1d_forward.1} parent=5 // pred_check
      _
    $region10: #{cnn1d_forward.1} parent=5 // pred_check_branch
      %292 = sbr.rel (%p289) target = $region12
    $region11: #{cnn1d_forward.1} parent=5 // pred_region
      %s293 = ssub.s32 %s17, 1
      // Predicated region
      $region13: #{cnn1d_forward.1} parent=11 // pred_check
        %p294 = pneg %p64
      $region14: #{cnn1d_forward.1} parent=11 // pred_check_branch
        %296 = sbr.rel (%p294) target = $region16
      $region15: #{cnn1d_forward.1} parent=11 // pred_region
        _
      $region16: #{cnn1d_forward.1} parent=11 // pred_fallthru
        _
      // Predicated region
      $region17: #{cnn1d_forward.1} parent=11 // pred_check
        %p297 = pneg %p85
      $region18: #{cnn1d_forward.1} parent=11 // pred_check_branch
        %299 = sbr.rel (%p297) target = $region20
      $region19: #{cnn1d_forward.1} parent=11 // pred_region
        _
      $region20: #{cnn1d_forward.1} parent=11 // pred_fallthru
        _
      // Predicated region
      $region21: #{cnn1d_forward.1} parent=11 // pred_check
        %p300 = pneg %p106
      $region22: #{cnn1d_forward.1} parent=11 // pred_check_branch
        %302 = sbr.rel (%p300) target = $region24
      $region23: #{cnn1d_forward.1} parent=11 // pred_region
        _
      $region24: #{cnn1d_forward.1} parent=11 // pred_fallthru
        _
      // Predicated region
      $region25: #{cnn1d_forward.1} parent=11 // pred_check
        %p303 = pneg %p127
      $region26: #{cnn1d_forward.1} parent=11 // pred_check_branch
        %305 = sbr.rel (%p303) target = $region28
      $region27: #{cnn1d_forward.1} parent=11 // pred_region
        _
      $region28: #{cnn1d_forward.1} parent=11 // pred_fallthru
        _
      // Predicated region
      $region29: #{cnn1d_forward.1} parent=11 // pred_check
        %p306 = pneg %p148
      $region30: #{cnn1d_forward.1} parent=11 // pred_check_branch
        %308 = sbr.rel (%p306) target = $region32
      $region31: #{cnn1d_forward.1} parent=11 // pred_region
        _
      $region32: #{cnn1d_forward.1} parent=11 // pred_fallthru
        _
      // Predicated region
      $region33: #{cnn1d_forward.1} parent=11 // pred_check
        %p309 = pneg %p169
      $region34: #{cnn1d_forward.1} parent=11 // pred_check_branch
        %311 = sbr.rel (%p309) target = $region36
      $region35: #{cnn1d_forward.1} parent=11 // pred_region
        _
      $region36: #{cnn1d_forward.1} parent=11 // pred_fallthru
        _
      // Predicated region
      $region37: #{cnn1d_forward.1} parent=11 // pred_check
        %p312 = pneg %p190
      $region38: #{cnn1d_forward.1} parent=11 // pred_check_branch
        %314 = sbr.rel (%p312) target = $region40
      $region39: #{cnn1d_forward.1} parent=11 // pred_region
        _
      $region40: #{cnn1d_forward.1} parent=11 // pred_fallthru
        _
      // Predicated region
      $region41: #{cnn1d_forward.1} parent=11 // pred_check
        %p315 = pneg %p211
      $region42: #{cnn1d_forward.1} parent=11 // pred_check_branch
        %317 = sbr.rel (%p315) target = $region44
      $region43: #{cnn1d_forward.1} parent=11 // pred_region
        _
      $region44: #{cnn1d_forward.1} parent=11 // pred_fallthru
        _
      // Predicated region
      $region45: #{cnn1d_forward.1} parent=11 // pred_check
        %p318 = pneg %p232
      $region46: #{cnn1d_forward.1} parent=11 // pred_check_branch
        %320 = sbr.rel (%p318) target = $region48
      $region47: #{cnn1d_forward.1} parent=11 // pred_region
        _
      $region48: #{cnn1d_forward.1} parent=11 // pred_fallthru
        _
      // Predicated region
      $region49: #{cnn1d_forward.1} parent=11 // pred_check
        %p321 = pneg %p253
      $region50: #{cnn1d_forward.1} parent=11 // pred_check_branch
        %323 = sbr.rel (%p321) target = $region52
      $region51: #{cnn1d_forward.1} parent=11 // pred_region
        _
      $region52: #{cnn1d_forward.1} parent=11 // pred_fallthru
        _
    $region12: #{cnn1d_forward.1} parent=5 // pred_fallthru
      _
    %p324 = scmp.lt.s32.totalorder %s17, 2
    // Predicated region
    $region53: #{cnn1d_forward.1} parent=5 // pred_check
      %p325 = pneg %p324
    $region54: #{cnn1d_forward.1} parent=5 // pred_check_branch
      %327 = sbr.rel (%p325) target = $region56
    $region55: #{cnn1d_forward.1} parent=5 // pred_region
      // Predicated region
      $region57: #{cnn1d_forward.1} parent=55 // pred_check
        %p328 = pneg %p37
      $region58: #{cnn1d_forward.1} parent=55 // pred_check_branch
        %330 = sbr.rel (%p328) target = $region60
      $region59: #{cnn1d_forward.1} parent=55 // pred_region
        %s331 = smul.u32 240, %s17
        %p332 = scmp.lt.s32.totalorder %s331, 479
        %s333 = scalar_select %p332, %s331, 479
        %s334 = smul.addr %s333, 8
        %s335 = scalar_lea.vmem %s0, %s334
        %s336 = smul.u32 240, %s17
      $region60: #{cnn1d_forward.1} parent=55 // pred_fallthru
        _
    $region56: #{cnn1d_forward.1} parent=5 // pred_fallthru
      _
    %p337 = scmp.le.s32.totalorder 1, %s17
    %p338 = scmp.lt.s32.totalorder %s17, 3
    %p339 = pnand %p337, %p338
    %p340 = pneg %p339
    // Predicated region
    $region61: #{cnn1d_forward.1} parent=5 // pred_check
      _
    $region62: #{cnn1d_forward.1} parent=5 // pred_check_branch
      %342 = sbr.rel (%p339) target = $region64
    $region63: #{cnn1d_forward.1} parent=5 // pred_region
      %s343 = ssub.s32 %s17, 1
      %s344 = smul.u32 240, %s22
      %p345 = scmp.lt.s32.totalorder %s344, 479
      %s346 = scalar_select %p345, %s344, 479
      %s347 = smul.addr %s346, 8
      %s348 = scalar_lea.vmem %s0, %s347
      %p349 = pneg %p43
      %p350 = pneg %p40
      %p351 = pneg %p64
      %p352 = pneg %p61
      %p353 = pneg %p85
      %p354 = pneg %p82
      %p355 = pneg %p106
      %p356 = pneg %p103
      %p357 = pneg %p127
      %p358 = pneg %p124
      %p359 = pneg %p148
      %p360 = pneg %p145
      %p361 = pneg %p169
      %p362 = pneg %p166
      %p363 = pneg %p190
      %p364 = pneg %p187
      %p365 = pneg %p211
      %p366 = pneg %p208
      %p367 = pneg %p232
      %p368 = pneg %p229
      %p369 = pneg %p253
      %p370 = pneg %p250
      %p371 = pneg %p279
      %p372 = pneg %p276
      %p373 = scmp.lt.s32.totalorder %s22, 1
      %s374 = scalar_select %p373, %s22, 1
      %s375 = smul.addr %s374, 8
      %s376 = scalar_lea.vmem %s11, %s375
      %s377 = smul.u32 240, %s22
      %p378 = scmp.lt.s32.totalorder %s377, 479
      %s379 = scalar_select %p378, %s377, 479
      %s380 = smul.addr %s379, 8
      %s381 = scalar_lea.vmem %s0, %s380
      %s382 = smul.u32 240, %s22
      %p383 = scmp.lt.s32.totalorder %s22, 1
      %s384 = scalar_select %p383, %s22, 1
      %s385 = smul.addr %s384, 8
      %s386 = scalar_lea.vmem %s11, %s385
      %v387 = vld [vmem:[%s2] sm:$0x1]
      %v388 = vld [vmem:[%s3] sm:$0x1]
      %v389 = vld [vmem:[%s381] sm:$0xff]
      %v390 = vld [vmem:[%s381 + $0x8] sm:$0xff]
      %v391 = vld [vmem:[%s381 + $0x10] sm:$0xff]
      %v392 = vld [vmem:[%s381 + $0x18] sm:$0xff]
      %v393 = vld [vmem:[%s381 + $0x20] sm:$0xff]
      %v394 = vld [vmem:[%s381 + $0x28] sm:$0xff]
      %v395 = vld [vmem:[%s381 + $0x30] sm:$0xff]
      %v396 = vld [vmem:[%s381 + $0x38] sm:$0xff]
      %v397 = vld [vmem:[%s381 + $0x40] sm:$0xff]
      %v398 = vld [vmem:[%s381 + $0x48] sm:$0xff]
      %v399 = vld [vmem:[%s381 + $0x50] sm:$0xff]
      %v400 = vld [vmem:[%s381 + $0x58] sm:$0xff]
      %v401 = vld [vmem:[%s381 + $0x60] sm:$0xff]
      %v402 = vld [vmem:[%s381 + $0x68] sm:$0xff]
      %v403 = vld [vmem:[%s381 + $0x70] sm:$0xff]
      %v404 = vld [vmem:[%s381 + $0x78] sm:$0xff]
      %v405 = vld [vmem:[%s381 + $0x80] sm:$0xff]
      %v406 = vld [vmem:[%s381 + $0x88] sm:$0xff]
      %v407 = vld [vmem:[%s381 + $0x90] sm:$0xff]
      %v408 = vld [vmem:[%s381 + $0x98] sm:$0xff]
      %v409 = vld [vmem:[%s381 + $0xa0] sm:$0xff]
      %v410 = vld [vmem:[%s381 + $0xa8] sm:$0xff]
      %v411 = vld [vmem:[%s381 + $0xb0] sm:$0xff]
      %v412 = vld [vmem:[%s381 + $0xb8] sm:$0xff]
      %v413 = vld [vmem:[%s381 + $0xc0] sm:$0xff]
      %v414 = vld [vmem:[%s381 + $0xc8] sm:$0xff]
      %v415 = vld [vmem:[%s381 + $0xd0] sm:$0xff]
      %v416 = vld [vmem:[%s381 + $0xd8] sm:$0xff]
      %v417 = vld [vmem:[%s381 + $0xe0] sm:$0xff]
      %v418 = vld [vmem:[%s381 + $0xe8] sm:$0xff]
      %v419 = vld [vmem:[%s1] sm:$0xff]
      %v420 = vld [vmem:[%s1 + $0x8] sm:$0xff]
      %vm421 = vcmask 130048
      %v423 = vsel %vm421, %v389, 0
      %v426 = vsel %vm421, %v390, 0
      %v429 = vsel %vm421, %v391, 0
      %v432 = vsel %vm421, %v392, 0
      %v435 = vsel %vm421, %v393, 0
      %v438 = vsel %vm421, %v394, 0
      %v441 = vsel %vm421, %v395, 0
      %v444 = vsel %vm421, %v396, 0
      %v447 = vsel %vm421, %v397, 0
      %v450 = vsel %vm421, %v398, 0
      %v453 = vsel %vm421, %v399, 0
      %v456 = vsel %vm421, %v400, 0
      %v459 = vsel %vm421, %v401, 0
      %v462 = vsel %vm421, %v402, 0
      %v465 = vsel %vm421, %v403, 0
      %v468 = vsel %vm421, %v404, 0
      %v471 = vsel %vm421, %v405, 0
      %v474 = vsel %vm421, %v406, 0
      %v477 = vsel %vm421, %v407, 0
      %v480 = vsel %vm421, %v408, 0
      %v483 = vsel %vm421, %v409, 0
      %v486 = vsel %vm421, %v410, 0
      %v489 = vsel %vm421, %v411, 0
      %v492 = vsel %vm421, %v412, 0
      %v495 = vsel %vm421, %v413, 0
      %v498 = vsel %vm421, %v414, 0
      %v501 = vsel %vm421, %v415, 0
      %v504 = vsel %vm421, %v416, 0
      %v507 = vsel %vm421, %v417, 0
      %v510 = vsel %vm421, %v418, 0
      %512 = vmatprep.subr.mxu0 0.0
      %513 = vmatpush1.msra.mxu0 %v419
      %514 = vmatprep.subr.mxu0 0.0
      %515 = vmatpush1.msra.mxu0 %v420
      %516 = vmatprep.subr.mxu0 0.0
      %517 = vmatpush1.msra.mxu0 0.0
      %518 = vmatprep.subr.mxu0 0.0
      %519 = vmatpush1.msra.mxu0 0.0
      %520 = vmatprep.subr.mxu0 0.0
      %521 = vmatpush1.msra.mxu0 0.0
      %522 = vmatprep.subr.mxu0 0.0
      %523 = vmatpush1.msra.mxu0 0.0
      %524 = vmatprep.subr.mxu0 0.0
      %525 = vmatpush1.msra.mxu0 0.0
      %526 = vmatprep.subr.mxu0 0.0
      %527 = vmatpush1.msra.mxu0 0.0
      %528 = vmatprep.subr.mxu0 0.0
      %529 = vmatpush1.msra.mxu0 0.0
      %530 = vmatprep.subr.mxu0 0.0
      %531 = vmatpush1.msra.mxu0 0.0
      %532 = vmatprep.subr.mxu0 0.0
      %533 = vmatpush1.msra.mxu0 0.0
      %534 = vmatprep.subr.mxu0 0.0
      %535 = vmatpush1.msra.mxu0 0.0
      %536 = vmatprep.subr.mxu0 0.0
      %537 = vmatpush1.msra.mxu0 0.0
      %538 = vmatprep.subr.mxu0 0.0
      %539 = vmatpush1.msra.mxu0 0.0
      %540 = vmatprep.subr.mxu0 0.0
      %541 = vmatpush1.msra.mxu0 0.0
      %542 = vmatprep.subr.mxu0 0.0
      %543 = vmatpush1.msra.mxu0 0.0
      %544 = vmatprep.subr.mxu0 0.0
      %545 = vmatpush1.msra.mxu0 0.0
      %546 = vmatprep.subr.mxu0 0.0
      %547 = vmatpush1.msra.mxu0 0.0
      %548 = vmatprep.subr.mxu0 0.0
      %549 = vmatpush1.msra.mxu0 0.0
      %550 = vmatprep.subr.mxu0 0.0
      %551 = vmatpush1.msra.mxu0 0.0
      %552 = vmatprep.subr.mxu0 0.0
      %553 = vmatpush1.msra.mxu0 0.0
      %554 = vmatprep.subr.mxu0 0.0
      %555 = vmatpush1.msra.mxu0 0.0
      %556 = vmatprep.subr.mxu0 0.0
      %557 = vmatpush1.msra.mxu0 0.0
      %558 = vmatprep.subr.mxu0 0.0
      %559 = vmatpush1.msra.mxu0 0.0
      %560 = vmatprep.subr.mxu0 0.0
      %561 = vmatpush1.msra.mxu0 0.0
      %562 = vmatprep.subr.mxu0 0.0
      %563 = vmatpush1.msra.mxu0 0.0
      %564 = vmatprep.subr.mxu0 0.0
      %565 = vmatpush1.msra.mxu0 0.0
      %566 = vmatprep.subr.mxu0 0.0
      %567 = vmatpush1.msra.mxu0 0.0
      %568 = vmatprep.subr.mxu0 0.0
      %569 = vmatpush1.msra.mxu0 0.0
      %570 = vmatprep.subr.mxu0 0.0
      %571 = vmatpush1.msra.mxu0 0.0
      %572 = vmatprep.subr.mxu0 0.0
      %573 = vmatpush1.msra.mxu0 0.0
      %574 = vmatprep.subr.mxu0 0.0
      %575 = vmatpush1.msra.mxu0 0.0
      %576 = vmatprep.mubr.f32.mxu0 0.0
      %577 = vmatmul.mubr.f32.gmra.mrb[0].mxu0 %v423
      %v578 = vpop.f32.mrb[0].mxu0
      %v579 = vadd.f32 0.0, %v578
      %v580 = vpop.f32.mrb[0].mxu0
      %581 = vmatprep.mubr.f32.mxu0 0.0
      %582 = vmatmul.mubr.f32.gmra.mrb[0].mxu0 %v426
      %v583 = vpop.f32.mrb[0].mxu0
      %v584 = vadd.f32 0.0, %v583
      %v585 = vpop.f32.mrb[0].mxu0
      %586 = vmatprep.mubr.f32.mxu0 0.0
      %587 = vmatmul.mubr.f32.gmra.mrb[0].mxu0 %v429
      %v588 = vpop.f32.mrb[0].mxu0
      %v589 = vadd.f32 0.0, %v588
      %v590 = vpop.f32.mrb[0].mxu0
      %591 = vmatprep.mubr.f32.mxu0 0.0
      %592 = vmatmul.mubr.f32.gmra.mrb[0].mxu0 %v432
      %v593 = vpop.f32.mrb[0].mxu0
      %v594 = vadd.f32 0.0, %v593
      %v595 = vpop.f32.mrb[0].mxu0
      %596 = vmatprep.mubr.f32.mxu0 0.0
      %597 = vmatmul.mubr.f32.gmra.mrb[0].mxu0 %v435
      %v598 = vpop.f32.mrb[0].mxu0
      %v599 = vadd.f32 0.0, %v598
      %v600 = vpop.f32.mrb[0].mxu0
      %601 = vmatprep.mubr.f32.mxu0 0.0
      %602 = vmatmul.mubr.f32.gmra.mrb[0].mxu0 %v438
      %v603 = vpop.f32.mrb[0].mxu0
      %v604 = vadd.f32 0.0, %v603
      %v605 = vpop.f32.mrb[0].mxu0
      %606 = vmatprep.mubr.f32.mxu0 0.0
      %607 = vmatmul.mubr.f32.gmra.mrb[0].mxu0 %v441
      %v608 = vpop.f32.mrb[0].mxu0
      %v609 = vadd.f32 0.0, %v608
      %v610 = vpop.f32.mrb[0].mxu0
      %611 = vmatprep.mubr.f32.mxu0 0.0
      %612 = vmatmul.mubr.f32.gmra.mrb[0].mxu0 %v444
      %v613 = vpop.f32.mrb[0].mxu0
      %v614 = vadd.f32 0.0, %v613
      %v615 = vpop.f32.mrb[0].mxu0
      %616 = vmatprep.mubr.f32.mxu0 0.0
      %617 = vmatmul.mubr.f32.gmra.mrb[0].mxu0 %v447
      %v618 = vpop.f32.mrb[0].mxu0
      %v619 = vadd.f32 0.0, %v618
      %v620 = vpop.f32.mrb[0].mxu0
      %621 = vmatprep.mubr.f32.mxu0 0.0
      %622 = vmatmul.mubr.f32.gmra.mrb[0].mxu0 %v450
      %v623 = vpop.f32.mrb[0].mxu0
      %v624 = vadd.f32 0.0, %v623
      %v625 = vpop.f32.mrb[0].mxu0
      %626 = vmatprep.mubr.f32.mxu0 0.0
      %627 = vmatmul.mubr.f32.gmra.mrb[0].mxu0 %v453
      %v628 = vpop.f32.mrb[0].mxu0
      %v629 = vadd.f32 0.0, %v628
      %v630 = vpop.f32.mrb[0].mxu0
      %631 = vmatprep.mubr.f32.mxu0 0.0
      %632 = vmatmul.mubr.f32.gmra.mrb[0].mxu0 %v456
      %v633 = vpop.f32.mrb[0].mxu0
      %v634 = vadd.f32 0.0, %v633
      %v635 = vpop.f32.mrb[0].mxu0
      %636 = vmatprep.mubr.f32.mxu0 0.0
      %637 = vmatmul.mubr.f32.gmra.mrb[0].mxu0 %v459
      %v638 = vpop.f32.mrb[0].mxu0
      %v639 = vadd.f32 0.0, %v638
      %v640 = vpop.f32.mrb[0].mxu0
      %641 = vmatprep.mubr.f32.mxu0 0.0
      %642 = vmatmul.mubr.f32.gmra.mrb[0].mxu0 %v462
      %v643 = vpop.f32.mrb[0].mxu0
      %v644 = vadd.f32 0.0, %v643
      %v645 = vpop.f32.mrb[0].mxu0
      %646 = vmatprep.mubr.f32.mxu0 0.0
      %647 = vmatmul.mubr.f32.gmra.mrb[0].mxu0 %v465
      %v648 = vpop.f32.mrb[0].mxu0
      %v649 = vadd.f32 0.0, %v648
      %v650 = vpop.f32.mrb[0].mxu0
      %651 = vmatprep.mubr.f32.mxu0 0.0
      %652 = vmatmul.mubr.f32.gmra.mrb[0].mxu0 %v468
      %v653 = vpop.f32.mrb[0].mxu0
      %v654 = vadd.f32 0.0, %v653
      %v655 = vpop.f32.mrb[0].mxu0
      %656 = vmatprep.mubr.f32.mxu0 0.0
      %657 = vmatmul.mubr.f32.gmra.mrb[0].mxu0 %v471
      %v658 = vpop.f32.mrb[0].mxu0
      %v659 = vadd.f32 0.0, %v658
      %v660 = vpop.f32.mrb[0].mxu0
      %661 = vmatprep.mubr.f32.mxu0 0.0
      %662 = vmatmul.mubr.f32.gmra.mrb[0].mxu0 %v474
      %v663 = vpop.f32.mrb[0].mxu0
      %v664 = vadd.f32 0.0, %v663
      %v665 = vpop.f32.mrb[0].mxu0
      %666 = vmatprep.mubr.f32.mxu0 0.0
      %667 = vmatmul.mubr.f32.gmra.mrb[0].mxu0 %v477
      %v668 = vpop.f32.mrb[0].mxu0
      %v669 = vadd.f32 0.0, %v668
      %v670 = vpop.f32.mrb[0].mxu0
      %671 = vmatprep.mubr.f32.mxu0 0.0
      %672 = vmatmul.mubr.f32.gmra.mrb[0].mxu0 %v480
      %v673 = vpop.f32.mrb[0].mxu0
      %v674 = vadd.f32 0.0, %v673
      %v675 = vpop.f32.mrb[0].mxu0
      %676 = vmatprep.mubr.f32.mxu0 0.0
      %677 = vmatmul.mubr.f32.gmra.mrb[0].mxu0 %v483
      %v678 = vpop.f32.mrb[0].mxu0
      %v679 = vadd.f32 0.0, %v678
      %v680 = vpop.f32.mrb[0].mxu0
      %681 = vmatprep.mubr.f32.mxu0 0.0
      %682 = vmatmul.mubr.f32.gmra.mrb[0].mxu0 %v486
      %v683 = vpop.f32.mrb[0].mxu0
      %v684 = vadd.f32 0.0, %v683
      %v685 = vpop.f32.mrb[0].mxu0
      %686 = vmatprep.mubr.f32.mxu0 0.0
      %687 = vmatmul.mubr.f32.gmra.mrb[0].mxu0 %v489
      %v688 = vpop.f32.mrb[0].mxu0
      %v689 = vadd.f32 0.0, %v688
      %v690 = vpop.f32.mrb[0].mxu0
      %691 = vmatprep.mubr.f32.mxu0 0.0
      %692 = vmatmul.mubr.f32.gmra.mrb[0].mxu0 %v492
      %v693 = vpop.f32.mrb[0].mxu0
      %v694 = vadd.f32 0.0, %v693
      %v695 = vpop.f32.mrb[0].mxu0
      %696 = vmatprep.mubr.f32.mxu0 0.0
      %697 = vmatmul.mubr.f32.gmra.mrb[0].mxu0 %v495
      %v698 = vpop.f32.mrb[0].mxu0
      %v699 = vadd.f32 0.0, %v698
      %v700 = vpop.f32.mrb[0].mxu0
      %701 = vmatprep.mubr.f32.mxu0 0.0
      %702 = vmatmul.mubr.f32.gmra.mrb[0].mxu0 %v498
      %v703 = vpop.f32.mrb[0].mxu0
      %v704 = vadd.f32 0.0, %v703
      %v705 = vpop.f32.mrb[0].mxu0
      %706 = vmatprep.mubr.f32.mxu0 0.0
      %707 = vmatmul.mubr.f32.gmra.mrb[0].mxu0 %v501
      %v708 = vpop.f32.mrb[0].mxu0
      %v709 = vadd.f32 0.0, %v708
      %v710 = vpop.f32.mrb[0].mxu0
      %711 = vmatprep.mubr.f32.mxu0 0.0
      %712 = vmatmul.mubr.f32.gmra.mrb[0].mxu0 %v504
      %v713 = vpop.f32.mrb[0].mxu0
      %v714 = vadd.f32 0.0, %v713
      %v715 = vpop.f32.mrb[0].mxu0
      %716 = vmatprep.mubr.f32.mxu0 0.0
      %717 = vmatmul.mubr.f32.gmra.mrb[0].mxu0 %v507
      %v718 = vpop.f32.mrb[0].mxu0
      %v719 = vadd.f32 0.0, %v718
      %v720 = vpop.f32.mrb[0].mxu0
      %721 = vmatprep.mubr.f32.mxu0 0.0
      %722 = vmatmul.mubr.f32.gmra.mrb[0].mxu0 %v510
      %v723 = vpop.f32.mrb[0].mxu0
      %v724 = vadd.f32 0.0, %v723
      %v725 = vpop.f32.mrb[0].mxu0
      %726 = vdwg.mxu0
      %v727 = vld [vmem:[%s381 + $0x3c0] sm:$0xff]
      %v728 = vld [vmem:[%s381 + $0x3c8] sm:$0xff]
      %v729 = vld [vmem:[%s381 + $0x3d0] sm:$0xff]
      %v730 = vld [vmem:[%s381 + $0x3d8] sm:$0xff]
      %v731 = vld [vmem:[%s381 + $0x3e0] sm:$0xff]
      %v732 = vld [vmem:[%s381 + $0x3e8] sm:$0xff]
      %v733 = vld [vmem:[%s381 + $0x3f0] sm:$0xff]
      %v734 = vld [vmem:[%s381 + $0x3f8] sm:$0xff]
      %v735 = vld [vmem:[%s381 + $0x400] sm:$0xff]
      %v736 = vld [vmem:[%s381 + $0x408] sm:$0xff]
      %v737 = vld [vmem:[%s381 + $0x410] sm:$0xff]
      %v738 = vld [vmem:[%s381 + $0x418] sm:$0xff]
      %v739 = vld [vmem:[%s381 + $0x420] sm:$0xff]
      %v740 = vld [vmem:[%s381 + $0x428] sm:$0xff]
      %v741 = vld [vmem:[%s381 + $0x430] sm:$0xff]
      %v742 = vld [vmem:[%s381 + $0x438] sm:$0xff]
      %v743 = vld [vmem:[%s381 + $0x440] sm:$0xff]
      %v744 = vld [vmem:[%s381 + $0x448] sm:$0xff]
      %v745 = vld [vmem:[%s381 + $0x450] sm:$0xff]
      %v746 = vld [vmem:[%s381 + $0x458] sm:$0xff]
      %v747 = vld [vmem:[%s381 + $0x460] sm:$0xff]
      %v748 = vld [vmem:[%s381 + $0x468] sm:$0xff]
      %v749 = vld [vmem:[%s381 + $0x470] sm:$0xff]
      %v750 = vld [vmem:[%s381 + $0x478] sm:$0xff]
      %v751 = vld [vmem:[%s381 + $0x480] sm:$0xff]
      %v752 = vld [vmem:[%s381 + $0x488] sm:$0xff]
      %v753 = vld [vmem:[%s381 + $0x490] sm:$0xff]
      %v754 = vld [vmem:[%s381 + $0x498] sm:$0xff]
      %v755 = vld [vmem:[%s381 + $0x4a0] sm:$0xff]
      %v756 = vld [vmem:[%s381 + $0x4a8] sm:$0xff]
      %v758 = vsel %vm421, %v727, 0
      %v761 = vsel %vm421, %v728, 0
      %v764 = vsel %vm421, %v729, 0
      %v767 = vsel %vm421, %v730, 0
      %v770 = vsel %vm421, %v731, 0
      %v773 = vsel %vm421, %v732, 0
      %v776 = vsel %vm421, %v733, 0
      %v779 = vsel %vm421, %v734, 0
      %v782 = vsel %vm421, %v735, 0
      %v785 = vsel %vm421, %v736, 0
      %v788 = vsel %vm421, %v737, 0
      %v791 = vsel %vm421, %v738, 0
      %v794 = vsel %vm421, %v739, 0
      %v797 = vsel %vm421, %v740, 0
      %v800 = vsel %vm421, %v741, 0
      %v803 = vsel %vm421, %v742, 0
      %v806 = vsel %vm421, %v743, 0
      %v809 = vsel %vm421, %v744, 0
      %v812 = vsel %vm421, %v745, 0
      %v815 = vsel %vm421, %v746, 0
      %v818 = vsel %vm421, %v747, 0
      %v821 = vsel %vm421, %v748, 0
      %v824 = vsel %vm421, %v749, 0
      %v827 = vsel %vm421, %v750, 0
      %v830 = vsel %vm421, %v751, 0
      %v833 = vsel %vm421, %v752, 0
      %v836 = vsel %vm421, %v753, 0
      %v839 = vsel %vm421, %v754, 0
      %v842 = vsel %vm421, %v755, 0
      %v845 = vsel %vm421, %v756, 0
      %847 = vmatprep.subr.mxu0 0.0
      %848 = vmatpush1.msra.mxu0 %v419
      %849 = vmatprep.subr.mxu0 0.0
      %850 = vmatpush1.msra.mxu0 %v420
      %851 = vmatprep.subr.mxu0 0.0
      %852 = vmatpush1.msra.mxu0 0.0
      %853 = vmatprep.subr.mxu0 0.0
      %854 = vmatpush1.msra.mxu0 0.0
      %855 = vmatprep.subr.mxu0 0.0
      %856 = vmatpush1.msra.mxu0 0.0
      %857 = vmatprep.subr.mxu0 0.0
      %858 = vmatpush1.msra.mxu0 0.0
      %859 = vmatprep.subr.mxu0 0.0
      %860 = vmatpush1.msra.mxu0 0.0
      %861 = vmatprep.subr.mxu0 0.0
      %862 = vmatpush1.msra.mxu0 0.0
      %863 = vmatprep.subr.mxu0 0.0
      %864 = vmatpush1.msra.mxu0 0.0
      %865 = vmatprep.subr.mxu0 0.0
      %866 = vmatpush1.msra.mxu0 0.0
      %867 = vmatprep.subr.mxu0 0.0
      %868 = vmatpush1.msra.mxu0 0.0
      %869 = vmatprep.subr.mxu0 0.0
      %870 = vmatpush1.msra.mxu0 0.0
      %871 = vmatprep.subr.mxu0 0.0
      %872 = vmatpush1.msra.mxu0 0.0
      %873 = vmatprep.subr.mxu0 0.0
      %874 = vmatpush1.msra.mxu0 0.0
      %875 = vmatprep.subr.mxu0 0.0
      %876 = vmatpush1.msra.mxu0 0.0
      %877 = vmatprep.subr.mxu0 0.0
      %878 = vmatpush1.msra.mxu0 0.0
      %879 = vmatprep.subr.mxu0 0.0
      %880 = vmatpush1.msra.mxu0 0.0
      %881 = vmatprep.subr.mxu0 0.0
      %882 = vmatpush1.msra.mxu0 0.0
      %883 = vmatprep.subr.mxu0 0.0
      %884 = vmatpush1.msra.mxu0 0.0
      %885 = vmatprep.subr.mxu0 0.0
      %886 = vmatpush1.msra.mxu0 0.0
      %887 = vmatprep.subr.mxu0 0.0
      %888 = vmatpush1.msra.mxu0 0.0
      %889 = vmatprep.subr.mxu0 0.0
      %890 = vmatpush1.msra.mxu0 0.0
      %891 = vmatprep.subr.mxu0 0.0
      %892 = vmatpush1.msra.mxu0 0.0
      %893 = vmatprep.subr.mxu0 0.0
      %894 = vmatpush1.msra.mxu0 0.0
      %895 = vmatprep.subr.mxu0 0.0
      %896 = vmatpush1.msra.mxu0 0.0
      %897 = vmatprep.subr.mxu0 0.0
      %898 = vmatpush1.msra.mxu0 0.0
      %899 = vmatprep.subr.mxu0 0.0
      %900 = vmatpush1.msra.mxu0 0.0
      %901 = vmatprep.subr.mxu0 0.0
      %902 = vmatpush1.msra.mxu0 0.0
      %903 = vmatprep.subr.mxu0 0.0
      %904 = vmatpush1.msra.mxu0 0.0
      %905 = vmatprep.subr.mxu0 0.0
      %906 = vmatpush1.msra.mxu0 0.0
      %907 = vmatprep.subr.mxu0 0.0
      %908 = vmatpush1.msra.mxu0 0.0
      %909 = vmatprep.subr.mxu0 0.0
      %910 = vmatpush1.msra.mxu0 0.0
      %911 = vmatprep.mubr.f32.mxu0 0.0
      %912 = vmatmul.mubr.f32.gmra.mrb[0].mxu0 %v758
      %v913 = vpop.f32.mrb[0].mxu0
      %v914 = vadd.f32 0.0, %v913
      %v915 = vpop.f32.mrb[0].mxu0
      %916 = vmatprep.mubr.f32.mxu0 0.0
      %917 = vmatmul.mubr.f32.gmra.mrb[0].mxu0 %v761
      %v918 = vpop.f32.mrb[0].mxu0
      %v919 = vadd.f32 0.0, %v918
      %v920 = vpop.f32.mrb[0].mxu0
      %921 = vmatprep.mubr.f32.mxu0 0.0
      %922 = vmatmul.mubr.f32.gmra.mrb[0].mxu0 %v764
      %v923 = vpop.f32.mrb[0].mxu0
      %v924 = vadd.f32 0.0, %v923
      %v925 = vpop.f32.mrb[0].mxu0
      %926 = vmatprep.mubr.f32.mxu0 0.0
      %927 = vmatmul.mubr.f32.gmra.mrb[0].mxu0 %v767
      %v928 = vpop.f32.mrb[0].mxu0
      %v929 = vadd.f32 0.0, %v928
      %v930 = vpop.f32.mrb[0].mxu0
      %931 = vmatprep.mubr.f32.mxu0 0.0
      %932 = vmatmul.mubr.f32.gmra.mrb[0].mxu0 %v770
      %v933 = vpop.f32.mrb[0].mxu0
      %v934 = vadd.f32 0.0, %v933
      %v935 = vpop.f32.mrb[0].mxu0
      %936 = vmatprep.mubr.f32.mxu0 0.0
      %937 = vmatmul.mubr.f32.gmra.mrb[0].mxu0 %v773
      %v938 = vpop.f32.mrb[0].mxu0
      %v939 = vadd.f32 0.0, %v938
      %v940 = vpop.f32.mrb[0].mxu0
      %941 = vmatprep.mubr.f32.mxu0 0.0
      %942 = vmatmul.mubr.f32.gmra.mrb[0].mxu0 %v776
      %v943 = vpop.f32.mrb[0].mxu0
      %v944 = vadd.f32 0.0, %v943
      %v945 = vpop.f32.mrb[0].mxu0
      %946 = vmatprep.mubr.f32.mxu0 0.0
      %947 = vmatmul.mubr.f32.gmra.mrb[0].mxu0 %v779
      %v948 = vpop.f32.mrb[0].mxu0
      %v949 = vadd.f32 0.0, %v948
      %v950 = vpop.f32.mrb[0].mxu0
      %951 = vmatprep.mubr.f32.mxu0 0.0
      %952 = vmatmul.mubr.f32.gmra.mrb[0].mxu0 %v782
      %v953 = vpop.f32.mrb[0].mxu0
      %v954 = vadd.f32 0.0, %v953
      %v955 = vpop.f32.mrb[0].mxu0
      %956 = vmatprep.mubr.f32.mxu0 0.0
      %957 = vmatmul.mubr.f32.gmra.mrb[0].mxu0 %v785
      %v958 = vpop.f32.mrb[0].mxu0
      %v959 = vadd.f32 0.0, %v958
      %v960 = vpop.f32.mrb[0].mxu0
      %961 = vmatprep.mubr.f32.mxu0 0.0
      %962 = vmatmul.mubr.f32.gmra.mrb[0].mxu0 %v788
      %v963 = vpop.f32.mrb[0].mxu0
      %v964 = vadd.f32 0.0, %v963
      %v965 = vpop.f32.mrb[0].mxu0
      %966 = vmatprep.mubr.f32.mxu0 0.0
      %967 = vmatmul.mubr.f32.gmra.mrb[0].mxu0 %v791
      %v968 = vpop.f32.mrb[0].mxu0
      %v969 = vadd.f32 0.0, %v968
      %v970 = vpop.f32.mrb[0].mxu0
      %971 = vmatprep.mubr.f32.mxu0 0.0
      %972 = vmatmul.mubr.f32.gmra.mrb[0].mxu0 %v794
      %v973 = vpop.f32.mrb[0].mxu0
      %v974 = vadd.f32 0.0, %v973
      %v975 = vpop.f32.mrb[0].mxu0
      %976 = vmatprep.mubr.f32.mxu0 0.0
      %977 = vmatmul.mubr.f32.gmra.mrb[0].mxu0 %v797
      %v978 = vpop.f32.mrb[0].mxu0
      %v979 = vadd.f32 0.0, %v978
      %v980 = vpop.f32.mrb[0].mxu0
      %981 = vmatprep.mubr.f32.mxu0 0.0
      %982 = vmatmul.mubr.f32.gmra.mrb[0].mxu0 %v800
      %v983 = vpop.f32.mrb[0].mxu0
      %v984 = vadd.f32 0.0, %v983
      %v985 = vpop.f32.mrb[0].mxu0
      %986 = vmatprep.mubr.f32.mxu0 0.0
      %987 = vmatmul.mubr.f32.gmra.mrb[0].mxu0 %v803
      %v988 = vpop.f32.mrb[0].mxu0
      %v989 = vadd.f32 0.0, %v988
      %v990 = vpop.f32.mrb[0].mxu0
      %991 = vmatprep.mubr.f32.mxu0 0.0
      %992 = vmatmul.mubr.f32.gmra.mrb[0].mxu0 %v806
      %v993 = vpop.f32.mrb[0].mxu0
      %v994 = vadd.f32 0.0, %v993
      %v995 = vpop.f32.mrb[0].mxu0
      %996 = vmatprep.mubr.f32.mxu0 0.0
      %997 = vmatmul.mubr.f32.gmra.mrb[0].mxu0 %v809
      %v998 = vpop.f32.mrb[0].mxu0
      %v999 = vadd.f32 0.0, %v998
      %v1000 = vpop.f32.mrb[0].mxu0
      %1001 = vmatprep.mubr.f32.mxu0 0.0
      %1002 = vmatmul.mubr.f32.gmra.mrb[0].mxu0 %v812
      %v1003 = vpop.f32.mrb[0].mxu0
      %v1004 = vadd.f32 0.0, %v1003
      %v1005 = vpop.f32.mrb[0].mxu0
      %1006 = vmatprep.mubr.f32.mxu0 0.0
      %1007 = vmatmul.mubr.f32.gmra.mrb[0].mxu0 %v815
      %v1008 = vpop.f32.mrb[0].mxu0
      %v1009 = vadd.f32 0.0, %v1008
      %v1010 = vpop.f32.mrb[0].mxu0
      %1011 = vmatprep.mubr.f32.mxu0 0.0
      %1012 = vmatmul.mubr.f32.gmra.mrb[0].mxu0 %v818
      %v1013 = vpop.f32.mrb[0].mxu0
      %v1014 = vadd.f32 0.0, %v1013
      %v1015 = vpop.f32.mrb[0].mxu0
      %1016 = vmatprep.mubr.f32.mxu0 0.0
      %1017 = vmatmul.mubr.f32.gmra.mrb[0].mxu0 %v821
      %v1018 = vpop.f32.mrb[0].mxu0
      %v1019 = vadd.f32 0.0, %v1018
      %v1020 = vpop.f32.mrb[0].mxu0
      %1021 = vmatprep.mubr.f32.mxu0 0.0
      %1022 = vmatmul.mubr.f32.gmra.mrb[0].mxu0 %v824
      %v1023 = vpop.f32.mrb[0].mxu0
      %v1024 = vadd.f32 0.0, %v1023
      %v1025 = vpop.f32.mrb[0].mxu0
      %1026 = vmatprep.mubr.f32.mxu0 0.0
      %1027 = vmatmul.mubr.f32.gmra.mrb[0].mxu0 %v827
      %v1028 = vpop.f32.mrb[0].mxu0
      %v1029 = vadd.f32 0.0, %v1028
      %v1030 = vpop.f32.mrb[0].mxu0
      %1031 = vmatprep.mubr.f32.mxu0 0.0
      %1032 = vmatmul.mubr.f32.gmra.mrb[0].mxu0 %v830
      %v1033 = vpop.f32.mrb[0].mxu0
      %v1034 = vadd.f32 0.0, %v1033
      %v1035 = vpop.f32.mrb[0].mxu0
      %1036 = vmatprep.mubr.f32.mxu0 0.0
      %1037 = vmatmul.mubr.f32.gmra.mrb[0].mxu0 %v833
      %v1038 = vpop.f32.mrb[0].mxu0
      %v1039 = vadd.f32 0.0, %v1038
      %v1040 = vpop.f32.mrb[0].mxu0
      %1041 = vmatprep.mubr.f32.mxu0 0.0
      %1042 = vmatmul.mubr.f32.gmra.mrb[0].mxu0 %v836
      %v1043 = vpop.f32.mrb[0].mxu0
      %v1044 = vadd.f32 0.0, %v1043
      %v1045 = vpop.f32.mrb[0].mxu0
      %1046 = vmatprep.mubr.f32.mxu0 0.0
      %1047 = vmatmul.mubr.f32.gmra.mrb[0].mxu0 %v839
      %v1048 = vpop.f32.mrb[0].mxu0
      %v1049 = vadd.f32 0.0, %v1048
      %v1050 = vpop.f32.mrb[0].mxu0
      %1051 = vmatprep.mubr.f32.mxu0 0.0
      %1052 = vmatmul.mubr.f32.gmra.mrb[0].mxu0 %v842
      %v1053 = vpop.f32.mrb[0].mxu0
      %v1054 = vadd.f32 0.0, %v1053
      %v1055 = vpop.f32.mrb[0].mxu0
      %1056 = vmatprep.mubr.f32.mxu0 0.0
      %1057 = vmatmul.mubr.f32.gmra.mrb[0].mxu0 %v845
      %v1058 = vpop.f32.mrb[0].mxu0
      %v1059 = vadd.f32 0.0, %v1058
      %v1060 = vpop.f32.mrb[0].mxu0
      %1061 = vdwg.mxu0
      %v1063 = vlaneseq
      %v1064 = vshrl.u32 %v1063, 7
      %v1065 = vsub.s32 0, %v1064
      %v1066 = vrot.slane %v387, %v1065
      %v1068 = vmul.f32 %v579, %v1066
      %v1069 = vmul.f32 %v584, %v1066
      %v1070 = vmul.f32 %v589, %v1066
      %v1071 = vmul.f32 %v594, %v1066
      %v1072 = vmul.f32 %v599, %v1066
      %v1073 = vmul.f32 %v604, %v1066
      %v1074 = vmul.f32 %v609, %v1066
      %v1075 = vmul.f32 %v614, %v1066
      %v1076 = vmul.f32 %v619, %v1066
      %v1077 = vmul.f32 %v624, %v1066
      %v1078 = vmul.f32 %v629, %v1066
      %v1079 = vmul.f32 %v634, %v1066
      %v1080 = vmul.f32 %v639, %v1066
      %v1081 = vmul.f32 %v644, %v1066
      %v1082 = vmul.f32 %v649, %v1066
      %v1083 = vmul.f32 %v654, %v1066
      %v1084 = vmul.f32 %v659, %v1066
      %v1085 = vmul.f32 %v664, %v1066
      %v1086 = vmul.f32 %v669, %v1066
      %v1087 = vmul.f32 %v674, %v1066
      %v1088 = vmul.f32 %v679, %v1066
      %v1089 = vmul.f32 %v684, %v1066
      %v1090 = vmul.f32 %v689, %v1066
      %v1091 = vmul.f32 %v694, %v1066
      %v1092 = vmul.f32 %v699, %v1066
      %v1093 = vmul.f32 %v704, %v1066
      %v1094 = vmul.f32 %v709, %v1066
      %v1095 = vmul.f32 %v714, %v1066
      %v1096 = vmul.f32 %v719, %v1066
      %v1097 = vmul.f32 %v724, %v1066
      %v1099 = vlaneseq
      %v1100 = vshrl.u32 %v1099, 7
      %v1101 = vsub.s32 0, %v1100
      %v1102 = vrot.slane %v388, %v1101
      %v1104 = vadd.f32 %v1068, %v1102
      %v1105 = vadd.f32 %v1069, %v1102
      %v1106 = vadd.f32 %v1070, %v1102
      %v1107 = vadd.f32 %v1071, %v1102
      %v1108 = vadd.f32 %v1072, %v1102
      %v1109 = vadd.f32 %v1073, %v1102
      %v1110 = vadd.f32 %v1074, %v1102
      %v1111 = vadd.f32 %v1075, %v1102
      %v1112 = vadd.f32 %v1076, %v1102
      %v1113 = vadd.f32 %v1077, %v1102
      %v1114 = vadd.f32 %v1078, %v1102
      %v1115 = vadd.f32 %v1079, %v1102
      %v1116 = vadd.f32 %v1080, %v1102
      %v1117 = vadd.f32 %v1081, %v1102
      %v1118 = vadd.f32 %v1082, %v1102
      %v1119 = vadd.f32 %v1083, %v1102
      %v1120 = vadd.f32 %v1084, %v1102
      %v1121 = vadd.f32 %v1085, %v1102
      %v1122 = vadd.f32 %v1086, %v1102
      %v1123 = vadd.f32 %v1087, %v1102
      %v1124 = vadd.f32 %v1088, %v1102
      %v1125 = vadd.f32 %v1089, %v1102
      %v1126 = vadd.f32 %v1090, %v1102
      %v1127 = vadd.f32 %v1091, %v1102
      %v1128 = vadd.f32 %v1092, %v1102
      %v1129 = vadd.f32 %v1093, %v1102
      %v1130 = vadd.f32 %v1094, %v1102
      %v1131 = vadd.f32 %v1095, %v1102
      %v1132 = vadd.f32 %v1096, %v1102
      %v1133 = vadd.f32 %v1097, %v1102
      %v1134 = vmax.f32 %v1104, 0.0
      %v1135 = vmax.f32 %v1105, 0.0
      %v1136 = vmax.f32 %v1106, 0.0
      %v1137 = vmax.f32 %v1107, 0.0
      %v1138 = vmax.f32 %v1108, 0.0
      %v1139 = vmax.f32 %v1109, 0.0
      %v1140 = vmax.f32 %v1110, 0.0
      %v1141 = vmax.f32 %v1111, 0.0
      %v1142 = vmax.f32 %v1112, 0.0
      %v1143 = vmax.f32 %v1113, 0.0
      %v1144 = vmax.f32 %v1114, 0.0
      %v1145 = vmax.f32 %v1115, 0.0
      %v1146 = vmax.f32 %v1116, 0.0
      %v1147 = vmax.f32 %v1117, 0.0
      %v1148 = vmax.f32 %v1118, 0.0
      %v1149 = vmax.f32 %v1119, 0.0
      %v1150 = vmax.f32 %v1120, 0.0
      %v1151 = vmax.f32 %v1121, 0.0
      %v1152 = vmax.f32 %v1122, 0.0
      %v1153 = vmax.f32 %v1123, 0.0
      %v1154 = vmax.f32 %v1124, 0.0
      %v1155 = vmax.f32 %v1125, 0.0
      %v1156 = vmax.f32 %v1126, 0.0
      %v1157 = vmax.f32 %v1127, 0.0
      %v1158 = vmax.f32 %v1128, 0.0
      %v1159 = vmax.f32 %v1129, 0.0
      %v1160 = vmax.f32 %v1130, 0.0
      %v1161 = vmax.f32 %v1131, 0.0
      %v1162 = vmax.f32 %v1132, 0.0
      %v1163 = vmax.f32 %v1133, 0.0
      %v1164 = vmul.f32 %v914, %v1066
      %v1165 = vmul.f32 %v919, %v1066
      %v1166 = vmul.f32 %v924, %v1066
      %v1167 = vmul.f32 %v929, %v1066
      %v1168 = vmul.f32 %v934, %v1066
      %v1169 = vmul.f32 %v939, %v1066
      %v1170 = vmul.f32 %v944, %v1066
      %v1171 = vmul.f32 %v949, %v1066
      %v1172 = vmul.f32 %v954, %v1066
      %v1173 = vmul.f32 %v959, %v1066
      %v1174 = vmul.f32 %v964, %v1066
      %v1175 = vmul.f32 %v969, %v1066
      %v1176 = vmul.f32 %v974, %v1066
      %v1177 = vmul.f32 %v979, %v1066
      %v1178 = vmul.f32 %v984, %v1066
      %v1179 = vmul.f32 %v989, %v1066
      %v1180 = vmul.f32 %v994, %v1066
      %v1181 = vmul.f32 %v999, %v1066
      %v1182 = vmul.f32 %v1004, %v1066
      %v1183 = vmul.f32 %v1009, %v1066
      %v1184 = vmul.f32 %v1014, %v1066
      %v1185 = vmul.f32 %v1019, %v1066
      %v1186 = vmul.f32 %v1024, %v1066
      %v1187 = vmul.f32 %v1029, %v1066
      %v1188 = vmul.f32 %v1034, %v1066
      %v1189 = vmul.f32 %v1039, %v1066
      %v1190 = vmul.f32 %v1044, %v1066
      %v1191 = vmul.f32 %v1049, %v1066
      %v1192 = vmul.f32 %v1054, %v1066
      %v1193 = vmul.f32 %v1059, %v1066
      %v1194 = vadd.f32 %v1164, %v1102
      %v1195 = vadd.f32 %v1165, %v1102
      %v1196 = vadd.f32 %v1166, %v1102
      %v1197 = vadd.f32 %v1167, %v1102
      %v1198 = vadd.f32 %v1168, %v1102
      %v1199 = vadd.f32 %v1169, %v1102
      %v1200 = vadd.f32 %v1170, %v1102
      %v1201 = vadd.f32 %v1171, %v1102
      %v1202 = vadd.f32 %v1172, %v1102
      %v1203 = vadd.f32 %v1173, %v1102
      %v1204 = vadd.f32 %v1174, %v1102
      %v1205 = vadd.f32 %v1175, %v1102
      %v1206 = vadd.f32 %v1176, %v1102
      %v1207 = vadd.f32 %v1177, %v1102
      %v1208 = vadd.f32 %v1178, %v1102
      %v1209 = vadd.f32 %v1179, %v1102
      %v1210 = vadd.f32 %v1180, %v1102
      %v1211 = vadd.f32 %v1181, %v1102
      %v1212 = vadd.f32 %v1182, %v1102
      %v1213 = vadd.f32 %v1183, %v1102
      %v1214 = vadd.f32 %v1184, %v1102
      %v1215 = vadd.f32 %v1185, %v1102
      %v1216 = vadd.f32 %v1186, %v1102
      %v1217 = vadd.f32 %v1187, %v1102
      %v1218 = vadd.f32 %v1188, %v1102
      %v1219 = vadd.f32 %v1189, %v1102
      %v1220 = vadd.f32 %v1190, %v1102
      %v1221 = vadd.f32 %v1191, %v1102
      %v1222 = vadd.f32 %v1192, %v1102
      %v1223 = vadd.f32 %v1193, %v1102
      %v1224 = vmax.f32 %v1194, 0.0
      %v1225 = vmax.f32 %v1195, 0.0
      %v1226 = vmax.f32 %v1196, 0.0
      %v1227 = vmax.f32 %v1197, 0.0
      %v1228 = vmax.f32 %v1198, 0.0
      %v1229 = vmax.f32 %v1199, 0.0
      %v1230 = vmax.f32 %v1200, 0.0
      %v1231 = vmax.f32 %v1201, 0.0
      %v1232 = vmax.f32 %v1202, 0.0
      %v1233 = vmax.f32 %v1203, 0.0
      %v1234 = vmax.f32 %v1204, 0.0
      %v1235 = vmax.f32 %v1205, 0.0
      %v1236 = vmax.f32 %v1206, 0.0
      %v1237 = vmax.f32 %v1207, 0.0
      %v1238 = vmax.f32 %v1208, 0.0
      %v1239 = vmax.f32 %v1209, 0.0
      %v1240 = vmax.f32 %v1210, 0.0
      %v1241 = vmax.f32 %v1211, 0.0
      %v1242 = vmax.f32 %v1212, 0.0
      %v1243 = vmax.f32 %v1213, 0.0
      %v1244 = vmax.f32 %v1214, 0.0
      %v1245 = vmax.f32 %v1215, 0.0
      %v1246 = vmax.f32 %v1216, 0.0
      %v1247 = vmax.f32 %v1217, 0.0
      %v1248 = vmax.f32 %v1218, 0.0
      %v1249 = vmax.f32 %v1219, 0.0
      %v1250 = vmax.f32 %v1220, 0.0
      %v1251 = vmax.f32 %v1221, 0.0
      %v1252 = vmax.f32 %v1222, 0.0
      %v1253 = vmax.f32 %v1223, 0.0
      %v1254 = vmax.f32 %v1134, %v1224
      %v1255 = vmax.f32 %v1135, %v1225
      %v1256 = vmax.f32 %v1136, %v1226
      %v1257 = vmax.f32 %v1137, %v1227
      %v1258 = vmax.f32 %v1138, %v1228
      %v1259 = vmax.f32 %v1139, %v1229
      %v1260 = vmax.f32 %v1140, %v1230
      %v1261 = vmax.f32 %v1141, %v1231
      %v1262 = vmax.f32 %v1142, %v1232
      %v1263 = vmax.f32 %v1143, %v1233
      %v1264 = vmax.f32 %v1144, %v1234
      %v1265 = vmax.f32 %v1145, %v1235
      %v1266 = vmax.f32 %v1146, %v1236
      %v1267 = vmax.f32 %v1147, %v1237
      %v1268 = vmax.f32 %v1148, %v1238
      %v1269 = vmax.f32 %v1149, %v1239
      %v1270 = vmax.f32 %v1150, %v1240
      %v1271 = vmax.f32 %v1151, %v1241
      %v1272 = vmax.f32 %v1152, %v1242
      %v1273 = vmax.f32 %v1153, %v1243
      %v1274 = vmax.f32 %v1154, %v1244
      %v1275 = vmax.f32 %v1155, %v1245
      %v1276 = vmax.f32 %v1156, %v1246
      %v1277 = vmax.f32 %v1157, %v1247
      %v1278 = vmax.f32 %v1158, %v1248
      %v1279 = vmax.f32 %v1159, %v1249
      %v1280 = vmax.f32 %v1160, %v1250
      %v1281 = vmax.f32 %v1161, %v1251
      %v1282 = vmax.f32 %v1162, %v1252
      %v1283 = vmax.f32 %v1163, %v1253
      %vm1284 = vcmask 261120
      %1285 = vst.msk [vmem:[#allocation2] sm:$0xff] %vm1284, %v1254
      %1286 = vst.msk [vmem:[#allocation2 + $0x8] sm:$0xff] %vm1284, %v1255
      %1287 = vst.msk [vmem:[#allocation2 + $0x10] sm:$0xff] %vm1284, %v1256
      %1288 = vst.msk [vmem:[#allocation2 + $0x18] sm:$0xff] %vm1284, %v1257
      %1289 = vst.msk [vmem:[#allocation2 + $0x20] sm:$0xff] %vm1284, %v1258
      %1290 = vst.msk [vmem:[#allocation2 + $0x28] sm:$0xff] %vm1284, %v1259
      %1291 = vst.msk [vmem:[#allocation2 + $0x30] sm:$0xff] %vm1284, %v1260
      %1292 = vst.msk [vmem:[#allocation2 + $0x38] sm:$0xff] %vm1284, %v1261
      %1293 = vst.msk [vmem:[#allocation2 + $0x40] sm:$0xff] %vm1284, %v1262
      %1294 = vst.msk [vmem:[#allocation2 + $0x48] sm:$0xff] %vm1284, %v1263
      %1295 = vst.msk [vmem:[#allocation2 + $0x50] sm:$0xff] %vm1284, %v1264
      %1296 = vst.msk [vmem:[#allocation2 + $0x58] sm:$0xff] %vm1284, %v1265
      %1297 = vst.msk [vmem:[#allocation2 + $0x60] sm:$0xff] %vm1284, %v1266
      %1298 = vst.msk [vmem:[#allocation2 + $0x68] sm:$0xff] %vm1284, %v1267
      %1299 = vst.msk [vmem:[#allocation2 + $0x70] sm:$0xff] %vm1284, %v1268
      %1300 = vst.msk [vmem:[#allocation2 + $0x78] sm:$0xff] %vm1284, %v1269
      %1301 = vst.msk [vmem:[#allocation2 + $0x80] sm:$0xff] %vm1284, %v1270
      %1302 = vst.msk [vmem:[#allocation2 + $0x88] sm:$0xff] %vm1284, %v1271
      %1303 = vst.msk [vmem:[#allocation2 + $0x90] sm:$0xff] %vm1284, %v1272
      %1304 = vst.msk [vmem:[#allocation2 + $0x98] sm:$0xff] %vm1284, %v1273
      %1305 = vst.msk [vmem:[#allocation2 + $0xa0] sm:$0xff] %vm1284, %v1274
      %1306 = vst.msk [vmem:[#allocation2 + $0xa8] sm:$0xff] %vm1284, %v1275
      %1307 = vst.msk [vmem:[#allocation2 + $0xb0] sm:$0xff] %vm1284, %v1276
      %1308 = vst.msk [vmem:[#allocation2 + $0xb8] sm:$0xff] %vm1284, %v1277
      %1309 = vst.msk [vmem:[#allocation2 + $0xc0] sm:$0xff] %vm1284, %v1278
      %1310 = vst.msk [vmem:[#allocation2 + $0xc8] sm:$0xff] %vm1284, %v1279
      %1311 = vst.msk [vmem:[#allocation2 + $0xd0] sm:$0xff] %vm1284, %v1280
      %1312 = vst.msk [vmem:[#allocation2 + $0xd8] sm:$0xff] %vm1284, %v1281
      %1313 = vst.msk [vmem:[#allocation2 + $0xe0] sm:$0xff] %vm1284, %v1282
      %1314 = vst.msk [vmem:[#allocation2 + $0xe8] sm:$0xff] %vm1284, %v1283
      %v1315 = vld [vmem:[%s381 + $0xf0] sm:$0xff]
      %v1316 = vld [vmem:[%s381 + $0xf8] sm:$0xff]
      %v1317 = vld [vmem:[%s381 + $0x100] sm:$0xff]
      %v1318 = vld [vmem:[%s381 + $0x108] sm:$0xff]
      %v1319 = vld [vmem:[%s381 + $0x110] sm:$0xff]
      %v1320 = vld [vmem:[%s381 + $0x118] sm:$0xff]
      %v1321 = vld [vmem:[%s381 + $0x120] sm:$0xff]
      %v1322 = vld [vmem:[%s381 + $0x128] sm:$0xff]
      %v1323 = vld [vmem:[%s381 + $0x130] sm:$0xff]
      %v1324 = vld [vmem:[%s381 + $0x138] sm:$0xff]
      %v1325 = vld [vmem:[%s381 + $0x140] sm:$0xff]
      %v1326 = vld [vmem:[%s381 + $0x148] sm:$0xff]
      %v1327 = vld [vmem:[%s381 + $0x150] sm:$0xff]
      %v1328 = vld [vmem:[%s381 + $0x158] sm:$0xff]
      %v1329 = vld [vmem:[%s381 + $0x160] sm:$0xff]
      %v1330 = vld [vmem:[%s381 + $0x168] sm:$0xff]
      %v1331 = vld [vmem:[%s381 + $0x170] sm:$0xff]
      %v1332 = vld [vmem:[%s381 + $0x178] sm:$0xff]
      %v1333 = vld [vmem:[%s381 + $0x180] sm:$0xff]
      %v1334 = vld [vmem:[%s381 + $0x188] sm:$0xff]
      %v1335 = vld [vmem:[%s381 + $0x190] sm:$0xff]
      %v1336 = vld [vmem:[%s381 + $0x198] sm:$0xff]
      %v1337 = vld [vmem:[%s381 + $0x1a0] sm:$0xff]
      %v1338 = vld [vmem:[%s381 + $0x1a8] sm:$0xff]
      %v1339 = vld [vmem:[%s381 + $0x1b0] sm:$0xff]
      %v1340 = vld [vmem:[%s381 + $0x1b8] sm:$0xff]
      %v1341 = vld [vmem:[%s381 + $0x1c0] sm:$0xff]
      %v1342 = vld [vmem:[%s381 + $0x1c8] sm:$0xff]
      %v1343 = vld [vmem:[%s381 + $0x1d0] sm:$0xff]
      %v1344 = vld [vmem:[%s381 + $0x1d8] sm:$0xff]
      %v1345 = vld [vmem:[%s1] sm:$0xff]
      %v1346 = vld [vmem:[%s1 + $0x8] sm:$0xff]
      %v1348 = vsel %vm421, %v1315, 0
      %v1351 = vsel %vm421, %v1316, 0
      %v1354 = vsel %vm421, %v1317, 0
      %v1357 = vsel %vm421, %v1318, 0
      %v1360 = vsel %vm421, %v1319, 0
      %v1363 = vsel %vm421, %v1320, 0
      %v1366 = vsel %vm421, %v1321, 0
      %v1369 = vsel %vm421, %v1322, 0
      %v1372 = vsel %vm421, %v1323, 0
      %v1375 = vsel %vm421, %v1324, 0
      %v1378 = vsel %vm421, %v1325, 0
      %v1381 = vsel %vm421, %v1326, 0
      %v1384 = vsel %vm421, %v1327, 0
      %v1387 = vsel %vm421, %v1328, 0
      %v1390 = vsel %vm421, %v1329, 0
      %v1393 = vsel %vm421, %v1330, 0
      %v1396 = vsel %vm421, %v1331, 0
      %v1399 = vsel %vm421, %v1332, 0
      %v1402 = vsel %vm421, %v1333, 0
      %v1405 = vsel %vm421, %v1334, 0
      %v1408 = vsel %vm421, %v1335, 0
      %v1411 = vsel %vm421, %v1336, 0
      %v1414 = vsel %vm421, %v1337, 0
      %v1417 = vsel %vm421, %v1338, 0
      %v1420 = vsel %vm421, %v1339, 0
      %v1423 = vsel %vm421, %v1340, 0
      %v1426 = vsel %vm421, %v1341, 0
      %v1429 = vsel %vm421, %v1342, 0
      %v1432 = vsel %vm421, %v1343, 0
      %v1435 = vsel %vm421, %v1344, 0
      %1437 = vmatprep.subr.mxu0 0.0
      %1438 = vmatpush1.msra.mxu0 %v1345
      %1439 = vmatprep.subr.mxu0 0.0
      %1440 = vmatpush1.msra.mxu0 %v1346
      %1441 = vmatprep.subr.mxu0 0.0
      %1442 = vmatpush1.msra.mxu0 0.0
      %1443 = vmatprep.subr.mxu0 0.0
      %1444 = vmatpush1.msra.mxu0 0.0
      %1445 = vmatprep.subr.mxu0 0.0
      %1446 = vmatpush1.msra.mxu0 0.0
      %1447 = vmatprep.subr.mxu0 0.0
      %1448 = vmatpush1.msra.mxu0 0.0
      %1449 = vmatprep.subr.mxu0 0.0
      %1450 = vmatpush1.msra.mxu0 0.0
      %1451 = vmatprep.subr.mxu0 0.0
      %1452 = vmatpush1.msra.mxu0 0.0
      %1453 = vmatprep.subr.mxu0 0.0
      %1454 = vmatpush1.msra.mxu0 0.0
      %1455 = vmatprep.subr.mxu0 0.0
      %1456 = vmatpush1.msra.mxu0 0.0
      %1457 = vmatprep.subr.mxu0 0.0
      %1458 = vmatpush1.msra.mxu0 0.0
      %1459 = vmatprep.subr.mxu0 0.0
      %1460 = vmatpush1.msra.mxu0 0.0
      %1461 = vmatprep.subr.mxu0 0.0
      %1462 = vmatpush1.msra.mxu0 0.0
      %1463 = vmatprep.subr.mxu0 0.0
      %1464 = vmatpush1.msra.mxu0 0.0
      %1465 = vmatprep.subr.mxu0 0.0
      %1466 = vmatpush1.msra.mxu0 0.0
      %1467 = vmatprep.subr.mxu0 0.0
      %1468 = vmatpush1.msra.mxu0 0.0
      %1469 = vmatprep.subr.mxu0 0.0
      %1470 = vmatpush1.msra.mxu0 0.0
      %1471 = vmatprep.subr.mxu0 0.0
      %1472 = vmatpush1.msra.mxu0 0.0
      %1473 = vmatprep.subr.mxu0 0.0
      %1474 = vmatpush1.msra.mxu0 0.0
      %1475 = vmatprep.subr.mxu0 0.0
      %1476 = vmatpush1.msra.mxu0 0.0
      %1477 = vmatprep.subr.mxu0 0.0
      %1478 = vmatpush1.msra.mxu0 0.0
      %1479 = vmatprep.subr.mxu0 0.0
      %1480 = vmatpush1.msra.mxu0 0.0
      %1481 = vmatprep.subr.mxu0 0.0
      %1482 = vmatpush1.msra.mxu0 0.0
      %1483 = vmatprep.subr.mxu0 0.0
      %1484 = vmatpush1.msra.mxu0 0.0
      %1485 = vmatprep.subr.mxu0 0.0
      %1486 = vmatpush1.msra.mxu0 0.0
      %1487 = vmatprep.subr.mxu0 0.0
      %1488 = vmatpush1.msra.mxu0 0.0
      %1489 = vmatprep.subr.mxu0 0.0
      %1490 = vmatpush1.msra.mxu0 0.0
      %1491 = vmatprep.subr.mxu0 0.0
      %1492 = vmatpush1.msra.mxu0 0.0
      %1493 = vmatprep.subr.mxu0 0.0
      %1494 = vmatpush1.msra.mxu0 0.0
      %1495 = vmatprep.subr.mxu0 0.0
      %1496 = vmatpush1.msra.mxu0 0.0
      %1497 = vmatprep.subr.mxu0 0.0
      %1498 = vmatpush1.msra.mxu0 0.0
      %1499 = vmatprep.subr.mxu0 0.0
      %1500 = vmatpush1.msra.mxu0 0.0
      %1501 = vmatprep.mubr.f32.mxu0 0.0
      %1502 = vmatmul.mubr.f32.gmra.mrb[0].mxu0 %v1348
      %v1503 = vpop.f32.mrb[0].mxu0
      %v1504 = vadd.f32 0.0, %v1503
      %v1505 = vpop.f32.mrb[0].mxu0
      %1506 = vmatprep.mubr.f32.mxu0 0.0
      %1507 = vmatmul.mubr.f32.gmra.mrb[0].mxu0 %v1351
      %v1508 = vpop.f32.mrb[0].mxu0
      %v1509 = vadd.f32 0.0, %v1508
      %v1510 = vpop.f32.mrb[0].mxu0
      %1511 = vmatprep.mubr.f32.mxu0 0.0
      %1512 = vmatmul.mubr.f32.gmra.mrb[0].mxu0 %v1354
      %v1513 = vpop.f32.mrb[0].mxu0
      %v1514 = vadd.f32 0.0, %v1513
      %v1515 = vpop.f32.mrb[0].mxu0
      %1516 = vmatprep.mubr.f32.mxu0 0.0
      %1517 = vmatmul.mubr.f32.gmra.mrb[0].mxu0 %v1357
      %v1518 = vpop.f32.mrb[0].mxu0
      %v1519 = vadd.f32 0.0, %v1518
      %v1520 = vpop.f32.mrb[0].mxu0
      %1521 = vmatprep.mubr.f32.mxu0 0.0
      %1522 = vmatmul.mubr.f32.gmra.mrb[0].mxu0 %v1360
      %v1523 = vpop.f32.mrb[0].mxu0
      %v1524 = vadd.f32 0.0, %v1523
      %v1525 = vpop.f32.mrb[0].mxu0
      %1526 = vmatprep.mubr.f32.mxu0 0.0
      %1527 = vmatmul.mubr.f32.gmra.mrb[0].mxu0 %v1363
      %v1528 = vpop.f32.mrb[0].mxu0
      %v1529 = vadd.f32 0.0, %v1528
      %v1530 = vpop.f32.mrb[0].mxu0
      %1531 = vmatprep.mubr.f32.mxu0 0.0
      %1532 = vmatmul.mubr.f32.gmra.mrb[0].mxu0 %v1366
      %v1533 = vpop.f32.mrb[0].mxu0
      %v1534 = vadd.f32 0.0, %v1533
      %v1535 = vpop.f32.mrb[0].mxu0
      %1536 = vmatprep.mubr.f32.mxu0 0.0
      %1537 = vmatmul.mubr.f32.gmra.mrb[0].mxu0 %v1369
      %v1538 = vpop.f32.mrb[0].mxu0
      %v1539 = vadd.f32 0.0, %v1538
      %v1540 = vpop.f32.mrb[0].mxu0
      %1541 = vmatprep.mubr.f32.mxu0 0.0
      %1542 = vmatmul.mubr.f32.gmra.mrb[0].mxu0 %v1372
      %v1543 = vpop.f32.mrb[0].mxu0
      %v1544 = vadd.f32 0.0, %v1543
      %v1545 = vpop.f32.mrb[0].mxu0
      %1546 = vmatprep.mubr.f32.mxu0 0.0
      %1547 = vmatmul.mubr.f32.gmra.mrb[0].mxu0 %v1375
      %v1548 = vpop.f32.mrb[0].mxu0
      %v1549 = vadd.f32 0.0, %v1548
      %v1550 = vpop.f32.mrb[0].mxu0
      %1551 = vmatprep.mubr.f32.mxu0 0.0
      %1552 = vmatmul.mubr.f32.gmra.mrb[0].mxu0 %v1378
      %v1553 = vpop.f32.mrb[0].mxu0
      %v1554 = vadd.f32 0.0, %v1553
      %v1555 = vpop.f32.mrb[0].mxu0
      %1556 = vmatprep.mubr.f32.mxu0 0.0
      %1557 = vmatmul.mubr.f32.gmra.mrb[0].mxu0 %v1381
      %v1558 = vpop.f32.mrb[0].mxu0
      %v1559 = vadd.f32 0.0, %v1558
      %v1560 = vpop.f32.mrb[0].mxu0
      %1561 = vmatprep.mubr.f32.mxu0 0.0
      %1562 = vmatmul.mubr.f32.gmra.mrb[0].mxu0 %v1384
      %v1563 = vpop.f32.mrb[0].mxu0
      %v1564 = vadd.f32 0.0, %v1563
      %v1565 = vpop.f32.mrb[0].mxu0
      %1566 = vmatprep.mubr.f32.mxu0 0.0
      %1567 = vmatmul.mubr.f32.gmra.mrb[0].mxu0 %v1387
      %v1568 = vpop.f32.mrb[0].mxu0
      %v1569 = vadd.f32 0.0, %v1568
      %v1570 = vpop.f32.mrb[0].mxu0
      %1571 = vmatprep.mubr.f32.mxu0 0.0
      %1572 = vmatmul.mubr.f32.gmra.mrb[0].mxu0 %v1390
      %v1573 = vpop.f32.mrb[0].mxu0
      %v1574 = vadd.f32 0.0, %v1573
      %v1575 = vpop.f32.mrb[0].mxu0
      %1576 = vmatprep.mubr.f32.mxu0 0.0
      %1577 = vmatmul.mubr.f32.gmra.mrb[0].mxu0 %v1393
      %v1578 = vpop.f32.mrb[0].mxu0
      %v1579 = vadd.f32 0.0, %v1578
      %v1580 = vpop.f32.mrb[0].mxu0
      %1581 = vmatprep.mubr.f32.mxu0 0.0
      %1582 = vmatmul.mubr.f32.gmra.mrb[0].mxu0 %v1396
      %v1583 = vpop.f32.mrb[0].mxu0
      %v1584 = vadd.f32 0.0, %v1583
      %v1585 = vpop.f32.mrb[0].mxu0
      %1586 = vmatprep.mubr.f32.mxu0 0.0
      %1587 = vmatmul.mubr.f32.gmra.mrb[0].mxu0 %v1399
      %v1588 = vpop.f32.mrb[0].mxu0
      %v1589 = vadd.f32 0.0, %v1588
      %v1590 = vpop.f32.mrb[0].mxu0
      %1591 = vmatprep.mubr.f32.mxu0 0.0
      %1592 = vmatmul.mubr.f32.gmra.mrb[0].mxu0 %v1402
      %v1593 = vpop.f32.mrb[0].mxu0
      %v1594 = vadd.f32 0.0, %v1593
      %v1595 = vpop.f32.mrb[0].mxu0
      %1596 = vmatprep.mubr.f32.mxu0 0.0
      %1597 = vmatmul.mubr.f32.gmra.mrb[0].mxu0 %v1405
      %v1598 = vpop.f32.mrb[0].mxu0
      %v1599 = vadd.f32 0.0, %v1598
      %v1600 = vpop.f32.mrb[0].mxu0
      %1601 = vmatprep.mubr.f32.mxu0 0.0
      %1602 = vmatmul.mubr.f32.gmra.mrb[0].mxu0 %v1408
      %v1603 = vpop.f32.mrb[0].mxu0
      %v1604 = vadd.f32 0.0, %v1603
      %v1605 = vpop.f32.mrb[0].mxu0
      %1606 = vmatprep.mubr.f32.mxu0 0.0
      %1607 = vmatmul.mubr.f32.gmra.mrb[0].mxu0 %v1411
      %v1608 = vpop.f32.mrb[0].mxu0
      %v1609 = vadd.f32 0.0, %v1608
      %v1610 = vpop.f32.mrb[0].mxu0
      %1611 = vmatprep.mubr.f32.mxu0 0.0
      %1612 = vmatmul.mubr.f32.gmra.mrb[0].mxu0 %v1414
      %v1613 = vpop.f32.mrb[0].mxu0
      %v1614 = vadd.f32 0.0, %v1613
      %v1615 = vpop.f32.mrb[0].mxu0
      %1616 = vmatprep.mubr.f32.mxu0 0.0
      %1617 = vmatmul.mubr.f32.gmra.mrb[0].mxu0 %v1417
      %v1618 = vpop.f32.mrb[0].mxu0
      %v1619 = vadd.f32 0.0, %v1618
      %v1620 = vpop.f32.mrb[0].mxu0
      %1621 = vmatprep.mubr.f32.mxu0 0.0
      %1622 = vmatmul.mubr.f32.gmra.mrb[0].mxu0 %v1420
      %v1623 = vpop.f32.mrb[0].mxu0
      %v1624 = vadd.f32 0.0, %v1623
      %v1625 = vpop.f32.mrb[0].mxu0
      %1626 = vmatprep.mubr.f32.mxu0 0.0
      %1627 = vmatmul.mubr.f32.gmra.mrb[0].mxu0 %v1423
      %v1628 = vpop.f32.mrb[0].mxu0
      %v1629 = vadd.f32 0.0, %v1628
      %v1630 = vpop.f32.mrb[0].mxu0
      %1631 = vmatprep.mubr.f32.mxu0 0.0
      %1632 = vmatmul.mubr.f32.gmra.mrb[0].mxu0 %v1426
      %v1633 = vpop.f32.mrb[0].mxu0
      %v1634 = vadd.f32 0.0, %v1633
      %v1635 = vpop.f32.mrb[0].mxu0
      %1636 = vmatprep.mubr.f32.mxu0 0.0
      %1637 = vmatmul.mubr.f32.gmra.mrb[0].mxu0 %v1429
      %v1638 = vpop.f32.mrb[0].mxu0
      %v1639 = vadd.f32 0.0, %v1638
      %v1640 = vpop.f32.mrb[0].mxu0
      %1641 = vmatprep.mubr.f32.mxu0 0.0
      %1642 = vmatmul.mubr.f32.gmra.mrb[0].mxu0 %v1432
      %v1643 = vpop.f32.mrb[0].mxu0
      %v1644 = vadd.f32 0.0, %v1643
      %v1645 = vpop.f32.mrb[0].mxu0
      %1646 = vmatprep.mubr.f32.mxu0 0.0
      %1647 = vmatmul.mubr.f32.gmra.mrb[0].mxu0 %v1435
      %v1648 = vpop.f32.mrb[0].mxu0
      %v1649 = vadd.f32 0.0, %v1648
      %v1650 = vpop.f32.mrb[0].mxu0
      %1651 = vdwg.mxu0
      %v1652 = vld [vmem:[%s381 + $0x4b0] sm:$0xff]
      %v1653 = vld [vmem:[%s381 + $0x4b8] sm:$0xff]
      %v1654 = vld [vmem:[%s381 + $0x4c0] sm:$0xff]
      %v1655 = vld [vmem:[%s381 + $0x4c8] sm:$0xff]
      %v1656 = vld [vmem:[%s381 + $0x4d0] sm:$0xff]
      %v1657 = vld [vmem:[%s381 + $0x4d8] sm:$0xff]
      %v1658 = vld [vmem:[%s381 + $0x4e0] sm:$0xff]
      %v1659 = vld [vmem:[%s381 + $0x4e8] sm:$0xff]
      %v1660 = vld [vmem:[%s381 + $0x4f0] sm:$0xff]
      %v1661 = vld [vmem:[%s381 + $0x4f8] sm:$0xff]
      %v1662 = vld [vmem:[%s381 + $0x500] sm:$0xff]
      %v1663 = vld [vmem:[%s381 + $0x508] sm:$0xff]
      %v1664 = vld [vmem:[%s381 + $0x510] sm:$0xff]
      %v1665 = vld [vmem:[%s381 + $0x518] sm:$0xff]
      %v1666 = vld [vmem:[%s381 + $0x520] sm:$0xff]
      %v1667 = vld [vmem:[%s381 + $0x528] sm:$0xff]
      %v1668 = vld [vmem:[%s381 + $0x530] sm:$0xff]
      %v1669 = vld [vmem:[%s381 + $0x538] sm:$0xff]
      %v1670 = vld [vmem:[%s381 + $0x540] sm:$0xff]
      %v1671 = vld [vmem:[%s381 + $0x548] sm:$0xff]
      %v1672 = vld [vmem:[%s381 + $0x550] sm:$0xff]
      %v1673 = vld [vmem:[%s381 + $0x558] sm:$0xff]
      %v1674 = vld [vmem:[%s381 + $0x560] sm:$0xff]
      %v1675 = vld [vmem:[%s381 + $0x568] sm:$0xff]
      %v1676 = vld [vmem:[%s381 + $0x570] sm:$0xff]
      %v1677 = vld [vmem:[%s381 + $0x578] sm:$0xff]
      %v1678 = vld [vmem:[%s381 + $0x580] sm:$0xff]
      %v1679 = vld [vmem:[%s381 + $0x588] sm:$0xff]
      %v1680 = vld [vmem:[%s381 + $0x590] sm:$0xff]
      %v1681 = vld [vmem:[%s381 + $0x598] sm:$0xff]
      %v1683 = vsel %vm421, %v1652, 0
      %v1686 = vsel %vm421, %v1653, 0
      %v1689 = vsel %vm421, %v1654, 0
      %v1692 = vsel %vm421, %v1655, 0
      %v1695 = vsel %vm421, %v1656, 0
      %v1698 = vsel %vm421, %v1657, 0
      %v1701 = vsel %vm421, %v1658, 0
      %v1704 = vsel %vm421, %v1659, 0
      %v1707 = vsel %vm421, %v1660, 0
      %v1710 = vsel %vm421, %v1661, 0
      %v1713 = vsel %vm421, %v1662, 0
      %v1716 = vsel %vm421, %v1663, 0
      %v1719 = vsel %vm421, %v1664, 0
      %v1722 = vsel %vm421, %v1665, 0
      %v1725 = vsel %vm421, %v1666, 0
      %v1728 = vsel %vm421, %v1667, 0
      %v1731 = vsel %vm421, %v1668, 0
      %v1734 = vsel %vm421, %v1669, 0
      %v1737 = vsel %vm421, %v1670, 0
      %v1740 = vsel %vm421, %v1671, 0
      %v1743 = vsel %vm421, %v1672, 0
      %v1746 = vsel %vm421, %v1673, 0
      %v1749 = vsel %vm421, %v1674, 0
      %v1752 = vsel %vm421, %v1675, 0
      %v1755 = vsel %vm421, %v1676, 0
      %v1758 = vsel %vm421, %v1677, 0
      %v1761 = vsel %vm421, %v1678, 0
      %v1764 = vsel %vm421, %v1679, 0
      %v1767 = vsel %vm421, %v1680, 0
      %v1770 = vsel %vm421, %v1681, 0
      %1772 = vmatprep.subr.mxu0 0.0
      %1773 = vmatpush1.msra.mxu0 %v1345
      %1774 = vmatprep.subr.mxu0 0.0
      %1775 = vmatpush1.msra.mxu0 %v1346
      %1776 = vmatprep.subr.mxu0 0.0
      %1777 = vmatpush1.msra.mxu0 0.0
      %1778 = vmatprep.subr.mxu0 0.0
      %1779 = vmatpush1.msra.mxu0 0.0
      %1780 = vmatprep.subr.mxu0 0.0
      %1781 = vmatpush1.msra.mxu0 0.0
      %1782 = vmatprep.subr.mxu0 0.0
      %1783 = vmatpush1.msra.mxu0 0.0
      %1784 = vmatprep.subr.mxu0 0.0
      %1785 = vmatpush1.msra.mxu0 0.0
      %1786 = vmatprep.subr.mxu0 0.0
      %1787 = vmatpush1.msra.mxu0 0.0
      %1788 = vmatprep.subr.mxu0 0.0
      %1789 = vmatpush1.msra.mxu0 0.0
      %1790 = vmatprep.subr.mxu0 0.0
      %1791 = vmatpush1.msra.mxu0 0.0
      %1792 = vmatprep.subr.mxu0 0.0
      %1793 = vmatpush1.msra.mxu0 0.0
      %1794 = vmatprep.subr.mxu0 0.0
      %1795 = vmatpush1.msra.mxu0 0.0
      %1796 = vmatprep.subr.mxu0 0.0
      %1797 = vmatpush1.msra.mxu0 0.0
      %1798 = vmatprep.subr.mxu0 0.0
      %1799 = vmatpush1.msra.mxu0 0.0
      %1800 = vmatprep.subr.mxu0 0.0
      %1801 = vmatpush1.msra.mxu0 0.0
      %1802 = vmatprep.subr.mxu0 0.0
      %1803 = vmatpush1.msra.mxu0 0.0
      %1804 = vmatprep.subr.mxu0 0.0
      %1805 = vmatpush1.msra.mxu0 0.0
      %1806 = vmatprep.subr.mxu0 0.0
      %1807 = vmatpush1.msra.mxu0 0.0
      %1808 = vmatprep.subr.mxu0 0.0
      %1809 = vmatpush1.msra.mxu0 0.0
      %1810 = vmatprep.subr.mxu0 0.0
      %1811 = vmatpush1.msra.mxu0 0.0
      %1812 = vmatprep.subr.mxu0 0.0
      %1813 = vmatpush1.msra.mxu0 0.0
      %1814 = vmatprep.subr.mxu0 0.0
      %1815 = vmatpush1.msra.mxu0 0.0
      %1816 = vmatprep.subr.mxu0 0.0
      %1817 = vmatpush1.msra.mxu0 0.0
      %1818 = vmatprep.subr.mxu0 0.0
      %1819 = vmatpush1.msra.mxu0 0.0
      %1820 = vmatprep.subr.mxu0 0.0
      %1821 = vmatpush1.msra.mxu0 0.0
      %1822 = vmatprep.subr.mxu0 0.0
      %1823 = vmatpush1.msra.mxu0 0.0
      %1824 = vmatprep.subr.mxu0 0.0
      %1825 = vmatpush1.msra.mxu0 0.0
      %1826 = vmatprep.subr.mxu0 0.0
      %1827 = vmatpush1.msra.mxu0 0.0
      %1828 = vmatprep.subr.mxu0 0.0
      %1829 = vmatpush1.msra.mxu0 0.0
      %1830 = vmatprep.subr.mxu0 0.0
      %1831 = vmatpush1.msra.mxu0 0.0
      %1832 = vmatprep.subr.mxu0 0.0
      %1833 = vmatpush1.msra.mxu0 0.0
      %1834 = vmatprep.subr.mxu0 0.0
      %1835 = vmatpush1.msra.mxu0 0.0
      %1836 = vmatprep.mubr.f32.mxu0 0.0
      %1837 = vmatmul.mubr.f32.gmra.mrb[0].mxu0 %v1683
      %v1838 = vpop.f32.mrb[0].mxu0
      %v1839 = vadd.f32 0.0, %v1838
      %v1840 = vpop.f32.mrb[0].mxu0
      %1841 = vmatprep.mubr.f32.mxu0 0.0
      %1842 = vmatmul.mubr.f32.gmra.mrb[0].mxu0 %v1686
      %v1843 = vpop.f32.mrb[0].mxu0
      %v1844 = vadd.f32 0.0, %v1843
      %v1845 = vpop.f32.mrb[0].mxu0
      %1846 = vmatprep.mubr.f32.mxu0 0.0
      %1847 = vmatmul.mubr.f32.gmra.mrb[0].mxu0 %v1689
      %v1848 = vpop.f32.mrb[0].mxu0
      %v1849 = vadd.f32 0.0, %v1848
      %v1850 = vpop.f32.mrb[0].mxu0
      %1851 = vmatprep.mubr.f32.mxu0 0.0
      %1852 = vmatmul.mubr.f32.gmra.mrb[0].mxu0 %v1692
      %v1853 = vpop.f32.mrb[0].mxu0
      %v1854 = vadd.f32 0.0, %v1853
      %v1855 = vpop.f32.mrb[0].mxu0
      %1856 = vmatprep.mubr.f32.mxu0 0.0
      %1857 = vmatmul.mubr.f32.gmra.mrb[0].mxu0 %v1695
      %v1858 = vpop.f32.mrb[0].mxu0
      %v1859 = vadd.f32 0.0, %v1858
      %v1860 = vpop.f32.mrb[0].mxu0
      %1861 = vmatprep.mubr.f32.mxu0 0.0
      %1862 = vmatmul.mubr.f32.gmra.mrb[0].mxu0 %v1698
      %v1863 = vpop.f32.mrb[0].mxu0
      %v1864 = vadd.f32 0.0, %v1863
      %v1865 = vpop.f32.mrb[0].mxu0
      %1866 = vmatprep.mubr.f32.mxu0 0.0
      %1867 = vmatmul.mubr.f32.gmra.mrb[0].mxu0 %v1701
      %v1868 = vpop.f32.mrb[0].mxu0
      %v1869 = vadd.f32 0.0, %v1868
      %v1870 = vpop.f32.mrb[0].mxu0
      %1871 = vmatprep.mubr.f32.mxu0 0.0
      %1872 = vmatmul.mubr.f32.gmra.mrb[0].mxu0 %v1704
      %v1873 = vpop.f32.mrb[0].mxu0
      %v1874 = vadd.f32 0.0, %v1873
      %v1875 = vpop.f32.mrb[0].mxu0
      %1876 = vmatprep.mubr.f32.mxu0 0.0
      %1877 = vmatmul.mubr.f32.gmra.mrb[0].mxu0 %v1707
      %v1878 = vpop.f32.mrb[0].mxu0
      %v1879 = vadd.f32 0.0, %v1878
      %v1880 = vpop.f32.mrb[0].mxu0
      %1881 = vmatprep.mubr.f32.mxu0 0.0
      %1882 = vmatmul.mubr.f32.gmra.mrb[0].mxu0 %v1710
      %v1883 = vpop.f32.mrb[0].mxu0
      %v1884 = vadd.f32 0.0, %v1883
      %v1885 = vpop.f32.mrb[0].mxu0
      %1886 = vmatprep.mubr.f32.mxu0 0.0
      %1887 = vmatmul.mubr.f32.gmra.mrb[0].mxu0 %v1713
      %v1888 = vpop.f32.mrb[0].mxu0
      %v1889 = vadd.f32 0.0, %v1888
      %v1890 = vpop.f32.mrb[0].mxu0
      %1891 = vmatprep.mubr.f32.mxu0 0.0
      %1892 = vmatmul.mubr.f32.gmra.mrb[0].mxu0 %v1716
      %v1893 = vpop.f32.mrb[0].mxu0
      %v1894 = vadd.f32 0.0, %v1893
      %v1895 = vpop.f32.mrb[0].mxu0
      %1896 = vmatprep.mubr.f32.mxu0 0.0
      %1897 = vmatmul.mubr.f32.gmra.mrb[0].mxu0 %v1719
      %v1898 = vpop.f32.mrb[0].mxu0
      %v1899 = vadd.f32 0.0, %v1898
      %v1900 = vpop.f32.mrb[0].mxu0
      %1901 = vmatprep.mubr.f32.mxu0 0.0
      %1902 = vmatmul.mubr.f32.gmra.mrb[0].mxu0 %v1722
      %v1903 = vpop.f32.mrb[0].mxu0
      %v1904 = vadd.f32 0.0, %v1903
      %v1905 = vpop.f32.mrb[0].mxu0
      %1906 = vmatprep.mubr.f32.mxu0 0.0
      %1907 = vmatmul.mubr.f32.gmra.mrb[0].mxu0 %v1725
      %v1908 = vpop.f32.mrb[0].mxu0
      %v1909 = vadd.f32 0.0, %v1908
      %v1910 = vpop.f32.mrb[0].mxu0
      %1911 = vmatprep.mubr.f32.mxu0 0.0
      %1912 = vmatmul.mubr.f32.gmra.mrb[0].mxu0 %v1728
      %v1913 = vpop.f32.mrb[0].mxu0
      %v1914 = vadd.f32 0.0, %v1913
      %v1915 = vpop.f32.mrb[0].mxu0
      %1916 = vmatprep.mubr.f32.mxu0 0.0
      %1917 = vmatmul.mubr.f32.gmra.mrb[0].mxu0 %v1731
      %v1918 = vpop.f32.mrb[0].mxu0
      %v1919 = vadd.f32 0.0, %v1918
      %v1920 = vpop.f32.mrb[0].mxu0
      %1921 = vmatprep.mubr.f32.mxu0 0.0
      %1922 = vmatmul.mubr.f32.gmra.mrb[0].mxu0 %v1734
      %v1923 = vpop.f32.mrb[0].mxu0
      %v1924 = vadd.f32 0.0, %v1923
      %v1925 = vpop.f32.mrb[0].mxu0
      %1926 = vmatprep.mubr.f32.mxu0 0.0
      %1927 = vmatmul.mubr.f32.gmra.mrb[0].mxu0 %v1737
      %v1928 = vpop.f32.mrb[0].mxu0
      %v1929 = vadd.f32 0.0, %v1928
      %v1930 = vpop.f32.mrb[0].mxu0
      %1931 = vmatprep.mubr.f32.mxu0 0.0
      %1932 = vmatmul.mubr.f32.gmra.mrb[0].mxu0 %v1740
      %v1933 = vpop.f32.mrb[0].mxu0
      %v1934 = vadd.f32 0.0, %v1933
      %v1935 = vpop.f32.mrb[0].mxu0
      %1936 = vmatprep.mubr.f32.mxu0 0.0
      %1937 = vmatmul.mubr.f32.gmra.mrb[0].mxu0 %v1743
      %v1938 = vpop.f32.mrb[0].mxu0
      %v1939 = vadd.f32 0.0, %v1938
      %v1940 = vpop.f32.mrb[0].mxu0
      %1941 = vmatprep.mubr.f32.mxu0 0.0
      %1942 = vmatmul.mubr.f32.gmra.mrb[0].mxu0 %v1746
      %v1943 = vpop.f32.mrb[0].mxu0
      %v1944 = vadd.f32 0.0, %v1943
      %v1945 = vpop.f32.mrb[0].mxu0
      %1946 = vmatprep.mubr.f32.mxu0 0.0
      %1947 = vmatmul.mubr.f32.gmra.mrb[0].mxu0 %v1749
      %v1948 = vpop.f32.mrb[0].mxu0
      %v1949 = vadd.f32 0.0, %v1948
      %v1950 = vpop.f32.mrb[0].mxu0
      %1951 = vmatprep.mubr.f32.mxu0 0.0
      %1952 = vmatmul.mubr.f32.gmra.mrb[0].mxu0 %v1752
      %v1953 = vpop.f32.mrb[0].mxu0
      %v1954 = vadd.f32 0.0, %v1953
      %v1955 = vpop.f32.mrb[0].mxu0
      %1956 = vmatprep.mubr.f32.mxu0 0.0
      %1957 = vmatmul.mubr.f32.gmra.mrb[0].mxu0 %v1755
      %v1958 = vpop.f32.mrb[0].mxu0
      %v1959 = vadd.f32 0.0, %v1958
      %v1960 = vpop.f32.mrb[0].mxu0
      %1961 = vmatprep.mubr.f32.mxu0 0.0
      %1962 = vmatmul.mubr.f32.gmra.mrb[0].mxu0 %v1758
      %v1963 = vpop.f32.mrb[0].mxu0
      %v1964 = vadd.f32 0.0, %v1963
      %v1965 = vpop.f32.mrb[0].mxu0
      %1966 = vmatprep.mubr.f32.mxu0 0.0
      %1967 = vmatmul.mubr.f32.gmra.mrb[0].mxu0 %v1761
      %v1968 = vpop.f32.mrb[0].mxu0
      %v1969 = vadd.f32 0.0, %v1968
      %v1970 = vpop.f32.mrb[0].mxu0
      %1971 = vmatprep.mubr.f32.mxu0 0.0
      %1972 = vmatmul.mubr.f32.gmra.mrb[0].mxu0 %v1764
      %v1973 = vpop.f32.mrb[0].mxu0
      %v1974 = vadd.f32 0.0, %v1973
      %v1975 = vpop.f32.mrb[0].mxu0
      %1976 = vmatprep.mubr.f32.mxu0 0.0
      %1977 = vmatmul.mubr.f32.gmra.mrb[0].mxu0 %v1767
      %v1978 = vpop.f32.mrb[0].mxu0
      %v1979 = vadd.f32 0.0, %v1978
      %v1980 = vpop.f32.mrb[0].mxu0
      %1981 = vmatprep.mubr.f32.mxu0 0.0
      %1982 = vmatmul.mubr.f32.gmra.mrb[0].mxu0 %v1770
      %v1983 = vpop.f32.mrb[0].mxu0
      %v1984 = vadd.f32 0.0, %v1983
      %v1985 = vpop.f32.mrb[0].mxu0
      %1986 = vdwg.mxu0
      %v1987 = vmul.f32 %v1504, %v1066
      %v1988 = vmul.f32 %v1509, %v1066
      %v1989 = vmul.f32 %v1514, %v1066
      %v1990 = vmul.f32 %v1519, %v1066
      %v1991 = vmul.f32 %v1524, %v1066
      %v1992 = vmul.f32 %v1529, %v1066
      %v1993 = vmul.f32 %v1534, %v1066
      %v1994 = vmul.f32 %v1539, %v1066
      %v1995 = vmul.f32 %v1544, %v1066
      %v1996 = vmul.f32 %v1549, %v1066
      %v1997 = vmul.f32 %v1554, %v1066
      %v1998 = vmul.f32 %v1559, %v1066
      %v1999 = vmul.f32 %v1564, %v1066
      %v2000 = vmul.f32 %v1569, %v1066
      %v2001 = vmul.f32 %v1574, %v1066
      %v2002 = vmul.f32 %v1579, %v1066
      %v2003 = vmul.f32 %v1584, %v1066
      %v2004 = vmul.f32 %v1589, %v1066
      %v2005 = vmul.f32 %v1594, %v1066
      %v2006 = vmul.f32 %v1599, %v1066
      %v2007 = vmul.f32 %v1604, %v1066
      %v2008 = vmul.f32 %v1609, %v1066
      %v2009 = vmul.f32 %v1614, %v1066
      %v2010 = vmul.f32 %v1619, %v1066
      %v2011 = vmul.f32 %v1624, %v1066
      %v2012 = vmul.f32 %v1629, %v1066
      %v2013 = vmul.f32 %v1634, %v1066
      %v2014 = vmul.f32 %v1639, %v1066
      %v2015 = vmul.f32 %v1644, %v1066
      %v2016 = vmul.f32 %v1649, %v1066
      %v2017 = vadd.f32 %v1987, %v1102
      %v2018 = vadd.f32 %v1988, %v1102
      %v2019 = vadd.f32 %v1989, %v1102
      %v2020 = vadd.f32 %v1990, %v1102
      %v2021 = vadd.f32 %v1991, %v1102
      %v2022 = vadd.f32 %v1992, %v1102
      %v2023 = vadd.f32 %v1993, %v1102
      %v2024 = vadd.f32 %v1994, %v1102
      %v2025 = vadd.f32 %v1995, %v1102
      %v2026 = vadd.f32 %v1996, %v1102
      %v2027 = vadd.f32 %v1997, %v1102
      %v2028 = vadd.f32 %v1998, %v1102
      %v2029 = vadd.f32 %v1999, %v1102
      %v2030 = vadd.f32 %v2000, %v1102
      %v2031 = vadd.f32 %v2001, %v1102
      %v2032 = vadd.f32 %v2002, %v1102
      %v2033 = vadd.f32 %v2003, %v1102
      %v2034 = vadd.f32 %v2004, %v1102
      %v2035 = vadd.f32 %v2005, %v1102
      %v2036 = vadd.f32 %v2006, %v1102
      %v2037 = vadd.f32 %v2007, %v1102
      %v2038 = vadd.f32 %v2008, %v1102
      %v2039 = vadd.f32 %v2009, %v1102
      %v2040 = vadd.f32 %v2010, %v1102
      %v2041 = vadd.f32 %v2011, %v1102
      %v2042 = vadd.f32 %v2012, %v1102
      %v2043 = vadd.f32 %v2013, %v1102
      %v2044 = vadd.f32 %v2014, %v1102
      %v2045 = vadd.f32 %v2015, %v1102
      %v2046 = vadd.f32 %v2016, %v1102
      %v2047 = vmax.f32 %v2017, 0.0
      %v2048 = vmax.f32 %v2018, 0.0
      %v2049 = vmax.f32 %v2019, 0.0
      %v2050 = vmax.f32 %v2020, 0.0
      %v2051 = vmax.f32 %v2021, 0.0
      %v2052 = vmax.f32 %v2022, 0.0
      %v2053 = vmax.f32 %v2023, 0.0
      %v2054 = vmax.f32 %v2024, 0.0
      %v2055 = vmax.f32 %v2025, 0.0
      %v2056 = vmax.f32 %v2026, 0.0
      %v2057 = vmax.f32 %v2027, 0.0
      %v2058 = vmax.f32 %v2028, 0.0
      %v2059 = vmax.f32 %v2029, 0.0
      %v2060 = vmax.f32 %v2030, 0.0
      %v2061 = vmax.f32 %v2031, 0.0
      %v2062 = vmax.f32 %v2032, 0.0
      %v2063 = vmax.f32 %v2033, 0.0
      %v2064 = vmax.f32 %v2034, 0.0
      %v2065 = vmax.f32 %v2035, 0.0
      %v2066 = vmax.f32 %v2036, 0.0
      %v2067 = vmax.f32 %v2037, 0.0
      %v2068 = vmax.f32 %v2038, 0.0
      %v2069 = vmax.f32 %v2039, 0.0
      %v2070 = vmax.f32 %v2040, 0.0
      %v2071 = vmax.f32 %v2041, 0.0
      %v2072 = vmax.f32 %v2042, 0.0
      %v2073 = vmax.f32 %v2043, 0.0
      %v2074 = vmax.f32 %v2044, 0.0
      %v2075 = vmax.f32 %v2045, 0.0
      %v2076 = vmax.f32 %v2046, 0.0
      %v2077 = vmul.f32 %v1839, %v1066
      %v2078 = vmul.f32 %v1844, %v1066
      %v2079 = vmul.f32 %v1849, %v1066
      %v2080 = vmul.f32 %v1854, %v1066
      %v2081 = vmul.f32 %v1859, %v1066
      %v2082 = vmul.f32 %v1864, %v1066
      %v2083 = vmul.f32 %v1869, %v1066
      %v2084 = vmul.f32 %v1874, %v1066
      %v2085 = vmul.f32 %v1879, %v1066
      %v2086 = vmul.f32 %v1884, %v1066
      %v2087 = vmul.f32 %v1889, %v1066
      %v2088 = vmul.f32 %v1894, %v1066
      %v2089 = vmul.f32 %v1899, %v1066
      %v2090 = vmul.f32 %v1904, %v1066
      %v2091 = vmul.f32 %v1909, %v1066
      %v2092 = vmul.f32 %v1914, %v1066
      %v2093 = vmul.f32 %v1919, %v1066
      %v2094 = vmul.f32 %v1924, %v1066
      %v2095 = vmul.f32 %v1929, %v1066
      %v2096 = vmul.f32 %v1934, %v1066
      %v2097 = vmul.f32 %v1939, %v1066
      %v2098 = vmul.f32 %v1944, %v1066
      %v2099 = vmul.f32 %v1949, %v1066
      %v2100 = vmul.f32 %v1954, %v1066
      %v2101 = vmul.f32 %v1959, %v1066
      %v2102 = vmul.f32 %v1964, %v1066
      %v2103 = vmul.f32 %v1969, %v1066
      %v2104 = vmul.f32 %v1974, %v1066
      %v2105 = vmul.f32 %v1979, %v1066
      %v2106 = vmul.f32 %v1984, %v1066
      %v2107 = vadd.f32 %v2077, %v1102
      %v2108 = vadd.f32 %v2078, %v1102
      %v2109 = vadd.f32 %v2079, %v1102
      %v2110 = vadd.f32 %v2080, %v1102
      %v2111 = vadd.f32 %v2081, %v1102
      %v2112 = vadd.f32 %v2082, %v1102
      %v2113 = vadd.f32 %v2083, %v1102
      %v2114 = vadd.f32 %v2084, %v1102
      %v2115 = vadd.f32 %v2085, %v1102
      %v2116 = vadd.f32 %v2086, %v1102
      %v2117 = vadd.f32 %v2087, %v1102
      %v2118 = vadd.f32 %v2088, %v1102
      %v2119 = vadd.f32 %v2089, %v1102
      %v2120 = vadd.f32 %v2090, %v1102
      %v2121 = vadd.f32 %v2091, %v1102
      %v2122 = vadd.f32 %v2092, %v1102
      %v2123 = vadd.f32 %v2093, %v1102
      %v2124 = vadd.f32 %v2094, %v1102
      %v2125 = vadd.f32 %v2095, %v1102
      %v2126 = vadd.f32 %v2096, %v1102
      %v2127 = vadd.f32 %v2097, %v1102
      %v2128 = vadd.f32 %v2098, %v1102
      %v2129 = vadd.f32 %v2099, %v1102
      %v2130 = vadd.f32 %v2100, %v1102
      %v2131 = vadd.f32 %v2101, %v1102
      %v2132 = vadd.f32 %v2102, %v1102
      %v2133 = vadd.f32 %v2103, %v1102
      %v2134 = vadd.f32 %v2104, %v1102
      %v2135 = vadd.f32 %v2105, %v1102
      %v2136 = vadd.f32 %v2106, %v1102
      %v2137 = vmax.f32 %v2107, 0.0
      %v2138 = vmax.f32 %v2108, 0.0
      %v2139 = vmax.f32 %v2109, 0.0
      %v2140 = vmax.f32 %v2110, 0.0
      %v2141 = vmax.f32 %v2111, 0.0
      %v2142 = vmax.f32 %v2112, 0.0
      %v2143 = vmax.f32 %v2113, 0.0
      %v2144 = vmax.f32 %v2114, 0.0
      %v2145 = vmax.f32 %v2115, 0.0
      %v2146 = vmax.f32 %v2116, 0.0
      %v2147 = vmax.f32 %v2117, 0.0
      %v2148 = vmax.f32 %v2118, 0.0
      %v2149 = vmax.f32 %v2119, 0.0
      %v2150 = vmax.f32 %v2120, 0.0
      %v2151 = vmax.f32 %v2121, 0.0
      %v2152 = vmax.f32 %v2122, 0.0
      %v2153 = vmax.f32 %v2123, 0.0
      %v2154 = vmax.f32 %v2124, 0.0
      %v2155 = vmax.f32 %v2125, 0.0
      %v2156 = vmax.f32 %v2126, 0.0
      %v2157 = vmax.f32 %v2127, 0.0
      %v2158 = vmax.f32 %v2128, 0.0
      %v2159 = vmax.f32 %v2129, 0.0
      %v2160 = vmax.f32 %v2130, 0.0
      %v2161 = vmax.f32 %v2131, 0.0
      %v2162 = vmax.f32 %v2132, 0.0
      %v2163 = vmax.f32 %v2133, 0.0
      %v2164 = vmax.f32 %v2134, 0.0
      %v2165 = vmax.f32 %v2135, 0.0
      %v2166 = vmax.f32 %v2136, 0.0
      %v2167 = vmax.f32 %v2047, %v2137
      %v2168 = vmax.f32 %v2048, %v2138
      %v2169 = vmax.f32 %v2049, %v2139
      %v2170 = vmax.f32 %v2050, %v2140
      %v2171 = vmax.f32 %v2051, %v2141
      %v2172 = vmax.f32 %v2052, %v2142
      %v2173 = vmax.f32 %v2053, %v2143
      %v2174 = vmax.f32 %v2054, %v2144
      %v2175 = vmax.f32 %v2055, %v2145
      %v2176 = vmax.f32 %v2056, %v2146
      %v2177 = vmax.f32 %v2057, %v2147
      %v2178 = vmax.f32 %v2058, %v2148
      %v2179 = vmax.f32 %v2059, %v2149
      %v2180 = vmax.f32 %v2060, %v2150
      %v2181 = vmax.f32 %v2061, %v2151
      %v2182 = vmax.f32 %v2062, %v2152
      %v2183 = vmax.f32 %v2063, %v2153
      %v2184 = vmax.f32 %v2064, %v2154
      %v2185 = vmax.f32 %v2065, %v2155
      %v2186 = vmax.f32 %v2066, %v2156
      %v2187 = vmax.f32 %v2067, %v2157
      %v2188 = vmax.f32 %v2068, %v2158
      %v2189 = vmax.f32 %v2069, %v2159
      %v2190 = vmax.f32 %v2070, %v2160
      %v2191 = vmax.f32 %v2071, %v2161
      %v2192 = vmax.f32 %v2072, %v2162
      %v2193 = vmax.f32 %v2073, %v2163
      %v2194 = vmax.f32 %v2074, %v2164
      %v2195 = vmax.f32 %v2075, %v2165
      %v2196 = vmax.f32 %v2076, %v2166
      %2197 = vst.msk [vmem:[#allocation2 + $0xf0] sm:$0xff] %vm1284, %v2167
      %2198 = vst.msk [vmem:[#allocation2 + $0xf8] sm:$0xff] %vm1284, %v2168
      %2199 = vst.msk [vmem:[#allocation2 + $0x100] sm:$0xff] %vm1284, %v2169
      %2200 = vst.msk [vmem:[#allocation2 + $0x108] sm:$0xff] %vm1284, %v2170
      %2201 = vst.msk [vmem:[#allocation2 + $0x110] sm:$0xff] %vm1284, %v2171
      %2202 = vst.msk [vmem:[#allocation2 + $0x118] sm:$0xff] %vm1284, %v2172
      %2203 = vst.msk [vmem:[#allocation2 + $0x120] sm:$0xff] %vm1284, %v2173
      %2204 = vst.msk [vmem:[#allocation2 + $0x128] sm:$0xff] %vm1284, %v2174
      %2205 = vst.msk [vmem:[#allocation2 + $0x130] sm:$0xff] %vm1284, %v2175
      %2206 = vst.msk [vmem:[#allocation2 + $0x138] sm:$0xff] %vm1284, %v2176
      %2207 = vst.msk [vmem:[#allocation2 + $0x140] sm:$0xff] %vm1284, %v2177
      %2208 = vst.msk [vmem:[#allocation2 + $0x148] sm:$0xff] %vm1284, %v2178
      %2209 = vst.msk [vmem:[#allocation2 + $0x150] sm:$0xff] %vm1284, %v2179
      %2210 = vst.msk [vmem:[#allocation2 + $0x158] sm:$0xff] %vm1284, %v2180
      %2211 = vst.msk [vmem:[#allocation2 + $0x160] sm:$0xff] %vm1284, %v2181
      %2212 = vst.msk [vmem:[#allocation2 + $0x168] sm:$0xff] %vm1284, %v2182
      %2213 = vst.msk [vmem:[#allocation2 + $0x170] sm:$0xff] %vm1284, %v2183
      %2214 = vst.msk [vmem:[#allocation2 + $0x178] sm:$0xff] %vm1284, %v2184
      %2215 = vst.msk [vmem:[#allocation2 + $0x180] sm:$0xff] %vm1284, %v2185
      %2216 = vst.msk [vmem:[#allocation2 + $0x188] sm:$0xff] %vm1284, %v2186
      %2217 = vst.msk [vmem:[#allocation2 + $0x190] sm:$0xff] %vm1284, %v2187
      %2218 = vst.msk [vmem:[#allocation2 + $0x198] sm:$0xff] %vm1284, %v2188
      %2219 = vst.msk [vmem:[#allocation2 + $0x1a0] sm:$0xff] %vm1284, %v2189
      %2220 = vst.msk [vmem:[#allocation2 + $0x1a8] sm:$0xff] %vm1284, %v2190
      %2221 = vst.msk [vmem:[#allocation2 + $0x1b0] sm:$0xff] %vm1284, %v2191
      %2222 = vst.msk [vmem:[#allocation2 + $0x1b8] sm:$0xff] %vm1284, %v2192
      %2223 = vst.msk [vmem:[#allocation2 + $0x1c0] sm:$0xff] %vm1284, %v2193
      %2224 = vst.msk [vmem:[#allocation2 + $0x1c8] sm:$0xff] %vm1284, %v2194
      %2225 = vst.msk [vmem:[#allocation2 + $0x1d0] sm:$0xff] %vm1284, %v2195
      %2226 = vst.msk [vmem:[#allocation2 + $0x1d8] sm:$0xff] %vm1284, %v2196
      %v2227 = vld [vmem:[%s381 + $0x1e0] sm:$0xff]
      %v2228 = vld [vmem:[%s381 + $0x1e8] sm:$0xff]
      %v2229 = vld [vmem:[%s381 + $0x1f0] sm:$0xff]
      %v2230 = vld [vmem:[%s381 + $0x1f8] sm:$0xff]
      %v2231 = vld [vmem:[%s381 + $0x200] sm:$0xff]
      %v2232 = vld [vmem:[%s381 + $0x208] sm:$0xff]
      %v2233 = vld [vmem:[%s381 + $0x210] sm:$0xff]
      %v2234 = vld [vmem:[%s381 + $0x218] sm:$0xff]
      %v2235 = vld [vmem:[%s381 + $0x220] sm:$0xff]
      %v2236 = vld [vmem:[%s381 + $0x228] sm:$0xff]
      %v2237 = vld [vmem:[%s381 + $0x230] sm:$0xff]
      %v2238 = vld [vmem:[%s381 + $0x238] sm:$0xff]
      %v2239 = vld [vmem:[%s381 + $0x240] sm:$0xff]
      %v2240 = vld [vmem:[%s381 + $0x248] sm:$0xff]
      %v2241 = vld [vmem:[%s381 + $0x250] sm:$0xff]
      %v2242 = vld [vmem:[%s381 + $0x258] sm:$0xff]
      %v2243 = vld [vmem:[%s381 + $0x260] sm:$0xff]
      %v2244 = vld [vmem:[%s381 + $0x268] sm:$0xff]
      %v2245 = vld [vmem:[%s381 + $0x270] sm:$0xff]
      %v2246 = vld [vmem:[%s381 + $0x278] sm:$0xff]
      %v2247 = vld [vmem:[%s381 + $0x280] sm:$0xff]
      %v2248 = vld [vmem:[%s381 + $0x288] sm:$0xff]
      %v2249 = vld [vmem:[%s381 + $0x290] sm:$0xff]
      %v2250 = vld [vmem:[%s381 + $0x298] sm:$0xff]
      %v2251 = vld [vmem:[%s381 + $0x2a0] sm:$0xff]
      %v2252 = vld [vmem:[%s381 + $0x2a8] sm:$0xff]
      %v2253 = vld [vmem:[%s381 + $0x2b0] sm:$0xff]
      %v2254 = vld [vmem:[%s381 + $0x2b8] sm:$0xff]
      %v2255 = vld [vmem:[%s381 + $0x2c0] sm:$0xff]
      %v2256 = vld [vmem:[%s381 + $0x2c8] sm:$0xff]
      %v2257 = vld [vmem:[%s1] sm:$0xff]
      %v2258 = vld [vmem:[%s1 + $0x8] sm:$0xff]
      %v2260 = vsel %vm421, %v2227, 0
      %v2263 = vsel %vm421, %v2228, 0
      %v2266 = vsel %vm421, %v2229, 0
      %v2269 = vsel %vm421, %v2230, 0
      %v2272 = vsel %vm421, %v2231, 0
      %v2275 = vsel %vm421, %v2232, 0
      %v2278 = vsel %vm421, %v2233, 0
      %v2281 = vsel %vm421, %v2234, 0
      %v2284 = vsel %vm421, %v2235, 0
      %v2287 = vsel %vm421, %v2236, 0
      %v2290 = vsel %vm421, %v2237, 0
      %v2293 = vsel %vm421, %v2238, 0
      %v2296 = vsel %vm421, %v2239, 0
      %v2299 = vsel %vm421, %v2240, 0
      %v2302 = vsel %vm421, %v2241, 0
      %v2305 = vsel %vm421, %v2242, 0
      %v2308 = vsel %vm421, %v2243, 0
      %v2311 = vsel %vm421, %v2244, 0
      %v2314 = vsel %vm421, %v2245, 0
      %v2317 = vsel %vm421, %v2246, 0
      %v2320 = vsel %vm421, %v2247, 0
      %v2323 = vsel %vm421, %v2248, 0
      %v2326 = vsel %vm421, %v2249, 0
      %v2329 = vsel %vm421, %v2250, 0
      %v2332 = vsel %vm421, %v2251, 0
      %v2335 = vsel %vm421, %v2252, 0
      %v2338 = vsel %vm421, %v2253, 0
      %v2341 = vsel %vm421, %v2254, 0
      %v2344 = vsel %vm421, %v2255, 0
      %v2347 = vsel %vm421, %v2256, 0
      %2349 = vmatprep.subr.mxu0 0.0
      %2350 = vmatpush1.msra.mxu0 %v2257
      %2351 = vmatprep.subr.mxu0 0.0
      %2352 = vmatpush1.msra.mxu0 %v2258
      %2353 = vmatprep.subr.mxu0 0.0
      %2354 = vmatpush1.msra.mxu0 0.0
      %2355 = vmatprep.subr.mxu0 0.0
      %2356 = vmatpush1.msra.mxu0 0.0
      %2357 = vmatprep.subr.mxu0 0.0
      %2358 = vmatpush1.msra.mxu0 0.0
      %2359 = vmatprep.subr.mxu0 0.0
      %2360 = vmatpush1.msra.mxu0 0.0
      %2361 = vmatprep.subr.mxu0 0.0
      %2362 = vmatpush1.msra.mxu0 0.0
      %2363 = vmatprep.subr.mxu0 0.0
      %2364 = vmatpush1.msra.mxu0 0.0
      %2365 = vmatprep.subr.mxu0 0.0
      %2366 = vmatpush1.msra.mxu0 0.0
      %2367 = vmatprep.subr.mxu0 0.0
      %2368 = vmatpush1.msra.mxu0 0.0
      %2369 = vmatprep.subr.mxu0 0.0
      %2370 = vmatpush1.msra.mxu0 0.0
      %2371 = vmatprep.subr.mxu0 0.0
      %2372 = vmatpush1.msra.mxu0 0.0
      %2373 = vmatprep.subr.mxu0 0.0
      %2374 = vmatpush1.msra.mxu0 0.0
      %2375 = vmatprep.subr.mxu0 0.0
      %2376 = vmatpush1.msra.mxu0 0.0
      %2377 = vmatprep.subr.mxu0 0.0
      %2378 = vmatpush1.msra.mxu0 0.0
      %2379 = vmatprep.subr.mxu0 0.0
      %2380 = vmatpush1.msra.mxu0 0.0
      %2381 = vmatprep.subr.mxu0 0.0
      %2382 = vmatpush1.msra.mxu0 0.0
      %2383 = vmatprep.subr.mxu0 0.0
      %2384 = vmatpush1.msra.mxu0 0.0
      %2385 = vmatprep.subr.mxu0 0.0
      %2386 = vmatpush1.msra.mxu0 0.0
      %2387 = vmatprep.subr.mxu0 0.0
      %2388 = vmatpush1.msra.mxu0 0.0
      %2389 = vmatprep.subr.mxu0 0.0
      %2390 = vmatpush1.msra.mxu0 0.0
      %2391 = vmatprep.subr.mxu0 0.0
      %2392 = vmatpush1.msra.mxu0 0.0
      %2393 = vmatprep.subr.mxu0 0.0
      %2394 = vmatpush1.msra.mxu0 0.0
      %2395 = vmatprep.subr.mxu0 0.0
      %2396 = vmatpush1.msra.mxu0 0.0
      %2397 = vmatprep.subr.mxu0 0.0
      %2398 = vmatpush1.msra.mxu0 0.0
      %2399 = vmatprep.subr.mxu0 0.0
      %2400 = vmatpush1.msra.mxu0 0.0
      %2401 = vmatprep.subr.mxu0 0.0
      %2402 = vmatpush1.msra.mxu0 0.0
      %2403 = vmatprep.subr.mxu0 0.0
      %2404 = vmatpush1.msra.mxu0 0.0
      %2405 = vmatprep.subr.mxu0 0.0
      %2406 = vmatpush1.msra.mxu0 0.0
      %2407 = vmatprep.subr.mxu0 0.0
      %2408 = vmatpush1.msra.mxu0 0.0
      %2409 = vmatprep.subr.mxu0 0.0
      %2410 = vmatpush1.msra.mxu0 0.0
      %2411 = vmatprep.subr.mxu0 0.0
      %2412 = vmatpush1.msra.mxu0 0.0
      %2413 = vmatprep.mubr.f32.mxu0 0.0
      %2414 = vmatmul.mubr.f32.gmra.mrb[0].mxu0 %v2260
      %v2415 = vpop.f32.mrb[0].mxu0
      %v2416 = vadd.f32 0.0, %v2415
      %v2417 = vpop.f32.mrb[0].mxu0
      %2418 = vmatprep.mubr.f32.mxu0 0.0
      %2419 = vmatmul.mubr.f32.gmra.mrb[0].mxu0 %v2263
      %v2420 = vpop.f32.mrb[0].mxu0
      %v2421 = vadd.f32 0.0, %v2420
      %v2422 = vpop.f32.mrb[0].mxu0
      %2423 = vmatprep.mubr.f32.mxu0 0.0
      %2424 = vmatmul.mubr.f32.gmra.mrb[0].mxu0 %v2266
      %v2425 = vpop.f32.mrb[0].mxu0
      %v2426 = vadd.f32 0.0, %v2425
      %v2427 = vpop.f32.mrb[0].mxu0
      %2428 = vmatprep.mubr.f32.mxu0 0.0
      %2429 = vmatmul.mubr.f32.gmra.mrb[0].mxu0 %v2269
      %v2430 = vpop.f32.mrb[0].mxu0
      %v2431 = vadd.f32 0.0, %v2430
      %v2432 = vpop.f32.mrb[0].mxu0
      %2433 = vmatprep.mubr.f32.mxu0 0.0
      %2434 = vmatmul.mubr.f32.gmra.mrb[0].mxu0 %v2272
      %v2435 = vpop.f32.mrb[0].mxu0
      %v2436 = vadd.f32 0.0, %v2435
      %v2437 = vpop.f32.mrb[0].mxu0
      %2438 = vmatprep.mubr.f32.mxu0 0.0
      %2439 = vmatmul.mubr.f32.gmra.mrb[0].mxu0 %v2275
      %v2440 = vpop.f32.mrb[0].mxu0
      %v2441 = vadd.f32 0.0, %v2440
      %v2442 = vpop.f32.mrb[0].mxu0
      %2443 = vmatprep.mubr.f32.mxu0 0.0
      %2444 = vmatmul.mubr.f32.gmra.mrb[0].mxu0 %v2278
      %v2445 = vpop.f32.mrb[0].mxu0
      %v2446 = vadd.f32 0.0, %v2445
      %v2447 = vpop.f32.mrb[0].mxu0
      %2448 = vmatprep.mubr.f32.mxu0 0.0
      %2449 = vmatmul.mubr.f32.gmra.mrb[0].mxu0 %v2281
      %v2450 = vpop.f32.mrb[0].mxu0
      %v2451 = vadd.f32 0.0, %v2450
      %v2452 = vpop.f32.mrb[0].mxu0
      %2453 = vmatprep.mubr.f32.mxu0 0.0
      %2454 = vmatmul.mubr.f32.gmra.mrb[0].mxu0 %v2284
      %v2455 = vpop.f32.mrb[0].mxu0
      %v2456 = vadd.f32 0.0, %v2455
      %v2457 = vpop.f32.mrb[0].mxu0
      %2458 = vmatprep.mubr.f32.mxu0 0.0
      %2459 = vmatmul.mubr.f32.gmra.mrb[0].mxu0 %v2287
      %v2460 = vpop.f32.mrb[0].mxu0
      %v2461 = vadd.f32 0.0, %v2460
      %v2462 = vpop.f32.mrb[0].mxu0
      %2463 = vmatprep.mubr.f32.mxu0 0.0
      %2464 = vmatmul.mubr.f32.gmra.mrb[0].mxu0 %v2290
      %v2465 = vpop.f32.mrb[0].mxu0
      %v2466 = vadd.f32 0.0, %v2465
      %v2467 = vpop.f32.mrb[0].mxu0
      %2468 = vmatprep.mubr.f32.mxu0 0.0
      %2469 = vmatmul.mubr.f32.gmra.mrb[0].mxu0 %v2293
      %v2470 = vpop.f32.mrb[0].mxu0
      %v2471 = vadd.f32 0.0, %v2470
      %v2472 = vpop.f32.mrb[0].mxu0
      %2473 = vmatprep.mubr.f32.mxu0 0.0
      %2474 = vmatmul.mubr.f32.gmra.mrb[0].mxu0 %v2296
      %v2475 = vpop.f32.mrb[0].mxu0
      %v2476 = vadd.f32 0.0, %v2475
      %v2477 = vpop.f32.mrb[0].mxu0
      %2478 = vmatprep.mubr.f32.mxu0 0.0
      %2479 = vmatmul.mubr.f32.gmra.mrb[0].mxu0 %v2299
      %v2480 = vpop.f32.mrb[0].mxu0
      %v2481 = vadd.f32 0.0, %v2480
      %v2482 = vpop.f32.mrb[0].mxu0
      %2483 = vmatprep.mubr.f32.mxu0 0.0
      %2484 = vmatmul.mubr.f32.gmra.mrb[0].mxu0 %v2302
      %v2485 = vpop.f32.mrb[0].mxu0
      %v2486 = vadd.f32 0.0, %v2485
      %v2487 = vpop.f32.mrb[0].mxu0
      %2488 = vmatprep.mubr.f32.mxu0 0.0
      %2489 = vmatmul.mubr.f32.gmra.mrb[0].mxu0 %v2305
      %v2490 = vpop.f32.mrb[0].mxu0
      %v2491 = vadd.f32 0.0, %v2490
      %v2492 = vpop.f32.mrb[0].mxu0
      %2493 = vmatprep.mubr.f32.mxu0 0.0
      %2494 = vmatmul.mubr.f32.gmra.mrb[0].mxu0 %v2308
      %v2495 = vpop.f32.mrb[0].mxu0
      %v2496 = vadd.f32 0.0, %v2495
      %v2497 = vpop.f32.mrb[0].mxu0
      %2498 = vmatprep.mubr.f32.mxu0 0.0
      %2499 = vmatmul.mubr.f32.gmra.mrb[0].mxu0 %v2311
      %v2500 = vpop.f32.mrb[0].mxu0
      %v2501 = vadd.f32 0.0, %v2500
      %v2502 = vpop.f32.mrb[0].mxu0
      %2503 = vmatprep.mubr.f32.mxu0 0.0
      %2504 = vmatmul.mubr.f32.gmra.mrb[0].mxu0 %v2314
      %v2505 = vpop.f32.mrb[0].mxu0
      %v2506 = vadd.f32 0.0, %v2505
      %v2507 = vpop.f32.mrb[0].mxu0
      %2508 = vmatprep.mubr.f32.mxu0 0.0
      %2509 = vmatmul.mubr.f32.gmra.mrb[0].mxu0 %v2317
      %v2510 = vpop.f32.mrb[0].mxu0
      %v2511 = vadd.f32 0.0, %v2510
      %v2512 = vpop.f32.mrb[0].mxu0
      %2513 = vmatprep.mubr.f32.mxu0 0.0
      %2514 = vmatmul.mubr.f32.gmra.mrb[0].mxu0 %v2320
      %v2515 = vpop.f32.mrb[0].mxu0
      %v2516 = vadd.f32 0.0, %v2515
      %v2517 = vpop.f32.mrb[0].mxu0
      %2518 = vmatprep.mubr.f32.mxu0 0.0
      %2519 = vmatmul.mubr.f32.gmra.mrb[0].mxu0 %v2323
      %v2520 = vpop.f32.mrb[0].mxu0
      %v2521 = vadd.f32 0.0, %v2520
      %v2522 = vpop.f32.mrb[0].mxu0
      %2523 = vmatprep.mubr.f32.mxu0 0.0
      %2524 = vmatmul.mubr.f32.gmra.mrb[0].mxu0 %v2326
      %v2525 = vpop.f32.mrb[0].mxu0
      %v2526 = vadd.f32 0.0, %v2525
      %v2527 = vpop.f32.mrb[0].mxu0
      %2528 = vmatprep.mubr.f32.mxu0 0.0
      %2529 = vmatmul.mubr.f32.gmra.mrb[0].mxu0 %v2329
      %v2530 = vpop.f32.mrb[0].mxu0
      %v2531 = vadd.f32 0.0, %v2530
      %v2532 = vpop.f32.mrb[0].mxu0
      %2533 = vmatprep.mubr.f32.mxu0 0.0
      %2534 = vmatmul.mubr.f32.gmra.mrb[0].mxu0 %v2332
      %v2535 = vpop.f32.mrb[0].mxu0
      %v2536 = vadd.f32 0.0, %v2535
      %v2537 = vpop.f32.mrb[0].mxu0
      %2538 = vmatprep.mubr.f32.mxu0 0.0
      %2539 = vmatmul.mubr.f32.gmra.mrb[0].mxu0 %v2335
      %v2540 = vpop.f32.mrb[0].mxu0
      %v2541 = vadd.f32 0.0, %v2540
      %v2542 = vpop.f32.mrb[0].mxu0
      %2543 = vmatprep.mubr.f32.mxu0 0.0
      %2544 = vmatmul.mubr.f32.gmra.mrb[0].mxu0 %v2338
      %v2545 = vpop.f32.mrb[0].mxu0
      %v2546 = vadd.f32 0.0, %v2545
      %v2547 = vpop.f32.mrb[0].mxu0
      %2548 = vmatprep.mubr.f32.mxu0 0.0
      %2549 = vmatmul.mubr.f32.gmra.mrb[0].mxu0 %v2341
      %v2550 = vpop.f32.mrb[0].mxu0
      %v2551 = vadd.f32 0.0, %v2550
      %v2552 = vpop.f32.mrb[0].mxu0
      %2553 = vmatprep.mubr.f32.mxu0 0.0
      %2554 = vmatmul.mubr.f32.gmra.mrb[0].mxu0 %v2344
      %v2555 = vpop.f32.mrb[0].mxu0
      %v2556 = vadd.f32 0.0, %v2555
      %v2557 = vpop.f32.mrb[0].mxu0
      %2558 = vmatprep.mubr.f32.mxu0 0.0
      %2559 = vmatmul.mubr.f32.gmra.mrb[0].mxu0 %v2347
      %v2560 = vpop.f32.mrb[0].mxu0
      %v2561 = vadd.f32 0.0, %v2560
      %v2562 = vpop.f32.mrb[0].mxu0
      %2563 = vdwg.mxu0
      %v2564 = vld [vmem:[%s381 + $0x5a0] sm:$0xff]
      %v2565 = vld [vmem:[%s381 + $0x5a8] sm:$0xff]
      %v2566 = vld [vmem:[%s381 + $0x5b0] sm:$0xff]
      %v2567 = vld [vmem:[%s381 + $0x5b8] sm:$0xff]
      %v2568 = vld [vmem:[%s381 + $0x5c0] sm:$0xff]
      %v2569 = vld [vmem:[%s381 + $0x5c8] sm:$0xff]
      %v2570 = vld [vmem:[%s381 + $0x5d0] sm:$0xff]
      %v2571 = vld [vmem:[%s381 + $0x5d8] sm:$0xff]
      %v2572 = vld [vmem:[%s381 + $0x5e0] sm:$0xff]
      %v2573 = vld [vmem:[%s381 + $0x5e8] sm:$0xff]
      %v2574 = vld [vmem:[%s381 + $0x5f0] sm:$0xff]
      %v2575 = vld [vmem:[%s381 + $0x5f8] sm:$0xff]
      %v2576 = vld [vmem:[%s381 + $0x600] sm:$0xff]
      %v2577 = vld [vmem:[%s381 + $0x608] sm:$0xff]
      %v2578 = vld [vmem:[%s381 + $0x610] sm:$0xff]
      %v2579 = vld [vmem:[%s381 + $0x618] sm:$0xff]
      %v2580 = vld [vmem:[%s381 + $0x620] sm:$0xff]
      %v2581 = vld [vmem:[%s381 + $0x628] sm:$0xff]
      %v2582 = vld [vmem:[%s381 + $0x630] sm:$0xff]
      %v2583 = vld [vmem:[%s381 + $0x638] sm:$0xff]
      %v2584 = vld [vmem:[%s381 + $0x640] sm:$0xff]
      %v2585 = vld [vmem:[%s381 + $0x648] sm:$0xff]
      %v2586 = vld [vmem:[%s381 + $0x650] sm:$0xff]
      %v2587 = vld [vmem:[%s381 + $0x658] sm:$0xff]
      %v2588 = vld [vmem:[%s381 + $0x660] sm:$0xff]
      %v2589 = vld [vmem:[%s381 + $0x668] sm:$0xff]
      %v2590 = vld [vmem:[%s381 + $0x670] sm:$0xff]
      %v2591 = vld [vmem:[%s381 + $0x678] sm:$0xff]
      %v2592 = vld [vmem:[%s381 + $0x680] sm:$0xff]
      %v2593 = vld [vmem:[%s381 + $0x688] sm:$0xff]
      %v2595 = vsel %vm421, %v2564, 0
      %v2598 = vsel %vm421, %v2565, 0
      %v2601 = vsel %vm421, %v2566, 0
      %v2604 = vsel %vm421, %v2567, 0
      %v2607 = vsel %vm421, %v2568, 0
      %v2610 = vsel %vm421, %v2569, 0
      %v2613 = vsel %vm421, %v2570, 0
      %v2616 = vsel %vm421, %v2571, 0
      %v2619 = vsel %vm421, %v2572, 0
      %v2622 = vsel %vm421, %v2573, 0
      %v2625 = vsel %vm421, %v2574, 0
      %v2628 = vsel %vm421, %v2575, 0
      %v2631 = vsel %vm421, %v2576, 0
      %v2634 = vsel %vm421, %v2577, 0
      %v2637 = vsel %vm421, %v2578, 0
      %v2640 = vsel %vm421, %v2579, 0
      %v2643 = vsel %vm421, %v2580, 0
      %v2646 = vsel %vm421, %v2581, 0
      %v2649 = vsel %vm421, %v2582, 0
      %v2652 = vsel %vm421, %v2583, 0
      %v2655 = vsel %vm421, %v2584, 0
      %v2658 = vsel %vm421, %v2585, 0
      %v2661 = vsel %vm421, %v2586, 0
      %v2664 = vsel %vm421, %v2587, 0
      %v2667 = vsel %vm421, %v2588, 0
      %v2670 = vsel %vm421, %v2589, 0
      %v2673 = vsel %vm421, %v2590, 0
      %v2676 = vsel %vm421, %v2591, 0
      %v2679 = vsel %vm421, %v2592, 0
      %v2682 = vsel %vm421, %v2593, 0
      %2684 = vmatprep.subr.mxu0 0.0
      %2685 = vmatpush1.msra.mxu0 %v2257
      %2686 = vmatprep.subr.mxu0 0.0
      %2687 = vmatpush1.msra.mxu0 %v2258
      %2688 = vmatprep.subr.mxu0 0.0
      %2689 = vmatpush1.msra.mxu0 0.0
      %2690 = vmatprep.subr.mxu0 0.0
      %2691 = vmatpush1.msra.mxu0 0.0
      %2692 = vmatprep.subr.mxu0 0.0
      %2693 = vmatpush1.msra.mxu0 0.0
      %2694 = vmatprep.subr.mxu0 0.0
      %2695 = vmatpush1.msra.mxu0 0.0
      %2696 = vmatprep.subr.mxu0 0.0
      %2697 = vmatpush1.msra.mxu0 0.0
      %2698 = vmatprep.subr.mxu0 0.0
      %2699 = vmatpush1.msra.mxu0 0.0
      %2700 = vmatprep.subr.mxu0 0.0
      %2701 = vmatpush1.msra.mxu0 0.0
      %2702 = vmatprep.subr.mxu0 0.0
      %2703 = vmatpush1.msra.mxu0 0.0
      %2704 = vmatprep.subr.mxu0 0.0
      %2705 = vmatpush1.msra.mxu0 0.0
      %2706 = vmatprep.subr.mxu0 0.0
      %2707 = vmatpush1.msra.mxu0 0.0
      %2708 = vmatprep.subr.mxu0 0.0
      %2709 = vmatpush1.msra.mxu0 0.0
      %2710 = vmatprep.subr.mxu0 0.0
      %2711 = vmatpush1.msra.mxu0 0.0
      %2712 = vmatprep.subr.mxu0 0.0
      %2713 = vmatpush1.msra.mxu0 0.0
      %2714 = vmatprep.subr.mxu0 0.0
      %2715 = vmatpush1.msra.mxu0 0.0
      %2716 = vmatprep.subr.mxu0 0.0
      %2717 = vmatpush1.msra.mxu0 0.0
      %2718 = vmatprep.subr.mxu0 0.0
      %2719 = vmatpush1.msra.mxu0 0.0
      %2720 = vmatprep.subr.mxu0 0.0
      %2721 = vmatpush1.msra.mxu0 0.0
      %2722 = vmatprep.subr.mxu0 0.0
      %2723 = vmatpush1.msra.mxu0 0.0
      %2724 = vmatprep.subr.mxu0 0.0
      %2725 = vmatpush1.msra.mxu0 0.0
      %2726 = vmatprep.subr.mxu0 0.0
      %2727 = vmatpush1.msra.mxu0 0.0
      %2728 = vmatprep.subr.mxu0 0.0
      %2729 = vmatpush1.msra.mxu0 0.0
      %2730 = vmatprep.subr.mxu0 0.0
      %2731 = vmatpush1.msra.mxu0 0.0
      %2732 = vmatprep.subr.mxu0 0.0
      %2733 = vmatpush1.msra.mxu0 0.0
      %2734 = vmatprep.subr.mxu0 0.0
      %2735 = vmatpush1.msra.mxu0 0.0
      %2736 = vmatprep.subr.mxu0 0.0
      %2737 = vmatpush1.msra.mxu0 0.0
      %2738 = vmatprep.subr.mxu0 0.0
      %2739 = vmatpush1.msra.mxu0 0.0
      %2740 = vmatprep.subr.mxu0 0.0
      %2741 = vmatpush1.msra.mxu0 0.0
      %2742 = vmatprep.subr.mxu0 0.0
      %2743 = vmatpush1.msra.mxu0 0.0
      %2744 = vmatprep.subr.mxu0 0.0
      %2745 = vmatpush1.msra.mxu0 0.0
      %2746 = vmatprep.subr.mxu0 0.0
      %2747 = vmatpush1.msra.mxu0 0.0
      %2748 = vmatprep.mubr.f32.mxu0 0.0
      %2749 = vmatmul.mubr.f32.gmra.mrb[0].mxu0 %v2595
      %v2750 = vpop.f32.mrb[0].mxu0
      %v2751 = vadd.f32 0.0, %v2750
      %v2752 = vpop.f32.mrb[0].mxu0
      %2753 = vmatprep.mubr.f32.mxu0 0.0
      %2754 = vmatmul.mubr.f32.gmra.mrb[0].mxu0 %v2598
      %v2755 = vpop.f32.mrb[0].mxu0
      %v2756 = vadd.f32 0.0, %v2755
      %v2757 = vpop.f32.mrb[0].mxu0
      %2758 = vmatprep.mubr.f32.mxu0 0.0
      %2759 = vmatmul.mubr.f32.gmra.mrb[0].mxu0 %v2601
      %v2760 = vpop.f32.mrb[0].mxu0
      %v2761 = vadd.f32 0.0, %v2760
      %v2762 = vpop.f32.mrb[0].mxu0
      %2763 = vmatprep.mubr.f32.mxu0 0.0
      %2764 = vmatmul.mubr.f32.gmra.mrb[0].mxu0 %v2604
      %v2765 = vpop.f32.mrb[0].mxu0
      %v2766 = vadd.f32 0.0, %v2765
      %v2767 = vpop.f32.mrb[0].mxu0
      %2768 = vmatprep.mubr.f32.mxu0 0.0
      %2769 = vmatmul.mubr.f32.gmra.mrb[0].mxu0 %v2607
      %v2770 = vpop.f32.mrb[0].mxu0
      %v2771 = vadd.f32 0.0, %v2770
      %v2772 = vpop.f32.mrb[0].mxu0
      %2773 = vmatprep.mubr.f32.mxu0 0.0
      %2774 = vmatmul.mubr.f32.gmra.mrb[0].mxu0 %v2610
      %v2775 = vpop.f32.mrb[0].mxu0
      %v2776 = vadd.f32 0.0, %v2775
      %v2777 = vpop.f32.mrb[0].mxu0
      %2778 = vmatprep.mubr.f32.mxu0 0.0
      %2779 = vmatmul.mubr.f32.gmra.mrb[0].mxu0 %v2613
      %v2780 = vpop.f32.mrb[0].mxu0
      %v2781 = vadd.f32 0.0, %v2780
      %v2782 = vpop.f32.mrb[0].mxu0
      %2783 = vmatprep.mubr.f32.mxu0 0.0
      %2784 = vmatmul.mubr.f32.gmra.mrb[0].mxu0 %v2616
      %v2785 = vpop.f32.mrb[0].mxu0
      %v2786 = vadd.f32 0.0, %v2785
      %v2787 = vpop.f32.mrb[0].mxu0
      %2788 = vmatprep.mubr.f32.mxu0 0.0
      %2789 = vmatmul.mubr.f32.gmra.mrb[0].mxu0 %v2619
      %v2790 = vpop.f32.mrb[0].mxu0
      %v2791 = vadd.f32 0.0, %v2790
      %v2792 = vpop.f32.mrb[0].mxu0
      %2793 = vmatprep.mubr.f32.mxu0 0.0
      %2794 = vmatmul.mubr.f32.gmra.mrb[0].mxu0 %v2622
      %v2795 = vpop.f32.mrb[0].mxu0
      %v2796 = vadd.f32 0.0, %v2795
      %v2797 = vpop.f32.mrb[0].mxu0
      %2798 = vmatprep.mubr.f32.mxu0 0.0
      %2799 = vmatmul.mubr.f32.gmra.mrb[0].mxu0 %v2625
      %v2800 = vpop.f32.mrb[0].mxu0
      %v2801 = vadd.f32 0.0, %v2800
      %v2802 = vpop.f32.mrb[0].mxu0
      %2803 = vmatprep.mubr.f32.mxu0 0.0
      %2804 = vmatmul.mubr.f32.gmra.mrb[0].mxu0 %v2628
      %v2805 = vpop.f32.mrb[0].mxu0
      %v2806 = vadd.f32 0.0, %v2805
      %v2807 = vpop.f32.mrb[0].mxu0
      %2808 = vmatprep.mubr.f32.mxu0 0.0
      %2809 = vmatmul.mubr.f32.gmra.mrb[0].mxu0 %v2631
      %v2810 = vpop.f32.mrb[0].mxu0
      %v2811 = vadd.f32 0.0, %v2810
      %v2812 = vpop.f32.mrb[0].mxu0
      %2813 = vmatprep.mubr.f32.mxu0 0.0
      %2814 = vmatmul.mubr.f32.gmra.mrb[0].mxu0 %v2634
      %v2815 = vpop.f32.mrb[0].mxu0
      %v2816 = vadd.f32 0.0, %v2815
      %v2817 = vpop.f32.mrb[0].mxu0
      %2818 = vmatprep.mubr.f32.mxu0 0.0
      %2819 = vmatmul.mubr.f32.gmra.mrb[0].mxu0 %v2637
      %v2820 = vpop.f32.mrb[0].mxu0
      %v2821 = vadd.f32 0.0, %v2820
      %v2822 = vpop.f32.mrb[0].mxu0
      %2823 = vmatprep.mubr.f32.mxu0 0.0
      %2824 = vmatmul.mubr.f32.gmra.mrb[0].mxu0 %v2640
      %v2825 = vpop.f32.mrb[0].mxu0
      %v2826 = vadd.f32 0.0, %v2825
      %v2827 = vpop.f32.mrb[0].mxu0
      %2828 = vmatprep.mubr.f32.mxu0 0.0
      %2829 = vmatmul.mubr.f32.gmra.mrb[0].mxu0 %v2643
      %v2830 = vpop.f32.mrb[0].mxu0
      %v2831 = vadd.f32 0.0, %v2830
      %v2832 = vpop.f32.mrb[0].mxu0
      %2833 = vmatprep.mubr.f32.mxu0 0.0
      %2834 = vmatmul.mubr.f32.gmra.mrb[0].mxu0 %v2646
      %v2835 = vpop.f32.mrb[0].mxu0
      %v2836 = vadd.f32 0.0, %v2835
      %v2837 = vpop.f32.mrb[0].mxu0
      %2838 = vmatprep.mubr.f32.mxu0 0.0
      %2839 = vmatmul.mubr.f32.gmra.mrb[0].mxu0 %v2649
      %v2840 = vpop.f32.mrb[0].mxu0
      %v2841 = vadd.f32 0.0, %v2840
      %v2842 = vpop.f32.mrb[0].mxu0
      %2843 = vmatprep.mubr.f32.mxu0 0.0
      %2844 = vmatmul.mubr.f32.gmra.mrb[0].mxu0 %v2652
      %v2845 = vpop.f32.mrb[0].mxu0
      %v2846 = vadd.f32 0.0, %v2845
      %v2847 = vpop.f32.mrb[0].mxu0
      %2848 = vmatprep.mubr.f32.mxu0 0.0
      %2849 = vmatmul.mubr.f32.gmra.mrb[0].mxu0 %v2655
      %v2850 = vpop.f32.mrb[0].mxu0
      %v2851 = vadd.f32 0.0, %v2850
      %v2852 = vpop.f32.mrb[0].mxu0
      %2853 = vmatprep.mubr.f32.mxu0 0.0
      %2854 = vmatmul.mubr.f32.gmra.mrb[0].mxu0 %v2658
      %v2855 = vpop.f32.mrb[0].mxu0
      %v2856 = vadd.f32 0.0, %v2855
      %v2857 = vpop.f32.mrb[0].mxu0
      %2858 = vmatprep.mubr.f32.mxu0 0.0
      %2859 = vmatmul.mubr.f32.gmra.mrb[0].mxu0 %v2661
      %v2860 = vpop.f32.mrb[0].mxu0
      %v2861 = vadd.f32 0.0, %v2860
      %v2862 = vpop.f32.mrb[0].mxu0
      %2863 = vmatprep.mubr.f32.mxu0 0.0
      %2864 = vmatmul.mubr.f32.gmra.mrb[0].mxu0 %v2664
      %v2865 = vpop.f32.mrb[0].mxu0
      %v2866 = vadd.f32 0.0, %v2865
      %v2867 = vpop.f32.mrb[0].mxu0
      %2868 = vmatprep.mubr.f32.mxu0 0.0
      %2869 = vmatmul.mubr.f32.gmra.mrb[0].mxu0 %v2667
      %v2870 = vpop.f32.mrb[0].mxu0
      %v2871 = vadd.f32 0.0, %v2870
      %v2872 = vpop.f32.mrb[0].mxu0
      %2873 = vmatprep.mubr.f32.mxu0 0.0
      %2874 = vmatmul.mubr.f32.gmra.mrb[0].mxu0 %v2670
      %v2875 = vpop.f32.mrb[0].mxu0
      %v2876 = vadd.f32 0.0, %v2875
      %v2877 = vpop.f32.mrb[0].mxu0
      %2878 = vmatprep.mubr.f32.mxu0 0.0
      %2879 = vmatmul.mubr.f32.gmra.mrb[0].mxu0 %v2673
      %v2880 = vpop.f32.mrb[0].mxu0
      %v2881 = vadd.f32 0.0, %v2880
      %v2882 = vpop.f32.mrb[0].mxu0
      %2883 = vmatprep.mubr.f32.mxu0 0.0
      %2884 = vmatmul.mubr.f32.gmra.mrb[0].mxu0 %v2676
      %v2885 = vpop.f32.mrb[0].mxu0
      %v2886 = vadd.f32 0.0, %v2885
      %v2887 = vpop.f32.mrb[0].mxu0
      %2888 = vmatprep.mubr.f32.mxu0 0.0
      %2889 = vmatmul.mubr.f32.gmra.mrb[0].mxu0 %v2679
      %v2890 = vpop.f32.mrb[0].mxu0
      %v2891 = vadd.f32 0.0, %v2890
      %v2892 = vpop.f32.mrb[0].mxu0
      %2893 = vmatprep.mubr.f32.mxu0 0.0
      %2894 = vmatmul.mubr.f32.gmra.mrb[0].mxu0 %v2682
      %v2895 = vpop.f32.mrb[0].mxu0
      %v2896 = vadd.f32 0.0, %v2895
      %v2897 = vpop.f32.mrb[0].mxu0
      %2898 = vdwg.mxu0
      %v2899 = vmul.f32 %v2416, %v1066
      %v2900 = vmul.f32 %v2421, %v1066
      %v2901 = vmul.f32 %v2426, %v1066
      %v2902 = vmul.f32 %v2431, %v1066
      %v2903 = vmul.f32 %v2436, %v1066
      %v2904 = vmul.f32 %v2441, %v1066
      %v2905 = vmul.f32 %v2446, %v1066
      %v2906 = vmul.f32 %v2451, %v1066
      %v2907 = vmul.f32 %v2456, %v1066
      %v2908 = vmul.f32 %v2461, %v1066
      %v2909 = vmul.f32 %v2466, %v1066
      %v2910 = vmul.f32 %v2471, %v1066
      %v2911 = vmul.f32 %v2476, %v1066
      %v2912 = vmul.f32 %v2481, %v1066
      %v2913 = vmul.f32 %v2486, %v1066
      %v2914 = vmul.f32 %v2491, %v1066
      %v2915 = vmul.f32 %v2496, %v1066
      %v2916 = vmul.f32 %v2501, %v1066
      %v2917 = vmul.f32 %v2506, %v1066
      %v2918 = vmul.f32 %v2511, %v1066
      %v2919 = vmul.f32 %v2516, %v1066
      %v2920 = vmul.f32 %v2521, %v1066
      %v2921 = vmul.f32 %v2526, %v1066
      %v2922 = vmul.f32 %v2531, %v1066
      %v2923 = vmul.f32 %v2536, %v1066
      %v2924 = vmul.f32 %v2541, %v1066
      %v2925 = vmul.f32 %v2546, %v1066
      %v2926 = vmul.f32 %v2551, %v1066
      %v2927 = vmul.f32 %v2556, %v1066
      %v2928 = vmul.f32 %v2561, %v1066
      %v2929 = vadd.f32 %v2899, %v1102
      %v2930 = vadd.f32 %v2900, %v1102
      %v2931 = vadd.f32 %v2901, %v1102
      %v2932 = vadd.f32 %v2902, %v1102
      %v2933 = vadd.f32 %v2903, %v1102
      %v2934 = vadd.f32 %v2904, %v1102
      %v2935 = vadd.f32 %v2905, %v1102
      %v2936 = vadd.f32 %v2906, %v1102
      %v2937 = vadd.f32 %v2907, %v1102
      %v2938 = vadd.f32 %v2908, %v1102
      %v2939 = vadd.f32 %v2909, %v1102
      %v2940 = vadd.f32 %v2910, %v1102
      %v2941 = vadd.f32 %v2911, %v1102
      %v2942 = vadd.f32 %v2912, %v1102
      %v2943 = vadd.f32 %v2913, %v1102
      %v2944 = vadd.f32 %v2914, %v1102
      %v2945 = vadd.f32 %v2915, %v1102
      %v2946 = vadd.f32 %v2916, %v1102
      %v2947 = vadd.f32 %v2917, %v1102
      %v2948 = vadd.f32 %v2918, %v1102
      %v2949 = vadd.f32 %v2919, %v1102
      %v2950 = vadd.f32 %v2920, %v1102
      %v2951 = vadd.f32 %v2921, %v1102
      %v2952 = vadd.f32 %v2922, %v1102
      %v2953 = vadd.f32 %v2923, %v1102
      %v2954 = vadd.f32 %v2924, %v1102
      %v2955 = vadd.f32 %v2925, %v1102
      %v2956 = vadd.f32 %v2926, %v1102
      %v2957 = vadd.f32 %v2927, %v1102
      %v2958 = vadd.f32 %v2928, %v1102
      %v2959 = vmax.f32 %v2929, 0.0
      %v2960 = vmax.f32 %v2930, 0.0
      %v2961 = vmax.f32 %v2931, 0.0
      %v2962 = vmax.f32 %v2932, 0.0
      %v2963 = vmax.f32 %v2933, 0.0
      %v2964 = vmax.f32 %v2934, 0.0
      %v2965 = vmax.f32 %v2935, 0.0
      %v2966 = vmax.f32 %v2936, 0.0
      %v2967 = vmax.f32 %v2937, 0.0
      %v2968 = vmax.f32 %v2938, 0.0
      %v2969 = vmax.f32 %v2939, 0.0
      %v2970 = vmax.f32 %v2940, 0.0
      %v2971 = vmax.f32 %v2941, 0.0
      %v2972 = vmax.f32 %v2942, 0.0
      %v2973 = vmax.f32 %v2943, 0.0
      %v2974 = vmax.f32 %v2944, 0.0
      %v2975 = vmax.f32 %v2945, 0.0
      %v2976 = vmax.f32 %v2946, 0.0
      %v2977 = vmax.f32 %v2947, 0.0
      %v2978 = vmax.f32 %v2948, 0.0
      %v2979 = vmax.f32 %v2949, 0.0
      %v2980 = vmax.f32 %v2950, 0.0
      %v2981 = vmax.f32 %v2951, 0.0
      %v2982 = vmax.f32 %v2952, 0.0
      %v2983 = vmax.f32 %v2953, 0.0
      %v2984 = vmax.f32 %v2954, 0.0
      %v2985 = vmax.f32 %v2955, 0.0
      %v2986 = vmax.f32 %v2956, 0.0
      %v2987 = vmax.f32 %v2957, 0.0
      %v2988 = vmax.f32 %v2958, 0.0
      %v2989 = vmul.f32 %v2751, %v1066
      %v2990 = vmul.f32 %v2756, %v1066
      %v2991 = vmul.f32 %v2761, %v1066
      %v2992 = vmul.f32 %v2766, %v1066
      %v2993 = vmul.f32 %v2771, %v1066
      %v2994 = vmul.f32 %v2776, %v1066
      %v2995 = vmul.f32 %v2781, %v1066
      %v2996 = vmul.f32 %v2786, %v1066
      %v2997 = vmul.f32 %v2791, %v1066
      %v2998 = vmul.f32 %v2796, %v1066
      %v2999 = vmul.f32 %v2801, %v1066
      %v3000 = vmul.f32 %v2806, %v1066
      %v3001 = vmul.f32 %v2811, %v1066
      %v3002 = vmul.f32 %v2816, %v1066
      %v3003 = vmul.f32 %v2821, %v1066
      %v3004 = vmul.f32 %v2826, %v1066
      %v3005 = vmul.f32 %v2831, %v1066
      %v3006 = vmul.f32 %v2836, %v1066
      %v3007 = vmul.f32 %v2841, %v1066
      %v3008 = vmul.f32 %v2846, %v1066
      %v3009 = vmul.f32 %v2851, %v1066
      %v3010 = vmul.f32 %v2856, %v1066
      %v3011 = vmul.f32 %v2861, %v1066
      %v3012 = vmul.f32 %v2866, %v1066
      %v3013 = vmul.f32 %v2871, %v1066
      %v3014 = vmul.f32 %v2876, %v1066
      %v3015 = vmul.f32 %v2881, %v1066
      %v3016 = vmul.f32 %v2886, %v1066
      %v3017 = vmul.f32 %v2891, %v1066
      %v3018 = vmul.f32 %v2896, %v1066
      %v3019 = vadd.f32 %v2989, %v1102
      %v3020 = vadd.f32 %v2990, %v1102
      %v3021 = vadd.f32 %v2991, %v1102
      %v3022 = vadd.f32 %v2992, %v1102
      %v3023 = vadd.f32 %v2993, %v1102
      %v3024 = vadd.f32 %v2994, %v1102
      %v3025 = vadd.f32 %v2995, %v1102
      %v3026 = vadd.f32 %v2996, %v1102
      %v3027 = vadd.f32 %v2997, %v1102
      %v3028 = vadd.f32 %v2998, %v1102
      %v3029 = vadd.f32 %v2999, %v1102
      %v3030 = vadd.f32 %v3000, %v1102
      %v3031 = vadd.f32 %v3001, %v1102
      %v3032 = vadd.f32 %v3002, %v1102
      %v3033 = vadd.f32 %v3003, %v1102
      %v3034 = vadd.f32 %v3004, %v1102
      %v3035 = vadd.f32 %v3005, %v1102
      %v3036 = vadd.f32 %v3006, %v1102
      %v3037 = vadd.f32 %v3007, %v1102
      %v3038 = vadd.f32 %v3008, %v1102
      %v3039 = vadd.f32 %v3009, %v1102
      %v3040 = vadd.f32 %v3010, %v1102
      %v3041 = vadd.f32 %v3011, %v1102
      %v3042 = vadd.f32 %v3012, %v1102
      %v3043 = vadd.f32 %v3013, %v1102
      %v3044 = vadd.f32 %v3014, %v1102
      %v3045 = vadd.f32 %v3015, %v1102
      %v3046 = vadd.f32 %v3016, %v1102
      %v3047 = vadd.f32 %v3017, %v1102
      %v3048 = vadd.f32 %v3018, %v1102
      %v3049 = vmax.f32 %v3019, 0.0
      %v3050 = vmax.f32 %v3020, 0.0
      %v3051 = vmax.f32 %v3021, 0.0
      %v3052 = vmax.f32 %v3022, 0.0
      %v3053 = vmax.f32 %v3023, 0.0
      %v3054 = vmax.f32 %v3024, 0.0
      %v3055 = vmax.f32 %v3025, 0.0
      %v3056 = vmax.f32 %v3026, 0.0
      %v3057 = vmax.f32 %v3027, 0.0
      %v3058 = vmax.f32 %v3028, 0.0
      %v3059 = vmax.f32 %v3029, 0.0
      %v3060 = vmax.f32 %v3030, 0.0
      %v3061 = vmax.f32 %v3031, 0.0
      %v3062 = vmax.f32 %v3032, 0.0
      %v3063 = vmax.f32 %v3033, 0.0
      %v3064 = vmax.f32 %v3034, 0.0
      %v3065 = vmax.f32 %v3035, 0.0
      %v3066 = vmax.f32 %v3036, 0.0
      %v3067 = vmax.f32 %v3037, 0.0
      %v3068 = vmax.f32 %v3038, 0.0
      %v3069 = vmax.f32 %v3039, 0.0
      %v3070 = vmax.f32 %v3040, 0.0
      %v3071 = vmax.f32 %v3041, 0.0
      %v3072 = vmax.f32 %v3042, 0.0
      %v3073 = vmax.f32 %v3043, 0.0
      %v3074 = vmax.f32 %v3044, 0.0
      %v3075 = vmax.f32 %v3045, 0.0
      %v3076 = vmax.f32 %v3046, 0.0
      %v3077 = vmax.f32 %v3047, 0.0
      %v3078 = vmax.f32 %v3048, 0.0
      %v3079 = vmax.f32 %v2959, %v3049
      %v3080 = vmax.f32 %v2960, %v3050
      %v3081 = vmax.f32 %v2961, %v3051
      %v3082 = vmax.f32 %v2962, %v3052
      %v3083 = vmax.f32 %v2963, %v3053
      %v3084 = vmax.f32 %v2964, %v3054
      %v3085 = vmax.f32 %v2965, %v3055
      %v3086 = vmax.f32 %v2966, %v3056
      %v3087 = vmax.f32 %v2967, %v3057
      %v3088 = vmax.f32 %v2968, %v3058
      %v3089 = vmax.f32 %v2969, %v3059
      %v3090 = vmax.f32 %v2970, %v3060
      %v3091 = vmax.f32 %v2971, %v3061
      %v3092 = vmax.f32 %v2972, %v3062
      %v3093 = vmax.f32 %v2973, %v3063
      %v3094 = vmax.f32 %v2974, %v3064
      %v3095 = vmax.f32 %v2975, %v3065
      %v3096 = vmax.f32 %v2976, %v3066
      %v3097 = vmax.f32 %v2977, %v3067
      %v3098 = vmax.f32 %v2978, %v3068
      %v3099 = vmax.f32 %v2979, %v3069
      %v3100 = vmax.f32 %v2980, %v3070
      %v3101 = vmax.f32 %v2981, %v3071
      %v3102 = vmax.f32 %v2982, %v3072
      %v3103 = vmax.f32 %v2983, %v3073
      %v3104 = vmax.f32 %v2984, %v3074
      %v3105 = vmax.f32 %v2985, %v3075
      %v3106 = vmax.f32 %v2986, %v3076
      %v3107 = vmax.f32 %v2987, %v3077
      %v3108 = vmax.f32 %v2988, %v3078
      %3109 = vst.msk [vmem:[#allocation2 + $0x1e0] sm:$0xff] %vm1284, %v3079
      %3110 = vst.msk [vmem:[#allocation2 + $0x1e8] sm:$0xff] %vm1284, %v3080
      %3111 = vst.msk [vmem:[#allocation2 + $0x1f0] sm:$0xff] %vm1284, %v3081
      %3112 = vst.msk [vmem:[#allocation2 + $0x1f8] sm:$0xff] %vm1284, %v3082
      %3113 = vst.msk [vmem:[#allocation2 + $0x200] sm:$0xff] %vm1284, %v3083
      %3114 = vst.msk [vmem:[#allocation2 + $0x208] sm:$0xff] %vm1284, %v3084
      %3115 = vst.msk [vmem:[#allocation2 + $0x210] sm:$0xff] %vm1284, %v3085
      %3116 = vst.msk [vmem:[#allocation2 + $0x218] sm:$0xff] %vm1284, %v3086
      %3117 = vst.msk [vmem:[#allocation2 + $0x220] sm:$0xff] %vm1284, %v3087
      %3118 = vst.msk [vmem:[#allocation2 + $0x228] sm:$0xff] %vm1284, %v3088
      %3119 = vst.msk [vmem:[#allocation2 + $0x230] sm:$0xff] %vm1284, %v3089
      %3120 = vst.msk [vmem:[#allocation2 + $0x238] sm:$0xff] %vm1284, %v3090
      %3121 = vst.msk [vmem:[#allocation2 + $0x240] sm:$0xff] %vm1284, %v3091
      %3122 = vst.msk [vmem:[#allocation2 + $0x248] sm:$0xff] %vm1284, %v3092
      %3123 = vst.msk [vmem:[#allocation2 + $0x250] sm:$0xff] %vm1284, %v3093
      %3124 = vst.msk [vmem:[#allocation2 + $0x258] sm:$0xff] %vm1284, %v3094
      %3125 = vst.msk [vmem:[#allocation2 + $0x260] sm:$0xff] %vm1284, %v3095
      %3126 = vst.msk [vmem:[#allocation2 + $0x268] sm:$0xff] %vm1284, %v3096
      %3127 = vst.msk [vmem:[#allocation2 + $0x270] sm:$0xff] %vm1284, %v3097
      %3128 = vst.msk [vmem:[#allocation2 + $0x278] sm:$0xff] %vm1284, %v3098
      %3129 = vst.msk [vmem:[#allocation2 + $0x280] sm:$0xff] %vm1284, %v3099
      %3130 = vst.msk [vmem:[#allocation2 + $0x288] sm:$0xff] %vm1284, %v3100
      %3131 = vst.msk [vmem:[#allocation2 + $0x290] sm:$0xff] %vm1284, %v3101
      %3132 = vst.msk [vmem:[#allocation2 + $0x298] sm:$0xff] %vm1284, %v3102
      %3133 = vst.msk [vmem:[#allocation2 + $0x2a0] sm:$0xff] %vm1284, %v3103
      %3134 = vst.msk [vmem:[#allocation2 + $0x2a8] sm:$0xff] %vm1284, %v3104
      %3135 = vst.msk [vmem:[#allocation2 + $0x2b0] sm:$0xff] %vm1284, %v3105
      %3136 = vst.msk [vmem:[#allocation2 + $0x2b8] sm:$0xff] %vm1284, %v3106
      %3137 = vst.msk [vmem:[#allocation2 + $0x2c0] sm:$0xff] %vm1284, %v3107
      %3138 = vst.msk [vmem:[#allocation2 + $0x2c8] sm:$0xff] %vm1284, %v3108
      %v3139 = vld [vmem:[%s381 + $0x2d0] sm:$0xff]
      %v3140 = vld [vmem:[%s381 + $0x2d8] sm:$0xff]
      %v3141 = vld [vmem:[%s381 + $0x2e0] sm:$0xff]
      %v3142 = vld [vmem:[%s381 + $0x2e8] sm:$0xff]
      %v3143 = vld [vmem:[%s381 + $0x2f0] sm:$0xff]
      %v3144 = vld [vmem:[%s381 + $0x2f8] sm:$0xff]
      %v3145 = vld [vmem:[%s381 + $0x300] sm:$0xff]
      %v3146 = vld [vmem:[%s381 + $0x308] sm:$0xff]
      %v3147 = vld [vmem:[%s381 + $0x310] sm:$0xff]
      %v3148 = vld [vmem:[%s381 + $0x318] sm:$0xff]
      %v3149 = vld [vmem:[%s381 + $0x320] sm:$0xff]
      %v3150 = vld [vmem:[%s381 + $0x328] sm:$0xff]
      %v3151 = vld [vmem:[%s381 + $0x330] sm:$0xff]
      %v3152 = vld [vmem:[%s381 + $0x338] sm:$0xff]
      %v3153 = vld [vmem:[%s381 + $0x340] sm:$0xff]
      %v3154 = vld [vmem:[%s381 + $0x348] sm:$0xff]
      %v3155 = vld [vmem:[%s381 + $0x350] sm:$0xff]
      %v3156 = vld [vmem:[%s381 + $0x358] sm:$0xff]
      %v3157 = vld [vmem:[%s381 + $0x360] sm:$0xff]
      %v3158 = vld [vmem:[%s381 + $0x368] sm:$0xff]
      %v3159 = vld [vmem:[%s381 + $0x370] sm:$0xff]
      %v3160 = vld [vmem:[%s381 + $0x378] sm:$0xff]
      %v3161 = vld [vmem:[%s381 + $0x380] sm:$0xff]
      %v3162 = vld [vmem:[%s381 + $0x388] sm:$0xff]
      %v3163 = vld [vmem:[%s381 + $0x390] sm:$0xff]
      %v3164 = vld [vmem:[%s381 + $0x398] sm:$0xff]
      %v3165 = vld [vmem:[%s381 + $0x3a0] sm:$0xff]
      %v3166 = vld [vmem:[%s381 + $0x3a8] sm:$0xff]
      %v3167 = vld [vmem:[%s381 + $0x3b0] sm:$0xff]
      %v3168 = vld [vmem:[%s381 + $0x3b8] sm:$0xff]
      %v3169 = vld [vmem:[%s1] sm:$0xff]
      %v3170 = vld [vmem:[%s1 + $0x8] sm:$0xff]
      %v3172 = vsel %vm421, %v3139, 0
      %v3175 = vsel %vm421, %v3140, 0
      %v3178 = vsel %vm421, %v3141, 0
      %v3181 = vsel %vm421, %v3142, 0
      %v3184 = vsel %vm421, %v3143, 0
      %v3187 = vsel %vm421, %v3144, 0
      %v3190 = vsel %vm421, %v3145, 0
      %v3193 = vsel %vm421, %v3146, 0
      %v3196 = vsel %vm421, %v3147, 0
      %v3199 = vsel %vm421, %v3148, 0
      %v3202 = vsel %vm421, %v3149, 0
      %v3205 = vsel %vm421, %v3150, 0
      %v3208 = vsel %vm421, %v3151, 0
      %v3211 = vsel %vm421, %v3152, 0
      %v3214 = vsel %vm421, %v3153, 0
      %v3217 = vsel %vm421, %v3154, 0
      %v3220 = vsel %vm421, %v3155, 0
      %v3223 = vsel %vm421, %v3156, 0
      %v3226 = vsel %vm421, %v3157, 0
      %v3229 = vsel %vm421, %v3158, 0
      %v3232 = vsel %vm421, %v3159, 0
      %v3235 = vsel %vm421, %v3160, 0
      %v3238 = vsel %vm421, %v3161, 0
      %v3241 = vsel %vm421, %v3162, 0
      %v3244 = vsel %vm421, %v3163, 0
      %v3247 = vsel %vm421, %v3164, 0
      %v3250 = vsel %vm421, %v3165, 0
      %v3253 = vsel %vm421, %v3166, 0
      %v3256 = vsel %vm421, %v3167, 0
      %v3259 = vsel %vm421, %v3168, 0
      %3261 = vmatprep.subr.mxu0 0.0
      %3262 = vmatpush1.msra.mxu0 %v3169
      %3263 = vmatprep.subr.mxu0 0.0
      %3264 = vmatpush1.msra.mxu0 %v3170
      %3265 = vmatprep.subr.mxu0 0.0
      %3266 = vmatpush1.msra.mxu0 0.0
      %3267 = vmatprep.subr.mxu0 0.0
      %3268 = vmatpush1.msra.mxu0 0.0
      %3269 = vmatprep.subr.mxu0 0.0
      %3270 = vmatpush1.msra.mxu0 0.0
      %3271 = vmatprep.subr.mxu0 0.0
      %3272 = vmatpush1.msra.mxu0 0.0
      %3273 = vmatprep.subr.mxu0 0.0
      %3274 = vmatpush1.msra.mxu0 0.0
      %3275 = vmatprep.subr.mxu0 0.0
      %3276 = vmatpush1.msra.mxu0 0.0
      %3277 = vmatprep.subr.mxu0 0.0
      %3278 = vmatpush1.msra.mxu0 0.0
      %3279 = vmatprep.subr.mxu0 0.0
      %3280 = vmatpush1.msra.mxu0 0.0
      %3281 = vmatprep.subr.mxu0 0.0
      %3282 = vmatpush1.msra.mxu0 0.0
      %3283 = vmatprep.subr.mxu0 0.0
      %3284 = vmatpush1.msra.mxu0 0.0
      %3285 = vmatprep.subr.mxu0 0.0
      %3286 = vmatpush1.msra.mxu0 0.0
      %3287 = vmatprep.subr.mxu0 0.0
      %3288 = vmatpush1.msra.mxu0 0.0
      %3289 = vmatprep.subr.mxu0 0.0
      %3290 = vmatpush1.msra.mxu0 0.0
      %3291 = vmatprep.subr.mxu0 0.0
      %3292 = vmatpush1.msra.mxu0 0.0
      %3293 = vmatprep.subr.mxu0 0.0
      %3294 = vmatpush1.msra.mxu0 0.0
      %3295 = vmatprep.subr.mxu0 0.0
      %3296 = vmatpush1.msra.mxu0 0.0
      %3297 = vmatprep.subr.mxu0 0.0
      %3298 = vmatpush1.msra.mxu0 0.0
      %3299 = vmatprep.subr.mxu0 0.0
      %3300 = vmatpush1.msra.mxu0 0.0
      %3301 = vmatprep.subr.mxu0 0.0
      %3302 = vmatpush1.msra.mxu0 0.0
      %3303 = vmatprep.subr.mxu0 0.0
      %3304 = vmatpush1.msra.mxu0 0.0
      %3305 = vmatprep.subr.mxu0 0.0
      %3306 = vmatpush1.msra.mxu0 0.0
      %3307 = vmatprep.subr.mxu0 0.0
      %3308 = vmatpush1.msra.mxu0 0.0
      %3309 = vmatprep.subr.mxu0 0.0
      %3310 = vmatpush1.msra.mxu0 0.0
      %3311 = vmatprep.subr.mxu0 0.0
      %3312 = vmatpush1.msra.mxu0 0.0
      %3313 = vmatprep.subr.mxu0 0.0
      %3314 = vmatpush1.msra.mxu0 0.0
      %3315 = vmatprep.subr.mxu0 0.0
      %3316 = vmatpush1.msra.mxu0 0.0
      %3317 = vmatprep.subr.mxu0 0.0
      %3318 = vmatpush1.msra.mxu0 0.0
      %3319 = vmatprep.subr.mxu0 0.0
      %3320 = vmatpush1.msra.mxu0 0.0
      %3321 = vmatprep.subr.mxu0 0.0
      %3322 = vmatpush1.msra.mxu0 0.0
      %3323 = vmatprep.subr.mxu0 0.0
      %3324 = vmatpush1.msra.mxu0 0.0
      %3325 = vmatprep.mubr.f32.mxu0 0.0
      %3326 = vmatmul.mubr.f32.gmra.mrb[0].mxu0 %v3172
      %v3327 = vpop.f32.mrb[0].mxu0
      %v3328 = vadd.f32 0.0, %v3327
      %v3329 = vpop.f32.mrb[0].mxu0
      %3330 = vmatprep.mubr.f32.mxu0 0.0
      %3331 = vmatmul.mubr.f32.gmra.mrb[0].mxu0 %v3175
      %v3332 = vpop.f32.mrb[0].mxu0
      %v3333 = vadd.f32 0.0, %v3332
      %v3334 = vpop.f32.mrb[0].mxu0
      %3335 = vmatprep.mubr.f32.mxu0 0.0
      %3336 = vmatmul.mubr.f32.gmra.mrb[0].mxu0 %v3178
      %v3337 = vpop.f32.mrb[0].mxu0
      %v3338 = vadd.f32 0.0, %v3337
      %v3339 = vpop.f32.mrb[0].mxu0
      %3340 = vmatprep.mubr.f32.mxu0 0.0
      %3341 = vmatmul.mubr.f32.gmra.mrb[0].mxu0 %v3181
      %v3342 = vpop.f32.mrb[0].mxu0
      %v3343 = vadd.f32 0.0, %v3342
      %v3344 = vpop.f32.mrb[0].mxu0
      %3345 = vmatprep.mubr.f32.mxu0 0.0
      %3346 = vmatmul.mubr.f32.gmra.mrb[0].mxu0 %v3184
      %v3347 = vpop.f32.mrb[0].mxu0
      %v3348 = vadd.f32 0.0, %v3347
      %v3349 = vpop.f32.mrb[0].mxu0
      %3350 = vmatprep.mubr.f32.mxu0 0.0
      %3351 = vmatmul.mubr.f32.gmra.mrb[0].mxu0 %v3187
      %v3352 = vpop.f32.mrb[0].mxu0
      %v3353 = vadd.f32 0.0, %v3352
      %v3354 = vpop.f32.mrb[0].mxu0
      %3355 = vmatprep.mubr.f32.mxu0 0.0
      %3356 = vmatmul.mubr.f32.gmra.mrb[0].mxu0 %v3190
      %v3357 = vpop.f32.mrb[0].mxu0
      %v3358 = vadd.f32 0.0, %v3357
      %v3359 = vpop.f32.mrb[0].mxu0
      %3360 = vmatprep.mubr.f32.mxu0 0.0
      %3361 = vmatmul.mubr.f32.gmra.mrb[0].mxu0 %v3193
      %v3362 = vpop.f32.mrb[0].mxu0
      %v3363 = vadd.f32 0.0, %v3362
      %v3364 = vpop.f32.mrb[0].mxu0
      %3365 = vmatprep.mubr.f32.mxu0 0.0
      %3366 = vmatmul.mubr.f32.gmra.mrb[0].mxu0 %v3196
      %v3367 = vpop.f32.mrb[0].mxu0
      %v3368 = vadd.f32 0.0, %v3367
      %v3369 = vpop.f32.mrb[0].mxu0
      %3370 = vmatprep.mubr.f32.mxu0 0.0
      %3371 = vmatmul.mubr.f32.gmra.mrb[0].mxu0 %v3199
      %v3372 = vpop.f32.mrb[0].mxu0
      %v3373 = vadd.f32 0.0, %v3372
      %v3374 = vpop.f32.mrb[0].mxu0
      %3375 = vmatprep.mubr.f32.mxu0 0.0
      %3376 = vmatmul.mubr.f32.gmra.mrb[0].mxu0 %v3202
      %v3377 = vpop.f32.mrb[0].mxu0
      %v3378 = vadd.f32 0.0, %v3377
      %v3379 = vpop.f32.mrb[0].mxu0
      %3380 = vmatprep.mubr.f32.mxu0 0.0
      %3381 = vmatmul.mubr.f32.gmra.mrb[0].mxu0 %v3205
      %v3382 = vpop.f32.mrb[0].mxu0
      %v3383 = vadd.f32 0.0, %v3382
      %v3384 = vpop.f32.mrb[0].mxu0
      %3385 = vmatprep.mubr.f32.mxu0 0.0
      %3386 = vmatmul.mubr.f32.gmra.mrb[0].mxu0 %v3208
      %v3387 = vpop.f32.mrb[0].mxu0
      %v3388 = vadd.f32 0.0, %v3387
      %v3389 = vpop.f32.mrb[0].mxu0
      %3390 = vmatprep.mubr.f32.mxu0 0.0
      %3391 = vmatmul.mubr.f32.gmra.mrb[0].mxu0 %v3211
      %v3392 = vpop.f32.mrb[0].mxu0
      %v3393 = vadd.f32 0.0, %v3392
      %v3394 = vpop.f32.mrb[0].mxu0
      %3395 = vmatprep.mubr.f32.mxu0 0.0
      %3396 = vmatmul.mubr.f32.gmra.mrb[0].mxu0 %v3214
      %v3397 = vpop.f32.mrb[0].mxu0
      %v3398 = vadd.f32 0.0, %v3397
      %v3399 = vpop.f32.mrb[0].mxu0
      %3400 = vmatprep.mubr.f32.mxu0 0.0
      %3401 = vmatmul.mubr.f32.gmra.mrb[0].mxu0 %v3217
      %v3402 = vpop.f32.mrb[0].mxu0
      %v3403 = vadd.f32 0.0, %v3402
      %v3404 = vpop.f32.mrb[0].mxu0
      %3405 = vmatprep.mubr.f32.mxu0 0.0
      %3406 = vmatmul.mubr.f32.gmra.mrb[0].mxu0 %v3220
      %v3407 = vpop.f32.mrb[0].mxu0
      %v3408 = vadd.f32 0.0, %v3407
      %v3409 = vpop.f32.mrb[0].mxu0
      %3410 = vmatprep.mubr.f32.mxu0 0.0
      %3411 = vmatmul.mubr.f32.gmra.mrb[0].mxu0 %v3223
      %v3412 = vpop.f32.mrb[0].mxu0
      %v3413 = vadd.f32 0.0, %v3412
      %v3414 = vpop.f32.mrb[0].mxu0
      %3415 = vmatprep.mubr.f32.mxu0 0.0
      %3416 = vmatmul.mubr.f32.gmra.mrb[0].mxu0 %v3226
      %v3417 = vpop.f32.mrb[0].mxu0
      %v3418 = vadd.f32 0.0, %v3417
      %v3419 = vpop.f32.mrb[0].mxu0
      %3420 = vmatprep.mubr.f32.mxu0 0.0
      %3421 = vmatmul.mubr.f32.gmra.mrb[0].mxu0 %v3229
      %v3422 = vpop.f32.mrb[0].mxu0
      %v3423 = vadd.f32 0.0, %v3422
      %v3424 = vpop.f32.mrb[0].mxu0
      %3425 = vmatprep.mubr.f32.mxu0 0.0
      %3426 = vmatmul.mubr.f32.gmra.mrb[0].mxu0 %v3232
      %v3427 = vpop.f32.mrb[0].mxu0
      %v3428 = vadd.f32 0.0, %v3427
      %v3429 = vpop.f32.mrb[0].mxu0
      %3430 = vmatprep.mubr.f32.mxu0 0.0
      %3431 = vmatmul.mubr.f32.gmra.mrb[0].mxu0 %v3235
      %v3432 = vpop.f32.mrb[0].mxu0
      %v3433 = vadd.f32 0.0, %v3432
      %v3434 = vpop.f32.mrb[0].mxu0
      %3435 = vmatprep.mubr.f32.mxu0 0.0
      %3436 = vmatmul.mubr.f32.gmra.mrb[0].mxu0 %v3238
      %v3437 = vpop.f32.mrb[0].mxu0
      %v3438 = vadd.f32 0.0, %v3437
      %v3439 = vpop.f32.mrb[0].mxu0
      %3440 = vmatprep.mubr.f32.mxu0 0.0
      %3441 = vmatmul.mubr.f32.gmra.mrb[0].mxu0 %v3241
      %v3442 = vpop.f32.mrb[0].mxu0
      %v3443 = vadd.f32 0.0, %v3442
      %v3444 = vpop.f32.mrb[0].mxu0
      %3445 = vmatprep.mubr.f32.mxu0 0.0
      %3446 = vmatmul.mubr.f32.gmra.mrb[0].mxu0 %v3244
      %v3447 = vpop.f32.mrb[0].mxu0
      %v3448 = vadd.f32 0.0, %v3447
      %v3449 = vpop.f32.mrb[0].mxu0
      %3450 = vmatprep.mubr.f32.mxu0 0.0
      %3451 = vmatmul.mubr.f32.gmra.mrb[0].mxu0 %v3247
      %v3452 = vpop.f32.mrb[0].mxu0
      %v3453 = vadd.f32 0.0, %v3452
      %v3454 = vpop.f32.mrb[0].mxu0
      %3455 = vmatprep.mubr.f32.mxu0 0.0
      %3456 = vmatmul.mubr.f32.gmra.mrb[0].mxu0 %v3250
      %v3457 = vpop.f32.mrb[0].mxu0
      %v3458 = vadd.f32 0.0, %v3457
      %v3459 = vpop.f32.mrb[0].mxu0
      %3460 = vmatprep.mubr.f32.mxu0 0.0
      %3461 = vmatmul.mubr.f32.gmra.mrb[0].mxu0 %v3253
      %v3462 = vpop.f32.mrb[0].mxu0
      %v3463 = vadd.f32 0.0, %v3462
      %v3464 = vpop.f32.mrb[0].mxu0
      %3465 = vmatprep.mubr.f32.mxu0 0.0
      %3466 = vmatmul.mubr.f32.gmra.mrb[0].mxu0 %v3256
      %v3467 = vpop.f32.mrb[0].mxu0
      %v3468 = vadd.f32 0.0, %v3467
      %v3469 = vpop.f32.mrb[0].mxu0
      %3470 = vmatprep.mubr.f32.mxu0 0.0
      %3471 = vmatmul.mubr.f32.gmra.mrb[0].mxu0 %v3259
      %v3472 = vpop.f32.mrb[0].mxu0
      %v3473 = vadd.f32 0.0, %v3472
      %v3474 = vpop.f32.mrb[0].mxu0
      %3475 = vdwg.mxu0
      %v3476 = vld [vmem:[%s381 + $0x690] sm:$0xff]
      %v3477 = vld [vmem:[%s381 + $0x698] sm:$0xff]
      %v3478 = vld [vmem:[%s381 + $0x6a0] sm:$0xff]
      %v3479 = vld [vmem:[%s381 + $0x6a8] sm:$0xff]
      %v3480 = vld [vmem:[%s381 + $0x6b0] sm:$0xff]
      %v3481 = vld [vmem:[%s381 + $0x6b8] sm:$0xff]
      %v3482 = vld [vmem:[%s381 + $0x6c0] sm:$0xff]
      %v3483 = vld [vmem:[%s381 + $0x6c8] sm:$0xff]
      %v3484 = vld [vmem:[%s381 + $0x6d0] sm:$0xff]
      %v3485 = vld [vmem:[%s381 + $0x6d8] sm:$0xff]
      %v3486 = vld [vmem:[%s381 + $0x6e0] sm:$0xff]
      %v3487 = vld [vmem:[%s381 + $0x6e8] sm:$0xff]
      %v3488 = vld [vmem:[%s381 + $0x6f0] sm:$0xff]
      %v3489 = vld [vmem:[%s381 + $0x6f8] sm:$0xff]
      %v3490 = vld [vmem:[%s381 + $0x700] sm:$0xff]
      %v3491 = vld [vmem:[%s381 + $0x708] sm:$0xff]
      %v3492 = vld [vmem:[%s381 + $0x710] sm:$0xff]
      %v3493 = vld [vmem:[%s381 + $0x718] sm:$0xff]
      %v3494 = vld [vmem:[%s381 + $0x720] sm:$0xff]
      %v3495 = vld [vmem:[%s381 + $0x728] sm:$0xff]
      %v3496 = vld [vmem:[%s381 + $0x730] sm:$0xff]
      %v3497 = vld [vmem:[%s381 + $0x738] sm:$0xff]
      %v3498 = vld [vmem:[%s381 + $0x740] sm:$0xff]
      %v3499 = vld [vmem:[%s381 + $0x748] sm:$0xff]
      %v3500 = vld [vmem:[%s381 + $0x750] sm:$0xff]
      %v3501 = vld [vmem:[%s381 + $0x758] sm:$0xff]
      %v3502 = vld [vmem:[%s381 + $0x760] sm:$0xff]
      %v3503 = vld [vmem:[%s381 + $0x768] sm:$0xff]
      %v3504 = vld [vmem:[%s381 + $0x770] sm:$0xff]
      %v3505 = vld [vmem:[%s381 + $0x778] sm:$0xff]
      %v3507 = vsel %vm421, %v3476, 0
      %v3510 = vsel %vm421, %v3477, 0
      %v3513 = vsel %vm421, %v3478, 0
      %v3516 = vsel %vm421, %v3479, 0
      %v3519 = vsel %vm421, %v3480, 0
      %v3522 = vsel %vm421, %v3481, 0
      %v3525 = vsel %vm421, %v3482, 0
      %v3528 = vsel %vm421, %v3483, 0
      %v3531 = vsel %vm421, %v3484, 0
      %v3534 = vsel %vm421, %v3485, 0
      %v3537 = vsel %vm421, %v3486, 0
      %v3540 = vsel %vm421, %v3487, 0
      %v3543 = vsel %vm421, %v3488, 0
      %v3546 = vsel %vm421, %v3489, 0
      %v3549 = vsel %vm421, %v3490, 0
      %v3552 = vsel %vm421, %v3491, 0
      %v3555 = vsel %vm421, %v3492, 0
      %v3558 = vsel %vm421, %v3493, 0
      %v3561 = vsel %vm421, %v3494, 0
      %v3564 = vsel %vm421, %v3495, 0
      %v3567 = vsel %vm421, %v3496, 0
      %v3570 = vsel %vm421, %v3497, 0
      %v3573 = vsel %vm421, %v3498, 0
      %v3576 = vsel %vm421, %v3499, 0
      %v3579 = vsel %vm421, %v3500, 0
      %v3582 = vsel %vm421, %v3501, 0
      %v3585 = vsel %vm421, %v3502, 0
      %v3588 = vsel %vm421, %v3503, 0
      %v3591 = vsel %vm421, %v3504, 0
      %v3594 = vsel %vm421, %v3505, 0
      %3596 = vmatprep.subr.mxu0 0.0
      %3597 = vmatpush1.msra.mxu0 %v3169
      %3598 = vmatprep.subr.mxu0 0.0
      %3599 = vmatpush1.msra.mxu0 %v3170
      %3600 = vmatprep.subr.mxu0 0.0
      %3601 = vmatpush1.msra.mxu0 0.0
      %3602 = vmatprep.subr.mxu0 0.0
      %3603 = vmatpush1.msra.mxu0 0.0
      %3604 = vmatprep.subr.mxu0 0.0
      %3605 = vmatpush1.msra.mxu0 0.0
      %3606 = vmatprep.subr.mxu0 0.0
      %3607 = vmatpush1.msra.mxu0 0.0
      %3608 = vmatprep.subr.mxu0 0.0
      %3609 = vmatpush1.msra.mxu0 0.0
      %3610 = vmatprep.subr.mxu0 0.0
      %3611 = vmatpush1.msra.mxu0 0.0
      %3612 = vmatprep.subr.mxu0 0.0
      %3613 = vmatpush1.msra.mxu0 0.0
      %3614 = vmatprep.subr.mxu0 0.0
      %3615 = vmatpush1.msra.mxu0 0.0
      %3616 = vmatprep.subr.mxu0 0.0
      %3617 = vmatpush1.msra.mxu0 0.0
      %3618 = vmatprep.subr.mxu0 0.0
      %3619 = vmatpush1.msra.mxu0 0.0
      %3620 = vmatprep.subr.mxu0 0.0
      %3621 = vmatpush1.msra.mxu0 0.0
      %3622 = vmatprep.subr.mxu0 0.0
      %3623 = vmatpush1.msra.mxu0 0.0
      %3624 = vmatprep.subr.mxu0 0.0
      %3625 = vmatpush1.msra.mxu0 0.0
      %3626 = vmatprep.subr.mxu0 0.0
      %3627 = vmatpush1.msra.mxu0 0.0
      %3628 = vmatprep.subr.mxu0 0.0
      %3629 = vmatpush1.msra.mxu0 0.0
      %3630 = vmatprep.subr.mxu0 0.0
      %3631 = vmatpush1.msra.mxu0 0.0
      %3632 = vmatprep.subr.mxu0 0.0
      %3633 = vmatpush1.msra.mxu0 0.0
      %3634 = vmatprep.subr.mxu0 0.0
      %3635 = vmatpush1.msra.mxu0 0.0
      %3636 = vmatprep.subr.mxu0 0.0
      %3637 = vmatpush1.msra.mxu0 0.0
      %3638 = vmatprep.subr.mxu0 0.0
      %3639 = vmatpush1.msra.mxu0 0.0
      %3640 = vmatprep.subr.mxu0 0.0
      %3641 = vmatpush1.msra.mxu0 0.0
      %3642 = vmatprep.subr.mxu0 0.0
      %3643 = vmatpush1.msra.mxu0 0.0
      %3644 = vmatprep.subr.mxu0 0.0
      %3645 = vmatpush1.msra.mxu0 0.0
      %3646 = vmatprep.subr.mxu0 0.0
      %3647 = vmatpush1.msra.mxu0 0.0
      %3648 = vmatprep.subr.mxu0 0.0
      %3649 = vmatpush1.msra.mxu0 0.0
      %3650 = vmatprep.subr.mxu0 0.0
      %3651 = vmatpush1.msra.mxu0 0.0
      %3652 = vmatprep.subr.mxu0 0.0
      %3653 = vmatpush1.msra.mxu0 0.0
      %3654 = vmatprep.subr.mxu0 0.0
      %3655 = vmatpush1.msra.mxu0 0.0
      %3656 = vmatprep.subr.mxu0 0.0
      %3657 = vmatpush1.msra.mxu0 0.0
      %3658 = vmatprep.subr.mxu0 0.0
      %3659 = vmatpush1.msra.mxu0 0.0
      %3660 = vmatprep.mubr.f32.mxu0 0.0
      %3661 = vmatmul.mubr.f32.gmra.mrb[0].mxu0 %v3507
      %v3662 = vpop.f32.mrb[0].mxu0
      %v3663 = vadd.f32 0.0, %v3662
      %v3664 = vpop.f32.mrb[0].mxu0
      %3665 = vmatprep.mubr.f32.mxu0 0.0
      %3666 = vmatmul.mubr.f32.gmra.mrb[0].mxu0 %v3510
      %v3667 = vpop.f32.mrb[0].mxu0
      %v3668 = vadd.f32 0.0, %v3667
      %v3669 = vpop.f32.mrb[0].mxu0
      %3670 = vmatprep.mubr.f32.mxu0 0.0
      %3671 = vmatmul.mubr.f32.gmra.mrb[0].mxu0 %v3513
      %v3672 = vpop.f32.mrb[0].mxu0
      %v3673 = vadd.f32 0.0, %v3672
      %v3674 = vpop.f32.mrb[0].mxu0
      %3675 = vmatprep.mubr.f32.mxu0 0.0
      %3676 = vmatmul.mubr.f32.gmra.mrb[0].mxu0 %v3516
      %v3677 = vpop.f32.mrb[0].mxu0
      %v3678 = vadd.f32 0.0, %v3677
      %v3679 = vpop.f32.mrb[0].mxu0
      %3680 = vmatprep.mubr.f32.mxu0 0.0
      %3681 = vmatmul.mubr.f32.gmra.mrb[0].mxu0 %v3519
      %v3682 = vpop.f32.mrb[0].mxu0
      %v3683 = vadd.f32 0.0, %v3682
      %v3684 = vpop.f32.mrb[0].mxu0
      %3685 = vmatprep.mubr.f32.mxu0 0.0
      %3686 = vmatmul.mubr.f32.gmra.mrb[0].mxu0 %v3522
      %v3687 = vpop.f32.mrb[0].mxu0
      %v3688 = vadd.f32 0.0, %v3687
      %v3689 = vpop.f32.mrb[0].mxu0
      %3690 = vmatprep.mubr.f32.mxu0 0.0
      %3691 = vmatmul.mubr.f32.gmra.mrb[0].mxu0 %v3525
      %v3692 = vpop.f32.mrb[0].mxu0
      %v3693 = vadd.f32 0.0, %v3692
      %v3694 = vpop.f32.mrb[0].mxu0
      %3695 = vmatprep.mubr.f32.mxu0 0.0
      %3696 = vmatmul.mubr.f32.gmra.mrb[0].mxu0 %v3528
      %v3697 = vpop.f32.mrb[0].mxu0
      %v3698 = vadd.f32 0.0, %v3697
      %v3699 = vpop.f32.mrb[0].mxu0
      %3700 = vmatprep.mubr.f32.mxu0 0.0
      %3701 = vmatmul.mubr.f32.gmra.mrb[0].mxu0 %v3531
      %v3702 = vpop.f32.mrb[0].mxu0
      %v3703 = vadd.f32 0.0, %v3702
      %v3704 = vpop.f32.mrb[0].mxu0
      %3705 = vmatprep.mubr.f32.mxu0 0.0
      %3706 = vmatmul.mubr.f32.gmra.mrb[0].mxu0 %v3534
      %v3707 = vpop.f32.mrb[0].mxu0
      %v3708 = vadd.f32 0.0, %v3707
      %v3709 = vpop.f32.mrb[0].mxu0
      %3710 = vmatprep.mubr.f32.mxu0 0.0
      %3711 = vmatmul.mubr.f32.gmra.mrb[0].mxu0 %v3537
      %v3712 = vpop.f32.mrb[0].mxu0
      %v3713 = vadd.f32 0.0, %v3712
      %v3714 = vpop.f32.mrb[0].mxu0
      %3715 = vmatprep.mubr.f32.mxu0 0.0
      %3716 = vmatmul.mubr.f32.gmra.mrb[0].mxu0 %v3540
      %v3717 = vpop.f32.mrb[0].mxu0
      %v3718 = vadd.f32 0.0, %v3717
      %v3719 = vpop.f32.mrb[0].mxu0
      %3720 = vmatprep.mubr.f32.mxu0 0.0
      %3721 = vmatmul.mubr.f32.gmra.mrb[0].mxu0 %v3543
      %v3722 = vpop.f32.mrb[0].mxu0
      %v3723 = vadd.f32 0.0, %v3722
      %v3724 = vpop.f32.mrb[0].mxu0
      %3725 = vmatprep.mubr.f32.mxu0 0.0
      %3726 = vmatmul.mubr.f32.gmra.mrb[0].mxu0 %v3546
      %v3727 = vpop.f32.mrb[0].mxu0
      %v3728 = vadd.f32 0.0, %v3727
      %v3729 = vpop.f32.mrb[0].mxu0
      %3730 = vmatprep.mubr.f32.mxu0 0.0
      %3731 = vmatmul.mubr.f32.gmra.mrb[0].mxu0 %v3549
      %v3732 = vpop.f32.mrb[0].mxu0
      %v3733 = vadd.f32 0.0, %v3732
      %v3734 = vpop.f32.mrb[0].mxu0
      %3735 = vmatprep.mubr.f32.mxu0 0.0
      %3736 = vmatmul.mubr.f32.gmra.mrb[0].mxu0 %v3552
      %v3737 = vpop.f32.mrb[0].mxu0
      %v3738 = vadd.f32 0.0, %v3737
      %v3739 = vpop.f32.mrb[0].mxu0
      %3740 = vmatprep.mubr.f32.mxu0 0.0
      %3741 = vmatmul.mubr.f32.gmra.mrb[0].mxu0 %v3555
      %v3742 = vpop.f32.mrb[0].mxu0
      %v3743 = vadd.f32 0.0, %v3742
      %v3744 = vpop.f32.mrb[0].mxu0
      %3745 = vmatprep.mubr.f32.mxu0 0.0
      %3746 = vmatmul.mubr.f32.gmra.mrb[0].mxu0 %v3558
      %v3747 = vpop.f32.mrb[0].mxu0
      %v3748 = vadd.f32 0.0, %v3747
      %v3749 = vpop.f32.mrb[0].mxu0
      %3750 = vmatprep.mubr.f32.mxu0 0.0
      %3751 = vmatmul.mubr.f32.gmra.mrb[0].mxu0 %v3561
      %v3752 = vpop.f32.mrb[0].mxu0
      %v3753 = vadd.f32 0.0, %v3752
      %v3754 = vpop.f32.mrb[0].mxu0
      %3755 = vmatprep.mubr.f32.mxu0 0.0
      %3756 = vmatmul.mubr.f32.gmra.mrb[0].mxu0 %v3564
      %v3757 = vpop.f32.mrb[0].mxu0
      %v3758 = vadd.f32 0.0, %v3757
      %v3759 = vpop.f32.mrb[0].mxu0
      %3760 = vmatprep.mubr.f32.mxu0 0.0
      %3761 = vmatmul.mubr.f32.gmra.mrb[0].mxu0 %v3567
      %v3762 = vpop.f32.mrb[0].mxu0
      %v3763 = vadd.f32 0.0, %v3762
      %v3764 = vpop.f32.mrb[0].mxu0
      %3765 = vmatprep.mubr.f32.mxu0 0.0
      %3766 = vmatmul.mubr.f32.gmra.mrb[0].mxu0 %v3570
      %v3767 = vpop.f32.mrb[0].mxu0
      %v3768 = vadd.f32 0.0, %v3767
      %v3769 = vpop.f32.mrb[0].mxu0
      %3770 = vmatprep.mubr.f32.mxu0 0.0
      %3771 = vmatmul.mubr.f32.gmra.mrb[0].mxu0 %v3573
      %v3772 = vpop.f32.mrb[0].mxu0
      %v3773 = vadd.f32 0.0, %v3772
      %v3774 = vpop.f32.mrb[0].mxu0
      %3775 = vmatprep.mubr.f32.mxu0 0.0
      %3776 = vmatmul.mubr.f32.gmra.mrb[0].mxu0 %v3576
      %v3777 = vpop.f32.mrb[0].mxu0
      %v3778 = vadd.f32 0.0, %v3777
      %v3779 = vpop.f32.mrb[0].mxu0
      %3780 = vmatprep.mubr.f32.mxu0 0.0
      %3781 = vmatmul.mubr.f32.gmra.mrb[0].mxu0 %v3579
      %v3782 = vpop.f32.mrb[0].mxu0
      %v3783 = vadd.f32 0.0, %v3782
      %v3784 = vpop.f32.mrb[0].mxu0
      %3785 = vmatprep.mubr.f32.mxu0 0.0
      %3786 = vmatmul.mubr.f32.gmra.mrb[0].mxu0 %v3582
      %v3787 = vpop.f32.mrb[0].mxu0
      %v3788 = vadd.f32 0.0, %v3787
      %v3789 = vpop.f32.mrb[0].mxu0
      %3790 = vmatprep.mubr.f32.mxu0 0.0
      %3791 = vmatmul.mubr.f32.gmra.mrb[0].mxu0 %v3585
      %v3792 = vpop.f32.mrb[0].mxu0
      %v3793 = vadd.f32 0.0, %v3792
      %v3794 = vpop.f32.mrb[0].mxu0
      %3795 = vmatprep.mubr.f32.mxu0 0.0
      %3796 = vmatmul.mubr.f32.gmra.mrb[0].mxu0 %v3588
      %v3797 = vpop.f32.mrb[0].mxu0
      %v3798 = vadd.f32 0.0, %v3797
      %v3799 = vpop.f32.mrb[0].mxu0
      %3800 = vmatprep.mubr.f32.mxu0 0.0
      %3801 = vmatmul.mubr.f32.gmra.mrb[0].mxu0 %v3591
      %v3802 = vpop.f32.mrb[0].mxu0
      %v3803 = vadd.f32 0.0, %v3802
      %v3804 = vpop.f32.mrb[0].mxu0
      %3805 = vmatprep.mubr.f32.mxu0 0.0
      %3806 = vmatmul.mubr.f32.gmra.mrb[0].mxu0 %v3594
      %v3807 = vpop.f32.mrb[0].mxu0
      %v3808 = vadd.f32 0.0, %v3807
      %v3809 = vpop.f32.mrb[0].mxu0
      %3810 = vdwg.mxu0
      %v3811 = vmul.f32 %v3328, %v1066
      %v3812 = vmul.f32 %v3333, %v1066
      %v3813 = vmul.f32 %v3338, %v1066
      %v3814 = vmul.f32 %v3343, %v1066
      %v3815 = vmul.f32 %v3348, %v1066
      %v3816 = vmul.f32 %v3353, %v1066
      %v3817 = vmul.f32 %v3358, %v1066
      %v3818 = vmul.f32 %v3363, %v1066
      %v3819 = vmul.f32 %v3368, %v1066
      %v3820 = vmul.f32 %v3373, %v1066
      %v3821 = vmul.f32 %v3378, %v1066
      %v3822 = vmul.f32 %v3383, %v1066
      %v3823 = vmul.f32 %v3388, %v1066
      %v3824 = vmul.f32 %v3393, %v1066
      %v3825 = vmul.f32 %v3398, %v1066
      %v3826 = vmul.f32 %v3403, %v1066
      %v3827 = vmul.f32 %v3408, %v1066
      %v3828 = vmul.f32 %v3413, %v1066
      %v3829 = vmul.f32 %v3418, %v1066
      %v3830 = vmul.f32 %v3423, %v1066
      %v3831 = vmul.f32 %v3428, %v1066
      %v3832 = vmul.f32 %v3433, %v1066
      %v3833 = vmul.f32 %v3438, %v1066
      %v3834 = vmul.f32 %v3443, %v1066
      %v3835 = vmul.f32 %v3448, %v1066
      %v3836 = vmul.f32 %v3453, %v1066
      %v3837 = vmul.f32 %v3458, %v1066
      %v3838 = vmul.f32 %v3463, %v1066
      %v3839 = vmul.f32 %v3468, %v1066
      %v3840 = vmul.f32 %v3473, %v1066
      %v3841 = vadd.f32 %v3811, %v1102
      %v3842 = vadd.f32 %v3812, %v1102
      %v3843 = vadd.f32 %v3813, %v1102
      %v3844 = vadd.f32 %v3814, %v1102
      %v3845 = vadd.f32 %v3815, %v1102
      %v3846 = vadd.f32 %v3816, %v1102
      %v3847 = vadd.f32 %v3817, %v1102
      %v3848 = vadd.f32 %v3818, %v1102
      %v3849 = vadd.f32 %v3819, %v1102
      %v3850 = vadd.f32 %v3820, %v1102
      %v3851 = vadd.f32 %v3821, %v1102
      %v3852 = vadd.f32 %v3822, %v1102
      %v3853 = vadd.f32 %v3823, %v1102
      %v3854 = vadd.f32 %v3824, %v1102
      %v3855 = vadd.f32 %v3825, %v1102
      %v3856 = vadd.f32 %v3826, %v1102
      %v3857 = vadd.f32 %v3827, %v1102
      %v3858 = vadd.f32 %v3828, %v1102
      %v3859 = vadd.f32 %v3829, %v1102
      %v3860 = vadd.f32 %v3830, %v1102
      %v3861 = vadd.f32 %v3831, %v1102
      %v3862 = vadd.f32 %v3832, %v1102
      %v3863 = vadd.f32 %v3833, %v1102
      %v3864 = vadd.f32 %v3834, %v1102
      %v3865 = vadd.f32 %v3835, %v1102
      %v3866 = vadd.f32 %v3836, %v1102
      %v3867 = vadd.f32 %v3837, %v1102
      %v3868 = vadd.f32 %v3838, %v1102
      %v3869 = vadd.f32 %v3839, %v1102
      %v3870 = vadd.f32 %v3840, %v1102
      %v3871 = vmax.f32 %v3841, 0.0
      %v3872 = vmax.f32 %v3842, 0.0
      %v3873 = vmax.f32 %v3843, 0.0
      %v3874 = vmax.f32 %v3844, 0.0
      %v3875 = vmax.f32 %v3845, 0.0
      %v3876 = vmax.f32 %v3846, 0.0
      %v3877 = vmax.f32 %v3847, 0.0
      %v3878 = vmax.f32 %v3848, 0.0
      %v3879 = vmax.f32 %v3849, 0.0
      %v3880 = vmax.f32 %v3850, 0.0
      %v3881 = vmax.f32 %v3851, 0.0
      %v3882 = vmax.f32 %v3852, 0.0
      %v3883 = vmax.f32 %v3853, 0.0
      %v3884 = vmax.f32 %v3854, 0.0
      %v3885 = vmax.f32 %v3855, 0.0
      %v3886 = vmax.f32 %v3856, 0.0
      %v3887 = vmax.f32 %v3857, 0.0
      %v3888 = vmax.f32 %v3858, 0.0
      %v3889 = vmax.f32 %v3859, 0.0
      %v3890 = vmax.f32 %v3860, 0.0
      %v3891 = vmax.f32 %v3861, 0.0
      %v3892 = vmax.f32 %v3862, 0.0
      %v3893 = vmax.f32 %v3863, 0.0
      %v3894 = vmax.f32 %v3864, 0.0
      %v3895 = vmax.f32 %v3865, 0.0
      %v3896 = vmax.f32 %v3866, 0.0
      %v3897 = vmax.f32 %v3867, 0.0
      %v3898 = vmax.f32 %v3868, 0.0
      %v3899 = vmax.f32 %v3869, 0.0
      %v3900 = vmax.f32 %v3870, 0.0
      %v3901 = vmul.f32 %v3663, %v1066
      %v3902 = vmul.f32 %v3668, %v1066
      %v3903 = vmul.f32 %v3673, %v1066
      %v3904 = vmul.f32 %v3678, %v1066
      %v3905 = vmul.f32 %v3683, %v1066
      %v3906 = vmul.f32 %v3688, %v1066
      %v3907 = vmul.f32 %v3693, %v1066
      %v3908 = vmul.f32 %v3698, %v1066
      %v3909 = vmul.f32 %v3703, %v1066
      %v3910 = vmul.f32 %v3708, %v1066
      %v3911 = vmul.f32 %v3713, %v1066
      %v3912 = vmul.f32 %v3718, %v1066
      %v3913 = vmul.f32 %v3723, %v1066
      %v3914 = vmul.f32 %v3728, %v1066
      %v3915 = vmul.f32 %v3733, %v1066
      %v3916 = vmul.f32 %v3738, %v1066
      %v3917 = vmul.f32 %v3743, %v1066
      %v3918 = vmul.f32 %v3748, %v1066
      %v3919 = vmul.f32 %v3753, %v1066
      %v3920 = vmul.f32 %v3758, %v1066
      %v3921 = vmul.f32 %v3763, %v1066
      %v3922 = vmul.f32 %v3768, %v1066
      %v3923 = vmul.f32 %v3773, %v1066
      %v3924 = vmul.f32 %v3778, %v1066
      %v3925 = vmul.f32 %v3783, %v1066
      %v3926 = vmul.f32 %v3788, %v1066
      %v3927 = vmul.f32 %v3793, %v1066
      %v3928 = vmul.f32 %v3798, %v1066
      %v3929 = vmul.f32 %v3803, %v1066
      %v3930 = vmul.f32 %v3808, %v1066
      %v3931 = vadd.f32 %v3901, %v1102
      %v3932 = vadd.f32 %v3902, %v1102
      %v3933 = vadd.f32 %v3903, %v1102
      %v3934 = vadd.f32 %v3904, %v1102
      %v3935 = vadd.f32 %v3905, %v1102
      %v3936 = vadd.f32 %v3906, %v1102
      %v3937 = vadd.f32 %v3907, %v1102
      %v3938 = vadd.f32 %v3908, %v1102
      %v3939 = vadd.f32 %v3909, %v1102
      %v3940 = vadd.f32 %v3910, %v1102
      %v3941 = vadd.f32 %v3911, %v1102
      %v3942 = vadd.f32 %v3912, %v1102
      %v3943 = vadd.f32 %v3913, %v1102
      %v3944 = vadd.f32 %v3914, %v1102
      %v3945 = vadd.f32 %v3915, %v1102
      %v3946 = vadd.f32 %v3916, %v1102
      %v3947 = vadd.f32 %v3917, %v1102
      %v3948 = vadd.f32 %v3918, %v1102
      %v3949 = vadd.f32 %v3919, %v1102
      %v3950 = vadd.f32 %v3920, %v1102
      %v3951 = vadd.f32 %v3921, %v1102
      %v3952 = vadd.f32 %v3922, %v1102
      %v3953 = vadd.f32 %v3923, %v1102
      %v3954 = vadd.f32 %v3924, %v1102
      %v3955 = vadd.f32 %v3925, %v1102
      %v3956 = vadd.f32 %v3926, %v1102
      %v3957 = vadd.f32 %v3927, %v1102
      %v3958 = vadd.f32 %v3928, %v1102
      %v3959 = vadd.f32 %v3929, %v1102
      %v3960 = vadd.f32 %v3930, %v1102
      %v3961 = vmax.f32 %v3931, 0.0
      %v3962 = vmax.f32 %v3932, 0.0
      %v3963 = vmax.f32 %v3933, 0.0
      %v3964 = vmax.f32 %v3934, 0.0
      %v3965 = vmax.f32 %v3935, 0.0
      %v3966 = vmax.f32 %v3936, 0.0
      %v3967 = vmax.f32 %v3937, 0.0
      %v3968 = vmax.f32 %v3938, 0.0
      %v3969 = vmax.f32 %v3939, 0.0
      %v3970 = vmax.f32 %v3940, 0.0
      %v3971 = vmax.f32 %v3941, 0.0
      %v3972 = vmax.f32 %v3942, 0.0
      %v3973 = vmax.f32 %v3943, 0.0
      %v3974 = vmax.f32 %v3944, 0.0
      %v3975 = vmax.f32 %v3945, 0.0
      %v3976 = vmax.f32 %v3946, 0.0
      %v3977 = vmax.f32 %v3947, 0.0
      %v3978 = vmax.f32 %v3948, 0.0
      %v3979 = vmax.f32 %v3949, 0.0
      %v3980 = vmax.f32 %v3950, 0.0
      %v3981 = vmax.f32 %v3951, 0.0
      %v3982 = vmax.f32 %v3952, 0.0
      %v3983 = vmax.f32 %v3953, 0.0
      %v3984 = vmax.f32 %v3954, 0.0
      %v3985 = vmax.f32 %v3955, 0.0
      %v3986 = vmax.f32 %v3956, 0.0
      %v3987 = vmax.f32 %v3957, 0.0
      %v3988 = vmax.f32 %v3958, 0.0
      %v3989 = vmax.f32 %v3959, 0.0
      %v3990 = vmax.f32 %v3960, 0.0
      %v3991 = vmax.f32 %v3871, %v3961
      %v3992 = vmax.f32 %v3872, %v3962
      %v3993 = vmax.f32 %v3873, %v3963
      %v3994 = vmax.f32 %v3874, %v3964
      %v3995 = vmax.f32 %v3875, %v3965
      %v3996 = vmax.f32 %v3876, %v3966
      %v3997 = vmax.f32 %v3877, %v3967
      %v3998 = vmax.f32 %v3878, %v3968
      %v3999 = vmax.f32 %v3879, %v3969
      %v4000 = vmax.f32 %v3880, %v3970
      %v4001 = vmax.f32 %v3881, %v3971
      %v4002 = vmax.f32 %v3882, %v3972
      %v4003 = vmax.f32 %v3883, %v3973
      %v4004 = vmax.f32 %v3884, %v3974
      %v4005 = vmax.f32 %v3885, %v3975
      %v4006 = vmax.f32 %v3886, %v3976
      %v4007 = vmax.f32 %v3887, %v3977
      %v4008 = vmax.f32 %v3888, %v3978
      %v4009 = vmax.f32 %v3889, %v3979
      %v4010 = vmax.f32 %v3890, %v3980
      %v4011 = vmax.f32 %v3891, %v3981
      %v4012 = vmax.f32 %v3892, %v3982
      %v4013 = vmax.f32 %v3893, %v3983
      %v4014 = vmax.f32 %v3894, %v3984
      %v4015 = vmax.f32 %v3895, %v3985
      %v4016 = vmax.f32 %v3896, %v3986
      %v4017 = vmax.f32 %v3897, %v3987
      %v4018 = vmax.f32 %v3898, %v3988
      %v4019 = vmax.f32 %v3899, %v3989
      %v4020 = vmax.f32 %v3900, %v3990
      %4021 = vst.msk [vmem:[#allocation2 + $0x2d0] sm:$0xff] %vm1284, %v3991
      %4022 = vst.msk [vmem:[#allocation2 + $0x2d8] sm:$0xff] %vm1284, %v3992
      %4023 = vst.msk [vmem:[#allocation2 + $0x2e0] sm:$0xff] %vm1284, %v3993
      %4024 = vst.msk [vmem:[#allocation2 + $0x2e8] sm:$0xff] %vm1284, %v3994
      %4025 = vst.msk [vmem:[#allocation2 + $0x2f0] sm:$0xff] %vm1284, %v3995
      %4026 = vst.msk [vmem:[#allocation2 + $0x2f8] sm:$0xff] %vm1284, %v3996
      %4027 = vst.msk [vmem:[#allocation2 + $0x300] sm:$0xff] %vm1284, %v3997
      %4028 = vst.msk [vmem:[#allocation2 + $0x308] sm:$0xff] %vm1284, %v3998
      %4029 = vst.msk [vmem:[#allocation2 + $0x310] sm:$0xff] %vm1284, %v3999
      %4030 = vst.msk [vmem:[#allocation2 + $0x318] sm:$0xff] %vm1284, %v4000
      %4031 = vst.msk [vmem:[#allocation2 + $0x320] sm:$0xff] %vm1284, %v4001
      %4032 = vst.msk [vmem:[#allocation2 + $0x328] sm:$0xff] %vm1284, %v4002
      %4033 = vst.msk [vmem:[#allocation2 + $0x330] sm:$0xff] %vm1284, %v4003
      %4034 = vst.msk [vmem:[#allocation2 + $0x338] sm:$0xff] %vm1284, %v4004
      %4035 = vst.msk [vmem:[#allocation2 + $0x340] sm:$0xff] %vm1284, %v4005
      %4036 = vst.msk [vmem:[#allocation2 + $0x348] sm:$0xff] %vm1284, %v4006
      %4037 = vst.msk [vmem:[#allocation2 + $0x350] sm:$0xff] %vm1284, %v4007
      %4038 = vst.msk [vmem:[#allocation2 + $0x358] sm:$0xff] %vm1284, %v4008
      %4039 = vst.msk [vmem:[#allocation2 + $0x360] sm:$0xff] %vm1284, %v4009
      %4040 = vst.msk [vmem:[#allocation2 + $0x368] sm:$0xff] %vm1284, %v4010
      %4041 = vst.msk [vmem:[#allocation2 + $0x370] sm:$0xff] %vm1284, %v4011
      %4042 = vst.msk [vmem:[#allocation2 + $0x378] sm:$0xff] %vm1284, %v4012
      %4043 = vst.msk [vmem:[#allocation2 + $0x380] sm:$0xff] %vm1284, %v4013
      %4044 = vst.msk [vmem:[#allocation2 + $0x388] sm:$0xff] %vm1284, %v4014
      %4045 = vst.msk [vmem:[#allocation2 + $0x390] sm:$0xff] %vm1284, %v4015
      %4046 = vst.msk [vmem:[#allocation2 + $0x398] sm:$0xff] %vm1284, %v4016
      %4047 = vst.msk [vmem:[#allocation2 + $0x3a0] sm:$0xff] %vm1284, %v4017
      %4048 = vst.msk [vmem:[#allocation2 + $0x3a8] sm:$0xff] %vm1284, %v4018
      %4049 = vst.msk [vmem:[#allocation2 + $0x3b0] sm:$0xff] %vm1284, %v4019
      %4050 = vst.msk [vmem:[#allocation2 + $0x3b8] sm:$0xff] %vm1284, %v4020
      %v4051 = vld [vmem:[%s5] sm:$0x1]
      %v4052 = vld [vmem:[%s6] sm:$0x1]
      %v4053 = vld [vmem:[#allocation2] sm:$0xff]
      %v4054 = vld [vmem:[#allocation2 + $0x8] sm:$0xff]
      %v4055 = vld [vmem:[#allocation2 + $0x10] sm:$0xff]
      %v4056 = vld [vmem:[#allocation2 + $0x18] sm:$0xff]
      %v4057 = vld [vmem:[#allocation2 + $0x20] sm:$0xff]
      %v4058 = vld [vmem:[#allocation2 + $0x28] sm:$0xff]
      %v4059 = vld [vmem:[#allocation2 + $0x30] sm:$0xff]
      %v4060 = vld [vmem:[#allocation2 + $0x38] sm:$0xff]
      %v4061 = vld [vmem:[#allocation2 + $0x40] sm:$0xff]
      %v4062 = vld [vmem:[#allocation2 + $0x48] sm:$0xff]
      %v4063 = vld [vmem:[#allocation2 + $0x50] sm:$0xff]
      %v4064 = vld [vmem:[#allocation2 + $0x58] sm:$0xff]
      %v4065 = vld [vmem:[#allocation2 + $0x60] sm:$0xff]
      %v4066 = vld [vmem:[#allocation2 + $0x68] sm:$0xff]
      %v4067 = vld [vmem:[#allocation2 + $0x70] sm:$0xff]
      %v4068 = vld [vmem:[#allocation2 + $0x78] sm:$0xff]
      %v4069 = vld [vmem:[#allocation2 + $0x80] sm:$0xff]
      %v4070 = vld [vmem:[#allocation2 + $0x88] sm:$0xff]
      %v4071 = vld [vmem:[#allocation2 + $0x90] sm:$0xff]
      %v4072 = vld [vmem:[#allocation2 + $0x98] sm:$0xff]
      %v4073 = vld [vmem:[#allocation2 + $0xa0] sm:$0xff]
      %v4074 = vld [vmem:[#allocation2 + $0xa8] sm:$0xff]
      %v4075 = vld [vmem:[#allocation2 + $0xb0] sm:$0xff]
      %v4076 = vld [vmem:[#allocation2 + $0xb8] sm:$0xff]
      %v4077 = vld [vmem:[#allocation2 + $0xc0] sm:$0xff]
      %v4078 = vld [vmem:[#allocation2 + $0xc8] sm:$0xff]
      %v4079 = vld [vmem:[#allocation2 + $0xd0] sm:$0xff]
      %v4080 = vld [vmem:[#allocation2 + $0xd8] sm:$0xff]
      %v4081 = vld [vmem:[%s4] sm:$0xff]
      %v4082 = vld [vmem:[%s4 + $0x8] sm:$0xff]
      %v4083 = vld [vmem:[%s4 + $0x10] sm:$0xff]
      %v4084 = vld [vmem:[%s4 + $0x18] sm:$0xff]
      %v4085 = vld [vmem:[#allocation2 + $0xf0] sm:$0xff]
      %v4086 = vld [vmem:[#allocation2 + $0xf8] sm:$0xff]
      %v4087 = vld [vmem:[#allocation2 + $0x100] sm:$0xff]
      %v4088 = vld [vmem:[#allocation2 + $0x108] sm:$0xff]
      %v4089 = vld [vmem:[#allocation2 + $0x110] sm:$0xff]
      %v4090 = vld [vmem:[#allocation2 + $0x118] sm:$0xff]
      %v4091 = vld [vmem:[#allocation2 + $0x120] sm:$0xff]
      %v4092 = vld [vmem:[#allocation2 + $0x128] sm:$0xff]
      %v4093 = vld [vmem:[#allocation2 + $0x130] sm:$0xff]
      %v4094 = vld [vmem:[#allocation2 + $0x138] sm:$0xff]
      %v4095 = vld [vmem:[#allocation2 + $0x140] sm:$0xff]
      %v4096 = vld [vmem:[#allocation2 + $0x148] sm:$0xff]
      %v4097 = vld [vmem:[#allocation2 + $0x150] sm:$0xff]
      %v4098 = vld [vmem:[#allocation2 + $0x158] sm:$0xff]
      %v4099 = vld [vmem:[#allocation2 + $0x160] sm:$0xff]
      %v4100 = vld [vmem:[#allocation2 + $0x168] sm:$0xff]
      %v4101 = vld [vmem:[#allocation2 + $0x170] sm:$0xff]
      %v4102 = vld [vmem:[#allocation2 + $0x178] sm:$0xff]
      %v4103 = vld [vmem:[#allocation2 + $0x180] sm:$0xff]
      %v4104 = vld [vmem:[#allocation2 + $0x188] sm:$0xff]
      %v4105 = vld [vmem:[#allocation2 + $0x190] sm:$0xff]
      %v4106 = vld [vmem:[#allocation2 + $0x198] sm:$0xff]
      %v4107 = vld [vmem:[#allocation2 + $0x1a0] sm:$0xff]
      %v4108 = vld [vmem:[#allocation2 + $0x1a8] sm:$0xff]
      %v4109 = vld [vmem:[#allocation2 + $0x1b0] sm:$0xff]
      %v4110 = vld [vmem:[#allocation2 + $0x1b8] sm:$0xff]
      %v4111 = vld [vmem:[#allocation2 + $0x1c0] sm:$0xff]
      %v4112 = vld [vmem:[#allocation2 + $0x1c8] sm:$0xff]
      %v4113 = vld [vmem:[%s4 + $0x20] sm:$0xff]
      %v4114 = vld [vmem:[%s4 + $0x28] sm:$0xff]
      %v4115 = vld [vmem:[%s4 + $0x30] sm:$0xff]
      %v4116 = vld [vmem:[%s4 + $0x38] sm:$0xff]
      %v4118 = vsel %vm1284, %v4085, 0
      %v4121 = vsel %vm1284, %v4086, 0
      %v4124 = vsel %vm1284, %v4087, 0
      %v4127 = vsel %vm1284, %v4088, 0
      %v4130 = vsel %vm1284, %v4089, 0
      %v4133 = vsel %vm1284, %v4090, 0
      %v4136 = vsel %vm1284, %v4091, 0
      %v4139 = vsel %vm1284, %v4092, 0
      %v4142 = vsel %vm1284, %v4093, 0
      %v4145 = vsel %vm1284, %v4094, 0
      %v4148 = vsel %vm1284, %v4095, 0
      %v4151 = vsel %vm1284, %v4096, 0
      %v4154 = vsel %vm1284, %v4097, 0
      %v4157 = vsel %vm1284, %v4098, 0
      %v4160 = vsel %vm1284, %v4099, 0
      %v4163 = vsel %vm1284, %v4100, 0
      %v4166 = vsel %vm1284, %v4101, 0
      %v4169 = vsel %vm1284, %v4102, 0
      %v4172 = vsel %vm1284, %v4103, 0
      %v4175 = vsel %vm1284, %v4104, 0
      %v4178 = vsel %vm1284, %v4105, 0
      %v4181 = vsel %vm1284, %v4106, 0
      %v4184 = vsel %vm1284, %v4107, 0
      %v4187 = vsel %vm1284, %v4108, 0
      %v4190 = vsel %vm1284, %v4109, 0
      %v4193 = vsel %vm1284, %v4110, 0
      %v4196 = vsel %vm1284, %v4111, 0
      %v4199 = vsel %vm1284, %v4112, 0
      %4201 = vmatprep.subr.mxu0 0.0
      %4202 = vmatpush1.msra.mxu0 %v4113
      %4203 = vmatprep.subr.mxu0 0.0
      %4204 = vmatpush1.msra.mxu0 %v4114
      %4205 = vmatprep.subr.mxu0 0.0
      %4206 = vmatpush1.msra.mxu0 %v4115
      %4207 = vmatprep.subr.mxu0 0.0
      %4208 = vmatpush1.msra.mxu0 %v4116
      %4209 = vmatprep.subr.mxu0 0.0
      %4210 = vmatpush1.msra.mxu0 0.0
      %4211 = vmatprep.subr.mxu0 0.0
      %4212 = vmatpush1.msra.mxu0 0.0
      %4213 = vmatprep.subr.mxu0 0.0
      %4214 = vmatpush1.msra.mxu0 0.0
      %4215 = vmatprep.subr.mxu0 0.0
      %4216 = vmatpush1.msra.mxu0 0.0
      %4217 = vmatprep.subr.mxu0 0.0
      %4218 = vmatpush1.msra.mxu0 0.0
      %4219 = vmatprep.subr.mxu0 0.0
      %4220 = vmatpush1.msra.mxu0 0.0
      %4221 = vmatprep.subr.mxu0 0.0
      %4222 = vmatpush1.msra.mxu0 0.0
      %4223 = vmatprep.subr.mxu0 0.0
      %4224 = vmatpush1.msra.mxu0 0.0
      %4225 = vmatprep.subr.mxu0 0.0
      %4226 = vmatpush1.msra.mxu0 0.0
      %4227 = vmatprep.subr.mxu0 0.0
      %4228 = vmatpush1.msra.mxu0 0.0
      %4229 = vmatprep.subr.mxu0 0.0
      %4230 = vmatpush1.msra.mxu0 0.0
      %4231 = vmatprep.subr.mxu0 0.0
      %4232 = vmatpush1.msra.mxu0 0.0
      %4233 = vmatprep.subr.mxu0 0.0
      %4234 = vmatpush1.msra.mxu0 0.0
      %4235 = vmatprep.subr.mxu0 0.0
      %4236 = vmatpush1.msra.mxu0 0.0
      %4237 = vmatprep.subr.mxu0 0.0
      %4238 = vmatpush1.msra.mxu0 0.0
      %4239 = vmatprep.subr.mxu0 0.0
      %4240 = vmatpush1.msra.mxu0 0.0
      %4241 = vmatprep.subr.mxu0 0.0
      %4242 = vmatpush1.msra.mxu0 0.0
      %4243 = vmatprep.subr.mxu0 0.0
      %4244 = vmatpush1.msra.mxu0 0.0
      %4245 = vmatprep.subr.mxu0 0.0
      %4246 = vmatpush1.msra.mxu0 0.0
      %4247 = vmatprep.subr.mxu0 0.0
      %4248 = vmatpush1.msra.mxu0 0.0
      %4249 = vmatprep.subr.mxu0 0.0
      %4250 = vmatpush1.msra.mxu0 0.0
      %4251 = vmatprep.subr.mxu0 0.0
      %4252 = vmatpush1.msra.mxu0 0.0
      %4253 = vmatprep.subr.mxu0 0.0
      %4254 = vmatpush1.msra.mxu0 0.0
      %4255 = vmatprep.subr.mxu0 0.0
      %4256 = vmatpush1.msra.mxu0 0.0
      %4257 = vmatprep.subr.mxu0 0.0
      %4258 = vmatpush1.msra.mxu0 0.0
      %4259 = vmatprep.subr.mxu0 0.0
      %4260 = vmatpush1.msra.mxu0 0.0
      %4261 = vmatprep.subr.mxu0 0.0
      %4262 = vmatpush1.msra.mxu0 0.0
      %4263 = vmatprep.subr.mxu0 0.0
      %4264 = vmatpush1.msra.mxu0 0.0
      %4265 = vmatprep.mubr.f32.mxu0 0.0
      %4266 = vmatmul.mubr.f32.gmra.mrb[0].mxu0 %v4118
      %v4267 = vpop.f32.mrb[0].mxu0
      %v4268 = vadd.f32 0.0, %v4267
      %v4269 = vpop.f32.mrb[0].mxu0
      %4270 = vmatprep.mubr.f32.mxu0 0.0
      %4271 = vmatmul.mubr.f32.gmra.mrb[0].mxu0 %v4121
      %v4272 = vpop.f32.mrb[0].mxu0
      %v4273 = vadd.f32 0.0, %v4272
      %v4274 = vpop.f32.mrb[0].mxu0
      %4275 = vmatprep.mubr.f32.mxu0 0.0
      %4276 = vmatmul.mubr.f32.gmra.mrb[0].mxu0 %v4124
      %v4277 = vpop.f32.mrb[0].mxu0
      %v4278 = vadd.f32 0.0, %v4277
      %v4279 = vpop.f32.mrb[0].mxu0
      %4280 = vmatprep.mubr.f32.mxu0 0.0
      %4281 = vmatmul.mubr.f32.gmra.mrb[0].mxu0 %v4127
      %v4282 = vpop.f32.mrb[0].mxu0
      %v4283 = vadd.f32 0.0, %v4282
      %v4284 = vpop.f32.mrb[0].mxu0
      %4285 = vmatprep.mubr.f32.mxu0 0.0
      %4286 = vmatmul.mubr.f32.gmra.mrb[0].mxu0 %v4130
      %v4287 = vpop.f32.mrb[0].mxu0
      %v4288 = vadd.f32 0.0, %v4287
      %v4289 = vpop.f32.mrb[0].mxu0
      %4290 = vmatprep.mubr.f32.mxu0 0.0
      %4291 = vmatmul.mubr.f32.gmra.mrb[0].mxu0 %v4133
      %v4292 = vpop.f32.mrb[0].mxu0
      %v4293 = vadd.f32 0.0, %v4292
      %v4294 = vpop.f32.mrb[0].mxu0
      %4295 = vmatprep.mubr.f32.mxu0 0.0
      %4296 = vmatmul.mubr.f32.gmra.mrb[0].mxu0 %v4136
      %v4297 = vpop.f32.mrb[0].mxu0
      %v4298 = vadd.f32 0.0, %v4297
      %v4299 = vpop.f32.mrb[0].mxu0
      %4300 = vmatprep.mubr.f32.mxu0 0.0
      %4301 = vmatmul.mubr.f32.gmra.mrb[0].mxu0 %v4139
      %v4302 = vpop.f32.mrb[0].mxu0
      %v4303 = vadd.f32 0.0, %v4302
      %v4304 = vpop.f32.mrb[0].mxu0
      %4305 = vmatprep.mubr.f32.mxu0 0.0
      %4306 = vmatmul.mubr.f32.gmra.mrb[0].mxu0 %v4142
      %v4307 = vpop.f32.mrb[0].mxu0
      %v4308 = vadd.f32 0.0, %v4307
      %v4309 = vpop.f32.mrb[0].mxu0
      %4310 = vmatprep.mubr.f32.mxu0 0.0
      %4311 = vmatmul.mubr.f32.gmra.mrb[0].mxu0 %v4145
      %v4312 = vpop.f32.mrb[0].mxu0
      %v4313 = vadd.f32 0.0, %v4312
      %v4314 = vpop.f32.mrb[0].mxu0
      %4315 = vmatprep.mubr.f32.mxu0 0.0
      %4316 = vmatmul.mubr.f32.gmra.mrb[0].mxu0 %v4148
      %v4317 = vpop.f32.mrb[0].mxu0
      %v4318 = vadd.f32 0.0, %v4317
      %v4319 = vpop.f32.mrb[0].mxu0
      %4320 = vmatprep.mubr.f32.mxu0 0.0
      %4321 = vmatmul.mubr.f32.gmra.mrb[0].mxu0 %v4151
      %v4322 = vpop.f32.mrb[0].mxu0
      %v4323 = vadd.f32 0.0, %v4322
      %v4324 = vpop.f32.mrb[0].mxu0
      %4325 = vmatprep.mubr.f32.mxu0 0.0
      %4326 = vmatmul.mubr.f32.gmra.mrb[0].mxu0 %v4154
      %v4327 = vpop.f32.mrb[0].mxu0
      %v4328 = vadd.f32 0.0, %v4327
      %v4329 = vpop.f32.mrb[0].mxu0
      %4330 = vmatprep.mubr.f32.mxu0 0.0
      %4331 = vmatmul.mubr.f32.gmra.mrb[0].mxu0 %v4157
      %v4332 = vpop.f32.mrb[0].mxu0
      %v4333 = vadd.f32 0.0, %v4332
      %v4334 = vpop.f32.mrb[0].mxu0
      %4335 = vmatprep.mubr.f32.mxu0 0.0
      %4336 = vmatmul.mubr.f32.gmra.mrb[0].mxu0 %v4160
      %v4337 = vpop.f32.mrb[0].mxu0
      %v4338 = vadd.f32 0.0, %v4337
      %v4339 = vpop.f32.mrb[0].mxu0
      %4340 = vmatprep.mubr.f32.mxu0 0.0
      %4341 = vmatmul.mubr.f32.gmra.mrb[0].mxu0 %v4163
      %v4342 = vpop.f32.mrb[0].mxu0
      %v4343 = vadd.f32 0.0, %v4342
      %v4344 = vpop.f32.mrb[0].mxu0
      %4345 = vmatprep.mubr.f32.mxu0 0.0
      %4346 = vmatmul.mubr.f32.gmra.mrb[0].mxu0 %v4166
      %v4347 = vpop.f32.mrb[0].mxu0
      %v4348 = vadd.f32 0.0, %v4347
      %v4349 = vpop.f32.mrb[0].mxu0
      %4350 = vmatprep.mubr.f32.mxu0 0.0
      %4351 = vmatmul.mubr.f32.gmra.mrb[0].mxu0 %v4169
      %v4352 = vpop.f32.mrb[0].mxu0
      %v4353 = vadd.f32 0.0, %v4352
      %v4354 = vpop.f32.mrb[0].mxu0
      %4355 = vmatprep.mubr.f32.mxu0 0.0
      %4356 = vmatmul.mubr.f32.gmra.mrb[0].mxu0 %v4172
      %v4357 = vpop.f32.mrb[0].mxu0
      %v4358 = vadd.f32 0.0, %v4357
      %v4359 = vpop.f32.mrb[0].mxu0
      %4360 = vmatprep.mubr.f32.mxu0 0.0
      %4361 = vmatmul.mubr.f32.gmra.mrb[0].mxu0 %v4175
      %v4362 = vpop.f32.mrb[0].mxu0
      %v4363 = vadd.f32 0.0, %v4362
      %v4364 = vpop.f32.mrb[0].mxu0
      %4365 = vmatprep.mubr.f32.mxu0 0.0
      %4366 = vmatmul.mubr.f32.gmra.mrb[0].mxu0 %v4178
      %v4367 = vpop.f32.mrb[0].mxu0
      %v4368 = vadd.f32 0.0, %v4367
      %v4369 = vpop.f32.mrb[0].mxu0
      %4370 = vmatprep.mubr.f32.mxu0 0.0
      %4371 = vmatmul.mubr.f32.gmra.mrb[0].mxu0 %v4181
      %v4372 = vpop.f32.mrb[0].mxu0
      %v4373 = vadd.f32 0.0, %v4372
      %v4374 = vpop.f32.mrb[0].mxu0
      %4375 = vmatprep.mubr.f32.mxu0 0.0
      %4376 = vmatmul.mubr.f32.gmra.mrb[0].mxu0 %v4184
      %v4377 = vpop.f32.mrb[0].mxu0
      %v4378 = vadd.f32 0.0, %v4377
      %v4379 = vpop.f32.mrb[0].mxu0
      %4380 = vmatprep.mubr.f32.mxu0 0.0
      %4381 = vmatmul.mubr.f32.gmra.mrb[0].mxu0 %v4187
      %v4382 = vpop.f32.mrb[0].mxu0
      %v4383 = vadd.f32 0.0, %v4382
      %v4384 = vpop.f32.mrb[0].mxu0
      %4385 = vmatprep.mubr.f32.mxu0 0.0
      %4386 = vmatmul.mubr.f32.gmra.mrb[0].mxu0 %v4190
      %v4387 = vpop.f32.mrb[0].mxu0
      %v4388 = vadd.f32 0.0, %v4387
      %v4389 = vpop.f32.mrb[0].mxu0
      %4390 = vmatprep.mubr.f32.mxu0 0.0
      %4391 = vmatmul.mubr.f32.gmra.mrb[0].mxu0 %v4193
      %v4392 = vpop.f32.mrb[0].mxu0
      %v4393 = vadd.f32 0.0, %v4392
      %v4394 = vpop.f32.mrb[0].mxu0
      %4395 = vmatprep.mubr.f32.mxu0 0.0
      %4396 = vmatmul.mubr.f32.gmra.mrb[0].mxu0 %v4196
      %v4397 = vpop.f32.mrb[0].mxu0
      %v4398 = vadd.f32 0.0, %v4397
      %v4399 = vpop.f32.mrb[0].mxu0
      %4400 = vmatprep.mubr.f32.mxu0 0.0
      %4401 = vmatmul.mubr.f32.gmra.mrb[0].mxu0 %v4199
      %v4402 = vpop.f32.mrb[0].mxu0
      %v4403 = vadd.f32 0.0, %v4402
      %v4404 = vpop.f32.mrb[0].mxu0
      %4405 = vdwg.mxu0
      %v4407 = vsel %vm1284, %v4053, 0
      %v4410 = vsel %vm1284, %v4054, 0
      %v4413 = vsel %vm1284, %v4055, 0
      %v4416 = vsel %vm1284, %v4056, 0
      %v4419 = vsel %vm1284, %v4057, 0
      %v4422 = vsel %vm1284, %v4058, 0
      %v4425 = vsel %vm1284, %v4059, 0
      %v4428 = vsel %vm1284, %v4060, 0
      %v4431 = vsel %vm1284, %v4061, 0
      %v4434 = vsel %vm1284, %v4062, 0
      %v4437 = vsel %vm1284, %v4063, 0
      %v4440 = vsel %vm1284, %v4064, 0
      %v4443 = vsel %vm1284, %v4065, 0
      %v4446 = vsel %vm1284, %v4066, 0
      %v4449 = vsel %vm1284, %v4067, 0
      %v4452 = vsel %vm1284, %v4068, 0
      %v4455 = vsel %vm1284, %v4069, 0
      %v4458 = vsel %vm1284, %v4070, 0
      %v4461 = vsel %vm1284, %v4071, 0
      %v4464 = vsel %vm1284, %v4072, 0
      %v4467 = vsel %vm1284, %v4073, 0
      %v4470 = vsel %vm1284, %v4074, 0
      %v4473 = vsel %vm1284, %v4075, 0
      %v4476 = vsel %vm1284, %v4076, 0
      %v4479 = vsel %vm1284, %v4077, 0
      %v4482 = vsel %vm1284, %v4078, 0
      %v4485 = vsel %vm1284, %v4079, 0
      %v4488 = vsel %vm1284, %v4080, 0
      %4490 = vmatprep.subr.mxu0 0.0
      %4491 = vmatpush1.msra.mxu0 %v4081
      %4492 = vmatprep.subr.mxu0 0.0
      %4493 = vmatpush1.msra.mxu0 %v4082
      %4494 = vmatprep.subr.mxu0 0.0
      %4495 = vmatpush1.msra.mxu0 %v4083
      %4496 = vmatprep.subr.mxu0 0.0
      %4497 = vmatpush1.msra.mxu0 %v4084
      %4498 = vmatprep.subr.mxu0 0.0
      %4499 = vmatpush1.msra.mxu0 0.0
      %4500 = vmatprep.subr.mxu0 0.0
      %4501 = vmatpush1.msra.mxu0 0.0
      %4502 = vmatprep.subr.mxu0 0.0
      %4503 = vmatpush1.msra.mxu0 0.0
      %4504 = vmatprep.subr.mxu0 0.0
      %4505 = vmatpush1.msra.mxu0 0.0
      %4506 = vmatprep.subr.mxu0 0.0
      %4507 = vmatpush1.msra.mxu0 0.0
      %4508 = vmatprep.subr.mxu0 0.0
      %4509 = vmatpush1.msra.mxu0 0.0
      %4510 = vmatprep.subr.mxu0 0.0
      %4511 = vmatpush1.msra.mxu0 0.0
      %4512 = vmatprep.subr.mxu0 0.0
      %4513 = vmatpush1.msra.mxu0 0.0
      %4514 = vmatprep.subr.mxu0 0.0
      %4515 = vmatpush1.msra.mxu0 0.0
      %4516 = vmatprep.subr.mxu0 0.0
      %4517 = vmatpush1.msra.mxu0 0.0
      %4518 = vmatprep.subr.mxu0 0.0
      %4519 = vmatpush1.msra.mxu0 0.0
      %4520 = vmatprep.subr.mxu0 0.0
      %4521 = vmatpush1.msra.mxu0 0.0
      %4522 = vmatprep.subr.mxu0 0.0
      %4523 = vmatpush1.msra.mxu0 0.0
      %4524 = vmatprep.subr.mxu0 0.0
      %4525 = vmatpush1.msra.mxu0 0.0
      %4526 = vmatprep.subr.mxu0 0.0
      %4527 = vmatpush1.msra.mxu0 0.0
      %4528 = vmatprep.subr.mxu0 0.0
      %4529 = vmatpush1.msra.mxu0 0.0
      %4530 = vmatprep.subr.mxu0 0.0
      %4531 = vmatpush1.msra.mxu0 0.0
      %4532 = vmatprep.subr.mxu0 0.0
      %4533 = vmatpush1.msra.mxu0 0.0
      %4534 = vmatprep.subr.mxu0 0.0
      %4535 = vmatpush1.msra.mxu0 0.0
      %4536 = vmatprep.subr.mxu0 0.0
      %4537 = vmatpush1.msra.mxu0 0.0
      %4538 = vmatprep.subr.mxu0 0.0
      %4539 = vmatpush1.msra.mxu0 0.0
      %4540 = vmatprep.subr.mxu0 0.0
      %4541 = vmatpush1.msra.mxu0 0.0
      %4542 = vmatprep.subr.mxu0 0.0
      %4543 = vmatpush1.msra.mxu0 0.0
      %4544 = vmatprep.subr.mxu0 0.0
      %4545 = vmatpush1.msra.mxu0 0.0
      %4546 = vmatprep.subr.mxu0 0.0
      %4547 = vmatpush1.msra.mxu0 0.0
      %4548 = vmatprep.subr.mxu0 0.0
      %4549 = vmatpush1.msra.mxu0 0.0
      %4550 = vmatprep.subr.mxu0 0.0
      %4551 = vmatpush1.msra.mxu0 0.0
      %4552 = vmatprep.subr.mxu0 0.0
      %4553 = vmatpush1.msra.mxu0 0.0
      %4554 = vmatprep.mubr.f32.mxu0 0.0
      %4555 = vmatmul.mubr.f32.gmra.mrb[0].mxu0 %v4407
      %v4556 = vpop.f32.mrb[0].mxu0
      %v4557 = vadd.f32 %v4268, %v4556
      %v4558 = vpop.f32.mrb[0].mxu0
      %4559 = vmatprep.mubr.f32.mxu0 0.0
      %4560 = vmatmul.mubr.f32.gmra.mrb[0].mxu0 %v4410
      %v4561 = vpop.f32.mrb[0].mxu0
      %v4562 = vadd.f32 %v4273, %v4561
      %v4563 = vpop.f32.mrb[0].mxu0
      %4564 = vmatprep.mubr.f32.mxu0 0.0
      %4565 = vmatmul.mubr.f32.gmra.mrb[0].mxu0 %v4413
      %v4566 = vpop.f32.mrb[0].mxu0
      %v4567 = vadd.f32 %v4278, %v4566
      %v4568 = vpop.f32.mrb[0].mxu0
      %4569 = vmatprep.mubr.f32.mxu0 0.0
      %4570 = vmatmul.mubr.f32.gmra.mrb[0].mxu0 %v4416
      %v4571 = vpop.f32.mrb[0].mxu0
      %v4572 = vadd.f32 %v4283, %v4571
      %v4573 = vpop.f32.mrb[0].mxu0
      %4574 = vmatprep.mubr.f32.mxu0 0.0
      %4575 = vmatmul.mubr.f32.gmra.mrb[0].mxu0 %v4419
      %v4576 = vpop.f32.mrb[0].mxu0
      %v4577 = vadd.f32 %v4288, %v4576
      %v4578 = vpop.f32.mrb[0].mxu0
      %4579 = vmatprep.mubr.f32.mxu0 0.0
      %4580 = vmatmul.mubr.f32.gmra.mrb[0].mxu0 %v4422
      %v4581 = vpop.f32.mrb[0].mxu0
      %v4582 = vadd.f32 %v4293, %v4581
      %v4583 = vpop.f32.mrb[0].mxu0
      %4584 = vmatprep.mubr.f32.mxu0 0.0
      %4585 = vmatmul.mubr.f32.gmra.mrb[0].mxu0 %v4425
      %v4586 = vpop.f32.mrb[0].mxu0
      %v4587 = vadd.f32 %v4298, %v4586
      %v4588 = vpop.f32.mrb[0].mxu0
      %4589 = vmatprep.mubr.f32.mxu0 0.0
      %4590 = vmatmul.mubr.f32.gmra.mrb[0].mxu0 %v4428
      %v4591 = vpop.f32.mrb[0].mxu0
      %v4592 = vadd.f32 %v4303, %v4591
      %v4593 = vpop.f32.mrb[0].mxu0
      %4594 = vmatprep.mubr.f32.mxu0 0.0
      %4595 = vmatmul.mubr.f32.gmra.mrb[0].mxu0 %v4431
      %v4596 = vpop.f32.mrb[0].mxu0
      %v4597 = vadd.f32 %v4308, %v4596
      %v4598 = vpop.f32.mrb[0].mxu0
      %4599 = vmatprep.mubr.f32.mxu0 0.0
      %4600 = vmatmul.mubr.f32.gmra.mrb[0].mxu0 %v4434
      %v4601 = vpop.f32.mrb[0].mxu0
      %v4602 = vadd.f32 %v4313, %v4601
      %v4603 = vpop.f32.mrb[0].mxu0
      %4604 = vmatprep.mubr.f32.mxu0 0.0
      %4605 = vmatmul.mubr.f32.gmra.mrb[0].mxu0 %v4437
      %v4606 = vpop.f32.mrb[0].mxu0
      %v4607 = vadd.f32 %v4318, %v4606
      %v4608 = vpop.f32.mrb[0].mxu0
      %4609 = vmatprep.mubr.f32.mxu0 0.0
      %4610 = vmatmul.mubr.f32.gmra.mrb[0].mxu0 %v4440
      %v4611 = vpop.f32.mrb[0].mxu0
      %v4612 = vadd.f32 %v4323, %v4611
      %v4613 = vpop.f32.mrb[0].mxu0
      %4614 = vmatprep.mubr.f32.mxu0 0.0
      %4615 = vmatmul.mubr.f32.gmra.mrb[0].mxu0 %v4443
      %v4616 = vpop.f32.mrb[0].mxu0
      %v4617 = vadd.f32 %v4328, %v4616
      %v4618 = vpop.f32.mrb[0].mxu0
      %4619 = vmatprep.mubr.f32.mxu0 0.0
      %4620 = vmatmul.mubr.f32.gmra.mrb[0].mxu0 %v4446
      %v4621 = vpop.f32.mrb[0].mxu0
      %v4622 = vadd.f32 %v4333, %v4621
      %v4623 = vpop.f32.mrb[0].mxu0
      %4624 = vmatprep.mubr.f32.mxu0 0.0
      %4625 = vmatmul.mubr.f32.gmra.mrb[0].mxu0 %v4449
      %v4626 = vpop.f32.mrb[0].mxu0
      %v4627 = vadd.f32 %v4338, %v4626
      %v4628 = vpop.f32.mrb[0].mxu0
      %4629 = vmatprep.mubr.f32.mxu0 0.0
      %4630 = vmatmul.mubr.f32.gmra.mrb[0].mxu0 %v4452
      %v4631 = vpop.f32.mrb[0].mxu0
      %v4632 = vadd.f32 %v4343, %v4631
      %v4633 = vpop.f32.mrb[0].mxu0
      %4634 = vmatprep.mubr.f32.mxu0 0.0
      %4635 = vmatmul.mubr.f32.gmra.mrb[0].mxu0 %v4455
      %v4636 = vpop.f32.mrb[0].mxu0
      %v4637 = vadd.f32 %v4348, %v4636
      %v4638 = vpop.f32.mrb[0].mxu0
      %4639 = vmatprep.mubr.f32.mxu0 0.0
      %4640 = vmatmul.mubr.f32.gmra.mrb[0].mxu0 %v4458
      %v4641 = vpop.f32.mrb[0].mxu0
      %v4642 = vadd.f32 %v4353, %v4641
      %v4643 = vpop.f32.mrb[0].mxu0
      %4644 = vmatprep.mubr.f32.mxu0 0.0
      %4645 = vmatmul.mubr.f32.gmra.mrb[0].mxu0 %v4461
      %v4646 = vpop.f32.mrb[0].mxu0
      %v4647 = vadd.f32 %v4358, %v4646
      %v4648 = vpop.f32.mrb[0].mxu0
      %4649 = vmatprep.mubr.f32.mxu0 0.0
      %4650 = vmatmul.mubr.f32.gmra.mrb[0].mxu0 %v4464
      %v4651 = vpop.f32.mrb[0].mxu0
      %v4652 = vadd.f32 %v4363, %v4651
      %v4653 = vpop.f32.mrb[0].mxu0
      %4654 = vmatprep.mubr.f32.mxu0 0.0
      %4655 = vmatmul.mubr.f32.gmra.mrb[0].mxu0 %v4467
      %v4656 = vpop.f32.mrb[0].mxu0
      %v4657 = vadd.f32 %v4368, %v4656
      %v4658 = vpop.f32.mrb[0].mxu0
      %4659 = vmatprep.mubr.f32.mxu0 0.0
      %4660 = vmatmul.mubr.f32.gmra.mrb[0].mxu0 %v4470
      %v4661 = vpop.f32.mrb[0].mxu0
      %v4662 = vadd.f32 %v4373, %v4661
      %v4663 = vpop.f32.mrb[0].mxu0
      %4664 = vmatprep.mubr.f32.mxu0 0.0
      %4665 = vmatmul.mubr.f32.gmra.mrb[0].mxu0 %v4473
      %v4666 = vpop.f32.mrb[0].mxu0
      %v4667 = vadd.f32 %v4378, %v4666
      %v4668 = vpop.f32.mrb[0].mxu0
      %4669 = vmatprep.mubr.f32.mxu0 0.0
      %4670 = vmatmul.mubr.f32.gmra.mrb[0].mxu0 %v4476
      %v4671 = vpop.f32.mrb[0].mxu0
      %v4672 = vadd.f32 %v4383, %v4671
      %v4673 = vpop.f32.mrb[0].mxu0
      %4674 = vmatprep.mubr.f32.mxu0 0.0
      %4675 = vmatmul.mubr.f32.gmra.mrb[0].mxu0 %v4479
      %v4676 = vpop.f32.mrb[0].mxu0
      %v4677 = vadd.f32 %v4388, %v4676
      %v4678 = vpop.f32.mrb[0].mxu0
      %4679 = vmatprep.mubr.f32.mxu0 0.0
      %4680 = vmatmul.mubr.f32.gmra.mrb[0].mxu0 %v4482
      %v4681 = vpop.f32.mrb[0].mxu0
      %v4682 = vadd.f32 %v4393, %v4681
      %v4683 = vpop.f32.mrb[0].mxu0
      %4684 = vmatprep.mubr.f32.mxu0 0.0
      %4685 = vmatmul.mubr.f32.gmra.mrb[0].mxu0 %v4485
      %v4686 = vpop.f32.mrb[0].mxu0
      %v4687 = vadd.f32 %v4398, %v4686
      %v4688 = vpop.f32.mrb[0].mxu0
      %4689 = vmatprep.mubr.f32.mxu0 0.0
      %4690 = vmatmul.mubr.f32.gmra.mrb[0].mxu0 %v4488
      %v4691 = vpop.f32.mrb[0].mxu0
      %v4692 = vadd.f32 %v4403, %v4691
      %v4693 = vpop.f32.mrb[0].mxu0
      %4694 = vdwg.mxu0
      %v4695 = vld [vmem:[#allocation2 + $0x1e0] sm:$0xff]
      %v4696 = vld [vmem:[#allocation2 + $0x1e8] sm:$0xff]
      %v4697 = vld [vmem:[#allocation2 + $0x1f0] sm:$0xff]
      %v4698 = vld [vmem:[#allocation2 + $0x1f8] sm:$0xff]
      %v4699 = vld [vmem:[#allocation2 + $0x200] sm:$0xff]
      %v4700 = vld [vmem:[#allocation2 + $0x208] sm:$0xff]
      %v4701 = vld [vmem:[#allocation2 + $0x210] sm:$0xff]
      %v4702 = vld [vmem:[#allocation2 + $0x218] sm:$0xff]
      %v4703 = vld [vmem:[#allocation2 + $0x220] sm:$0xff]
      %v4704 = vld [vmem:[#allocation2 + $0x228] sm:$0xff]
      %v4705 = vld [vmem:[#allocation2 + $0x230] sm:$0xff]
      %v4706 = vld [vmem:[#allocation2 + $0x238] sm:$0xff]
      %v4707 = vld [vmem:[#allocation2 + $0x240] sm:$0xff]
      %v4708 = vld [vmem:[#allocation2 + $0x248] sm:$0xff]
      %v4709 = vld [vmem:[#allocation2 + $0x250] sm:$0xff]
      %v4710 = vld [vmem:[#allocation2 + $0x258] sm:$0xff]
      %v4711 = vld [vmem:[#allocation2 + $0x260] sm:$0xff]
      %v4712 = vld [vmem:[#allocation2 + $0x268] sm:$0xff]
      %v4713 = vld [vmem:[#allocation2 + $0x270] sm:$0xff]
      %v4714 = vld [vmem:[#allocation2 + $0x278] sm:$0xff]
      %v4715 = vld [vmem:[#allocation2 + $0x280] sm:$0xff]
      %v4716 = vld [vmem:[#allocation2 + $0x288] sm:$0xff]
      %v4717 = vld [vmem:[#allocation2 + $0x290] sm:$0xff]
      %v4718 = vld [vmem:[#allocation2 + $0x298] sm:$0xff]
      %v4719 = vld [vmem:[#allocation2 + $0x2a0] sm:$0xff]
      %v4720 = vld [vmem:[#allocation2 + $0x2a8] sm:$0xff]
      %v4721 = vld [vmem:[#allocation2 + $0x2b0] sm:$0xff]
      %v4722 = vld [vmem:[#allocation2 + $0x2b8] sm:$0xff]
      %v4723 = vld [vmem:[%s4 + $0x40] sm:$0xff]
      %v4724 = vld [vmem:[%s4 + $0x48] sm:$0xff]
      %v4725 = vld [vmem:[%s4 + $0x50] sm:$0xff]
      %v4726 = vld [vmem:[%s4 + $0x58] sm:$0xff]
      %v4728 = vsel %vm1284, %v4695, 0
      %v4731 = vsel %vm1284, %v4696, 0
      %v4734 = vsel %vm1284, %v4697, 0
      %v4737 = vsel %vm1284, %v4698, 0
      %v4740 = vsel %vm1284, %v4699, 0
      %v4743 = vsel %vm1284, %v4700, 0
      %v4746 = vsel %vm1284, %v4701, 0
      %v4749 = vsel %vm1284, %v4702, 0
      %v4752 = vsel %vm1284, %v4703, 0
      %v4755 = vsel %vm1284, %v4704, 0
      %v4758 = vsel %vm1284, %v4705, 0
      %v4761 = vsel %vm1284, %v4706, 0
      %v4764 = vsel %vm1284, %v4707, 0
      %v4767 = vsel %vm1284, %v4708, 0
      %v4770 = vsel %vm1284, %v4709, 0
      %v4773 = vsel %vm1284, %v4710, 0
      %v4776 = vsel %vm1284, %v4711, 0
      %v4779 = vsel %vm1284, %v4712, 0
      %v4782 = vsel %vm1284, %v4713, 0
      %v4785 = vsel %vm1284, %v4714, 0
      %v4788 = vsel %vm1284, %v4715, 0
      %v4791 = vsel %vm1284, %v4716, 0
      %v4794 = vsel %vm1284, %v4717, 0
      %v4797 = vsel %vm1284, %v4718, 0
      %v4800 = vsel %vm1284, %v4719, 0
      %v4803 = vsel %vm1284, %v4720, 0
      %v4806 = vsel %vm1284, %v4721, 0
      %v4809 = vsel %vm1284, %v4722, 0
      %4811 = vmatprep.subr.mxu0 0.0
      %4812 = vmatpush1.msra.mxu0 %v4723
      %4813 = vmatprep.subr.mxu0 0.0
      %4814 = vmatpush1.msra.mxu0 %v4724
      %4815 = vmatprep.subr.mxu0 0.0
      %4816 = vmatpush1.msra.mxu0 %v4725
      %4817 = vmatprep.subr.mxu0 0.0
      %4818 = vmatpush1.msra.mxu0 %v4726
      %4819 = vmatprep.subr.mxu0 0.0
      %4820 = vmatpush1.msra.mxu0 0.0
      %4821 = vmatprep.subr.mxu0 0.0
      %4822 = vmatpush1.msra.mxu0 0.0
      %4823 = vmatprep.subr.mxu0 0.0
      %4824 = vmatpush1.msra.mxu0 0.0
      %4825 = vmatprep.subr.mxu0 0.0
      %4826 = vmatpush1.msra.mxu0 0.0
      %4827 = vmatprep.subr.mxu0 0.0
      %4828 = vmatpush1.msra.mxu0 0.0
      %4829 = vmatprep.subr.mxu0 0.0
      %4830 = vmatpush1.msra.mxu0 0.0
      %4831 = vmatprep.subr.mxu0 0.0
      %4832 = vmatpush1.msra.mxu0 0.0
      %4833 = vmatprep.subr.mxu0 0.0
      %4834 = vmatpush1.msra.mxu0 0.0
      %4835 = vmatprep.subr.mxu0 0.0
      %4836 = vmatpush1.msra.mxu0 0.0
      %4837 = vmatprep.subr.mxu0 0.0
      %4838 = vmatpush1.msra.mxu0 0.0
      %4839 = vmatprep.subr.mxu0 0.0
      %4840 = vmatpush1.msra.mxu0 0.0
      %4841 = vmatprep.subr.mxu0 0.0
      %4842 = vmatpush1.msra.mxu0 0.0
      %4843 = vmatprep.subr.mxu0 0.0
      %4844 = vmatpush1.msra.mxu0 0.0
      %4845 = vmatprep.subr.mxu0 0.0
      %4846 = vmatpush1.msra.mxu0 0.0
      %4847 = vmatprep.subr.mxu0 0.0
      %4848 = vmatpush1.msra.mxu0 0.0
      %4849 = vmatprep.subr.mxu0 0.0
      %4850 = vmatpush1.msra.mxu0 0.0
      %4851 = vmatprep.subr.mxu0 0.0
      %4852 = vmatpush1.msra.mxu0 0.0
      %4853 = vmatprep.subr.mxu0 0.0
      %4854 = vmatpush1.msra.mxu0 0.0
      %4855 = vmatprep.subr.mxu0 0.0
      %4856 = vmatpush1.msra.mxu0 0.0
      %4857 = vmatprep.subr.mxu0 0.0
      %4858 = vmatpush1.msra.mxu0 0.0
      %4859 = vmatprep.subr.mxu0 0.0
      %4860 = vmatpush1.msra.mxu0 0.0
      %4861 = vmatprep.subr.mxu0 0.0
      %4862 = vmatpush1.msra.mxu0 0.0
      %4863 = vmatprep.subr.mxu0 0.0
      %4864 = vmatpush1.msra.mxu0 0.0
      %4865 = vmatprep.subr.mxu0 0.0
      %4866 = vmatpush1.msra.mxu0 0.0
      %4867 = vmatprep.subr.mxu0 0.0
      %4868 = vmatpush1.msra.mxu0 0.0
      %4869 = vmatprep.subr.mxu0 0.0
      %4870 = vmatpush1.msra.mxu0 0.0
      %4871 = vmatprep.subr.mxu0 0.0
      %4872 = vmatpush1.msra.mxu0 0.0
      %4873 = vmatprep.subr.mxu0 0.0
      %4874 = vmatpush1.msra.mxu0 0.0
      %4875 = vmatprep.mubr.f32.mxu0 0.0
      %4876 = vmatmul.mubr.f32.gmra.mrb[0].mxu0 %v4728
      %v4877 = vpop.f32.mrb[0].mxu0
      %v4878 = vadd.f32 0.0, %v4877
      %v4879 = vpop.f32.mrb[0].mxu0
      %4880 = vmatprep.mubr.f32.mxu0 0.0
      %4881 = vmatmul.mubr.f32.gmra.mrb[0].mxu0 %v4731
      %v4882 = vpop.f32.mrb[0].mxu0
      %v4883 = vadd.f32 0.0, %v4882
      %v4884 = vpop.f32.mrb[0].mxu0
      %4885 = vmatprep.mubr.f32.mxu0 0.0
      %4886 = vmatmul.mubr.f32.gmra.mrb[0].mxu0 %v4734
      %v4887 = vpop.f32.mrb[0].mxu0
      %v4888 = vadd.f32 0.0, %v4887
      %v4889 = vpop.f32.mrb[0].mxu0
      %4890 = vmatprep.mubr.f32.mxu0 0.0
      %4891 = vmatmul.mubr.f32.gmra.mrb[0].mxu0 %v4737
      %v4892 = vpop.f32.mrb[0].mxu0
      %v4893 = vadd.f32 0.0, %v4892
      %v4894 = vpop.f32.mrb[0].mxu0
      %4895 = vmatprep.mubr.f32.mxu0 0.0
      %4896 = vmatmul.mubr.f32.gmra.mrb[0].mxu0 %v4740
      %v4897 = vpop.f32.mrb[0].mxu0
      %v4898 = vadd.f32 0.0, %v4897
      %v4899 = vpop.f32.mrb[0].mxu0
      %4900 = vmatprep.mubr.f32.mxu0 0.0
      %4901 = vmatmul.mubr.f32.gmra.mrb[0].mxu0 %v4743
      %v4902 = vpop.f32.mrb[0].mxu0
      %v4903 = vadd.f32 0.0, %v4902
      %v4904 = vpop.f32.mrb[0].mxu0
      %4905 = vmatprep.mubr.f32.mxu0 0.0
      %4906 = vmatmul.mubr.f32.gmra.mrb[0].mxu0 %v4746
      %v4907 = vpop.f32.mrb[0].mxu0
      %v4908 = vadd.f32 0.0, %v4907
      %v4909 = vpop.f32.mrb[0].mxu0
      %4910 = vmatprep.mubr.f32.mxu0 0.0
      %4911 = vmatmul.mubr.f32.gmra.mrb[0].mxu0 %v4749
      %v4912 = vpop.f32.mrb[0].mxu0
      %v4913 = vadd.f32 0.0, %v4912
      %v4914 = vpop.f32.mrb[0].mxu0
      %4915 = vmatprep.mubr.f32.mxu0 0.0
      %4916 = vmatmul.mubr.f32.gmra.mrb[0].mxu0 %v4752
      %v4917 = vpop.f32.mrb[0].mxu0
      %v4918 = vadd.f32 0.0, %v4917
      %v4919 = vpop.f32.mrb[0].mxu0
      %4920 = vmatprep.mubr.f32.mxu0 0.0
      %4921 = vmatmul.mubr.f32.gmra.mrb[0].mxu0 %v4755
      %v4922 = vpop.f32.mrb[0].mxu0
      %v4923 = vadd.f32 0.0, %v4922
      %v4924 = vpop.f32.mrb[0].mxu0
      %4925 = vmatprep.mubr.f32.mxu0 0.0
      %4926 = vmatmul.mubr.f32.gmra.mrb[0].mxu0 %v4758
      %v4927 = vpop.f32.mrb[0].mxu0
      %v4928 = vadd.f32 0.0, %v4927
      %v4929 = vpop.f32.mrb[0].mxu0
      %4930 = vmatprep.mubr.f32.mxu0 0.0
      %4931 = vmatmul.mubr.f32.gmra.mrb[0].mxu0 %v4761
      %v4932 = vpop.f32.mrb[0].mxu0
      %v4933 = vadd.f32 0.0, %v4932
      %v4934 = vpop.f32.mrb[0].mxu0
      %4935 = vmatprep.mubr.f32.mxu0 0.0
      %4936 = vmatmul.mubr.f32.gmra.mrb[0].mxu0 %v4764
      %v4937 = vpop.f32.mrb[0].mxu0
      %v4938 = vadd.f32 0.0, %v4937
      %v4939 = vpop.f32.mrb[0].mxu0
      %4940 = vmatprep.mubr.f32.mxu0 0.0
      %4941 = vmatmul.mubr.f32.gmra.mrb[0].mxu0 %v4767
      %v4942 = vpop.f32.mrb[0].mxu0
      %v4943 = vadd.f32 0.0, %v4942
      %v4944 = vpop.f32.mrb[0].mxu0
      %4945 = vmatprep.mubr.f32.mxu0 0.0
      %4946 = vmatmul.mubr.f32.gmra.mrb[0].mxu0 %v4770
      %v4947 = vpop.f32.mrb[0].mxu0
      %v4948 = vadd.f32 0.0, %v4947
      %v4949 = vpop.f32.mrb[0].mxu0
      %4950 = vmatprep.mubr.f32.mxu0 0.0
      %4951 = vmatmul.mubr.f32.gmra.mrb[0].mxu0 %v4773
      %v4952 = vpop.f32.mrb[0].mxu0
      %v4953 = vadd.f32 0.0, %v4952
      %v4954 = vpop.f32.mrb[0].mxu0
      %4955 = vmatprep.mubr.f32.mxu0 0.0
      %4956 = vmatmul.mubr.f32.gmra.mrb[0].mxu0 %v4776
      %v4957 = vpop.f32.mrb[0].mxu0
      %v4958 = vadd.f32 0.0, %v4957
      %v4959 = vpop.f32.mrb[0].mxu0
      %4960 = vmatprep.mubr.f32.mxu0 0.0
      %4961 = vmatmul.mubr.f32.gmra.mrb[0].mxu0 %v4779
      %v4962 = vpop.f32.mrb[0].mxu0
      %v4963 = vadd.f32 0.0, %v4962
      %v4964 = vpop.f32.mrb[0].mxu0
      %4965 = vmatprep.mubr.f32.mxu0 0.0
      %4966 = vmatmul.mubr.f32.gmra.mrb[0].mxu0 %v4782
      %v4967 = vpop.f32.mrb[0].mxu0
      %v4968 = vadd.f32 0.0, %v4967
      %v4969 = vpop.f32.mrb[0].mxu0
      %4970 = vmatprep.mubr.f32.mxu0 0.0
      %4971 = vmatmul.mubr.f32.gmra.mrb[0].mxu0 %v4785
      %v4972 = vpop.f32.mrb[0].mxu0
      %v4973 = vadd.f32 0.0, %v4972
      %v4974 = vpop.f32.mrb[0].mxu0
      %4975 = vmatprep.mubr.f32.mxu0 0.0
      %4976 = vmatmul.mubr.f32.gmra.mrb[0].mxu0 %v4788
      %v4977 = vpop.f32.mrb[0].mxu0
      %v4978 = vadd.f32 0.0, %v4977
      %v4979 = vpop.f32.mrb[0].mxu0
      %4980 = vmatprep.mubr.f32.mxu0 0.0
      %4981 = vmatmul.mubr.f32.gmra.mrb[0].mxu0 %v4791
      %v4982 = vpop.f32.mrb[0].mxu0
      %v4983 = vadd.f32 0.0, %v4982
      %v4984 = vpop.f32.mrb[0].mxu0
      %4985 = vmatprep.mubr.f32.mxu0 0.0
      %4986 = vmatmul.mubr.f32.gmra.mrb[0].mxu0 %v4794
      %v4987 = vpop.f32.mrb[0].mxu0
      %v4988 = vadd.f32 0.0, %v4987
      %v4989 = vpop.f32.mrb[0].mxu0
      %4990 = vmatprep.mubr.f32.mxu0 0.0
      %4991 = vmatmul.mubr.f32.gmra.mrb[0].mxu0 %v4797
      %v4992 = vpop.f32.mrb[0].mxu0
      %v4993 = vadd.f32 0.0, %v4992
      %v4994 = vpop.f32.mrb[0].mxu0
      %4995 = vmatprep.mubr.f32.mxu0 0.0
      %4996 = vmatmul.mubr.f32.gmra.mrb[0].mxu0 %v4800
      %v4997 = vpop.f32.mrb[0].mxu0
      %v4998 = vadd.f32 0.0, %v4997
      %v4999 = vpop.f32.mrb[0].mxu0
      %5000 = vmatprep.mubr.f32.mxu0 0.0
      %5001 = vmatmul.mubr.f32.gmra.mrb[0].mxu0 %v4803
      %v5002 = vpop.f32.mrb[0].mxu0
      %v5003 = vadd.f32 0.0, %v5002
      %v5004 = vpop.f32.mrb[0].mxu0
      %5005 = vmatprep.mubr.f32.mxu0 0.0
      %5006 = vmatmul.mubr.f32.gmra.mrb[0].mxu0 %v4806
      %v5007 = vpop.f32.mrb[0].mxu0
      %v5008 = vadd.f32 0.0, %v5007
      %v5009 = vpop.f32.mrb[0].mxu0
      %5010 = vmatprep.mubr.f32.mxu0 0.0
      %5011 = vmatmul.mubr.f32.gmra.mrb[0].mxu0 %v4809
      %v5012 = vpop.f32.mrb[0].mxu0
      %v5013 = vadd.f32 0.0, %v5012
      %v5014 = vpop.f32.mrb[0].mxu0
      %5015 = vdwg.mxu0
      %v5016 = vadd.f32 %v4557, %v4878
      %v5017 = vadd.f32 %v4562, %v4883
      %v5018 = vadd.f32 %v4567, %v4888
      %v5019 = vadd.f32 %v4572, %v4893
      %v5020 = vadd.f32 %v4577, %v4898
      %v5021 = vadd.f32 %v4582, %v4903
      %v5022 = vadd.f32 %v4587, %v4908
      %v5023 = vadd.f32 %v4592, %v4913
      %v5024 = vadd.f32 %v4597, %v4918
      %v5025 = vadd.f32 %v4602, %v4923
      %v5026 = vadd.f32 %v4607, %v4928
      %v5027 = vadd.f32 %v4612, %v4933
      %v5028 = vadd.f32 %v4617, %v4938
      %v5029 = vadd.f32 %v4622, %v4943
      %v5030 = vadd.f32 %v4627, %v4948
      %v5031 = vadd.f32 %v4632, %v4953
      %v5032 = vadd.f32 %v4637, %v4958
      %v5033 = vadd.f32 %v4642, %v4963
      %v5034 = vadd.f32 %v4647, %v4968
      %v5035 = vadd.f32 %v4652, %v4973
      %v5036 = vadd.f32 %v4657, %v4978
      %v5037 = vadd.f32 %v4662, %v4983
      %v5038 = vadd.f32 %v4667, %v4988
      %v5039 = vadd.f32 %v4672, %v4993
      %v5040 = vadd.f32 %v4677, %v4998
      %v5041 = vadd.f32 %v4682, %v5003
      %v5042 = vadd.f32 %v4687, %v5008
      %v5043 = vadd.f32 %v4692, %v5013
      %v5044 = vld [vmem:[#allocation2 + $0x2d0] sm:$0xff]
      %v5045 = vld [vmem:[#allocation2 + $0x2d8] sm:$0xff]
      %v5046 = vld [vmem:[#allocation2 + $0x2e0] sm:$0xff]
      %v5047 = vld [vmem:[#allocation2 + $0x2e8] sm:$0xff]
      %v5048 = vld [vmem:[#allocation2 + $0x2f0] sm:$0xff]
      %v5049 = vld [vmem:[#allocation2 + $0x2f8] sm:$0xff]
      %v5050 = vld [vmem:[#allocation2 + $0x300] sm:$0xff]
      %v5051 = vld [vmem:[#allocation2 + $0x308] sm:$0xff]
      %v5052 = vld [vmem:[#allocation2 + $0x310] sm:$0xff]
      %v5053 = vld [vmem:[#allocation2 + $0x318] sm:$0xff]
      %v5054 = vld [vmem:[#allocation2 + $0x320] sm:$0xff]
      %v5055 = vld [vmem:[#allocation2 + $0x328] sm:$0xff]
      %v5056 = vld [vmem:[#allocation2 + $0x330] sm:$0xff]
      %v5057 = vld [vmem:[#allocation2 + $0x338] sm:$0xff]
      %v5058 = vld [vmem:[#allocation2 + $0x340] sm:$0xff]
      %v5059 = vld [vmem:[#allocation2 + $0x348] sm:$0xff]
      %v5060 = vld [vmem:[#allocation2 + $0x350] sm:$0xff]
      %v5061 = vld [vmem:[#allocation2 + $0x358] sm:$0xff]
      %v5062 = vld [vmem:[#allocation2 + $0x360] sm:$0xff]
      %v5063 = vld [vmem:[#allocation2 + $0x368] sm:$0xff]
      %v5064 = vld [vmem:[#allocation2 + $0x370] sm:$0xff]
      %v5065 = vld [vmem:[#allocation2 + $0x378] sm:$0xff]
      %v5066 = vld [vmem:[#allocation2 + $0x380] sm:$0xff]
      %v5067 = vld [vmem:[#allocation2 + $0x388] sm:$0xff]
      %v5068 = vld [vmem:[#allocation2 + $0x390] sm:$0xff]
      %v5069 = vld [vmem:[#allocation2 + $0x398] sm:$0xff]
      %v5070 = vld [vmem:[#allocation2 + $0x3a0] sm:$0xff]
      %v5071 = vld [vmem:[#allocation2 + $0x3a8] sm:$0xff]
      %v5072 = vld [vmem:[%s4 + $0x60] sm:$0xff]
      %v5073 = vld [vmem:[%s4 + $0x68] sm:$0xff]
      %v5074 = vld [vmem:[%s4 + $0x70] sm:$0xff]
      %v5075 = vld [vmem:[%s4 + $0x78] sm:$0xff]
      %v5077 = vsel %vm1284, %v5044, 0
      %v5080 = vsel %vm1284, %v5045, 0
      %v5083 = vsel %vm1284, %v5046, 0
      %v5086 = vsel %vm1284, %v5047, 0
      %v5089 = vsel %vm1284, %v5048, 0
      %v5092 = vsel %vm1284, %v5049, 0
      %v5095 = vsel %vm1284, %v5050, 0
      %v5098 = vsel %vm1284, %v5051, 0
      %v5101 = vsel %vm1284, %v5052, 0
      %v5104 = vsel %vm1284, %v5053, 0
      %v5107 = vsel %vm1284, %v5054, 0
      %v5110 = vsel %vm1284, %v5055, 0
      %v5113 = vsel %vm1284, %v5056, 0
      %v5116 = vsel %vm1284, %v5057, 0
      %v5119 = vsel %vm1284, %v5058, 0
      %v5122 = vsel %vm1284, %v5059, 0
      %v5125 = vsel %vm1284, %v5060, 0
      %v5128 = vsel %vm1284, %v5061, 0
      %v5131 = vsel %vm1284, %v5062, 0
      %v5134 = vsel %vm1284, %v5063, 0
      %v5137 = vsel %vm1284, %v5064, 0
      %v5140 = vsel %vm1284, %v5065, 0
      %v5143 = vsel %vm1284, %v5066, 0
      %v5146 = vsel %vm1284, %v5067, 0
      %v5149 = vsel %vm1284, %v5068, 0
      %v5152 = vsel %vm1284, %v5069, 0
      %v5155 = vsel %vm1284, %v5070, 0
      %v5158 = vsel %vm1284, %v5071, 0
      %5160 = vmatprep.subr.mxu0 0.0
      %5161 = vmatpush1.msra.mxu0 %v5072
      %5162 = vmatprep.subr.mxu0 0.0
      %5163 = vmatpush1.msra.mxu0 %v5073
      %5164 = vmatprep.subr.mxu0 0.0
      %5165 = vmatpush1.msra.mxu0 %v5074
      %5166 = vmatprep.subr.mxu0 0.0
      %5167 = vmatpush1.msra.mxu0 %v5075
      %5168 = vmatprep.subr.mxu0 0.0
      %5169 = vmatpush1.msra.mxu0 0.0
      %5170 = vmatprep.subr.mxu0 0.0
      %5171 = vmatpush1.msra.mxu0 0.0
      %5172 = vmatprep.subr.mxu0 0.0
      %5173 = vmatpush1.msra.mxu0 0.0
      %5174 = vmatprep.subr.mxu0 0.0
      %5175 = vmatpush1.msra.mxu0 0.0
      %5176 = vmatprep.subr.mxu0 0.0
      %5177 = vmatpush1.msra.mxu0 0.0
      %5178 = vmatprep.subr.mxu0 0.0
      %5179 = vmatpush1.msra.mxu0 0.0
      %5180 = vmatprep.subr.mxu0 0.0
      %5181 = vmatpush1.msra.mxu0 0.0
      %5182 = vmatprep.subr.mxu0 0.0
      %5183 = vmatpush1.msra.mxu0 0.0
      %5184 = vmatprep.subr.mxu0 0.0
      %5185 = vmatpush1.msra.mxu0 0.0
      %5186 = vmatprep.subr.mxu0 0.0
      %5187 = vmatpush1.msra.mxu0 0.0
      %5188 = vmatprep.subr.mxu0 0.0
      %5189 = vmatpush1.msra.mxu0 0.0
      %5190 = vmatprep.subr.mxu0 0.0
      %5191 = vmatpush1.msra.mxu0 0.0
      %5192 = vmatprep.subr.mxu0 0.0
      %5193 = vmatpush1.msra.mxu0 0.0
      %5194 = vmatprep.subr.mxu0 0.0
      %5195 = vmatpush1.msra.mxu0 0.0
      %5196 = vmatprep.subr.mxu0 0.0
      %5197 = vmatpush1.msra.mxu0 0.0
      %5198 = vmatprep.subr.mxu0 0.0
      %5199 = vmatpush1.msra.mxu0 0.0
      %5200 = vmatprep.subr.mxu0 0.0
      %5201 = vmatpush1.msra.mxu0 0.0
      %5202 = vmatprep.subr.mxu0 0.0
      %5203 = vmatpush1.msra.mxu0 0.0
      %5204 = vmatprep.subr.mxu0 0.0
      %5205 = vmatpush1.msra.mxu0 0.0
      %5206 = vmatprep.subr.mxu0 0.0
      %5207 = vmatpush1.msra.mxu0 0.0
      %5208 = vmatprep.subr.mxu0 0.0
      %5209 = vmatpush1.msra.mxu0 0.0
      %5210 = vmatprep.subr.mxu0 0.0
      %5211 = vmatpush1.msra.mxu0 0.0
      %5212 = vmatprep.subr.mxu0 0.0
      %5213 = vmatpush1.msra.mxu0 0.0
      %5214 = vmatprep.subr.mxu0 0.0
      %5215 = vmatpush1.msra.mxu0 0.0
      %5216 = vmatprep.subr.mxu0 0.0
      %5217 = vmatpush1.msra.mxu0 0.0
      %5218 = vmatprep.subr.mxu0 0.0
      %5219 = vmatpush1.msra.mxu0 0.0
      %5220 = vmatprep.subr.mxu0 0.0
      %5221 = vmatpush1.msra.mxu0 0.0
      %5222 = vmatprep.subr.mxu0 0.0
      %5223 = vmatpush1.msra.mxu0 0.0
      %5224 = vmatprep.mubr.f32.mxu0 0.0
      %5225 = vmatmul.mubr.f32.gmra.mrb[0].mxu0 %v5077
      %v5226 = vpop.f32.mrb[0].mxu0
      %v5227 = vadd.f32 0.0, %v5226
      %v5228 = vpop.f32.mrb[0].mxu0
      %5229 = vmatprep.mubr.f32.mxu0 0.0
      %5230 = vmatmul.mubr.f32.gmra.mrb[0].mxu0 %v5080
      %v5231 = vpop.f32.mrb[0].mxu0
      %v5232 = vadd.f32 0.0, %v5231
      %v5233 = vpop.f32.mrb[0].mxu0
      %5234 = vmatprep.mubr.f32.mxu0 0.0
      %5235 = vmatmul.mubr.f32.gmra.mrb[0].mxu0 %v5083
      %v5236 = vpop.f32.mrb[0].mxu0
      %v5237 = vadd.f32 0.0, %v5236
      %v5238 = vpop.f32.mrb[0].mxu0
      %5239 = vmatprep.mubr.f32.mxu0 0.0
      %5240 = vmatmul.mubr.f32.gmra.mrb[0].mxu0 %v5086
      %v5241 = vpop.f32.mrb[0].mxu0
      %v5242 = vadd.f32 0.0, %v5241
      %v5243 = vpop.f32.mrb[0].mxu0
      %5244 = vmatprep.mubr.f32.mxu0 0.0
      %5245 = vmatmul.mubr.f32.gmra.mrb[0].mxu0 %v5089
      %v5246 = vpop.f32.mrb[0].mxu0
      %v5247 = vadd.f32 0.0, %v5246
      %v5248 = vpop.f32.mrb[0].mxu0
      %5249 = vmatprep.mubr.f32.mxu0 0.0
      %5250 = vmatmul.mubr.f32.gmra.mrb[0].mxu0 %v5092
      %v5251 = vpop.f32.mrb[0].mxu0
      %v5252 = vadd.f32 0.0, %v5251
      %v5253 = vpop.f32.mrb[0].mxu0
      %5254 = vmatprep.mubr.f32.mxu0 0.0
      %5255 = vmatmul.mubr.f32.gmra.mrb[0].mxu0 %v5095
      %v5256 = vpop.f32.mrb[0].mxu0
      %v5257 = vadd.f32 0.0, %v5256
      %v5258 = vpop.f32.mrb[0].mxu0
      %5259 = vmatprep.mubr.f32.mxu0 0.0
      %5260 = vmatmul.mubr.f32.gmra.mrb[0].mxu0 %v5098
      %v5261 = vpop.f32.mrb[0].mxu0
      %v5262 = vadd.f32 0.0, %v5261
      %v5263 = vpop.f32.mrb[0].mxu0
      %5264 = vmatprep.mubr.f32.mxu0 0.0
      %5265 = vmatmul.mubr.f32.gmra.mrb[0].mxu0 %v5101
      %v5266 = vpop.f32.mrb[0].mxu0
      %v5267 = vadd.f32 0.0, %v5266
      %v5268 = vpop.f32.mrb[0].mxu0
      %5269 = vmatprep.mubr.f32.mxu0 0.0
      %5270 = vmatmul.mubr.f32.gmra.mrb[0].mxu0 %v5104
      %v5271 = vpop.f32.mrb[0].mxu0
      %v5272 = vadd.f32 0.0, %v5271
      %v5273 = vpop.f32.mrb[0].mxu0
      %5274 = vmatprep.mubr.f32.mxu0 0.0
      %5275 = vmatmul.mubr.f32.gmra.mrb[0].mxu0 %v5107
      %v5276 = vpop.f32.mrb[0].mxu0
      %v5277 = vadd.f32 0.0, %v5276
      %v5278 = vpop.f32.mrb[0].mxu0
      %5279 = vmatprep.mubr.f32.mxu0 0.0
      %5280 = vmatmul.mubr.f32.gmra.mrb[0].mxu0 %v5110
      %v5281 = vpop.f32.mrb[0].mxu0
      %v5282 = vadd.f32 0.0, %v5281
      %v5283 = vpop.f32.mrb[0].mxu0
      %5284 = vmatprep.mubr.f32.mxu0 0.0
      %5285 = vmatmul.mubr.f32.gmra.mrb[0].mxu0 %v5113
      %v5286 = vpop.f32.mrb[0].mxu0
      %v5287 = vadd.f32 0.0, %v5286
      %v5288 = vpop.f32.mrb[0].mxu0
      %5289 = vmatprep.mubr.f32.mxu0 0.0
      %5290 = vmatmul.mubr.f32.gmra.mrb[0].mxu0 %v5116
      %v5291 = vpop.f32.mrb[0].mxu0
      %v5292 = vadd.f32 0.0, %v5291
      %v5293 = vpop.f32.mrb[0].mxu0
      %5294 = vmatprep.mubr.f32.mxu0 0.0
      %5295 = vmatmul.mubr.f32.gmra.mrb[0].mxu0 %v5119
      %v5296 = vpop.f32.mrb[0].mxu0
      %v5297 = vadd.f32 0.0, %v5296
      %v5298 = vpop.f32.mrb[0].mxu0
      %5299 = vmatprep.mubr.f32.mxu0 0.0
      %5300 = vmatmul.mubr.f32.gmra.mrb[0].mxu0 %v5122
      %v5301 = vpop.f32.mrb[0].mxu0
      %v5302 = vadd.f32 0.0, %v5301
      %v5303 = vpop.f32.mrb[0].mxu0
      %5304 = vmatprep.mubr.f32.mxu0 0.0
      %5305 = vmatmul.mubr.f32.gmra.mrb[0].mxu0 %v5125
      %v5306 = vpop.f32.mrb[0].mxu0
      %v5307 = vadd.f32 0.0, %v5306
      %v5308 = vpop.f32.mrb[0].mxu0
      %5309 = vmatprep.mubr.f32.mxu0 0.0
      %5310 = vmatmul.mubr.f32.gmra.mrb[0].mxu0 %v5128
      %v5311 = vpop.f32.mrb[0].mxu0
      %v5312 = vadd.f32 0.0, %v5311
      %v5313 = vpop.f32.mrb[0].mxu0
      %5314 = vmatprep.mubr.f32.mxu0 0.0
      %5315 = vmatmul.mubr.f32.gmra.mrb[0].mxu0 %v5131
      %v5316 = vpop.f32.mrb[0].mxu0
      %v5317 = vadd.f32 0.0, %v5316
      %v5318 = vpop.f32.mrb[0].mxu0
      %5319 = vmatprep.mubr.f32.mxu0 0.0
      %5320 = vmatmul.mubr.f32.gmra.mrb[0].mxu0 %v5134
      %v5321 = vpop.f32.mrb[0].mxu0
      %v5322 = vadd.f32 0.0, %v5321
      %v5323 = vpop.f32.mrb[0].mxu0
      %5324 = vmatprep.mubr.f32.mxu0 0.0
      %5325 = vmatmul.mubr.f32.gmra.mrb[0].mxu0 %v5137
      %v5326 = vpop.f32.mrb[0].mxu0
      %v5327 = vadd.f32 0.0, %v5326
      %v5328 = vpop.f32.mrb[0].mxu0
      %5329 = vmatprep.mubr.f32.mxu0 0.0
      %5330 = vmatmul.mubr.f32.gmra.mrb[0].mxu0 %v5140
      %v5331 = vpop.f32.mrb[0].mxu0
      %v5332 = vadd.f32 0.0, %v5331
      %v5333 = vpop.f32.mrb[0].mxu0
      %5334 = vmatprep.mubr.f32.mxu0 0.0
      %5335 = vmatmul.mubr.f32.gmra.mrb[0].mxu0 %v5143
      %v5336 = vpop.f32.mrb[0].mxu0
      %v5337 = vadd.f32 0.0, %v5336
      %v5338 = vpop.f32.mrb[0].mxu0
      %5339 = vmatprep.mubr.f32.mxu0 0.0
      %5340 = vmatmul.mubr.f32.gmra.mrb[0].mxu0 %v5146
      %v5341 = vpop.f32.mrb[0].mxu0
      %v5342 = vadd.f32 0.0, %v5341
      %v5343 = vpop.f32.mrb[0].mxu0
      %5344 = vmatprep.mubr.f32.mxu0 0.0
      %5345 = vmatmul.mubr.f32.gmra.mrb[0].mxu0 %v5149
      %v5346 = vpop.f32.mrb[0].mxu0
      %v5347 = vadd.f32 0.0, %v5346
      %v5348 = vpop.f32.mrb[0].mxu0
      %5349 = vmatprep.mubr.f32.mxu0 0.0
      %5350 = vmatmul.mubr.f32.gmra.mrb[0].mxu0 %v5152
      %v5351 = vpop.f32.mrb[0].mxu0
      %v5352 = vadd.f32 0.0, %v5351
      %v5353 = vpop.f32.mrb[0].mxu0
      %5354 = vmatprep.mubr.f32.mxu0 0.0
      %5355 = vmatmul.mubr.f32.gmra.mrb[0].mxu0 %v5155
      %v5356 = vpop.f32.mrb[0].mxu0
      %v5357 = vadd.f32 0.0, %v5356
      %v5358 = vpop.f32.mrb[0].mxu0
      %5359 = vmatprep.mubr.f32.mxu0 0.0
      %5360 = vmatmul.mubr.f32.gmra.mrb[0].mxu0 %v5158
      %v5361 = vpop.f32.mrb[0].mxu0
      %v5362 = vadd.f32 0.0, %v5361
      %v5363 = vpop.f32.mrb[0].mxu0
      %5364 = vdwg.mxu0
      %v5365 = vadd.f32 %v5016, %v5227
      %v5366 = vadd.f32 %v5017, %v5232
      %v5367 = vadd.f32 %v5018, %v5237
      %v5368 = vadd.f32 %v5019, %v5242
      %v5369 = vadd.f32 %v5020, %v5247
      %v5370 = vadd.f32 %v5021, %v5252
      %v5371 = vadd.f32 %v5022, %v5257
      %v5372 = vadd.f32 %v5023, %v5262
      %v5373 = vadd.f32 %v5024, %v5267
      %v5374 = vadd.f32 %v5025, %v5272
      %v5375 = vadd.f32 %v5026, %v5277
      %v5376 = vadd.f32 %v5027, %v5282
      %v5377 = vadd.f32 %v5028, %v5287
      %v5378 = vadd.f32 %v5029, %v5292
      %v5379 = vadd.f32 %v5030, %v5297
      %v5380 = vadd.f32 %v5031, %v5302
      %v5381 = vadd.f32 %v5032, %v5307
      %v5382 = vadd.f32 %v5033, %v5312
      %v5383 = vadd.f32 %v5034, %v5317
      %v5384 = vadd.f32 %v5035, %v5322
      %v5385 = vadd.f32 %v5036, %v5327
      %v5386 = vadd.f32 %v5037, %v5332
      %v5387 = vadd.f32 %v5038, %v5337
      %v5388 = vadd.f32 %v5039, %v5342
      %v5389 = vadd.f32 %v5040, %v5347
      %v5390 = vadd.f32 %v5041, %v5352
      %v5391 = vadd.f32 %v5042, %v5357
      %v5392 = vadd.f32 %v5043, %v5362
      %v5393 = vld [vmem:[#allocation2 + $0x8] sm:$0xff]
      %v5394 = vld [vmem:[#allocation2 + $0x10] sm:$0xff]
      %v5395 = vld [vmem:[#allocation2 + $0x18] sm:$0xff]
      %v5396 = vld [vmem:[#allocation2 + $0x20] sm:$0xff]
      %v5397 = vld [vmem:[#allocation2 + $0x28] sm:$0xff]
      %v5398 = vld [vmem:[#allocation2 + $0x30] sm:$0xff]
      %v5399 = vld [vmem:[#allocation2 + $0x38] sm:$0xff]
      %v5400 = vld [vmem:[#allocation2 + $0x40] sm:$0xff]
      %v5401 = vld [vmem:[#allocation2 + $0x48] sm:$0xff]
      %v5402 = vld [vmem:[#allocation2 + $0x50] sm:$0xff]
      %v5403 = vld [vmem:[#allocation2 + $0x58] sm:$0xff]
      %v5404 = vld [vmem:[#allocation2 + $0x60] sm:$0xff]
      %v5405 = vld [vmem:[#allocation2 + $0x68] sm:$0xff]
      %v5406 = vld [vmem:[#allocation2 + $0x70] sm:$0xff]
      %v5407 = vld [vmem:[#allocation2 + $0x78] sm:$0xff]
      %v5408 = vld [vmem:[#allocation2 + $0x80] sm:$0xff]
      %v5409 = vld [vmem:[#allocation2 + $0x88] sm:$0xff]
      %v5410 = vld [vmem:[#allocation2 + $0x90] sm:$0xff]
      %v5411 = vld [vmem:[#allocation2 + $0x98] sm:$0xff]
      %v5412 = vld [vmem:[#allocation2 + $0xa0] sm:$0xff]
      %v5413 = vld [vmem:[#allocation2 + $0xa8] sm:$0xff]
      %v5414 = vld [vmem:[#allocation2 + $0xb0] sm:$0xff]
      %v5415 = vld [vmem:[#allocation2 + $0xb8] sm:$0xff]
      %v5416 = vld [vmem:[#allocation2 + $0xc0] sm:$0xff]
      %v5417 = vld [vmem:[#allocation2 + $0xc8] sm:$0xff]
      %v5418 = vld [vmem:[#allocation2 + $0xd0] sm:$0xff]
      %v5419 = vld [vmem:[#allocation2 + $0xd8] sm:$0xff]
      %v5420 = vld [vmem:[#allocation2 + $0xe0] sm:$0xff]
      %v5421 = vld [vmem:[%s4 + $0x80] sm:$0xff]
      %v5422 = vld [vmem:[%s4 + $0x88] sm:$0xff]
      %v5423 = vld [vmem:[%s4 + $0x90] sm:$0xff]
      %v5424 = vld [vmem:[%s4 + $0x98] sm:$0xff]
      %v5426 = vsel %vm1284, %v5393, 0
      %v5429 = vsel %vm1284, %v5394, 0
      %v5432 = vsel %vm1284, %v5395, 0
      %v5435 = vsel %vm1284, %v5396, 0
      %v5438 = vsel %vm1284, %v5397, 0
      %v5441 = vsel %vm1284, %v5398, 0
      %v5444 = vsel %vm1284, %v5399, 0
      %v5447 = vsel %vm1284, %v5400, 0
      %v5450 = vsel %vm1284, %v5401, 0
      %v5453 = vsel %vm1284, %v5402, 0
      %v5456 = vsel %vm1284, %v5403, 0
      %v5459 = vsel %vm1284, %v5404, 0
      %v5462 = vsel %vm1284, %v5405, 0
      %v5465 = vsel %vm1284, %v5406, 0
      %v5468 = vsel %vm1284, %v5407, 0
      %v5471 = vsel %vm1284, %v5408, 0
      %v5474 = vsel %vm1284, %v5409, 0
      %v5477 = vsel %vm1284, %v5410, 0
      %v5480 = vsel %vm1284, %v5411, 0
      %v5483 = vsel %vm1284, %v5412, 0
      %v5486 = vsel %vm1284, %v5413, 0
      %v5489 = vsel %vm1284, %v5414, 0
      %v5492 = vsel %vm1284, %v5415, 0
      %v5495 = vsel %vm1284, %v5416, 0
      %v5498 = vsel %vm1284, %v5417, 0
      %v5501 = vsel %vm1284, %v5418, 0
      %v5504 = vsel %vm1284, %v5419, 0
      %v5507 = vsel %vm1284, %v5420, 0
      %5509 = vmatprep.subr.mxu0 0.0
      %5510 = vmatpush1.msra.mxu0 %v5421
      %5511 = vmatprep.subr.mxu0 0.0
      %5512 = vmatpush1.msra.mxu0 %v5422
      %5513 = vmatprep.subr.mxu0 0.0
      %5514 = vmatpush1.msra.mxu0 %v5423
      %5515 = vmatprep.subr.mxu0 0.0
      %5516 = vmatpush1.msra.mxu0 %v5424
      %5517 = vmatprep.subr.mxu0 0.0
      %5518 = vmatpush1.msra.mxu0 0.0
      %5519 = vmatprep.subr.mxu0 0.0
      %5520 = vmatpush1.msra.mxu0 0.0
      %5521 = vmatprep.subr.mxu0 0.0
      %5522 = vmatpush1.msra.mxu0 0.0
      %5523 = vmatprep.subr.mxu0 0.0
      %5524 = vmatpush1.msra.mxu0 0.0
      %5525 = vmatprep.subr.mxu0 0.0
      %5526 = vmatpush1.msra.mxu0 0.0
      %5527 = vmatprep.subr.mxu0 0.0
      %5528 = vmatpush1.msra.mxu0 0.0
      %5529 = vmatprep.subr.mxu0 0.0
      %5530 = vmatpush1.msra.mxu0 0.0
      %5531 = vmatprep.subr.mxu0 0.0
      %5532 = vmatpush1.msra.mxu0 0.0
      %5533 = vmatprep.subr.mxu0 0.0
      %5534 = vmatpush1.msra.mxu0 0.0
      %5535 = vmatprep.subr.mxu0 0.0
      %5536 = vmatpush1.msra.mxu0 0.0
      %5537 = vmatprep.subr.mxu0 0.0
      %5538 = vmatpush1.msra.mxu0 0.0
      %5539 = vmatprep.subr.mxu0 0.0
      %5540 = vmatpush1.msra.mxu0 0.0
      %5541 = vmatprep.subr.mxu0 0.0
      %5542 = vmatpush1.msra.mxu0 0.0
      %5543 = vmatprep.subr.mxu0 0.0
      %5544 = vmatpush1.msra.mxu0 0.0
      %5545 = vmatprep.subr.mxu0 0.0
      %5546 = vmatpush1.msra.mxu0 0.0
      %5547 = vmatprep.subr.mxu0 0.0
      %5548 = vmatpush1.msra.mxu0 0.0
      %5549 = vmatprep.subr.mxu0 0.0
      %5550 = vmatpush1.msra.mxu0 0.0
      %5551 = vmatprep.subr.mxu0 0.0
      %5552 = vmatpush1.msra.mxu0 0.0
      %5553 = vmatprep.subr.mxu0 0.0
      %5554 = vmatpush1.msra.mxu0 0.0
      %5555 = vmatprep.subr.mxu0 0.0
      %5556 = vmatpush1.msra.mxu0 0.0
      %5557 = vmatprep.subr.mxu0 0.0
      %5558 = vmatpush1.msra.mxu0 0.0
      %5559 = vmatprep.subr.mxu0 0.0
      %5560 = vmatpush1.msra.mxu0 0.0
      %5561 = vmatprep.subr.mxu0 0.0
      %5562 = vmatpush1.msra.mxu0 0.0
      %5563 = vmatprep.subr.mxu0 0.0
      %5564 = vmatpush1.msra.mxu0 0.0
      %5565 = vmatprep.subr.mxu0 0.0
      %5566 = vmatpush1.msra.mxu0 0.0
      %5567 = vmatprep.subr.mxu0 0.0
      %5568 = vmatpush1.msra.mxu0 0.0
      %5569 = vmatprep.subr.mxu0 0.0
      %5570 = vmatpush1.msra.mxu0 0.0
      %5571 = vmatprep.subr.mxu0 0.0
      %5572 = vmatpush1.msra.mxu0 0.0
      %5573 = vmatprep.mubr.f32.mxu0 0.0
      %5574 = vmatmul.mubr.f32.gmra.mrb[0].mxu0 %v5426
      %v5575 = vpop.f32.mrb[0].mxu0
      %v5576 = vadd.f32 0.0, %v5575
      %v5577 = vpop.f32.mrb[0].mxu0
      %5578 = vmatprep.mubr.f32.mxu0 0.0
      %5579 = vmatmul.mubr.f32.gmra.mrb[0].mxu0 %v5429
      %v5580 = vpop.f32.mrb[0].mxu0
      %v5581 = vadd.f32 0.0, %v5580
      %v5582 = vpop.f32.mrb[0].mxu0
      %5583 = vmatprep.mubr.f32.mxu0 0.0
      %5584 = vmatmul.mubr.f32.gmra.mrb[0].mxu0 %v5432
      %v5585 = vpop.f32.mrb[0].mxu0
      %v5586 = vadd.f32 0.0, %v5585
      %v5587 = vpop.f32.mrb[0].mxu0
      %5588 = vmatprep.mubr.f32.mxu0 0.0
      %5589 = vmatmul.mubr.f32.gmra.mrb[0].mxu0 %v5435
      %v5590 = vpop.f32.mrb[0].mxu0
      %v5591 = vadd.f32 0.0, %v5590
      %v5592 = vpop.f32.mrb[0].mxu0
      %5593 = vmatprep.mubr.f32.mxu0 0.0
      %5594 = vmatmul.mubr.f32.gmra.mrb[0].mxu0 %v5438
      %v5595 = vpop.f32.mrb[0].mxu0
      %v5596 = vadd.f32 0.0, %v5595
      %v5597 = vpop.f32.mrb[0].mxu0
      %5598 = vmatprep.mubr.f32.mxu0 0.0
      %5599 = vmatmul.mubr.f32.gmra.mrb[0].mxu0 %v5441
      %v5600 = vpop.f32.mrb[0].mxu0
      %v5601 = vadd.f32 0.0, %v5600
      %v5602 = vpop.f32.mrb[0].mxu0
      %5603 = vmatprep.mubr.f32.mxu0 0.0
      %5604 = vmatmul.mubr.f32.gmra.mrb[0].mxu0 %v5444
      %v5605 = vpop.f32.mrb[0].mxu0
      %v5606 = vadd.f32 0.0, %v5605
      %v5607 = vpop.f32.mrb[0].mxu0
      %5608 = vmatprep.mubr.f32.mxu0 0.0
      %5609 = vmatmul.mubr.f32.gmra.mrb[0].mxu0 %v5447
      %v5610 = vpop.f32.mrb[0].mxu0
      %v5611 = vadd.f32 0.0, %v5610
      %v5612 = vpop.f32.mrb[0].mxu0
      %5613 = vmatprep.mubr.f32.mxu0 0.0
      %5614 = vmatmul.mubr.f32.gmra.mrb[0].mxu0 %v5450
      %v5615 = vpop.f32.mrb[0].mxu0
      %v5616 = vadd.f32 0.0, %v5615
      %v5617 = vpop.f32.mrb[0].mxu0
      %5618 = vmatprep.mubr.f32.mxu0 0.0
      %5619 = vmatmul.mubr.f32.gmra.mrb[0].mxu0 %v5453
      %v5620 = vpop.f32.mrb[0].mxu0
      %v5621 = vadd.f32 0.0, %v5620
      %v5622 = vpop.f32.mrb[0].mxu0
      %5623 = vmatprep.mubr.f32.mxu0 0.0
      %5624 = vmatmul.mubr.f32.gmra.mrb[0].mxu0 %v5456
      %v5625 = vpop.f32.mrb[0].mxu0
      %v5626 = vadd.f32 0.0, %v5625
      %v5627 = vpop.f32.mrb[0].mxu0
      %5628 = vmatprep.mubr.f32.mxu0 0.0
      %5629 = vmatmul.mubr.f32.gmra.mrb[0].mxu0 %v5459
      %v5630 = vpop.f32.mrb[0].mxu0
      %v5631 = vadd.f32 0.0, %v5630
      %v5632 = vpop.f32.mrb[0].mxu0
      %5633 = vmatprep.mubr.f32.mxu0 0.0
      %5634 = vmatmul.mubr.f32.gmra.mrb[0].mxu0 %v5462
      %v5635 = vpop.f32.mrb[0].mxu0
      %v5636 = vadd.f32 0.0, %v5635
      %v5637 = vpop.f32.mrb[0].mxu0
      %5638 = vmatprep.mubr.f32.mxu0 0.0
      %5639 = vmatmul.mubr.f32.gmra.mrb[0].mxu0 %v5465
      %v5640 = vpop.f32.mrb[0].mxu0
      %v5641 = vadd.f32 0.0, %v5640
      %v5642 = vpop.f32.mrb[0].mxu0
      %5643 = vmatprep.mubr.f32.mxu0 0.0
      %5644 = vmatmul.mubr.f32.gmra.mrb[0].mxu0 %v5468
      %v5645 = vpop.f32.mrb[0].mxu0
      %v5646 = vadd.f32 0.0, %v5645
      %v5647 = vpop.f32.mrb[0].mxu0
      %5648 = vmatprep.mubr.f32.mxu0 0.0
      %5649 = vmatmul.mubr.f32.gmra.mrb[0].mxu0 %v5471
      %v5650 = vpop.f32.mrb[0].mxu0
      %v5651 = vadd.f32 0.0, %v5650
      %v5652 = vpop.f32.mrb[0].mxu0
      %5653 = vmatprep.mubr.f32.mxu0 0.0
      %5654 = vmatmul.mubr.f32.gmra.mrb[0].mxu0 %v5474
      %v5655 = vpop.f32.mrb[0].mxu0
      %v5656 = vadd.f32 0.0, %v5655
      %v5657 = vpop.f32.mrb[0].mxu0
      %5658 = vmatprep.mubr.f32.mxu0 0.0
      %5659 = vmatmul.mubr.f32.gmra.mrb[0].mxu0 %v5477
      %v5660 = vpop.f32.mrb[0].mxu0
      %v5661 = vadd.f32 0.0, %v5660
      %v5662 = vpop.f32.mrb[0].mxu0
      %5663 = vmatprep.mubr.f32.mxu0 0.0
      %5664 = vmatmul.mubr.f32.gmra.mrb[0].mxu0 %v5480
      %v5665 = vpop.f32.mrb[0].mxu0
      %v5666 = vadd.f32 0.0, %v5665
      %v5667 = vpop.f32.mrb[0].mxu0
      %5668 = vmatprep.mubr.f32.mxu0 0.0
      %5669 = vmatmul.mubr.f32.gmra.mrb[0].mxu0 %v5483
      %v5670 = vpop.f32.mrb[0].mxu0
      %v5671 = vadd.f32 0.0, %v5670
      %v5672 = vpop.f32.mrb[0].mxu0
      %5673 = vmatprep.mubr.f32.mxu0 0.0
      %5674 = vmatmul.mubr.f32.gmra.mrb[0].mxu0 %v5486
      %v5675 = vpop.f32.mrb[0].mxu0
      %v5676 = vadd.f32 0.0, %v5675
      %v5677 = vpop.f32.mrb[0].mxu0
      %5678 = vmatprep.mubr.f32.mxu0 0.0
      %5679 = vmatmul.mubr.f32.gmra.mrb[0].mxu0 %v5489
      %v5680 = vpop.f32.mrb[0].mxu0
      %v5681 = vadd.f32 0.0, %v5680
      %v5682 = vpop.f32.mrb[0].mxu0
      %5683 = vmatprep.mubr.f32.mxu0 0.0
      %5684 = vmatmul.mubr.f32.gmra.mrb[0].mxu0 %v5492
      %v5685 = vpop.f32.mrb[0].mxu0
      %v5686 = vadd.f32 0.0, %v5685
      %v5687 = vpop.f32.mrb[0].mxu0
      %5688 = vmatprep.mubr.f32.mxu0 0.0
      %5689 = vmatmul.mubr.f32.gmra.mrb[0].mxu0 %v5495
      %v5690 = vpop.f32.mrb[0].mxu0
      %v5691 = vadd.f32 0.0, %v5690
      %v5692 = vpop.f32.mrb[0].mxu0
      %5693 = vmatprep.mubr.f32.mxu0 0.0
      %5694 = vmatmul.mubr.f32.gmra.mrb[0].mxu0 %v5498
      %v5695 = vpop.f32.mrb[0].mxu0
      %v5696 = vadd.f32 0.0, %v5695
      %v5697 = vpop.f32.mrb[0].mxu0
      %5698 = vmatprep.mubr.f32.mxu0 0.0
      %5699 = vmatmul.mubr.f32.gmra.mrb[0].mxu0 %v5501
      %v5700 = vpop.f32.mrb[0].mxu0
      %v5701 = vadd.f32 0.0, %v5700
      %v5702 = vpop.f32.mrb[0].mxu0
      %5703 = vmatprep.mubr.f32.mxu0 0.0
      %5704 = vmatmul.mubr.f32.gmra.mrb[0].mxu0 %v5504
      %v5705 = vpop.f32.mrb[0].mxu0
      %v5706 = vadd.f32 0.0, %v5705
      %v5707 = vpop.f32.mrb[0].mxu0
      %5708 = vmatprep.mubr.f32.mxu0 0.0
      %5709 = vmatmul.mubr.f32.gmra.mrb[0].mxu0 %v5507
      %v5710 = vpop.f32.mrb[0].mxu0
      %v5711 = vadd.f32 0.0, %v5710
      %v5712 = vpop.f32.mrb[0].mxu0
      %5713 = vdwg.mxu0
      %v5714 = vadd.f32 %v5365, %v5576
      %v5715 = vadd.f32 %v5366, %v5581
      %v5716 = vadd.f32 %v5367, %v5586
      %v5717 = vadd.f32 %v5368, %v5591
      %v5718 = vadd.f32 %v5369, %v5596
      %v5719 = vadd.f32 %v5370, %v5601
      %v5720 = vadd.f32 %v5371, %v5606
      %v5721 = vadd.f32 %v5372, %v5611
      %v5722 = vadd.f32 %v5373, %v5616
      %v5723 = vadd.f32 %v5374, %v5621
      %v5724 = vadd.f32 %v5375, %v5626
      %v5725 = vadd.f32 %v5376, %v5631
      %v5726 = vadd.f32 %v5377, %v5636
      %v5727 = vadd.f32 %v5378, %v5641
      %v5728 = vadd.f32 %v5379, %v5646
      %v5729 = vadd.f32 %v5380, %v5651
      %v5730 = vadd.f32 %v5381, %v5656
      %v5731 = vadd.f32 %v5382, %v5661
      %v5732 = vadd.f32 %v5383, %v5666
      %v5733 = vadd.f32 %v5384, %v5671
      %v5734 = vadd.f32 %v5385, %v5676
      %v5735 = vadd.f32 %v5386, %v5681
      %v5736 = vadd.f32 %v5387, %v5686
      %v5737 = vadd.f32 %v5388, %v5691
      %v5738 = vadd.f32 %v5389, %v5696
      %v5739 = vadd.f32 %v5390, %v5701
      %v5740 = vadd.f32 %v5391, %v5706
      %v5741 = vadd.f32 %v5392, %v5711
      %v5742 = vld [vmem:[#allocation2 + $0xf8] sm:$0xff]
      %v5743 = vld [vmem:[#allocation2 + $0x100] sm:$0xff]
      %v5744 = vld [vmem:[#allocation2 + $0x108] sm:$0xff]
      %v5745 = vld [vmem:[#allocation2 + $0x110] sm:$0xff]
      %v5746 = vld [vmem:[#allocation2 + $0x118] sm:$0xff]
      %v5747 = vld [vmem:[#allocation2 + $0x120] sm:$0xff]
      %v5748 = vld [vmem:[#allocation2 + $0x128] sm:$0xff]
      %v5749 = vld [vmem:[#allocation2 + $0x130] sm:$0xff]
      %v5750 = vld [vmem:[#allocation2 + $0x138] sm:$0xff]
      %v5751 = vld [vmem:[#allocation2 + $0x140] sm:$0xff]
      %v5752 = vld [vmem:[#allocation2 + $0x148] sm:$0xff]
      %v5753 = vld [vmem:[#allocation2 + $0x150] sm:$0xff]
      %v5754 = vld [vmem:[#allocation2 + $0x158] sm:$0xff]
      %v5755 = vld [vmem:[#allocation2 + $0x160] sm:$0xff]
      %v5756 = vld [vmem:[#allocation2 + $0x168] sm:$0xff]
      %v5757 = vld [vmem:[#allocation2 + $0x170] sm:$0xff]
      %v5758 = vld [vmem:[#allocation2 + $0x178] sm:$0xff]
      %v5759 = vld [vmem:[#allocation2 + $0x180] sm:$0xff]
      %v5760 = vld [vmem:[#allocation2 + $0x188] sm:$0xff]
      %v5761 = vld [vmem:[#allocation2 + $0x190] sm:$0xff]
      %v5762 = vld [vmem:[#allocation2 + $0x198] sm:$0xff]
      %v5763 = vld [vmem:[#allocation2 + $0x1a0] sm:$0xff]
      %v5764 = vld [vmem:[#allocation2 + $0x1a8] sm:$0xff]
      %v5765 = vld [vmem:[#allocation2 + $0x1b0] sm:$0xff]
      %v5766 = vld [vmem:[#allocation2 + $0x1b8] sm:$0xff]
      %v5767 = vld [vmem:[#allocation2 + $0x1c0] sm:$0xff]
      %v5768 = vld [vmem:[#allocation2 + $0x1c8] sm:$0xff]
      %v5769 = vld [vmem:[#allocation2 + $0x1d0] sm:$0xff]
      %v5770 = vld [vmem:[%s4 + $0xa0] sm:$0xff]
      %v5771 = vld [vmem:[%s4 + $0xa8] sm:$0xff]
      %v5772 = vld [vmem:[%s4 + $0xb0] sm:$0xff]
      %v5773 = vld [vmem:[%s4 + $0xb8] sm:$0xff]
      %v5775 = vsel %vm1284, %v5742, 0
      %v5778 = vsel %vm1284, %v5743, 0
      %v5781 = vsel %vm1284, %v5744, 0
      %v5784 = vsel %vm1284, %v5745, 0
      %v5787 = vsel %vm1284, %v5746, 0
      %v5790 = vsel %vm1284, %v5747, 0
      %v5793 = vsel %vm1284, %v5748, 0
      %v5796 = vsel %vm1284, %v5749, 0
      %v5799 = vsel %vm1284, %v5750, 0
      %v5802 = vsel %vm1284, %v5751, 0
      %v5805 = vsel %vm1284, %v5752, 0
      %v5808 = vsel %vm1284, %v5753, 0
      %v5811 = vsel %vm1284, %v5754, 0
      %v5814 = vsel %vm1284, %v5755, 0
      %v5817 = vsel %vm1284, %v5756, 0
      %v5820 = vsel %vm1284, %v5757, 0
      %v5823 = vsel %vm1284, %v5758, 0
      %v5826 = vsel %vm1284, %v5759, 0
      %v5829 = vsel %vm1284, %v5760, 0
      %v5832 = vsel %vm1284, %v5761, 0
      %v5835 = vsel %vm1284, %v5762, 0
      %v5838 = vsel %vm1284, %v5763, 0
      %v5841 = vsel %vm1284, %v5764, 0
      %v5844 = vsel %vm1284, %v5765, 0
      %v5847 = vsel %vm1284, %v5766, 0
      %v5850 = vsel %vm1284, %v5767, 0
      %v5853 = vsel %vm1284, %v5768, 0
      %v5856 = vsel %vm1284, %v5769, 0
      %5858 = vmatprep.subr.mxu0 0.0
      %5859 = vmatpush1.msra.mxu0 %v5770
      %5860 = vmatprep.subr.mxu0 0.0
      %5861 = vmatpush1.msra.mxu0 %v5771
      %5862 = vmatprep.subr.mxu0 0.0
      %5863 = vmatpush1.msra.mxu0 %v5772
      %5864 = vmatprep.subr.mxu0 0.0
      %5865 = vmatpush1.msra.mxu0 %v5773
      %5866 = vmatprep.subr.mxu0 0.0
      %5867 = vmatpush1.msra.mxu0 0.0
      %5868 = vmatprep.subr.mxu0 0.0
      %5869 = vmatpush1.msra.mxu0 0.0
      %5870 = vmatprep.subr.mxu0 0.0
      %5871 = vmatpush1.msra.mxu0 0.0
      %5872 = vmatprep.subr.mxu0 0.0
      %5873 = vmatpush1.msra.mxu0 0.0
      %5874 = vmatprep.subr.mxu0 0.0
      %5875 = vmatpush1.msra.mxu0 0.0
      %5876 = vmatprep.subr.mxu0 0.0
      %5877 = vmatpush1.msra.mxu0 0.0
      %5878 = vmatprep.subr.mxu0 0.0
      %5879 = vmatpush1.msra.mxu0 0.0
      %5880 = vmatprep.subr.mxu0 0.0
      %5881 = vmatpush1.msra.mxu0 0.0
      %5882 = vmatprep.subr.mxu0 0.0
      %5883 = vmatpush1.msra.mxu0 0.0
      %5884 = vmatprep.subr.mxu0 0.0
      %5885 = vmatpush1.msra.mxu0 0.0
      %5886 = vmatprep.subr.mxu0 0.0
      %5887 = vmatpush1.msra.mxu0 0.0
      %5888 = vmatprep.subr.mxu0 0.0
      %5889 = vmatpush1.msra.mxu0 0.0
      %5890 = vmatprep.subr.mxu0 0.0
      %5891 = vmatpush1.msra.mxu0 0.0
      %5892 = vmatprep.subr.mxu0 0.0
      %5893 = vmatpush1.msra.mxu0 0.0
      %5894 = vmatprep.subr.mxu0 0.0
      %5895 = vmatpush1.msra.mxu0 0.0
      %5896 = vmatprep.subr.mxu0 0.0
      %5897 = vmatpush1.msra.mxu0 0.0
      %5898 = vmatprep.subr.mxu0 0.0
      %5899 = vmatpush1.msra.mxu0 0.0
      %5900 = vmatprep.subr.mxu0 0.0
      %5901 = vmatpush1.msra.mxu0 0.0
      %5902 = vmatprep.subr.mxu0 0.0
      %5903 = vmatpush1.msra.mxu0 0.0
      %5904 = vmatprep.subr.mxu0 0.0
      %5905 = vmatpush1.msra.mxu0 0.0
      %5906 = vmatprep.subr.mxu0 0.0
      %5907 = vmatpush1.msra.mxu0 0.0
      %5908 = vmatprep.subr.mxu0 0.0
      %5909 = vmatpush1.msra.mxu0 0.0
      %5910 = vmatprep.subr.mxu0 0.0
      %5911 = vmatpush1.msra.mxu0 0.0
      %5912 = vmatprep.subr.mxu0 0.0
      %5913 = vmatpush1.msra.mxu0 0.0
      %5914 = vmatprep.subr.mxu0 0.0
      %5915 = vmatpush1.msra.mxu0 0.0
      %5916 = vmatprep.subr.mxu0 0.0
      %5917 = vmatpush1.msra.mxu0 0.0
      %5918 = vmatprep.subr.mxu0 0.0
      %5919 = vmatpush1.msra.mxu0 0.0
      %5920 = vmatprep.subr.mxu0 0.0
      %5921 = vmatpush1.msra.mxu0 0.0
      %5922 = vmatprep.mubr.f32.mxu0 0.0
      %5923 = vmatmul.mubr.f32.gmra.mrb[0].mxu0 %v5775
      %v5924 = vpop.f32.mrb[0].mxu0
      %v5925 = vadd.f32 0.0, %v5924
      %v5926 = vpop.f32.mrb[0].mxu0
      %5927 = vmatprep.mubr.f32.mxu0 0.0
      %5928 = vmatmul.mubr.f32.gmra.mrb[0].mxu0 %v5778
      %v5929 = vpop.f32.mrb[0].mxu0
      %v5930 = vadd.f32 0.0, %v5929
      %v5931 = vpop.f32.mrb[0].mxu0
      %5932 = vmatprep.mubr.f32.mxu0 0.0
      %5933 = vmatmul.mubr.f32.gmra.mrb[0].mxu0 %v5781
      %v5934 = vpop.f32.mrb[0].mxu0
      %v5935 = vadd.f32 0.0, %v5934
      %v5936 = vpop.f32.mrb[0].mxu0
      %5937 = vmatprep.mubr.f32.mxu0 0.0
      %5938 = vmatmul.mubr.f32.gmra.mrb[0].mxu0 %v5784
      %v5939 = vpop.f32.mrb[0].mxu0
      %v5940 = vadd.f32 0.0, %v5939
      %v5941 = vpop.f32.mrb[0].mxu0
      %5942 = vmatprep.mubr.f32.mxu0 0.0
      %5943 = vmatmul.mubr.f32.gmra.mrb[0].mxu0 %v5787
      %v5944 = vpop.f32.mrb[0].mxu0
      %v5945 = vadd.f32 0.0, %v5944
      %v5946 = vpop.f32.mrb[0].mxu0
      %5947 = vmatprep.mubr.f32.mxu0 0.0
      %5948 = vmatmul.mubr.f32.gmra.mrb[0].mxu0 %v5790
      %v5949 = vpop.f32.mrb[0].mxu0
      %v5950 = vadd.f32 0.0, %v5949
      %v5951 = vpop.f32.mrb[0].mxu0
      %5952 = vmatprep.mubr.f32.mxu0 0.0
      %5953 = vmatmul.mubr.f32.gmra.mrb[0].mxu0 %v5793
      %v5954 = vpop.f32.mrb[0].mxu0
      %v5955 = vadd.f32 0.0, %v5954
      %v5956 = vpop.f32.mrb[0].mxu0
      %5957 = vmatprep.mubr.f32.mxu0 0.0
      %5958 = vmatmul.mubr.f32.gmra.mrb[0].mxu0 %v5796
      %v5959 = vpop.f32.mrb[0].mxu0
      %v5960 = vadd.f32 0.0, %v5959
      %v5961 = vpop.f32.mrb[0].mxu0
      %5962 = vmatprep.mubr.f32.mxu0 0.0
      %5963 = vmatmul.mubr.f32.gmra.mrb[0].mxu0 %v5799
      %v5964 = vpop.f32.mrb[0].mxu0
      %v5965 = vadd.f32 0.0, %v5964
      %v5966 = vpop.f32.mrb[0].mxu0
      %5967 = vmatprep.mubr.f32.mxu0 0.0
      %5968 = vmatmul.mubr.f32.gmra.mrb[0].mxu0 %v5802
      %v5969 = vpop.f32.mrb[0].mxu0
      %v5970 = vadd.f32 0.0, %v5969
      %v5971 = vpop.f32.mrb[0].mxu0
      %5972 = vmatprep.mubr.f32.mxu0 0.0
      %5973 = vmatmul.mubr.f32.gmra.mrb[0].mxu0 %v5805
      %v5974 = vpop.f32.mrb[0].mxu0
      %v5975 = vadd.f32 0.0, %v5974
      %v5976 = vpop.f32.mrb[0].mxu0
      %5977 = vmatprep.mubr.f32.mxu0 0.0
      %5978 = vmatmul.mubr.f32.gmra.mrb[0].mxu0 %v5808
      %v5979 = vpop.f32.mrb[0].mxu0
      %v5980 = vadd.f32 0.0, %v5979
      %v5981 = vpop.f32.mrb[0].mxu0
      %5982 = vmatprep.mubr.f32.mxu0 0.0
      %5983 = vmatmul.mubr.f32.gmra.mrb[0].mxu0 %v5811
      %v5984 = vpop.f32.mrb[0].mxu0
      %v5985 = vadd.f32 0.0, %v5984
      %v5986 = vpop.f32.mrb[0].mxu0
      %5987 = vmatprep.mubr.f32.mxu0 0.0
      %5988 = vmatmul.mubr.f32.gmra.mrb[0].mxu0 %v5814
      %v5989 = vpop.f32.mrb[0].mxu0
      %v5990 = vadd.f32 0.0, %v5989
      %v5991 = vpop.f32.mrb[0].mxu0
      %5992 = vmatprep.mubr.f32.mxu0 0.0
      %5993 = vmatmul.mubr.f32.gmra.mrb[0].mxu0 %v5817
      %v5994 = vpop.f32.mrb[0].mxu0
      %v5995 = vadd.f32 0.0, %v5994
      %v5996 = vpop.f32.mrb[0].mxu0
      %5997 = vmatprep.mubr.f32.mxu0 0.0
      %5998 = vmatmul.mubr.f32.gmra.mrb[0].mxu0 %v5820
      %v5999 = vpop.f32.mrb[0].mxu0
      %v6000 = vadd.f32 0.0, %v5999
      %v6001 = vpop.f32.mrb[0].mxu0
      %6002 = vmatprep.mubr.f32.mxu0 0.0
      %6003 = vmatmul.mubr.f32.gmra.mrb[0].mxu0 %v5823
      %v6004 = vpop.f32.mrb[0].mxu0
      %v6005 = vadd.f32 0.0, %v6004
      %v6006 = vpop.f32.mrb[0].mxu0
      %6007 = vmatprep.mubr.f32.mxu0 0.0
      %6008 = vmatmul.mubr.f32.gmra.mrb[0].mxu0 %v5826
      %v6009 = vpop.f32.mrb[0].mxu0
      %v6010 = vadd.f32 0.0, %v6009
      %v6011 = vpop.f32.mrb[0].mxu0
      %6012 = vmatprep.mubr.f32.mxu0 0.0
      %6013 = vmatmul.mubr.f32.gmra.mrb[0].mxu0 %v5829
      %v6014 = vpop.f32.mrb[0].mxu0
      %v6015 = vadd.f32 0.0, %v6014
      %v6016 = vpop.f32.mrb[0].mxu0
      %6017 = vmatprep.mubr.f32.mxu0 0.0
      %6018 = vmatmul.mubr.f32.gmra.mrb[0].mxu0 %v5832
      %v6019 = vpop.f32.mrb[0].mxu0
      %v6020 = vadd.f32 0.0, %v6019
      %v6021 = vpop.f32.mrb[0].mxu0
      %6022 = vmatprep.mubr.f32.mxu0 0.0
      %6023 = vmatmul.mubr.f32.gmra.mrb[0].mxu0 %v5835
      %v6024 = vpop.f32.mrb[0].mxu0
      %v6025 = vadd.f32 0.0, %v6024
      %v6026 = vpop.f32.mrb[0].mxu0
      %6027 = vmatprep.mubr.f32.mxu0 0.0
      %6028 = vmatmul.mubr.f32.gmra.mrb[0].mxu0 %v5838
      %v6029 = vpop.f32.mrb[0].mxu0
      %v6030 = vadd.f32 0.0, %v6029
      %v6031 = vpop.f32.mrb[0].mxu0
      %6032 = vmatprep.mubr.f32.mxu0 0.0
      %6033 = vmatmul.mubr.f32.gmra.mrb[0].mxu0 %v5841
      %v6034 = vpop.f32.mrb[0].mxu0
      %v6035 = vadd.f32 0.0, %v6034
      %v6036 = vpop.f32.mrb[0].mxu0
      %6037 = vmatprep.mubr.f32.mxu0 0.0
      %6038 = vmatmul.mubr.f32.gmra.mrb[0].mxu0 %v5844
      %v6039 = vpop.f32.mrb[0].mxu0
      %v6040 = vadd.f32 0.0, %v6039
      %v6041 = vpop.f32.mrb[0].mxu0
      %6042 = vmatprep.mubr.f32.mxu0 0.0
      %6043 = vmatmul.mubr.f32.gmra.mrb[0].mxu0 %v5847
      %v6044 = vpop.f32.mrb[0].mxu0
      %v6045 = vadd.f32 0.0, %v6044
      %v6046 = vpop.f32.mrb[0].mxu0
      %6047 = vmatprep.mubr.f32.mxu0 0.0
      %6048 = vmatmul.mubr.f32.gmra.mrb[0].mxu0 %v5850
      %v6049 = vpop.f32.mrb[0].mxu0
      %v6050 = vadd.f32 0.0, %v6049
      %v6051 = vpop.f32.mrb[0].mxu0
      %6052 = vmatprep.mubr.f32.mxu0 0.0
      %6053 = vmatmul.mubr.f32.gmra.mrb[0].mxu0 %v5853
      %v6054 = vpop.f32.mrb[0].mxu0
      %v6055 = vadd.f32 0.0, %v6054
      %v6056 = vpop.f32.mrb[0].mxu0
      %6057 = vmatprep.mubr.f32.mxu0 0.0
      %6058 = vmatmul.mubr.f32.gmra.mrb[0].mxu0 %v5856
      %v6059 = vpop.f32.mrb[0].mxu0
      %v6060 = vadd.f32 0.0, %v6059
      %v6061 = vpop.f32.mrb[0].mxu0
      %6062 = vdwg.mxu0
      %v6063 = vadd.f32 %v5714, %v5925
      %v6064 = vadd.f32 %v5715, %v5930
      %v6065 = vadd.f32 %v5716, %v5935
      %v6066 = vadd.f32 %v5717, %v5940
      %v6067 = vadd.f32 %v5718, %v5945
      %v6068 = vadd.f32 %v5719, %v5950
      %v6069 = vadd.f32 %v5720, %v5955
      %v6070 = vadd.f32 %v5721, %v5960
      %v6071 = vadd.f32 %v5722, %v5965
      %v6072 = vadd.f32 %v5723, %v5970
      %v6073 = vadd.f32 %v5724, %v5975
      %v6074 = vadd.f32 %v5725, %v5980
      %v6075 = vadd.f32 %v5726, %v5985
      %v6076 = vadd.f32 %v5727, %v5990
      %v6077 = vadd.f32 %v5728, %v5995
      %v6078 = vadd.f32 %v5729, %v6000
      %v6079 = vadd.f32 %v5730, %v6005
      %v6080 = vadd.f32 %v5731, %v6010
      %v6081 = vadd.f32 %v5732, %v6015
      %v6082 = vadd.f32 %v5733, %v6020
      %v6083 = vadd.f32 %v5734, %v6025
      %v6084 = vadd.f32 %v5735, %v6030
      %v6085 = vadd.f32 %v5736, %v6035
      %v6086 = vadd.f32 %v5737, %v6040
      %v6087 = vadd.f32 %v5738, %v6045
      %v6088 = vadd.f32 %v5739, %v6050
      %v6089 = vadd.f32 %v5740, %v6055
      %v6090 = vadd.f32 %v5741, %v6060
      %v6091 = vld [vmem:[#allocation2 + $0x1e8] sm:$0xff]
      %v6092 = vld [vmem:[#allocation2 + $0x1f0] sm:$0xff]
      %v6093 = vld [vmem:[#allocation2 + $0x1f8] sm:$0xff]
      %v6094 = vld [vmem:[#allocation2 + $0x200] sm:$0xff]
      %v6095 = vld [vmem:[#allocation2 + $0x208] sm:$0xff]
      %v6096 = vld [vmem:[#allocation2 + $0x210] sm:$0xff]
      %v6097 = vld [vmem:[#allocation2 + $0x218] sm:$0xff]
      %v6098 = vld [vmem:[#allocation2 + $0x220] sm:$0xff]
      %v6099 = vld [vmem:[#allocation2 + $0x228] sm:$0xff]
      %v6100 = vld [vmem:[#allocation2 + $0x230] sm:$0xff]
      %v6101 = vld [vmem:[#allocation2 + $0x238] sm:$0xff]
      %v6102 = vld [vmem:[#allocation2 + $0x240] sm:$0xff]
      %v6103 = vld [vmem:[#allocation2 + $0x248] sm:$0xff]
      %v6104 = vld [vmem:[#allocation2 + $0x250] sm:$0xff]
      %v6105 = vld [vmem:[#allocation2 + $0x258] sm:$0xff]
      %v6106 = vld [vmem:[#allocation2 + $0x260] sm:$0xff]
      %v6107 = vld [vmem:[#allocation2 + $0x268] sm:$0xff]
      %v6108 = vld [vmem:[#allocation2 + $0x270] sm:$0xff]
      %v6109 = vld [vmem:[#allocation2 + $0x278] sm:$0xff]
      %v6110 = vld [vmem:[#allocation2 + $0x280] sm:$0xff]
      %v6111 = vld [vmem:[#allocation2 + $0x288] sm:$0xff]
      %v6112 = vld [vmem:[#allocation2 + $0x290] sm:$0xff]
      %v6113 = vld [vmem:[#allocation2 + $0x298] sm:$0xff]
      %v6114 = vld [vmem:[#allocation2 + $0x2a0] sm:$0xff]
      %v6115 = vld [vmem:[#allocation2 + $0x2a8] sm:$0xff]
      %v6116 = vld [vmem:[#allocation2 + $0x2b0] sm:$0xff]
      %v6117 = vld [vmem:[#allocation2 + $0x2b8] sm:$0xff]
      %v6118 = vld [vmem:[#allocation2 + $0x2c0] sm:$0xff]
      %v6119 = vld [vmem:[%s4 + $0xc0] sm:$0xff]
      %v6120 = vld [vmem:[%s4 + $0xc8] sm:$0xff]
      %v6121 = vld [vmem:[%s4 + $0xd0] sm:$0xff]
      %v6122 = vld [vmem:[%s4 + $0xd8] sm:$0xff]
      %v6124 = vsel %vm1284, %v6091, 0
      %v6127 = vsel %vm1284, %v6092, 0
      %v6130 = vsel %vm1284, %v6093, 0
      %v6133 = vsel %vm1284, %v6094, 0
      %v6136 = vsel %vm1284, %v6095, 0
      %v6139 = vsel %vm1284, %v6096, 0
      %v6142 = vsel %vm1284, %v6097, 0
      %v6145 = vsel %vm1284, %v6098, 0
      %v6148 = vsel %vm1284, %v6099, 0
      %v6151 = vsel %vm1284, %v6100, 0
      %v6154 = vsel %vm1284, %v6101, 0
      %v6157 = vsel %vm1284, %v6102, 0
      %v6160 = vsel %vm1284, %v6103, 0
      %v6163 = vsel %vm1284, %v6104, 0
      %v6166 = vsel %vm1284, %v6105, 0
      %v6169 = vsel %vm1284, %v6106, 0
      %v6172 = vsel %vm1284, %v6107, 0
      %v6175 = vsel %vm1284, %v6108, 0
      %v6178 = vsel %vm1284, %v6109, 0
      %v6181 = vsel %vm1284, %v6110, 0
      %v6184 = vsel %vm1284, %v6111, 0
      %v6187 = vsel %vm1284, %v6112, 0
      %v6190 = vsel %vm1284, %v6113, 0
      %v6193 = vsel %vm1284, %v6114, 0
      %v6196 = vsel %vm1284, %v6115, 0
      %v6199 = vsel %vm1284, %v6116, 0
      %v6202 = vsel %vm1284, %v6117, 0
      %v6205 = vsel %vm1284, %v6118, 0
      %6207 = vmatprep.subr.mxu0 0.0
      %6208 = vmatpush1.msra.mxu0 %v6119
      %6209 = vmatprep.subr.mxu0 0.0
      %6210 = vmatpush1.msra.mxu0 %v6120
      %6211 = vmatprep.subr.mxu0 0.0
      %6212 = vmatpush1.msra.mxu0 %v6121
      %6213 = vmatprep.subr.mxu0 0.0
      %6214 = vmatpush1.msra.mxu0 %v6122
      %6215 = vmatprep.subr.mxu0 0.0
      %6216 = vmatpush1.msra.mxu0 0.0
      %6217 = vmatprep.subr.mxu0 0.0
      %6218 = vmatpush1.msra.mxu0 0.0
      %6219 = vmatprep.subr.mxu0 0.0
      %6220 = vmatpush1.msra.mxu0 0.0
      %6221 = vmatprep.subr.mxu0 0.0
      %6222 = vmatpush1.msra.mxu0 0.0
      %6223 = vmatprep.subr.mxu0 0.0
      %6224 = vmatpush1.msra.mxu0 0.0
      %6225 = vmatprep.subr.mxu0 0.0
      %6226 = vmatpush1.msra.mxu0 0.0
      %6227 = vmatprep.subr.mxu0 0.0
      %6228 = vmatpush1.msra.mxu0 0.0
      %6229 = vmatprep.subr.mxu0 0.0
      %6230 = vmatpush1.msra.mxu0 0.0
      %6231 = vmatprep.subr.mxu0 0.0
      %6232 = vmatpush1.msra.mxu0 0.0
      %6233 = vmatprep.subr.mxu0 0.0
      %6234 = vmatpush1.msra.mxu0 0.0
      %6235 = vmatprep.subr.mxu0 0.0
      %6236 = vmatpush1.msra.mxu0 0.0
      %6237 = vmatprep.subr.mxu0 0.0
      %6238 = vmatpush1.msra.mxu0 0.0
      %6239 = vmatprep.subr.mxu0 0.0
      %6240 = vmatpush1.msra.mxu0 0.0
      %6241 = vmatprep.subr.mxu0 0.0
      %6242 = vmatpush1.msra.mxu0 0.0
      %6243 = vmatprep.subr.mxu0 0.0
      %6244 = vmatpush1.msra.mxu0 0.0
      %6245 = vmatprep.subr.mxu0 0.0
      %6246 = vmatpush1.msra.mxu0 0.0
      %6247 = vmatprep.subr.mxu0 0.0
      %6248 = vmatpush1.msra.mxu0 0.0
      %6249 = vmatprep.subr.mxu0 0.0
      %6250 = vmatpush1.msra.mxu0 0.0
      %6251 = vmatprep.subr.mxu0 0.0
      %6252 = vmatpush1.msra.mxu0 0.0
      %6253 = vmatprep.subr.mxu0 0.0
      %6254 = vmatpush1.msra.mxu0 0.0
      %6255 = vmatprep.subr.mxu0 0.0
      %6256 = vmatpush1.msra.mxu0 0.0
      %6257 = vmatprep.subr.mxu0 0.0
      %6258 = vmatpush1.msra.mxu0 0.0
      %6259 = vmatprep.subr.mxu0 0.0
      %6260 = vmatpush1.msra.mxu0 0.0
      %6261 = vmatprep.subr.mxu0 0.0
      %6262 = vmatpush1.msra.mxu0 0.0
      %6263 = vmatprep.subr.mxu0 0.0
      %6264 = vmatpush1.msra.mxu0 0.0
      %6265 = vmatprep.subr.mxu0 0.0
      %6266 = vmatpush1.msra.mxu0 0.0
      %6267 = vmatprep.subr.mxu0 0.0
      %6268 = vmatpush1.msra.mxu0 0.0
      %6269 = vmatprep.subr.mxu0 0.0
      %6270 = vmatpush1.msra.mxu0 0.0
      %6271 = vmatprep.mubr.f32.mxu0 0.0
      %6272 = vmatmul.mubr.f32.gmra.mrb[0].mxu0 %v6124
      %v6273 = vpop.f32.mrb[0].mxu0
      %v6274 = vadd.f32 0.0, %v6273
      %v6275 = vpop.f32.mrb[0].mxu0
      %6276 = vmatprep.mubr.f32.mxu0 0.0
      %6277 = vmatmul.mubr.f32.gmra.mrb[0].mxu0 %v6127
      %v6278 = vpop.f32.mrb[0].mxu0
      %v6279 = vadd.f32 0.0, %v6278
      %v6280 = vpop.f32.mrb[0].mxu0
      %6281 = vmatprep.mubr.f32.mxu0 0.0
      %6282 = vmatmul.mubr.f32.gmra.mrb[0].mxu0 %v6130
      %v6283 = vpop.f32.mrb[0].mxu0
      %v6284 = vadd.f32 0.0, %v6283
      %v6285 = vpop.f32.mrb[0].mxu0
      %6286 = vmatprep.mubr.f32.mxu0 0.0
      %6287 = vmatmul.mubr.f32.gmra.mrb[0].mxu0 %v6133
      %v6288 = vpop.f32.mrb[0].mxu0
      %v6289 = vadd.f32 0.0, %v6288
      %v6290 = vpop.f32.mrb[0].mxu0
      %6291 = vmatprep.mubr.f32.mxu0 0.0
      %6292 = vmatmul.mubr.f32.gmra.mrb[0].mxu0 %v6136
      %v6293 = vpop.f32.mrb[0].mxu0
      %v6294 = vadd.f32 0.0, %v6293
      %v6295 = vpop.f32.mrb[0].mxu0
      %6296 = vmatprep.mubr.f32.mxu0 0.0
      %6297 = vmatmul.mubr.f32.gmra.mrb[0].mxu0 %v6139
      %v6298 = vpop.f32.mrb[0].mxu0
      %v6299 = vadd.f32 0.0, %v6298
      %v6300 = vpop.f32.mrb[0].mxu0
      %6301 = vmatprep.mubr.f32.mxu0 0.0
      %6302 = vmatmul.mubr.f32.gmra.mrb[0].mxu0 %v6142
      %v6303 = vpop.f32.mrb[0].mxu0
      %v6304 = vadd.f32 0.0, %v6303
      %v6305 = vpop.f32.mrb[0].mxu0
      %6306 = vmatprep.mubr.f32.mxu0 0.0
      %6307 = vmatmul.mubr.f32.gmra.mrb[0].mxu0 %v6145
      %v6308 = vpop.f32.mrb[0].mxu0
      %v6309 = vadd.f32 0.0, %v6308
      %v6310 = vpop.f32.mrb[0].mxu0
      %6311 = vmatprep.mubr.f32.mxu0 0.0
      %6312 = vmatmul.mubr.f32.gmra.mrb[0].mxu0 %v6148
      %v6313 = vpop.f32.mrb[0].mxu0
      %v6314 = vadd.f32 0.0, %v6313
      %v6315 = vpop.f32.mrb[0].mxu0
      %6316 = vmatprep.mubr.f32.mxu0 0.0
      %6317 = vmatmul.mubr.f32.gmra.mrb[0].mxu0 %v6151
      %v6318 = vpop.f32.mrb[0].mxu0
      %v6319 = vadd.f32 0.0, %v6318
      %v6320 = vpop.f32.mrb[0].mxu0
      %6321 = vmatprep.mubr.f32.mxu0 0.0
      %6322 = vmatmul.mubr.f32.gmra.mrb[0].mxu0 %v6154
      %v6323 = vpop.f32.mrb[0].mxu0
      %v6324 = vadd.f32 0.0, %v6323
      %v6325 = vpop.f32.mrb[0].mxu0
      %6326 = vmatprep.mubr.f32.mxu0 0.0
      %6327 = vmatmul.mubr.f32.gmra.mrb[0].mxu0 %v6157
      %v6328 = vpop.f32.mrb[0].mxu0
      %v6329 = vadd.f32 0.0, %v6328
      %v6330 = vpop.f32.mrb[0].mxu0
      %6331 = vmatprep.mubr.f32.mxu0 0.0
      %6332 = vmatmul.mubr.f32.gmra.mrb[0].mxu0 %v6160
      %v6333 = vpop.f32.mrb[0].mxu0
      %v6334 = vadd.f32 0.0, %v6333
      %v6335 = vpop.f32.mrb[0].mxu0
      %6336 = vmatprep.mubr.f32.mxu0 0.0
      %6337 = vmatmul.mubr.f32.gmra.mrb[0].mxu0 %v6163
      %v6338 = vpop.f32.mrb[0].mxu0
      %v6339 = vadd.f32 0.0, %v6338
      %v6340 = vpop.f32.mrb[0].mxu0
      %6341 = vmatprep.mubr.f32.mxu0 0.0
      %6342 = vmatmul.mubr.f32.gmra.mrb[0].mxu0 %v6166
      %v6343 = vpop.f32.mrb[0].mxu0
      %v6344 = vadd.f32 0.0, %v6343
      %v6345 = vpop.f32.mrb[0].mxu0
      %6346 = vmatprep.mubr.f32.mxu0 0.0
      %6347 = vmatmul.mubr.f32.gmra.mrb[0].mxu0 %v6169
      %v6348 = vpop.f32.mrb[0].mxu0
      %v6349 = vadd.f32 0.0, %v6348
      %v6350 = vpop.f32.mrb[0].mxu0
      %6351 = vmatprep.mubr.f32.mxu0 0.0
      %6352 = vmatmul.mubr.f32.gmra.mrb[0].mxu0 %v6172
      %v6353 = vpop.f32.mrb[0].mxu0
      %v6354 = vadd.f32 0.0, %v6353
      %v6355 = vpop.f32.mrb[0].mxu0
      %6356 = vmatprep.mubr.f32.mxu0 0.0
      %6357 = vmatmul.mubr.f32.gmra.mrb[0].mxu0 %v6175
      %v6358 = vpop.f32.mrb[0].mxu0
      %v6359 = vadd.f32 0.0, %v6358
      %v6360 = vpop.f32.mrb[0].mxu0
      %6361 = vmatprep.mubr.f32.mxu0 0.0
      %6362 = vmatmul.mubr.f32.gmra.mrb[0].mxu0 %v6178
      %v6363 = vpop.f32.mrb[0].mxu0
      %v6364 = vadd.f32 0.0, %v6363
      %v6365 = vpop.f32.mrb[0].mxu0
      %6366 = vmatprep.mubr.f32.mxu0 0.0
      %6367 = vmatmul.mubr.f32.gmra.mrb[0].mxu0 %v6181
      %v6368 = vpop.f32.mrb[0].mxu0
      %v6369 = vadd.f32 0.0, %v6368
      %v6370 = vpop.f32.mrb[0].mxu0
      %6371 = vmatprep.mubr.f32.mxu0 0.0
      %6372 = vmatmul.mubr.f32.gmra.mrb[0].mxu0 %v6184
      %v6373 = vpop.f32.mrb[0].mxu0
      %v6374 = vadd.f32 0.0, %v6373
      %v6375 = vpop.f32.mrb[0].mxu0
      %6376 = vmatprep.mubr.f32.mxu0 0.0
      %6377 = vmatmul.mubr.f32.gmra.mrb[0].mxu0 %v6187
      %v6378 = vpop.f32.mrb[0].mxu0
      %v6379 = vadd.f32 0.0, %v6378
      %v6380 = vpop.f32.mrb[0].mxu0
      %6381 = vmatprep.mubr.f32.mxu0 0.0
      %6382 = vmatmul.mubr.f32.gmra.mrb[0].mxu0 %v6190
      %v6383 = vpop.f32.mrb[0].mxu0
      %v6384 = vadd.f32 0.0, %v6383
      %v6385 = vpop.f32.mrb[0].mxu0
      %6386 = vmatprep.mubr.f32.mxu0 0.0
      %6387 = vmatmul.mubr.f32.gmra.mrb[0].mxu0 %v6193
      %v6388 = vpop.f32.mrb[0].mxu0
      %v6389 = vadd.f32 0.0, %v6388
      %v6390 = vpop.f32.mrb[0].mxu0
      %6391 = vmatprep.mubr.f32.mxu0 0.0
      %6392 = vmatmul.mubr.f32.gmra.mrb[0].mxu0 %v6196
      %v6393 = vpop.f32.mrb[0].mxu0
      %v6394 = vadd.f32 0.0, %v6393
      %v6395 = vpop.f32.mrb[0].mxu0
      %6396 = vmatprep.mubr.f32.mxu0 0.0
      %6397 = vmatmul.mubr.f32.gmra.mrb[0].mxu0 %v6199
      %v6398 = vpop.f32.mrb[0].mxu0
      %v6399 = vadd.f32 0.0, %v6398
      %v6400 = vpop.f32.mrb[0].mxu0
      %6401 = vmatprep.mubr.f32.mxu0 0.0
      %6402 = vmatmul.mubr.f32.gmra.mrb[0].mxu0 %v6202
      %v6403 = vpop.f32.mrb[0].mxu0
      %v6404 = vadd.f32 0.0, %v6403
      %v6405 = vpop.f32.mrb[0].mxu0
      %6406 = vmatprep.mubr.f32.mxu0 0.0
      %6407 = vmatmul.mubr.f32.gmra.mrb[0].mxu0 %v6205
      %v6408 = vpop.f32.mrb[0].mxu0
      %v6409 = vadd.f32 0.0, %v6408
      %v6410 = vpop.f32.mrb[0].mxu0
      %6411 = vdwg.mxu0
      %v6412 = vadd.f32 %v6063, %v6274
      %v6413 = vadd.f32 %v6064, %v6279
      %v6414 = vadd.f32 %v6065, %v6284
      %v6415 = vadd.f32 %v6066, %v6289
      %v6416 = vadd.f32 %v6067, %v6294
      %v6417 = vadd.f32 %v6068, %v6299
      %v6418 = vadd.f32 %v6069, %v6304
      %v6419 = vadd.f32 %v6070, %v6309
      %v6420 = vadd.f32 %v6071, %v6314
      %v6421 = vadd.f32 %v6072, %v6319
      %v6422 = vadd.f32 %v6073, %v6324
      %v6423 = vadd.f32 %v6074, %v6329
      %v6424 = vadd.f32 %v6075, %v6334
      %v6425 = vadd.f32 %v6076, %v6339
      %v6426 = vadd.f32 %v6077, %v6344
      %v6427 = vadd.f32 %v6078, %v6349
      %v6428 = vadd.f32 %v6079, %v6354
      %v6429 = vadd.f32 %v6080, %v6359
      %v6430 = vadd.f32 %v6081, %v6364
      %v6431 = vadd.f32 %v6082, %v6369
      %v6432 = vadd.f32 %v6083, %v6374
      %v6433 = vadd.f32 %v6084, %v6379
      %v6434 = vadd.f32 %v6085, %v6384
      %v6435 = vadd.f32 %v6086, %v6389
      %v6436 = vadd.f32 %v6087, %v6394
      %v6437 = vadd.f32 %v6088, %v6399
      %v6438 = vadd.f32 %v6089, %v6404
      %v6439 = vadd.f32 %v6090, %v6409
      %v6440 = vld [vmem:[#allocation2 + $0x2d8] sm:$0xff]
      %v6441 = vld [vmem:[#allocation2 + $0x2e0] sm:$0xff]
      %v6442 = vld [vmem:[#allocation2 + $0x2e8] sm:$0xff]
      %v6443 = vld [vmem:[#allocation2 + $0x2f0] sm:$0xff]
      %v6444 = vld [vmem:[#allocation2 + $0x2f8] sm:$0xff]
      %v6445 = vld [vmem:[#allocation2 + $0x300] sm:$0xff]
      %v6446 = vld [vmem:[#allocation2 + $0x308] sm:$0xff]
      %v6447 = vld [vmem:[#allocation2 + $0x310] sm:$0xff]
      %v6448 = vld [vmem:[#allocation2 + $0x318] sm:$0xff]
      %v6449 = vld [vmem:[#allocation2 + $0x320] sm:$0xff]
      %v6450 = vld [vmem:[#allocation2 + $0x328] sm:$0xff]
      %v6451 = vld [vmem:[#allocation2 + $0x330] sm:$0xff]
      %v6452 = vld [vmem:[#allocation2 + $0x338] sm:$0xff]
      %v6453 = vld [vmem:[#allocation2 + $0x340] sm:$0xff]
      %v6454 = vld [vmem:[#allocation2 + $0x348] sm:$0xff]
      %v6455 = vld [vmem:[#allocation2 + $0x350] sm:$0xff]
      %v6456 = vld [vmem:[#allocation2 + $0x358] sm:$0xff]
      %v6457 = vld [vmem:[#allocation2 + $0x360] sm:$0xff]
      %v6458 = vld [vmem:[#allocation2 + $0x368] sm:$0xff]
      %v6459 = vld [vmem:[#allocation2 + $0x370] sm:$0xff]
      %v6460 = vld [vmem:[#allocation2 + $0x378] sm:$0xff]
      %v6461 = vld [vmem:[#allocation2 + $0x380] sm:$0xff]
      %v6462 = vld [vmem:[#allocation2 + $0x388] sm:$0xff]
      %v6463 = vld [vmem:[#allocation2 + $0x390] sm:$0xff]
      %v6464 = vld [vmem:[#allocation2 + $0x398] sm:$0xff]
      %v6465 = vld [vmem:[#allocation2 + $0x3a0] sm:$0xff]
      %v6466 = vld [vmem:[#allocation2 + $0x3a8] sm:$0xff]
      %v6467 = vld [vmem:[#allocation2 + $0x3b0] sm:$0xff]
      %v6468 = vld [vmem:[%s4 + $0xe0] sm:$0xff]
      %v6469 = vld [vmem:[%s4 + $0xe8] sm:$0xff]
      %v6470 = vld [vmem:[%s4 + $0xf0] sm:$0xff]
      %v6471 = vld [vmem:[%s4 + $0xf8] sm:$0xff]
      %v6473 = vsel %vm1284, %v6440, 0
      %v6476 = vsel %vm1284, %v6441, 0
      %v6479 = vsel %vm1284, %v6442, 0
      %v6482 = vsel %vm1284, %v6443, 0
      %v6485 = vsel %vm1284, %v6444, 0
      %v6488 = vsel %vm1284, %v6445, 0
      %v6491 = vsel %vm1284, %v6446, 0
      %v6494 = vsel %vm1284, %v6447, 0
      %v6497 = vsel %vm1284, %v6448, 0
      %v6500 = vsel %vm1284, %v6449, 0
      %v6503 = vsel %vm1284, %v6450, 0
      %v6506 = vsel %vm1284, %v6451, 0
      %v6509 = vsel %vm1284, %v6452, 0
      %v6512 = vsel %vm1284, %v6453, 0
      %v6515 = vsel %vm1284, %v6454, 0
      %v6518 = vsel %vm1284, %v6455, 0
      %v6521 = vsel %vm1284, %v6456, 0
      %v6524 = vsel %vm1284, %v6457, 0
      %v6527 = vsel %vm1284, %v6458, 0
      %v6530 = vsel %vm1284, %v6459, 0
      %v6533 = vsel %vm1284, %v6460, 0
      %v6536 = vsel %vm1284, %v6461, 0
      %v6539 = vsel %vm1284, %v6462, 0
      %v6542 = vsel %vm1284, %v6463, 0
      %v6545 = vsel %vm1284, %v6464, 0
      %v6548 = vsel %vm1284, %v6465, 0
      %v6551 = vsel %vm1284, %v6466, 0
      %v6554 = vsel %vm1284, %v6467, 0
      %6556 = vmatprep.subr.mxu0 0.0
      %6557 = vmatpush1.msra.mxu0 %v6468
      %6558 = vmatprep.subr.mxu0 0.0
      %6559 = vmatpush1.msra.mxu0 %v6469
      %6560 = vmatprep.subr.mxu0 0.0
      %6561 = vmatpush1.msra.mxu0 %v6470
      %6562 = vmatprep.subr.mxu0 0.0
      %6563 = vmatpush1.msra.mxu0 %v6471
      %6564 = vmatprep.subr.mxu0 0.0
      %6565 = vmatpush1.msra.mxu0 0.0
      %6566 = vmatprep.subr.mxu0 0.0
      %6567 = vmatpush1.msra.mxu0 0.0
      %6568 = vmatprep.subr.mxu0 0.0
      %6569 = vmatpush1.msra.mxu0 0.0
      %6570 = vmatprep.subr.mxu0 0.0
      %6571 = vmatpush1.msra.mxu0 0.0
      %6572 = vmatprep.subr.mxu0 0.0
      %6573 = vmatpush1.msra.mxu0 0.0
      %6574 = vmatprep.subr.mxu0 0.0
      %6575 = vmatpush1.msra.mxu0 0.0
      %6576 = vmatprep.subr.mxu0 0.0
      %6577 = vmatpush1.msra.mxu0 0.0
      %6578 = vmatprep.subr.mxu0 0.0
      %6579 = vmatpush1.msra.mxu0 0.0
      %6580 = vmatprep.subr.mxu0 0.0
      %6581 = vmatpush1.msra.mxu0 0.0
      %6582 = vmatprep.subr.mxu0 0.0
      %6583 = vmatpush1.msra.mxu0 0.0
      %6584 = vmatprep.subr.mxu0 0.0
      %6585 = vmatpush1.msra.mxu0 0.0
      %6586 = vmatprep.subr.mxu0 0.0
      %6587 = vmatpush1.msra.mxu0 0.0
      %6588 = vmatprep.subr.mxu0 0.0
      %6589 = vmatpush1.msra.mxu0 0.0
      %6590 = vmatprep.subr.mxu0 0.0
      %6591 = vmatpush1.msra.mxu0 0.0
      %6592 = vmatprep.subr.mxu0 0.0
      %6593 = vmatpush1.msra.mxu0 0.0
      %6594 = vmatprep.subr.mxu0 0.0
      %6595 = vmatpush1.msra.mxu0 0.0
      %6596 = vmatprep.subr.mxu0 0.0
      %6597 = vmatpush1.msra.mxu0 0.0
      %6598 = vmatprep.subr.mxu0 0.0
      %6599 = vmatpush1.msra.mxu0 0.0
      %6600 = vmatprep.subr.mxu0 0.0
      %6601 = vmatpush1.msra.mxu0 0.0
      %6602 = vmatprep.subr.mxu0 0.0
      %6603 = vmatpush1.msra.mxu0 0.0
      %6604 = vmatprep.subr.mxu0 0.0
      %6605 = vmatpush1.msra.mxu0 0.0
      %6606 = vmatprep.subr.mxu0 0.0
      %6607 = vmatpush1.msra.mxu0 0.0
      %6608 = vmatprep.subr.mxu0 0.0
      %6609 = vmatpush1.msra.mxu0 0.0
      %6610 = vmatprep.subr.mxu0 0.0
      %6611 = vmatpush1.msra.mxu0 0.0
      %6612 = vmatprep.subr.mxu0 0.0
      %6613 = vmatpush1.msra.mxu0 0.0
      %6614 = vmatprep.subr.mxu0 0.0
      %6615 = vmatpush1.msra.mxu0 0.0
      %6616 = vmatprep.subr.mxu0 0.0
      %6617 = vmatpush1.msra.mxu0 0.0
      %6618 = vmatprep.subr.mxu0 0.0
      %6619 = vmatpush1.msra.mxu0 0.0
      %6620 = vmatprep.mubr.f32.mxu0 0.0
      %6621 = vmatmul.mubr.f32.gmra.mrb[0].mxu0 %v6473
      %v6622 = vpop.f32.mrb[0].mxu0
      %v6623 = vadd.f32 0.0, %v6622
      %v6624 = vpop.f32.mrb[0].mxu0
      %6625 = vmatprep.mubr.f32.mxu0 0.0
      %6626 = vmatmul.mubr.f32.gmra.mrb[0].mxu0 %v6476
      %v6627 = vpop.f32.mrb[0].mxu0
      %v6628 = vadd.f32 0.0, %v6627
      %v6629 = vpop.f32.mrb[0].mxu0
      %6630 = vmatprep.mubr.f32.mxu0 0.0
      %6631 = vmatmul.mubr.f32.gmra.mrb[0].mxu0 %v6479
      %v6632 = vpop.f32.mrb[0].mxu0
      %v6633 = vadd.f32 0.0, %v6632
      %v6634 = vpop.f32.mrb[0].mxu0
      %6635 = vmatprep.mubr.f32.mxu0 0.0
      %6636 = vmatmul.mubr.f32.gmra.mrb[0].mxu0 %v6482
      %v6637 = vpop.f32.mrb[0].mxu0
      %v6638 = vadd.f32 0.0, %v6637
      %v6639 = vpop.f32.mrb[0].mxu0
      %6640 = vmatprep.mubr.f32.mxu0 0.0
      %6641 = vmatmul.mubr.f32.gmra.mrb[0].mxu0 %v6485
      %v6642 = vpop.f32.mrb[0].mxu0
      %v6643 = vadd.f32 0.0, %v6642
      %v6644 = vpop.f32.mrb[0].mxu0
      %6645 = vmatprep.mubr.f32.mxu0 0.0
      %6646 = vmatmul.mubr.f32.gmra.mrb[0].mxu0 %v6488
      %v6647 = vpop.f32.mrb[0].mxu0
      %v6648 = vadd.f32 0.0, %v6647
      %v6649 = vpop.f32.mrb[0].mxu0
      %6650 = vmatprep.mubr.f32.mxu0 0.0
      %6651 = vmatmul.mubr.f32.gmra.mrb[0].mxu0 %v6491
      %v6652 = vpop.f32.mrb[0].mxu0
      %v6653 = vadd.f32 0.0, %v6652
      %v6654 = vpop.f32.mrb[0].mxu0
      %6655 = vmatprep.mubr.f32.mxu0 0.0
      %6656 = vmatmul.mubr.f32.gmra.mrb[0].mxu0 %v6494
      %v6657 = vpop.f32.mrb[0].mxu0
      %v6658 = vadd.f32 0.0, %v6657
      %v6659 = vpop.f32.mrb[0].mxu0
      %6660 = vmatprep.mubr.f32.mxu0 0.0
      %6661 = vmatmul.mubr.f32.gmra.mrb[0].mxu0 %v6497
      %v6662 = vpop.f32.mrb[0].mxu0
      %v6663 = vadd.f32 0.0, %v6662
      %v6664 = vpop.f32.mrb[0].mxu0
      %6665 = vmatprep.mubr.f32.mxu0 0.0
      %6666 = vmatmul.mubr.f32.gmra.mrb[0].mxu0 %v6500
      %v6667 = vpop.f32.mrb[0].mxu0
      %v6668 = vadd.f32 0.0, %v6667
      %v6669 = vpop.f32.mrb[0].mxu0
      %6670 = vmatprep.mubr.f32.mxu0 0.0
      %6671 = vmatmul.mubr.f32.gmra.mrb[0].mxu0 %v6503
      %v6672 = vpop.f32.mrb[0].mxu0
      %v6673 = vadd.f32 0.0, %v6672
      %v6674 = vpop.f32.mrb[0].mxu0
      %6675 = vmatprep.mubr.f32.mxu0 0.0
      %6676 = vmatmul.mubr.f32.gmra.mrb[0].mxu0 %v6506
      %v6677 = vpop.f32.mrb[0].mxu0
      %v6678 = vadd.f32 0.0, %v6677
      %v6679 = vpop.f32.mrb[0].mxu0
      %6680 = vmatprep.mubr.f32.mxu0 0.0
      %6681 = vmatmul.mubr.f32.gmra.mrb[0].mxu0 %v6509
      %v6682 = vpop.f32.mrb[0].mxu0
      %v6683 = vadd.f32 0.0, %v6682
      %v6684 = vpop.f32.mrb[0].mxu0
      %6685 = vmatprep.mubr.f32.mxu0 0.0
      %6686 = vmatmul.mubr.f32.gmra.mrb[0].mxu0 %v6512
      %v6687 = vpop.f32.mrb[0].mxu0
      %v6688 = vadd.f32 0.0, %v6687
      %v6689 = vpop.f32.mrb[0].mxu0
      %6690 = vmatprep.mubr.f32.mxu0 0.0
      %6691 = vmatmul.mubr.f32.gmra.mrb[0].mxu0 %v6515
      %v6692 = vpop.f32.mrb[0].mxu0
      %v6693 = vadd.f32 0.0, %v6692
      %v6694 = vpop.f32.mrb[0].mxu0
      %6695 = vmatprep.mubr.f32.mxu0 0.0
      %6696 = vmatmul.mubr.f32.gmra.mrb[0].mxu0 %v6518
      %v6697 = vpop.f32.mrb[0].mxu0
      %v6698 = vadd.f32 0.0, %v6697
      %v6699 = vpop.f32.mrb[0].mxu0
      %6700 = vmatprep.mubr.f32.mxu0 0.0
      %6701 = vmatmul.mubr.f32.gmra.mrb[0].mxu0 %v6521
      %v6702 = vpop.f32.mrb[0].mxu0
      %v6703 = vadd.f32 0.0, %v6702
      %v6704 = vpop.f32.mrb[0].mxu0
      %6705 = vmatprep.mubr.f32.mxu0 0.0
      %6706 = vmatmul.mubr.f32.gmra.mrb[0].mxu0 %v6524
      %v6707 = vpop.f32.mrb[0].mxu0
      %v6708 = vadd.f32 0.0, %v6707
      %v6709 = vpop.f32.mrb[0].mxu0
      %6710 = vmatprep.mubr.f32.mxu0 0.0
      %6711 = vmatmul.mubr.f32.gmra.mrb[0].mxu0 %v6527
      %v6712 = vpop.f32.mrb[0].mxu0
      %v6713 = vadd.f32 0.0, %v6712
      %v6714 = vpop.f32.mrb[0].mxu0
      %6715 = vmatprep.mubr.f32.mxu0 0.0
      %6716 = vmatmul.mubr.f32.gmra.mrb[0].mxu0 %v6530
      %v6717 = vpop.f32.mrb[0].mxu0
      %v6718 = vadd.f32 0.0, %v6717
      %v6719 = vpop.f32.mrb[0].mxu0
      %6720 = vmatprep.mubr.f32.mxu0 0.0
      %6721 = vmatmul.mubr.f32.gmra.mrb[0].mxu0 %v6533
      %v6722 = vpop.f32.mrb[0].mxu0
      %v6723 = vadd.f32 0.0, %v6722
      %v6724 = vpop.f32.mrb[0].mxu0
      %6725 = vmatprep.mubr.f32.mxu0 0.0
      %6726 = vmatmul.mubr.f32.gmra.mrb[0].mxu0 %v6536
      %v6727 = vpop.f32.mrb[0].mxu0
      %v6728 = vadd.f32 0.0, %v6727
      %v6729 = vpop.f32.mrb[0].mxu0
      %6730 = vmatprep.mubr.f32.mxu0 0.0
      %6731 = vmatmul.mubr.f32.gmra.mrb[0].mxu0 %v6539
      %v6732 = vpop.f32.mrb[0].mxu0
      %v6733 = vadd.f32 0.0, %v6732
      %v6734 = vpop.f32.mrb[0].mxu0
      %6735 = vmatprep.mubr.f32.mxu0 0.0
      %6736 = vmatmul.mubr.f32.gmra.mrb[0].mxu0 %v6542
      %v6737 = vpop.f32.mrb[0].mxu0
      %v6738 = vadd.f32 0.0, %v6737
      %v6739 = vpop.f32.mrb[0].mxu0
      %6740 = vmatprep.mubr.f32.mxu0 0.0
      %6741 = vmatmul.mubr.f32.gmra.mrb[0].mxu0 %v6545
      %v6742 = vpop.f32.mrb[0].mxu0
      %v6743 = vadd.f32 0.0, %v6742
      %v6744 = vpop.f32.mrb[0].mxu0
      %6745 = vmatprep.mubr.f32.mxu0 0.0
      %6746 = vmatmul.mubr.f32.gmra.mrb[0].mxu0 %v6548
      %v6747 = vpop.f32.mrb[0].mxu0
      %v6748 = vadd.f32 0.0, %v6747
      %v6749 = vpop.f32.mrb[0].mxu0
      %6750 = vmatprep.mubr.f32.mxu0 0.0
      %6751 = vmatmul.mubr.f32.gmra.mrb[0].mxu0 %v6551
      %v6752 = vpop.f32.mrb[0].mxu0
      %v6753 = vadd.f32 0.0, %v6752
      %v6754 = vpop.f32.mrb[0].mxu0
      %6755 = vmatprep.mubr.f32.mxu0 0.0
      %6756 = vmatmul.mubr.f32.gmra.mrb[0].mxu0 %v6554
      %v6757 = vpop.f32.mrb[0].mxu0
      %v6758 = vadd.f32 0.0, %v6757
      %v6759 = vpop.f32.mrb[0].mxu0
      %6760 = vdwg.mxu0
      %v6761 = vadd.f32 %v6412, %v6623
      %v6762 = vadd.f32 %v6413, %v6628
      %v6763 = vadd.f32 %v6414, %v6633
      %v6764 = vadd.f32 %v6415, %v6638
      %v6765 = vadd.f32 %v6416, %v6643
      %v6766 = vadd.f32 %v6417, %v6648
      %v6767 = vadd.f32 %v6418, %v6653
      %v6768 = vadd.f32 %v6419, %v6658
      %v6769 = vadd.f32 %v6420, %v6663
      %v6770 = vadd.f32 %v6421, %v6668
      %v6771 = vadd.f32 %v6422, %v6673
      %v6772 = vadd.f32 %v6423, %v6678
      %v6773 = vadd.f32 %v6424, %v6683
      %v6774 = vadd.f32 %v6425, %v6688
      %v6775 = vadd.f32 %v6426, %v6693
      %v6776 = vadd.f32 %v6427, %v6698
      %v6777 = vadd.f32 %v6428, %v6703
      %v6778 = vadd.f32 %v6429, %v6708
      %v6779 = vadd.f32 %v6430, %v6713
      %v6780 = vadd.f32 %v6431, %v6718
      %v6781 = vadd.f32 %v6432, %v6723
      %v6782 = vadd.f32 %v6433, %v6728
      %v6783 = vadd.f32 %v6434, %v6733
      %v6784 = vadd.f32 %v6435, %v6738
      %v6785 = vadd.f32 %v6436, %v6743
      %v6786 = vadd.f32 %v6437, %v6748
      %v6787 = vadd.f32 %v6438, %v6753
      %v6788 = vadd.f32 %v6439, %v6758
      %v6790 = vlaneseq
      %v6791 = vshrl.u32 %v6790, 7
      %v6792 = vsub.s32 0, %v6791
      %v6793 = vrot.slane %v4051, %v6792
      %v6795 = vmul.f32 %v6761, %v6793
      %v6796 = vmul.f32 %v6762, %v6793
      %v6797 = vmul.f32 %v6763, %v6793
      %v6798 = vmul.f32 %v6764, %v6793
      %v6799 = vmul.f32 %v6765, %v6793
      %v6800 = vmul.f32 %v6766, %v6793
      %v6801 = vmul.f32 %v6767, %v6793
      %v6802 = vmul.f32 %v6768, %v6793
      %v6803 = vmul.f32 %v6769, %v6793
      %v6804 = vmul.f32 %v6770, %v6793
      %v6805 = vmul.f32 %v6771, %v6793
      %v6806 = vmul.f32 %v6772, %v6793
      %v6807 = vmul.f32 %v6773, %v6793
      %v6808 = vmul.f32 %v6774, %v6793
      %v6809 = vmul.f32 %v6775, %v6793
      %v6810 = vmul.f32 %v6776, %v6793
      %v6811 = vmul.f32 %v6777, %v6793
      %v6812 = vmul.f32 %v6778, %v6793
      %v6813 = vmul.f32 %v6779, %v6793
      %v6814 = vmul.f32 %v6780, %v6793
      %v6815 = vmul.f32 %v6781, %v6793
      %v6816 = vmul.f32 %v6782, %v6793
      %v6817 = vmul.f32 %v6783, %v6793
      %v6818 = vmul.f32 %v6784, %v6793
      %v6819 = vmul.f32 %v6785, %v6793
      %v6820 = vmul.f32 %v6786, %v6793
      %v6821 = vmul.f32 %v6787, %v6793
      %v6822 = vmul.f32 %v6788, %v6793
      %v6824 = vlaneseq
      %v6825 = vshrl.u32 %v6824, 7
      %v6826 = vsub.s32 0, %v6825
      %v6827 = vrot.slane %v4052, %v6826
      %v6829 = vadd.f32 %v6795, %v6827
      %v6830 = vadd.f32 %v6796, %v6827
      %v6831 = vadd.f32 %v6797, %v6827
      %v6832 = vadd.f32 %v6798, %v6827
      %v6833 = vadd.f32 %v6799, %v6827
      %v6834 = vadd.f32 %v6800, %v6827
      %v6835 = vadd.f32 %v6801, %v6827
      %v6836 = vadd.f32 %v6802, %v6827
      %v6837 = vadd.f32 %v6803, %v6827
      %v6838 = vadd.f32 %v6804, %v6827
      %v6839 = vadd.f32 %v6805, %v6827
      %v6840 = vadd.f32 %v6806, %v6827
      %v6841 = vadd.f32 %v6807, %v6827
      %v6842 = vadd.f32 %v6808, %v6827
      %v6843 = vadd.f32 %v6809, %v6827
      %v6844 = vadd.f32 %v6810, %v6827
      %v6845 = vadd.f32 %v6811, %v6827
      %v6846 = vadd.f32 %v6812, %v6827
      %v6847 = vadd.f32 %v6813, %v6827
      %v6848 = vadd.f32 %v6814, %v6827
      %v6849 = vadd.f32 %v6815, %v6827
      %v6850 = vadd.f32 %v6816, %v6827
      %v6851 = vadd.f32 %v6817, %v6827
      %v6852 = vadd.f32 %v6818, %v6827
      %v6853 = vadd.f32 %v6819, %v6827
      %v6854 = vadd.f32 %v6820, %v6827
      %v6855 = vadd.f32 %v6821, %v6827
      %v6856 = vadd.f32 %v6822, %v6827
      %v6857 = vmax.f32 %v6829, 0.0
      %v6858 = vmax.f32 %v6830, 0.0
      %v6859 = vmax.f32 %v6831, 0.0
      %v6860 = vmax.f32 %v6832, 0.0
      %v6861 = vmax.f32 %v6833, 0.0
      %v6862 = vmax.f32 %v6834, 0.0
      %v6863 = vmax.f32 %v6835, 0.0
      %v6864 = vmax.f32 %v6836, 0.0
      %v6865 = vmax.f32 %v6837, 0.0
      %v6866 = vmax.f32 %v6838, 0.0
      %v6867 = vmax.f32 %v6839, 0.0
      %v6868 = vmax.f32 %v6840, 0.0
      %v6869 = vmax.f32 %v6841, 0.0
      %v6870 = vmax.f32 %v6842, 0.0
      %v6871 = vmax.f32 %v6843, 0.0
      %v6872 = vmax.f32 %v6844, 0.0
      %v6873 = vmax.f32 %v6845, 0.0
      %v6874 = vmax.f32 %v6846, 0.0
      %v6875 = vmax.f32 %v6847, 0.0
      %v6876 = vmax.f32 %v6848, 0.0
      %v6877 = vmax.f32 %v6849, 0.0
      %v6878 = vmax.f32 %v6850, 0.0
      %v6879 = vmax.f32 %v6851, 0.0
      %v6880 = vmax.f32 %v6852, 0.0
      %v6881 = vmax.f32 %v6853, 0.0
      %v6882 = vmax.f32 %v6854, 0.0
      %v6883 = vmax.f32 %v6855, 0.0
      %v6884 = vmax.f32 %v6856, 0.0
      %6885 = vmatprep.subr.mxu0 0.0
      %6886 = vmatpush1.msra.mxu0 %v4113
      %6887 = vmatprep.subr.mxu0 0.0
      %6888 = vmatpush1.msra.mxu0 %v4114
      %6889 = vmatprep.subr.mxu0 0.0
      %6890 = vmatpush1.msra.mxu0 %v4115
      %6891 = vmatprep.subr.mxu0 0.0
      %6892 = vmatpush1.msra.mxu0 %v4116
      %6893 = vmatprep.subr.mxu0 0.0
      %6894 = vmatpush1.msra.mxu0 0.0
      %6895 = vmatprep.subr.mxu0 0.0
      %6896 = vmatpush1.msra.mxu0 0.0
      %6897 = vmatprep.subr.mxu0 0.0
      %6898 = vmatpush1.msra.mxu0 0.0
      %6899 = vmatprep.subr.mxu0 0.0
      %6900 = vmatpush1.msra.mxu0 0.0
      %6901 = vmatprep.subr.mxu0 0.0
      %6902 = vmatpush1.msra.mxu0 0.0
      %6903 = vmatprep.subr.mxu0 0.0
      %6904 = vmatpush1.msra.mxu0 0.0
      %6905 = vmatprep.subr.mxu0 0.0
      %6906 = vmatpush1.msra.mxu0 0.0
      %6907 = vmatprep.subr.mxu0 0.0
      %6908 = vmatpush1.msra.mxu0 0.0
      %6909 = vmatprep.subr.mxu0 0.0
      %6910 = vmatpush1.msra.mxu0 0.0
      %6911 = vmatprep.subr.mxu0 0.0
      %6912 = vmatpush1.msra.mxu0 0.0
      %6913 = vmatprep.subr.mxu0 0.0
      %6914 = vmatpush1.msra.mxu0 0.0
      %6915 = vmatprep.subr.mxu0 0.0
      %6916 = vmatpush1.msra.mxu0 0.0
      %6917 = vmatprep.subr.mxu0 0.0
      %6918 = vmatpush1.msra.mxu0 0.0
      %6919 = vmatprep.subr.mxu0 0.0
      %6920 = vmatpush1.msra.mxu0 0.0
      %6921 = vmatprep.subr.mxu0 0.0
      %6922 = vmatpush1.msra.mxu0 0.0
      %6923 = vmatprep.subr.mxu0 0.0
      %6924 = vmatpush1.msra.mxu0 0.0
      %6925 = vmatprep.subr.mxu0 0.0
      %6926 = vmatpush1.msra.mxu0 0.0
      %6927 = vmatprep.subr.mxu0 0.0
      %6928 = vmatpush1.msra.mxu0 0.0
      %6929 = vmatprep.subr.mxu0 0.0
      %6930 = vmatpush1.msra.mxu0 0.0
      %6931 = vmatprep.subr.mxu0 0.0
      %6932 = vmatpush1.msra.mxu0 0.0
      %6933 = vmatprep.subr.mxu0 0.0
      %6934 = vmatpush1.msra.mxu0 0.0
      %6935 = vmatprep.subr.mxu0 0.0
      %6936 = vmatpush1.msra.mxu0 0.0
      %6937 = vmatprep.subr.mxu0 0.0
      %6938 = vmatpush1.msra.mxu0 0.0
      %6939 = vmatprep.subr.mxu0 0.0
      %6940 = vmatpush1.msra.mxu0 0.0
      %6941 = vmatprep.subr.mxu0 0.0
      %6942 = vmatpush1.msra.mxu0 0.0
      %6943 = vmatprep.subr.mxu0 0.0
      %6944 = vmatpush1.msra.mxu0 0.0
      %6945 = vmatprep.subr.mxu0 0.0
      %6946 = vmatpush1.msra.mxu0 0.0
      %6947 = vmatprep.subr.mxu0 0.0
      %6948 = vmatpush1.msra.mxu0 0.0
      %6949 = vmatprep.mubr.f32.mxu0 0.0
      %6950 = vmatmul.mubr.f32.gmra.mrb[0].mxu0 %v5077
      %v6951 = vpop.f32.mrb[0].mxu0
      %v6952 = vadd.f32 0.0, %v6951
      %v6953 = vpop.f32.mrb[0].mxu0
      %6954 = vmatprep.mubr.f32.mxu0 0.0
      %6955 = vmatmul.mubr.f32.gmra.mrb[0].mxu0 %v5080
      %v6956 = vpop.f32.mrb[0].mxu0
      %v6957 = vadd.f32 0.0, %v6956
      %v6958 = vpop.f32.mrb[0].mxu0
      %6959 = vmatprep.mubr.f32.mxu0 0.0
      %6960 = vmatmul.mubr.f32.gmra.mrb[0].mxu0 %v5083
      %v6961 = vpop.f32.mrb[0].mxu0
      %v6962 = vadd.f32 0.0, %v6961
      %v6963 = vpop.f32.mrb[0].mxu0
      %6964 = vmatprep.mubr.f32.mxu0 0.0
      %6965 = vmatmul.mubr.f32.gmra.mrb[0].mxu0 %v5086
      %v6966 = vpop.f32.mrb[0].mxu0
      %v6967 = vadd.f32 0.0, %v6966
      %v6968 = vpop.f32.mrb[0].mxu0
      %6969 = vmatprep.mubr.f32.mxu0 0.0
      %6970 = vmatmul.mubr.f32.gmra.mrb[0].mxu0 %v5089
      %v6971 = vpop.f32.mrb[0].mxu0
      %v6972 = vadd.f32 0.0, %v6971
      %v6973 = vpop.f32.mrb[0].mxu0
      %6974 = vmatprep.mubr.f32.mxu0 0.0
      %6975 = vmatmul.mubr.f32.gmra.mrb[0].mxu0 %v5092
      %v6976 = vpop.f32.mrb[0].mxu0
      %v6977 = vadd.f32 0.0, %v6976
      %v6978 = vpop.f32.mrb[0].mxu0
      %6979 = vmatprep.mubr.f32.mxu0 0.0
      %6980 = vmatmul.mubr.f32.gmra.mrb[0].mxu0 %v5095
      %v6981 = vpop.f32.mrb[0].mxu0
      %v6982 = vadd.f32 0.0, %v6981
      %v6983 = vpop.f32.mrb[0].mxu0
      %6984 = vmatprep.mubr.f32.mxu0 0.0
      %6985 = vmatmul.mubr.f32.gmra.mrb[0].mxu0 %v5098
      %v6986 = vpop.f32.mrb[0].mxu0
      %v6987 = vadd.f32 0.0, %v6986
      %v6988 = vpop.f32.mrb[0].mxu0
      %6989 = vmatprep.mubr.f32.mxu0 0.0
      %6990 = vmatmul.mubr.f32.gmra.mrb[0].mxu0 %v5101
      %v6991 = vpop.f32.mrb[0].mxu0
      %v6992 = vadd.f32 0.0, %v6991
      %v6993 = vpop.f32.mrb[0].mxu0
      %6994 = vmatprep.mubr.f32.mxu0 0.0
      %6995 = vmatmul.mubr.f32.gmra.mrb[0].mxu0 %v5104
      %v6996 = vpop.f32.mrb[0].mxu0
      %v6997 = vadd.f32 0.0, %v6996
      %v6998 = vpop.f32.mrb[0].mxu0
      %6999 = vmatprep.mubr.f32.mxu0 0.0
      %7000 = vmatmul.mubr.f32.gmra.mrb[0].mxu0 %v5107
      %v7001 = vpop.f32.mrb[0].mxu0
      %v7002 = vadd.f32 0.0, %v7001
      %v7003 = vpop.f32.mrb[0].mxu0
      %7004 = vmatprep.mubr.f32.mxu0 0.0
      %7005 = vmatmul.mubr.f32.gmra.mrb[0].mxu0 %v5110
      %v7006 = vpop.f32.mrb[0].mxu0
      %v7007 = vadd.f32 0.0, %v7006
      %v7008 = vpop.f32.mrb[0].mxu0
      %7009 = vmatprep.mubr.f32.mxu0 0.0
      %7010 = vmatmul.mubr.f32.gmra.mrb[0].mxu0 %v5113
      %v7011 = vpop.f32.mrb[0].mxu0
      %v7012 = vadd.f32 0.0, %v7011
      %v7013 = vpop.f32.mrb[0].mxu0
      %7014 = vmatprep.mubr.f32.mxu0 0.0
      %7015 = vmatmul.mubr.f32.gmra.mrb[0].mxu0 %v5116
      %v7016 = vpop.f32.mrb[0].mxu0
      %v7017 = vadd.f32 0.0, %v7016
      %v7018 = vpop.f32.mrb[0].mxu0
      %7019 = vmatprep.mubr.f32.mxu0 0.0
      %7020 = vmatmul.mubr.f32.gmra.mrb[0].mxu0 %v5119
      %v7021 = vpop.f32.mrb[0].mxu0
      %v7022 = vadd.f32 0.0, %v7021
      %v7023 = vpop.f32.mrb[0].mxu0
      %7024 = vmatprep.mubr.f32.mxu0 0.0
      %7025 = vmatmul.mubr.f32.gmra.mrb[0].mxu0 %v5122
      %v7026 = vpop.f32.mrb[0].mxu0
      %v7027 = vadd.f32 0.0, %v7026
      %v7028 = vpop.f32.mrb[0].mxu0
      %7029 = vmatprep.mubr.f32.mxu0 0.0
      %7030 = vmatmul.mubr.f32.gmra.mrb[0].mxu0 %v5125
      %v7031 = vpop.f32.mrb[0].mxu0
      %v7032 = vadd.f32 0.0, %v7031
      %v7033 = vpop.f32.mrb[0].mxu0
      %7034 = vmatprep.mubr.f32.mxu0 0.0
      %7035 = vmatmul.mubr.f32.gmra.mrb[0].mxu0 %v5128
      %v7036 = vpop.f32.mrb[0].mxu0
      %v7037 = vadd.f32 0.0, %v7036
      %v7038 = vpop.f32.mrb[0].mxu0
      %7039 = vmatprep.mubr.f32.mxu0 0.0
      %7040 = vmatmul.mubr.f32.gmra.mrb[0].mxu0 %v5131
      %v7041 = vpop.f32.mrb[0].mxu0
      %v7042 = vadd.f32 0.0, %v7041
      %v7043 = vpop.f32.mrb[0].mxu0
      %7044 = vmatprep.mubr.f32.mxu0 0.0
      %7045 = vmatmul.mubr.f32.gmra.mrb[0].mxu0 %v5134
      %v7046 = vpop.f32.mrb[0].mxu0
      %v7047 = vadd.f32 0.0, %v7046
      %v7048 = vpop.f32.mrb[0].mxu0
      %7049 = vmatprep.mubr.f32.mxu0 0.0
      %7050 = vmatmul.mubr.f32.gmra.mrb[0].mxu0 %v5137
      %v7051 = vpop.f32.mrb[0].mxu0
      %v7052 = vadd.f32 0.0, %v7051
      %v7053 = vpop.f32.mrb[0].mxu0
      %7054 = vmatprep.mubr.f32.mxu0 0.0
      %7055 = vmatmul.mubr.f32.gmra.mrb[0].mxu0 %v5140
      %v7056 = vpop.f32.mrb[0].mxu0
      %v7057 = vadd.f32 0.0, %v7056
      %v7058 = vpop.f32.mrb[0].mxu0
      %7059 = vmatprep.mubr.f32.mxu0 0.0
      %7060 = vmatmul.mubr.f32.gmra.mrb[0].mxu0 %v5143
      %v7061 = vpop.f32.mrb[0].mxu0
      %v7062 = vadd.f32 0.0, %v7061
      %v7063 = vpop.f32.mrb[0].mxu0
      %7064 = vmatprep.mubr.f32.mxu0 0.0
      %7065 = vmatmul.mubr.f32.gmra.mrb[0].mxu0 %v5146
      %v7066 = vpop.f32.mrb[0].mxu0
      %v7067 = vadd.f32 0.0, %v7066
      %v7068 = vpop.f32.mrb[0].mxu0
      %7069 = vmatprep.mubr.f32.mxu0 0.0
      %7070 = vmatmul.mubr.f32.gmra.mrb[0].mxu0 %v5149
      %v7071 = vpop.f32.mrb[0].mxu0
      %v7072 = vadd.f32 0.0, %v7071
      %v7073 = vpop.f32.mrb[0].mxu0
      %7074 = vmatprep.mubr.f32.mxu0 0.0
      %7075 = vmatmul.mubr.f32.gmra.mrb[0].mxu0 %v5152
      %v7076 = vpop.f32.mrb[0].mxu0
      %v7077 = vadd.f32 0.0, %v7076
      %v7078 = vpop.f32.mrb[0].mxu0
      %7079 = vmatprep.mubr.f32.mxu0 0.0
      %7080 = vmatmul.mubr.f32.gmra.mrb[0].mxu0 %v5155
      %v7081 = vpop.f32.mrb[0].mxu0
      %v7082 = vadd.f32 0.0, %v7081
      %v7083 = vpop.f32.mrb[0].mxu0
      %7084 = vmatprep.mubr.f32.mxu0 0.0
      %7085 = vmatmul.mubr.f32.gmra.mrb[0].mxu0 %v5158
      %v7086 = vpop.f32.mrb[0].mxu0
      %v7087 = vadd.f32 0.0, %v7086
      %v7088 = vpop.f32.mrb[0].mxu0
      %7089 = vdwg.mxu0
      %7090 = vmatprep.subr.mxu0 0.0
      %7091 = vmatpush1.msra.mxu0 %v4081
      %7092 = vmatprep.subr.mxu0 0.0
      %7093 = vmatpush1.msra.mxu0 %v4082
      %7094 = vmatprep.subr.mxu0 0.0
      %7095 = vmatpush1.msra.mxu0 %v4083
      %7096 = vmatprep.subr.mxu0 0.0
      %7097 = vmatpush1.msra.mxu0 %v4084
      %7098 = vmatprep.subr.mxu0 0.0
      %7099 = vmatpush1.msra.mxu0 0.0
      %7100 = vmatprep.subr.mxu0 0.0
      %7101 = vmatpush1.msra.mxu0 0.0
      %7102 = vmatprep.subr.mxu0 0.0
      %7103 = vmatpush1.msra.mxu0 0.0
      %7104 = vmatprep.subr.mxu0 0.0
      %7105 = vmatpush1.msra.mxu0 0.0
      %7106 = vmatprep.subr.mxu0 0.0
      %7107 = vmatpush1.msra.mxu0 0.0
      %7108 = vmatprep.subr.mxu0 0.0
      %7109 = vmatpush1.msra.mxu0 0.0
      %7110 = vmatprep.subr.mxu0 0.0
      %7111 = vmatpush1.msra.mxu0 0.0
      %7112 = vmatprep.subr.mxu0 0.0
      %7113 = vmatpush1.msra.mxu0 0.0
      %7114 = vmatprep.subr.mxu0 0.0
      %7115 = vmatpush1.msra.mxu0 0.0
      %7116 = vmatprep.subr.mxu0 0.0
      %7117 = vmatpush1.msra.mxu0 0.0
      %7118 = vmatprep.subr.mxu0 0.0
      %7119 = vmatpush1.msra.mxu0 0.0
      %7120 = vmatprep.subr.mxu0 0.0
      %7121 = vmatpush1.msra.mxu0 0.0
      %7122 = vmatprep.subr.mxu0 0.0
      %7123 = vmatpush1.msra.mxu0 0.0
      %7124 = vmatprep.subr.mxu0 0.0
      %7125 = vmatpush1.msra.mxu0 0.0
      %7126 = vmatprep.subr.mxu0 0.0
      %7127 = vmatpush1.msra.mxu0 0.0
      %7128 = vmatprep.subr.mxu0 0.0
      %7129 = vmatpush1.msra.mxu0 0.0
      %7130 = vmatprep.subr.mxu0 0.0
      %7131 = vmatpush1.msra.mxu0 0.0
      %7132 = vmatprep.subr.mxu0 0.0
      %7133 = vmatpush1.msra.mxu0 0.0
      %7134 = vmatprep.subr.mxu0 0.0
      %7135 = vmatpush1.msra.mxu0 0.0
      %7136 = vmatprep.subr.mxu0 0.0
      %7137 = vmatpush1.msra.mxu0 0.0
      %7138 = vmatprep.subr.mxu0 0.0
      %7139 = vmatpush1.msra.mxu0 0.0
      %7140 = vmatprep.subr.mxu0 0.0
      %7141 = vmatpush1.msra.mxu0 0.0
      %7142 = vmatprep.subr.mxu0 0.0
      %7143 = vmatpush1.msra.mxu0 0.0
      %7144 = vmatprep.subr.mxu0 0.0
      %7145 = vmatpush1.msra.mxu0 0.0
      %7146 = vmatprep.subr.mxu0 0.0
      %7147 = vmatpush1.msra.mxu0 0.0
      %7148 = vmatprep.subr.mxu0 0.0
      %7149 = vmatpush1.msra.mxu0 0.0
      %7150 = vmatprep.subr.mxu0 0.0
      %7151 = vmatpush1.msra.mxu0 0.0
      %7152 = vmatprep.subr.mxu0 0.0
      %7153 = vmatpush1.msra.mxu0 0.0
      %7154 = vmatprep.mubr.f32.mxu0 0.0
      %7155 = vmatmul.mubr.f32.gmra.mrb[0].mxu0 %v4728
      %v7156 = vpop.f32.mrb[0].mxu0
      %v7157 = vadd.f32 %v6952, %v7156
      %v7158 = vpop.f32.mrb[0].mxu0
      %7159 = vmatprep.mubr.f32.mxu0 0.0
      %7160 = vmatmul.mubr.f32.gmra.mrb[0].mxu0 %v4731
      %v7161 = vpop.f32.mrb[0].mxu0
      %v7162 = vadd.f32 %v6957, %v7161
      %v7163 = vpop.f32.mrb[0].mxu0
      %7164 = vmatprep.mubr.f32.mxu0 0.0
      %7165 = vmatmul.mubr.f32.gmra.mrb[0].mxu0 %v4734
      %v7166 = vpop.f32.mrb[0].mxu0
      %v7167 = vadd.f32 %v6962, %v7166
      %v7168 = vpop.f32.mrb[0].mxu0
      %7169 = vmatprep.mubr.f32.mxu0 0.0
      %7170 = vmatmul.mubr.f32.gmra.mrb[0].mxu0 %v4737
      %v7171 = vpop.f32.mrb[0].mxu0
      %v7172 = vadd.f32 %v6967, %v7171
      %v7173 = vpop.f32.mrb[0].mxu0
      %7174 = vmatprep.mubr.f32.mxu0 0.0
      %7175 = vmatmul.mubr.f32.gmra.mrb[0].mxu0 %v4740
      %v7176 = vpop.f32.mrb[0].mxu0
      %v7177 = vadd.f32 %v6972, %v7176
      %v7178 = vpop.f32.mrb[0].mxu0
      %7179 = vmatprep.mubr.f32.mxu0 0.0
      %7180 = vmatmul.mubr.f32.gmra.mrb[0].mxu0 %v4743
      %v7181 = vpop.f32.mrb[0].mxu0
      %v7182 = vadd.f32 %v6977, %v7181
      %v7183 = vpop.f32.mrb[0].mxu0
      %7184 = vmatprep.mubr.f32.mxu0 0.0
      %7185 = vmatmul.mubr.f32.gmra.mrb[0].mxu0 %v4746
      %v7186 = vpop.f32.mrb[0].mxu0
      %v7187 = vadd.f32 %v6982, %v7186
      %v7188 = vpop.f32.mrb[0].mxu0
      %7189 = vmatprep.mubr.f32.mxu0 0.0
      %7190 = vmatmul.mubr.f32.gmra.mrb[0].mxu0 %v4749
      %v7191 = vpop.f32.mrb[0].mxu0
      %v7192 = vadd.f32 %v6987, %v7191
      %v7193 = vpop.f32.mrb[0].mxu0
      %7194 = vmatprep.mubr.f32.mxu0 0.0
      %7195 = vmatmul.mubr.f32.gmra.mrb[0].mxu0 %v4752
      %v7196 = vpop.f32.mrb[0].mxu0
      %v7197 = vadd.f32 %v6992, %v7196
      %v7198 = vpop.f32.mrb[0].mxu0
      %7199 = vmatprep.mubr.f32.mxu0 0.0
      %7200 = vmatmul.mubr.f32.gmra.mrb[0].mxu0 %v4755
      %v7201 = vpop.f32.mrb[0].mxu0
      %v7202 = vadd.f32 %v6997, %v7201
      %v7203 = vpop.f32.mrb[0].mxu0
      %7204 = vmatprep.mubr.f32.mxu0 0.0
      %7205 = vmatmul.mubr.f32.gmra.mrb[0].mxu0 %v4758
      %v7206 = vpop.f32.mrb[0].mxu0
      %v7207 = vadd.f32 %v7002, %v7206
      %v7208 = vpop.f32.mrb[0].mxu0
      %7209 = vmatprep.mubr.f32.mxu0 0.0
      %7210 = vmatmul.mubr.f32.gmra.mrb[0].mxu0 %v4761
      %v7211 = vpop.f32.mrb[0].mxu0
      %v7212 = vadd.f32 %v7007, %v7211
      %v7213 = vpop.f32.mrb[0].mxu0
      %7214 = vmatprep.mubr.f32.mxu0 0.0
      %7215 = vmatmul.mubr.f32.gmra.mrb[0].mxu0 %v4764
      %v7216 = vpop.f32.mrb[0].mxu0
      %v7217 = vadd.f32 %v7012, %v7216
      %v7218 = vpop.f32.mrb[0].mxu0
      %7219 = vmatprep.mubr.f32.mxu0 0.0
      %7220 = vmatmul.mubr.f32.gmra.mrb[0].mxu0 %v4767
      %v7221 = vpop.f32.mrb[0].mxu0
      %v7222 = vadd.f32 %v7017, %v7221
      %v7223 = vpop.f32.mrb[0].mxu0
      %7224 = vmatprep.mubr.f32.mxu0 0.0
      %7225 = vmatmul.mubr.f32.gmra.mrb[0].mxu0 %v4770
      %v7226 = vpop.f32.mrb[0].mxu0
      %v7227 = vadd.f32 %v7022, %v7226
      %v7228 = vpop.f32.mrb[0].mxu0
      %7229 = vmatprep.mubr.f32.mxu0 0.0
      %7230 = vmatmul.mubr.f32.gmra.mrb[0].mxu0 %v4773
      %v7231 = vpop.f32.mrb[0].mxu0
      %v7232 = vadd.f32 %v7027, %v7231
      %v7233 = vpop.f32.mrb[0].mxu0
      %7234 = vmatprep.mubr.f32.mxu0 0.0
      %7235 = vmatmul.mubr.f32.gmra.mrb[0].mxu0 %v4776
      %v7236 = vpop.f32.mrb[0].mxu0
      %v7237 = vadd.f32 %v7032, %v7236
      %v7238 = vpop.f32.mrb[0].mxu0
      %7239 = vmatprep.mubr.f32.mxu0 0.0
      %7240 = vmatmul.mubr.f32.gmra.mrb[0].mxu0 %v4779
      %v7241 = vpop.f32.mrb[0].mxu0
      %v7242 = vadd.f32 %v7037, %v7241
      %v7243 = vpop.f32.mrb[0].mxu0
      %7244 = vmatprep.mubr.f32.mxu0 0.0
      %7245 = vmatmul.mubr.f32.gmra.mrb[0].mxu0 %v4782
      %v7246 = vpop.f32.mrb[0].mxu0
      %v7247 = vadd.f32 %v7042, %v7246
      %v7248 = vpop.f32.mrb[0].mxu0
      %7249 = vmatprep.mubr.f32.mxu0 0.0
      %7250 = vmatmul.mubr.f32.gmra.mrb[0].mxu0 %v4785
      %v7251 = vpop.f32.mrb[0].mxu0
      %v7252 = vadd.f32 %v7047, %v7251
      %v7253 = vpop.f32.mrb[0].mxu0
      %7254 = vmatprep.mubr.f32.mxu0 0.0
      %7255 = vmatmul.mubr.f32.gmra.mrb[0].mxu0 %v4788
      %v7256 = vpop.f32.mrb[0].mxu0
      %v7257 = vadd.f32 %v7052, %v7256
      %v7258 = vpop.f32.mrb[0].mxu0
      %7259 = vmatprep.mubr.f32.mxu0 0.0
      %7260 = vmatmul.mubr.f32.gmra.mrb[0].mxu0 %v4791
      %v7261 = vpop.f32.mrb[0].mxu0
      %v7262 = vadd.f32 %v7057, %v7261
      %v7263 = vpop.f32.mrb[0].mxu0
      %7264 = vmatprep.mubr.f32.mxu0 0.0
      %7265 = vmatmul.mubr.f32.gmra.mrb[0].mxu0 %v4794
      %v7266 = vpop.f32.mrb[0].mxu0
      %v7267 = vadd.f32 %v7062, %v7266
      %v7268 = vpop.f32.mrb[0].mxu0
      %7269 = vmatprep.mubr.f32.mxu0 0.0
      %7270 = vmatmul.mubr.f32.gmra.mrb[0].mxu0 %v4797
      %v7271 = vpop.f32.mrb[0].mxu0
      %v7272 = vadd.f32 %v7067, %v7271
      %v7273 = vpop.f32.mrb[0].mxu0
      %7274 = vmatprep.mubr.f32.mxu0 0.0
      %7275 = vmatmul.mubr.f32.gmra.mrb[0].mxu0 %v4800
      %v7276 = vpop.f32.mrb[0].mxu0
      %v7277 = vadd.f32 %v7072, %v7276
      %v7278 = vpop.f32.mrb[0].mxu0
      %7279 = vmatprep.mubr.f32.mxu0 0.0
      %7280 = vmatmul.mubr.f32.gmra.mrb[0].mxu0 %v4803
      %v7281 = vpop.f32.mrb[0].mxu0
      %v7282 = vadd.f32 %v7077, %v7281
      %v7283 = vpop.f32.mrb[0].mxu0
      %7284 = vmatprep.mubr.f32.mxu0 0.0
      %7285 = vmatmul.mubr.f32.gmra.mrb[0].mxu0 %v4806
      %v7286 = vpop.f32.mrb[0].mxu0
      %v7287 = vadd.f32 %v7082, %v7286
      %v7288 = vpop.f32.mrb[0].mxu0
      %7289 = vmatprep.mubr.f32.mxu0 0.0
      %7290 = vmatmul.mubr.f32.gmra.mrb[0].mxu0 %v4809
      %v7291 = vpop.f32.mrb[0].mxu0
      %v7292 = vadd.f32 %v7087, %v7291
      %v7293 = vpop.f32.mrb[0].mxu0
      %7294 = vdwg.mxu0
      %7295 = vmatprep.subr.mxu0 0.0
      %7296 = vmatpush1.msra.mxu0 %v4723
      %7297 = vmatprep.subr.mxu0 0.0
      %7298 = vmatpush1.msra.mxu0 %v4724
      %7299 = vmatprep.subr.mxu0 0.0
      %7300 = vmatpush1.msra.mxu0 %v4725
      %7301 = vmatprep.subr.mxu0 0.0
      %7302 = vmatpush1.msra.mxu0 %v4726
      %7303 = vmatprep.subr.mxu0 0.0
      %7304 = vmatpush1.msra.mxu0 0.0
      %7305 = vmatprep.subr.mxu0 0.0
      %7306 = vmatpush1.msra.mxu0 0.0
      %7307 = vmatprep.subr.mxu0 0.0
      %7308 = vmatpush1.msra.mxu0 0.0
      %7309 = vmatprep.subr.mxu0 0.0
      %7310 = vmatpush1.msra.mxu0 0.0
      %7311 = vmatprep.subr.mxu0 0.0
      %7312 = vmatpush1.msra.mxu0 0.0
      %7313 = vmatprep.subr.mxu0 0.0
      %7314 = vmatpush1.msra.mxu0 0.0
      %7315 = vmatprep.subr.mxu0 0.0
      %7316 = vmatpush1.msra.mxu0 0.0
      %7317 = vmatprep.subr.mxu0 0.0
      %7318 = vmatpush1.msra.mxu0 0.0
      %7319 = vmatprep.subr.mxu0 0.0
      %7320 = vmatpush1.msra.mxu0 0.0
      %7321 = vmatprep.subr.mxu0 0.0
      %7322 = vmatpush1.msra.mxu0 0.0
      %7323 = vmatprep.subr.mxu0 0.0
      %7324 = vmatpush1.msra.mxu0 0.0
      %7325 = vmatprep.subr.mxu0 0.0
      %7326 = vmatpush1.msra.mxu0 0.0
      %7327 = vmatprep.subr.mxu0 0.0
      %7328 = vmatpush1.msra.mxu0 0.0
      %7329 = vmatprep.subr.mxu0 0.0
      %7330 = vmatpush1.msra.mxu0 0.0
      %7331 = vmatprep.subr.mxu0 0.0
      %7332 = vmatpush1.msra.mxu0 0.0
      %7333 = vmatprep.subr.mxu0 0.0
      %7334 = vmatpush1.msra.mxu0 0.0
      %7335 = vmatprep.subr.mxu0 0.0
      %7336 = vmatpush1.msra.mxu0 0.0
      %7337 = vmatprep.subr.mxu0 0.0
      %7338 = vmatpush1.msra.mxu0 0.0
      %7339 = vmatprep.subr.mxu0 0.0
      %7340 = vmatpush1.msra.mxu0 0.0
      %7341 = vmatprep.subr.mxu0 0.0
      %7342 = vmatpush1.msra.mxu0 0.0
      %7343 = vmatprep.subr.mxu0 0.0
      %7344 = vmatpush1.msra.mxu0 0.0
      %7345 = vmatprep.subr.mxu0 0.0
      %7346 = vmatpush1.msra.mxu0 0.0
      %7347 = vmatprep.subr.mxu0 0.0
      %7348 = vmatpush1.msra.mxu0 0.0
      %7349 = vmatprep.subr.mxu0 0.0
      %7350 = vmatpush1.msra.mxu0 0.0
      %7351 = vmatprep.subr.mxu0 0.0
      %7352 = vmatpush1.msra.mxu0 0.0
      %7353 = vmatprep.subr.mxu0 0.0
      %7354 = vmatpush1.msra.mxu0 0.0
      %7355 = vmatprep.subr.mxu0 0.0
      %7356 = vmatpush1.msra.mxu0 0.0
      %7357 = vmatprep.subr.mxu0 0.0
      %7358 = vmatpush1.msra.mxu0 0.0
      %7359 = vmatprep.mubr.f32.mxu0 0.0
      %7360 = vmatmul.mubr.f32.gmra.mrb[0].mxu0 %v5426
      %v7361 = vpop.f32.mrb[0].mxu0
      %v7362 = vadd.f32 0.0, %v7361
      %v7363 = vpop.f32.mrb[0].mxu0
      %7364 = vmatprep.mubr.f32.mxu0 0.0
      %7365 = vmatmul.mubr.f32.gmra.mrb[0].mxu0 %v5429
      %v7366 = vpop.f32.mrb[0].mxu0
      %v7367 = vadd.f32 0.0, %v7366
      %v7368 = vpop.f32.mrb[0].mxu0
      %7369 = vmatprep.mubr.f32.mxu0 0.0
      %7370 = vmatmul.mubr.f32.gmra.mrb[0].mxu0 %v5432
      %v7371 = vpop.f32.mrb[0].mxu0
      %v7372 = vadd.f32 0.0, %v7371
      %v7373 = vpop.f32.mrb[0].mxu0
      %7374 = vmatprep.mubr.f32.mxu0 0.0
      %7375 = vmatmul.mubr.f32.gmra.mrb[0].mxu0 %v5435
      %v7376 = vpop.f32.mrb[0].mxu0
      %v7377 = vadd.f32 0.0, %v7376
      %v7378 = vpop.f32.mrb[0].mxu0
      %7379 = vmatprep.mubr.f32.mxu0 0.0
      %7380 = vmatmul.mubr.f32.gmra.mrb[0].mxu0 %v5438
      %v7381 = vpop.f32.mrb[0].mxu0
      %v7382 = vadd.f32 0.0, %v7381
      %v7383 = vpop.f32.mrb[0].mxu0
      %7384 = vmatprep.mubr.f32.mxu0 0.0
      %7385 = vmatmul.mubr.f32.gmra.mrb[0].mxu0 %v5441
      %v7386 = vpop.f32.mrb[0].mxu0
      %v7387 = vadd.f32 0.0, %v7386
      %v7388 = vpop.f32.mrb[0].mxu0
      %7389 = vmatprep.mubr.f32.mxu0 0.0
      %7390 = vmatmul.mubr.f32.gmra.mrb[0].mxu0 %v5444
      %v7391 = vpop.f32.mrb[0].mxu0
      %v7392 = vadd.f32 0.0, %v7391
      %v7393 = vpop.f32.mrb[0].mxu0
      %7394 = vmatprep.mubr.f32.mxu0 0.0
      %7395 = vmatmul.mubr.f32.gmra.mrb[0].mxu0 %v5447
      %v7396 = vpop.f32.mrb[0].mxu0
      %v7397 = vadd.f32 0.0, %v7396
      %v7398 = vpop.f32.mrb[0].mxu0
      %7399 = vmatprep.mubr.f32.mxu0 0.0
      %7400 = vmatmul.mubr.f32.gmra.mrb[0].mxu0 %v5450
      %v7401 = vpop.f32.mrb[0].mxu0
      %v7402 = vadd.f32 0.0, %v7401
      %v7403 = vpop.f32.mrb[0].mxu0
      %7404 = vmatprep.mubr.f32.mxu0 0.0
      %7405 = vmatmul.mubr.f32.gmra.mrb[0].mxu0 %v5453
      %v7406 = vpop.f32.mrb[0].mxu0
      %v7407 = vadd.f32 0.0, %v7406
      %v7408 = vpop.f32.mrb[0].mxu0
      %7409 = vmatprep.mubr.f32.mxu0 0.0
      %7410 = vmatmul.mubr.f32.gmra.mrb[0].mxu0 %v5456
      %v7411 = vpop.f32.mrb[0].mxu0
      %v7412 = vadd.f32 0.0, %v7411
      %v7413 = vpop.f32.mrb[0].mxu0
      %7414 = vmatprep.mubr.f32.mxu0 0.0
      %7415 = vmatmul.mubr.f32.gmra.mrb[0].mxu0 %v5459
      %v7416 = vpop.f32.mrb[0].mxu0
      %v7417 = vadd.f32 0.0, %v7416
      %v7418 = vpop.f32.mrb[0].mxu0
      %7419 = vmatprep.mubr.f32.mxu0 0.0
      %7420 = vmatmul.mubr.f32.gmra.mrb[0].mxu0 %v5462
      %v7421 = vpop.f32.mrb[0].mxu0
      %v7422 = vadd.f32 0.0, %v7421
      %v7423 = vpop.f32.mrb[0].mxu0
      %7424 = vmatprep.mubr.f32.mxu0 0.0
      %7425 = vmatmul.mubr.f32.gmra.mrb[0].mxu0 %v5465
      %v7426 = vpop.f32.mrb[0].mxu0
      %v7427 = vadd.f32 0.0, %v7426
      %v7428 = vpop.f32.mrb[0].mxu0
      %7429 = vmatprep.mubr.f32.mxu0 0.0
      %7430 = vmatmul.mubr.f32.gmra.mrb[0].mxu0 %v5468
      %v7431 = vpop.f32.mrb[0].mxu0
      %v7432 = vadd.f32 0.0, %v7431
      %v7433 = vpop.f32.mrb[0].mxu0
      %7434 = vmatprep.mubr.f32.mxu0 0.0
      %7435 = vmatmul.mubr.f32.gmra.mrb[0].mxu0 %v5471
      %v7436 = vpop.f32.mrb[0].mxu0
      %v7437 = vadd.f32 0.0, %v7436
      %v7438 = vpop.f32.mrb[0].mxu0
      %7439 = vmatprep.mubr.f32.mxu0 0.0
      %7440 = vmatmul.mubr.f32.gmra.mrb[0].mxu0 %v5474
      %v7441 = vpop.f32.mrb[0].mxu0
      %v7442 = vadd.f32 0.0, %v7441
      %v7443 = vpop.f32.mrb[0].mxu0
      %7444 = vmatprep.mubr.f32.mxu0 0.0
      %7445 = vmatmul.mubr.f32.gmra.mrb[0].mxu0 %v5477
      %v7446 = vpop.f32.mrb[0].mxu0
      %v7447 = vadd.f32 0.0, %v7446
      %v7448 = vpop.f32.mrb[0].mxu0
      %7449 = vmatprep.mubr.f32.mxu0 0.0
      %7450 = vmatmul.mubr.f32.gmra.mrb[0].mxu0 %v5480
      %v7451 = vpop.f32.mrb[0].mxu0
      %v7452 = vadd.f32 0.0, %v7451
      %v7453 = vpop.f32.mrb[0].mxu0
      %7454 = vmatprep.mubr.f32.mxu0 0.0
      %7455 = vmatmul.mubr.f32.gmra.mrb[0].mxu0 %v5483
      %v7456 = vpop.f32.mrb[0].mxu0
      %v7457 = vadd.f32 0.0, %v7456
      %v7458 = vpop.f32.mrb[0].mxu0
      %7459 = vmatprep.mubr.f32.mxu0 0.0
      %7460 = vmatmul.mubr.f32.gmra.mrb[0].mxu0 %v5486
      %v7461 = vpop.f32.mrb[0].mxu0
      %v7462 = vadd.f32 0.0, %v7461
      %v7463 = vpop.f32.mrb[0].mxu0
      %7464 = vmatprep.mubr.f32.mxu0 0.0
      %7465 = vmatmul.mubr.f32.gmra.mrb[0].mxu0 %v5489
      %v7466 = vpop.f32.mrb[0].mxu0
      %v7467 = vadd.f32 0.0, %v7466
      %v7468 = vpop.f32.mrb[0].mxu0
      %7469 = vmatprep.mubr.f32.mxu0 0.0
      %7470 = vmatmul.mubr.f32.gmra.mrb[0].mxu0 %v5492
      %v7471 = vpop.f32.mrb[0].mxu0
      %v7472 = vadd.f32 0.0, %v7471
      %v7473 = vpop.f32.mrb[0].mxu0
      %7474 = vmatprep.mubr.f32.mxu0 0.0
      %7475 = vmatmul.mubr.f32.gmra.mrb[0].mxu0 %v5495
      %v7476 = vpop.f32.mrb[0].mxu0
      %v7477 = vadd.f32 0.0, %v7476
      %v7478 = vpop.f32.mrb[0].mxu0
      %7479 = vmatprep.mubr.f32.mxu0 0.0
      %7480 = vmatmul.mubr.f32.gmra.mrb[0].mxu0 %v5498
      %v7481 = vpop.f32.mrb[0].mxu0
      %v7482 = vadd.f32 0.0, %v7481
      %v7483 = vpop.f32.mrb[0].mxu0
      %7484 = vmatprep.mubr.f32.mxu0 0.0
      %7485 = vmatmul.mubr.f32.gmra.mrb[0].mxu0 %v5501
      %v7486 = vpop.f32.mrb[0].mxu0
      %v7487 = vadd.f32 0.0, %v7486
      %v7488 = vpop.f32.mrb[0].mxu0
      %7489 = vmatprep.mubr.f32.mxu0 0.0
      %7490 = vmatmul.mubr.f32.gmra.mrb[0].mxu0 %v5504
      %v7491 = vpop.f32.mrb[0].mxu0
      %v7492 = vadd.f32 0.0, %v7491
      %v7493 = vpop.f32.mrb[0].mxu0
      %7494 = vmatprep.mubr.f32.mxu0 0.0
      %7495 = vmatmul.mubr.f32.gmra.mrb[0].mxu0 %v5507
      %v7496 = vpop.f32.mrb[0].mxu0
      %v7497 = vadd.f32 0.0, %v7496
      %v7498 = vpop.f32.mrb[0].mxu0
      %7499 = vdwg.mxu0
      %v7500 = vadd.f32 %v7157, %v7362
      %v7501 = vadd.f32 %v7162, %v7367
      %v7502 = vadd.f32 %v7167, %v7372
      %v7503 = vadd.f32 %v7172, %v7377
      %v7504 = vadd.f32 %v7177, %v7382
      %v7505 = vadd.f32 %v7182, %v7387
      %v7506 = vadd.f32 %v7187, %v7392
      %v7507 = vadd.f32 %v7192, %v7397
      %v7508 = vadd.f32 %v7197, %v7402
      %v7509 = vadd.f32 %v7202, %v7407
      %v7510 = vadd.f32 %v7207, %v7412
      %v7511 = vadd.f32 %v7212, %v7417
      %v7512 = vadd.f32 %v7217, %v7422
      %v7513 = vadd.f32 %v7222, %v7427
      %v7514 = vadd.f32 %v7227, %v7432
      %v7515 = vadd.f32 %v7232, %v7437
      %v7516 = vadd.f32 %v7237, %v7442
      %v7517 = vadd.f32 %v7242, %v7447
      %v7518 = vadd.f32 %v7247, %v7452
      %v7519 = vadd.f32 %v7252, %v7457
      %v7520 = vadd.f32 %v7257, %v7462
      %v7521 = vadd.f32 %v7262, %v7467
      %v7522 = vadd.f32 %v7267, %v7472
      %v7523 = vadd.f32 %v7272, %v7477
      %v7524 = vadd.f32 %v7277, %v7482
      %v7525 = vadd.f32 %v7282, %v7487
      %v7526 = vadd.f32 %v7287, %v7492
      %v7527 = vadd.f32 %v7292, %v7497
      %7528 = vmatprep.subr.mxu0 0.0
      %7529 = vmatpush1.msra.mxu0 %v5072
      %7530 = vmatprep.subr.mxu0 0.0
      %7531 = vmatpush1.msra.mxu0 %v5073
      %7532 = vmatprep.subr.mxu0 0.0
      %7533 = vmatpush1.msra.mxu0 %v5074
      %7534 = vmatprep.subr.mxu0 0.0
      %7535 = vmatpush1.msra.mxu0 %v5075
      %7536 = vmatprep.subr.mxu0 0.0
      %7537 = vmatpush1.msra.mxu0 0.0
      %7538 = vmatprep.subr.mxu0 0.0
      %7539 = vmatpush1.msra.mxu0 0.0
      %7540 = vmatprep.subr.mxu0 0.0
      %7541 = vmatpush1.msra.mxu0 0.0
      %7542 = vmatprep.subr.mxu0 0.0
      %7543 = vmatpush1.msra.mxu0 0.0
      %7544 = vmatprep.subr.mxu0 0.0
      %7545 = vmatpush1.msra.mxu0 0.0
      %7546 = vmatprep.subr.mxu0 0.0
      %7547 = vmatpush1.msra.mxu0 0.0
      %7548 = vmatprep.subr.mxu0 0.0
      %7549 = vmatpush1.msra.mxu0 0.0
      %7550 = vmatprep.subr.mxu0 0.0
      %7551 = vmatpush1.msra.mxu0 0.0
      %7552 = vmatprep.subr.mxu0 0.0
      %7553 = vmatpush1.msra.mxu0 0.0
      %7554 = vmatprep.subr.mxu0 0.0
      %7555 = vmatpush1.msra.mxu0 0.0
      %7556 = vmatprep.subr.mxu0 0.0
      %7557 = vmatpush1.msra.mxu0 0.0
      %7558 = vmatprep.subr.mxu0 0.0
      %7559 = vmatpush1.msra.mxu0 0.0
      %7560 = vmatprep.subr.mxu0 0.0
      %7561 = vmatpush1.msra.mxu0 0.0
      %7562 = vmatprep.subr.mxu0 0.0
      %7563 = vmatpush1.msra.mxu0 0.0
      %7564 = vmatprep.subr.mxu0 0.0
      %7565 = vmatpush1.msra.mxu0 0.0
      %7566 = vmatprep.subr.mxu0 0.0
      %7567 = vmatpush1.msra.mxu0 0.0
      %7568 = vmatprep.subr.mxu0 0.0
      %7569 = vmatpush1.msra.mxu0 0.0
      %7570 = vmatprep.subr.mxu0 0.0
      %7571 = vmatpush1.msra.mxu0 0.0
      %7572 = vmatprep.subr.mxu0 0.0
      %7573 = vmatpush1.msra.mxu0 0.0
      %7574 = vmatprep.subr.mxu0 0.0
      %7575 = vmatpush1.msra.mxu0 0.0
      %7576 = vmatprep.subr.mxu0 0.0
      %7577 = vmatpush1.msra.mxu0 0.0
      %7578 = vmatprep.subr.mxu0 0.0
      %7579 = vmatpush1.msra.mxu0 0.0
      %7580 = vmatprep.subr.mxu0 0.0
      %7581 = vmatpush1.msra.mxu0 0.0
      %7582 = vmatprep.subr.mxu0 0.0
      %7583 = vmatpush1.msra.mxu0 0.0
      %7584 = vmatprep.subr.mxu0 0.0
      %7585 = vmatpush1.msra.mxu0 0.0
      %7586 = vmatprep.subr.mxu0 0.0
      %7587 = vmatpush1.msra.mxu0 0.0
      %7588 = vmatprep.subr.mxu0 0.0
      %7589 = vmatpush1.msra.mxu0 0.0
      %7590 = vmatprep.subr.mxu0 0.0
      %7591 = vmatpush1.msra.mxu0 0.0
      %7592 = vmatprep.mubr.f32.mxu0 0.0
      %7593 = vmatmul.mubr.f32.gmra.mrb[0].mxu0 %v5775
      %v7594 = vpop.f32.mrb[0].mxu0
      %v7595 = vadd.f32 0.0, %v7594
      %v7596 = vpop.f32.mrb[0].mxu0
      %7597 = vmatprep.mubr.f32.mxu0 0.0
      %7598 = vmatmul.mubr.f32.gmra.mrb[0].mxu0 %v5778
      %v7599 = vpop.f32.mrb[0].mxu0
      %v7600 = vadd.f32 0.0, %v7599
      %v7601 = vpop.f32.mrb[0].mxu0
      %7602 = vmatprep.mubr.f32.mxu0 0.0
      %7603 = vmatmul.mubr.f32.gmra.mrb[0].mxu0 %v5781
      %v7604 = vpop.f32.mrb[0].mxu0
      %v7605 = vadd.f32 0.0, %v7604
      %v7606 = vpop.f32.mrb[0].mxu0
      %7607 = vmatprep.mubr.f32.mxu0 0.0
      %7608 = vmatmul.mubr.f32.gmra.mrb[0].mxu0 %v5784
      %v7609 = vpop.f32.mrb[0].mxu0
      %v7610 = vadd.f32 0.0, %v7609
      %v7611 = vpop.f32.mrb[0].mxu0
      %7612 = vmatprep.mubr.f32.mxu0 0.0
      %7613 = vmatmul.mubr.f32.gmra.mrb[0].mxu0 %v5787
      %v7614 = vpop.f32.mrb[0].mxu0
      %v7615 = vadd.f32 0.0, %v7614
      %v7616 = vpop.f32.mrb[0].mxu0
      %7617 = vmatprep.mubr.f32.mxu0 0.0
      %7618 = vmatmul.mubr.f32.gmra.mrb[0].mxu0 %v5790
      %v7619 = vpop.f32.mrb[0].mxu0
      %v7620 = vadd.f32 0.0, %v7619
      %v7621 = vpop.f32.mrb[0].mxu0
      %7622 = vmatprep.mubr.f32.mxu0 0.0
      %7623 = vmatmul.mubr.f32.gmra.mrb[0].mxu0 %v5793
      %v7624 = vpop.f32.mrb[0].mxu0
      %v7625 = vadd.f32 0.0, %v7624
      %v7626 = vpop.f32.mrb[0].mxu0
      %7627 = vmatprep.mubr.f32.mxu0 0.0
      %7628 = vmatmul.mubr.f32.gmra.mrb[0].mxu0 %v5796
      %v7629 = vpop.f32.mrb[0].mxu0
      %v7630 = vadd.f32 0.0, %v7629
      %v7631 = vpop.f32.mrb[0].mxu0
      %7632 = vmatprep.mubr.f32.mxu0 0.0
      %7633 = vmatmul.mubr.f32.gmra.mrb[0].mxu0 %v5799
      %v7634 = vpop.f32.mrb[0].mxu0
      %v7635 = vadd.f32 0.0, %v7634
      %v7636 = vpop.f32.mrb[0].mxu0
      %7637 = vmatprep.mubr.f32.mxu0 0.0
      %7638 = vmatmul.mubr.f32.gmra.mrb[0].mxu0 %v5802
      %v7639 = vpop.f32.mrb[0].mxu0
      %v7640 = vadd.f32 0.0, %v7639
      %v7641 = vpop.f32.mrb[0].mxu0
      %7642 = vmatprep.mubr.f32.mxu0 0.0
      %7643 = vmatmul.mubr.f32.gmra.mrb[0].mxu0 %v5805
      %v7644 = vpop.f32.mrb[0].mxu0
      %v7645 = vadd.f32 0.0, %v7644
      %v7646 = vpop.f32.mrb[0].mxu0
      %7647 = vmatprep.mubr.f32.mxu0 0.0
      %7648 = vmatmul.mubr.f32.gmra.mrb[0].mxu0 %v5808
      %v7649 = vpop.f32.mrb[0].mxu0
      %v7650 = vadd.f32 0.0, %v7649
      %v7651 = vpop.f32.mrb[0].mxu0
      %7652 = vmatprep.mubr.f32.mxu0 0.0
      %7653 = vmatmul.mubr.f32.gmra.mrb[0].mxu0 %v5811
      %v7654 = vpop.f32.mrb[0].mxu0
      %v7655 = vadd.f32 0.0, %v7654
      %v7656 = vpop.f32.mrb[0].mxu0
      %7657 = vmatprep.mubr.f32.mxu0 0.0
      %7658 = vmatmul.mubr.f32.gmra.mrb[0].mxu0 %v5814
      %v7659 = vpop.f32.mrb[0].mxu0
      %v7660 = vadd.f32 0.0, %v7659
      %v7661 = vpop.f32.mrb[0].mxu0
      %7662 = vmatprep.mubr.f32.mxu0 0.0
      %7663 = vmatmul.mubr.f32.gmra.mrb[0].mxu0 %v5817
      %v7664 = vpop.f32.mrb[0].mxu0
      %v7665 = vadd.f32 0.0, %v7664
      %v7666 = vpop.f32.mrb[0].mxu0
      %7667 = vmatprep.mubr.f32.mxu0 0.0
      %7668 = vmatmul.mubr.f32.gmra.mrb[0].mxu0 %v5820
      %v7669 = vpop.f32.mrb[0].mxu0
      %v7670 = vadd.f32 0.0, %v7669
      %v7671 = vpop.f32.mrb[0].mxu0
      %7672 = vmatprep.mubr.f32.mxu0 0.0
      %7673 = vmatmul.mubr.f32.gmra.mrb[0].mxu0 %v5823
      %v7674 = vpop.f32.mrb[0].mxu0
      %v7675 = vadd.f32 0.0, %v7674
      %v7676 = vpop.f32.mrb[0].mxu0
      %7677 = vmatprep.mubr.f32.mxu0 0.0
      %7678 = vmatmul.mubr.f32.gmra.mrb[0].mxu0 %v5826
      %v7679 = vpop.f32.mrb[0].mxu0
      %v7680 = vadd.f32 0.0, %v7679
      %v7681 = vpop.f32.mrb[0].mxu0
      %7682 = vmatprep.mubr.f32.mxu0 0.0
      %7683 = vmatmul.mubr.f32.gmra.mrb[0].mxu0 %v5829
      %v7684 = vpop.f32.mrb[0].mxu0
      %v7685 = vadd.f32 0.0, %v7684
      %v7686 = vpop.f32.mrb[0].mxu0
      %7687 = vmatprep.mubr.f32.mxu0 0.0
      %7688 = vmatmul.mubr.f32.gmra.mrb[0].mxu0 %v5832
      %v7689 = vpop.f32.mrb[0].mxu0
      %v7690 = vadd.f32 0.0, %v7689
      %v7691 = vpop.f32.mrb[0].mxu0
      %7692 = vmatprep.mubr.f32.mxu0 0.0
      %7693 = vmatmul.mubr.f32.gmra.mrb[0].mxu0 %v5835
      %v7694 = vpop.f32.mrb[0].mxu0
      %v7695 = vadd.f32 0.0, %v7694
      %v7696 = vpop.f32.mrb[0].mxu0
      %7697 = vmatprep.mubr.f32.mxu0 0.0
      %7698 = vmatmul.mubr.f32.gmra.mrb[0].mxu0 %v5838
      %v7699 = vpop.f32.mrb[0].mxu0
      %v7700 = vadd.f32 0.0, %v7699
      %v7701 = vpop.f32.mrb[0].mxu0
      %7702 = vmatprep.mubr.f32.mxu0 0.0
      %7703 = vmatmul.mubr.f32.gmra.mrb[0].mxu0 %v5841
      %v7704 = vpop.f32.mrb[0].mxu0
      %v7705 = vadd.f32 0.0, %v7704
      %v7706 = vpop.f32.mrb[0].mxu0
      %7707 = vmatprep.mubr.f32.mxu0 0.0
      %7708 = vmatmul.mubr.f32.gmra.mrb[0].mxu0 %v5844
      %v7709 = vpop.f32.mrb[0].mxu0
      %v7710 = vadd.f32 0.0, %v7709
      %v7711 = vpop.f32.mrb[0].mxu0
      %7712 = vmatprep.mubr.f32.mxu0 0.0
      %7713 = vmatmul.mubr.f32.gmra.mrb[0].mxu0 %v5847
      %v7714 = vpop.f32.mrb[0].mxu0
      %v7715 = vadd.f32 0.0, %v7714
      %v7716 = vpop.f32.mrb[0].mxu0
      %7717 = vmatprep.mubr.f32.mxu0 0.0
      %7718 = vmatmul.mubr.f32.gmra.mrb[0].mxu0 %v5850
      %v7719 = vpop.f32.mrb[0].mxu0
      %v7720 = vadd.f32 0.0, %v7719
      %v7721 = vpop.f32.mrb[0].mxu0
      %7722 = vmatprep.mubr.f32.mxu0 0.0
      %7723 = vmatmul.mubr.f32.gmra.mrb[0].mxu0 %v5853
      %v7724 = vpop.f32.mrb[0].mxu0
      %v7725 = vadd.f32 0.0, %v7724
      %v7726 = vpop.f32.mrb[0].mxu0
      %7727 = vmatprep.mubr.f32.mxu0 0.0
      %7728 = vmatmul.mubr.f32.gmra.mrb[0].mxu0 %v5856
      %v7729 = vpop.f32.mrb[0].mxu0
      %v7730 = vadd.f32 0.0, %v7729
      %v7731 = vpop.f32.mrb[0].mxu0
      %7732 = vdwg.mxu0
      %v7733 = vadd.f32 %v7500, %v7595
      %v7734 = vadd.f32 %v7501, %v7600
      %v7735 = vadd.f32 %v7502, %v7605
      %v7736 = vadd.f32 %v7503, %v7610
      %v7737 = vadd.f32 %v7504, %v7615
      %v7738 = vadd.f32 %v7505, %v7620
      %v7739 = vadd.f32 %v7506, %v7625
      %v7740 = vadd.f32 %v7507, %v7630
      %v7741 = vadd.f32 %v7508, %v7635
      %v7742 = vadd.f32 %v7509, %v7640
      %v7743 = vadd.f32 %v7510, %v7645
      %v7744 = vadd.f32 %v7511, %v7650
      %v7745 = vadd.f32 %v7512, %v7655
      %v7746 = vadd.f32 %v7513, %v7660
      %v7747 = vadd.f32 %v7514, %v7665
      %v7748 = vadd.f32 %v7515, %v7670
      %v7749 = vadd.f32 %v7516, %v7675
      %v7750 = vadd.f32 %v7517, %v7680
      %v7751 = vadd.f32 %v7518, %v7685
      %v7752 = vadd.f32 %v7519, %v7690
      %v7753 = vadd.f32 %v7520, %v7695
      %v7754 = vadd.f32 %v7521, %v7700
      %v7755 = vadd.f32 %v7522, %v7705
      %v7756 = vadd.f32 %v7523, %v7710
      %v7757 = vadd.f32 %v7524, %v7715
      %v7758 = vadd.f32 %v7525, %v7720
      %v7759 = vadd.f32 %v7526, %v7725
      %v7760 = vadd.f32 %v7527, %v7730
      %7761 = vmatprep.subr.mxu0 0.0
      %7762 = vmatpush1.msra.mxu0 %v5421
      %7763 = vmatprep.subr.mxu0 0.0
      %7764 = vmatpush1.msra.mxu0 %v5422
      %7765 = vmatprep.subr.mxu0 0.0
      %7766 = vmatpush1.msra.mxu0 %v5423
      %7767 = vmatprep.subr.mxu0 0.0
      %7768 = vmatpush1.msra.mxu0 %v5424
      %7769 = vmatprep.subr.mxu0 0.0
      %7770 = vmatpush1.msra.mxu0 0.0
      %7771 = vmatprep.subr.mxu0 0.0
      %7772 = vmatpush1.msra.mxu0 0.0
      %7773 = vmatprep.subr.mxu0 0.0
      %7774 = vmatpush1.msra.mxu0 0.0
      %7775 = vmatprep.subr.mxu0 0.0
      %7776 = vmatpush1.msra.mxu0 0.0
      %7777 = vmatprep.subr.mxu0 0.0
      %7778 = vmatpush1.msra.mxu0 0.0
      %7779 = vmatprep.subr.mxu0 0.0
      %7780 = vmatpush1.msra.mxu0 0.0
      %7781 = vmatprep.subr.mxu0 0.0
      %7782 = vmatpush1.msra.mxu0 0.0
      %7783 = vmatprep.subr.mxu0 0.0
      %7784 = vmatpush1.msra.mxu0 0.0
      %7785 = vmatprep.subr.mxu0 0.0
      %7786 = vmatpush1.msra.mxu0 0.0
      %7787 = vmatprep.subr.mxu0 0.0
      %7788 = vmatpush1.msra.mxu0 0.0
      %7789 = vmatprep.subr.mxu0 0.0
      %7790 = vmatpush1.msra.mxu0 0.0
      %7791 = vmatprep.subr.mxu0 0.0
      %7792 = vmatpush1.msra.mxu0 0.0
      %7793 = vmatprep.subr.mxu0 0.0
      %7794 = vmatpush1.msra.mxu0 0.0
      %7795 = vmatprep.subr.mxu0 0.0
      %7796 = vmatpush1.msra.mxu0 0.0
      %7797 = vmatprep.subr.mxu0 0.0
      %7798 = vmatpush1.msra.mxu0 0.0
      %7799 = vmatprep.subr.mxu0 0.0
      %7800 = vmatpush1.msra.mxu0 0.0
      %7801 = vmatprep.subr.mxu0 0.0
      %7802 = vmatpush1.msra.mxu0 0.0
      %7803 = vmatprep.subr.mxu0 0.0
      %7804 = vmatpush1.msra.mxu0 0.0
      %7805 = vmatprep.subr.mxu0 0.0
      %7806 = vmatpush1.msra.mxu0 0.0
      %7807 = vmatprep.subr.mxu0 0.0
      %7808 = vmatpush1.msra.mxu0 0.0
      %7809 = vmatprep.subr.mxu0 0.0
      %7810 = vmatpush1.msra.mxu0 0.0
      %7811 = vmatprep.subr.mxu0 0.0
      %7812 = vmatpush1.msra.mxu0 0.0
      %7813 = vmatprep.subr.mxu0 0.0
      %7814 = vmatpush1.msra.mxu0 0.0
      %7815 = vmatprep.subr.mxu0 0.0
      %7816 = vmatpush1.msra.mxu0 0.0
      %7817 = vmatprep.subr.mxu0 0.0
      %7818 = vmatpush1.msra.mxu0 0.0
      %7819 = vmatprep.subr.mxu0 0.0
      %7820 = vmatpush1.msra.mxu0 0.0
      %7821 = vmatprep.subr.mxu0 0.0
      %7822 = vmatpush1.msra.mxu0 0.0
      %7823 = vmatprep.subr.mxu0 0.0
      %7824 = vmatpush1.msra.mxu0 0.0
      %7825 = vmatprep.mubr.f32.mxu0 0.0
      %7826 = vmatmul.mubr.f32.gmra.mrb[0].mxu0 %v6124
      %v7827 = vpop.f32.mrb[0].mxu0
      %v7828 = vadd.f32 0.0, %v7827
      %v7829 = vpop.f32.mrb[0].mxu0
      %7830 = vmatprep.mubr.f32.mxu0 0.0
      %7831 = vmatmul.mubr.f32.gmra.mrb[0].mxu0 %v6127
      %v7832 = vpop.f32.mrb[0].mxu0
      %v7833 = vadd.f32 0.0, %v7832
      %v7834 = vpop.f32.mrb[0].mxu0
      %7835 = vmatprep.mubr.f32.mxu0 0.0
      %7836 = vmatmul.mubr.f32.gmra.mrb[0].mxu0 %v6130
      %v7837 = vpop.f32.mrb[0].mxu0
      %v7838 = vadd.f32 0.0, %v7837
      %v7839 = vpop.f32.mrb[0].mxu0
      %7840 = vmatprep.mubr.f32.mxu0 0.0
      %7841 = vmatmul.mubr.f32.gmra.mrb[0].mxu0 %v6133
      %v7842 = vpop.f32.mrb[0].mxu0
      %v7843 = vadd.f32 0.0, %v7842
      %v7844 = vpop.f32.mrb[0].mxu0
      %7845 = vmatprep.mubr.f32.mxu0 0.0
      %7846 = vmatmul.mubr.f32.gmra.mrb[0].mxu0 %v6136
      %v7847 = vpop.f32.mrb[0].mxu0
      %v7848 = vadd.f32 0.0, %v7847
      %v7849 = vpop.f32.mrb[0].mxu0
      %7850 = vmatprep.mubr.f32.mxu0 0.0
      %7851 = vmatmul.mubr.f32.gmra.mrb[0].mxu0 %v6139
      %v7852 = vpop.f32.mrb[0].mxu0
      %v7853 = vadd.f32 0.0, %v7852
      %v7854 = vpop.f32.mrb[0].mxu0
      %7855 = vmatprep.mubr.f32.mxu0 0.0
      %7856 = vmatmul.mubr.f32.gmra.mrb[0].mxu0 %v6142
      %v7857 = vpop.f32.mrb[0].mxu0
      %v7858 = vadd.f32 0.0, %v7857
      %v7859 = vpop.f32.mrb[0].mxu0
      %7860 = vmatprep.mubr.f32.mxu0 0.0
      %7861 = vmatmul.mubr.f32.gmra.mrb[0].mxu0 %v6145
      %v7862 = vpop.f32.mrb[0].mxu0
      %v7863 = vadd.f32 0.0, %v7862
      %v7864 = vpop.f32.mrb[0].mxu0
      %7865 = vmatprep.mubr.f32.mxu0 0.0
      %7866 = vmatmul.mubr.f32.gmra.mrb[0].mxu0 %v6148
      %v7867 = vpop.f32.mrb[0].mxu0
      %v7868 = vadd.f32 0.0, %v7867
      %v7869 = vpop.f32.mrb[0].mxu0
      %7870 = vmatprep.mubr.f32.mxu0 0.0
      %7871 = vmatmul.mubr.f32.gmra.mrb[0].mxu0 %v6151
      %v7872 = vpop.f32.mrb[0].mxu0
      %v7873 = vadd.f32 0.0, %v7872
      %v7874 = vpop.f32.mrb[0].mxu0
      %7875 = vmatprep.mubr.f32.mxu0 0.0
      %7876 = vmatmul.mubr.f32.gmra.mrb[0].mxu0 %v6154
      %v7877 = vpop.f32.mrb[0].mxu0
      %v7878 = vadd.f32 0.0, %v7877
      %v7879 = vpop.f32.mrb[0].mxu0
      %7880 = vmatprep.mubr.f32.mxu0 0.0
      %7881 = vmatmul.mubr.f32.gmra.mrb[0].mxu0 %v6157
      %v7882 = vpop.f32.mrb[0].mxu0
      %v7883 = vadd.f32 0.0, %v7882
      %v7884 = vpop.f32.mrb[0].mxu0
      %7885 = vmatprep.mubr.f32.mxu0 0.0
      %7886 = vmatmul.mubr.f32.gmra.mrb[0].mxu0 %v6160
      %v7887 = vpop.f32.mrb[0].mxu0
      %v7888 = vadd.f32 0.0, %v7887
      %v7889 = vpop.f32.mrb[0].mxu0
      %7890 = vmatprep.mubr.f32.mxu0 0.0
      %7891 = vmatmul.mubr.f32.gmra.mrb[0].mxu0 %v6163
      %v7892 = vpop.f32.mrb[0].mxu0
      %v7893 = vadd.f32 0.0, %v7892
      %v7894 = vpop.f32.mrb[0].mxu0
      %7895 = vmatprep.mubr.f32.mxu0 0.0
      %7896 = vmatmul.mubr.f32.gmra.mrb[0].mxu0 %v6166
      %v7897 = vpop.f32.mrb[0].mxu0
      %v7898 = vadd.f32 0.0, %v7897
      %v7899 = vpop.f32.mrb[0].mxu0
      %7900 = vmatprep.mubr.f32.mxu0 0.0
      %7901 = vmatmul.mubr.f32.gmra.mrb[0].mxu0 %v6169
      %v7902 = vpop.f32.mrb[0].mxu0
      %v7903 = vadd.f32 0.0, %v7902
      %v7904 = vpop.f32.mrb[0].mxu0
      %7905 = vmatprep.mubr.f32.mxu0 0.0
      %7906 = vmatmul.mubr.f32.gmra.mrb[0].mxu0 %v6172
      %v7907 = vpop.f32.mrb[0].mxu0
      %v7908 = vadd.f32 0.0, %v7907
      %v7909 = vpop.f32.mrb[0].mxu0
      %7910 = vmatprep.mubr.f32.mxu0 0.0
      %7911 = vmatmul.mubr.f32.gmra.mrb[0].mxu0 %v6175
      %v7912 = vpop.f32.mrb[0].mxu0
      %v7913 = vadd.f32 0.0, %v7912
      %v7914 = vpop.f32.mrb[0].mxu0
      %7915 = vmatprep.mubr.f32.mxu0 0.0
      %7916 = vmatmul.mubr.f32.gmra.mrb[0].mxu0 %v6178
      %v7917 = vpop.f32.mrb[0].mxu0
      %v7918 = vadd.f32 0.0, %v7917
      %v7919 = vpop.f32.mrb[0].mxu0
      %7920 = vmatprep.mubr.f32.mxu0 0.0
      %7921 = vmatmul.mubr.f32.gmra.mrb[0].mxu0 %v6181
      %v7922 = vpop.f32.mrb[0].mxu0
      %v7923 = vadd.f32 0.0, %v7922
      %v7924 = vpop.f32.mrb[0].mxu0
      %7925 = vmatprep.mubr.f32.mxu0 0.0
      %7926 = vmatmul.mubr.f32.gmra.mrb[0].mxu0 %v6184
      %v7927 = vpop.f32.mrb[0].mxu0
      %v7928 = vadd.f32 0.0, %v7927
      %v7929 = vpop.f32.mrb[0].mxu0
      %7930 = vmatprep.mubr.f32.mxu0 0.0
      %7931 = vmatmul.mubr.f32.gmra.mrb[0].mxu0 %v6187
      %v7932 = vpop.f32.mrb[0].mxu0
      %v7933 = vadd.f32 0.0, %v7932
      %v7934 = vpop.f32.mrb[0].mxu0
      %7935 = vmatprep.mubr.f32.mxu0 0.0
      %7936 = vmatmul.mubr.f32.gmra.mrb[0].mxu0 %v6190
      %v7937 = vpop.f32.mrb[0].mxu0
      %v7938 = vadd.f32 0.0, %v7937
      %v7939 = vpop.f32.mrb[0].mxu0
      %7940 = vmatprep.mubr.f32.mxu0 0.0
      %7941 = vmatmul.mubr.f32.gmra.mrb[0].mxu0 %v6193
      %v7942 = vpop.f32.mrb[0].mxu0
      %v7943 = vadd.f32 0.0, %v7942
      %v7944 = vpop.f32.mrb[0].mxu0
      %7945 = vmatprep.mubr.f32.mxu0 0.0
      %7946 = vmatmul.mubr.f32.gmra.mrb[0].mxu0 %v6196
      %v7947 = vpop.f32.mrb[0].mxu0
      %v7948 = vadd.f32 0.0, %v7947
      %v7949 = vpop.f32.mrb[0].mxu0
      %7950 = vmatprep.mubr.f32.mxu0 0.0
      %7951 = vmatmul.mubr.f32.gmra.mrb[0].mxu0 %v6199
      %v7952 = vpop.f32.mrb[0].mxu0
      %v7953 = vadd.f32 0.0, %v7952
      %v7954 = vpop.f32.mrb[0].mxu0
      %7955 = vmatprep.mubr.f32.mxu0 0.0
      %7956 = vmatmul.mubr.f32.gmra.mrb[0].mxu0 %v6202
      %v7957 = vpop.f32.mrb[0].mxu0
      %v7958 = vadd.f32 0.0, %v7957
      %v7959 = vpop.f32.mrb[0].mxu0
      %7960 = vmatprep.mubr.f32.mxu0 0.0
      %7961 = vmatmul.mubr.f32.gmra.mrb[0].mxu0 %v6205
      %v7962 = vpop.f32.mrb[0].mxu0
      %v7963 = vadd.f32 0.0, %v7962
      %v7964 = vpop.f32.mrb[0].mxu0
      %7965 = vdwg.mxu0
      %v7966 = vadd.f32 %v7733, %v7828
      %v7967 = vadd.f32 %v7734, %v7833
      %v7968 = vadd.f32 %v7735, %v7838
      %v7969 = vadd.f32 %v7736, %v7843
      %v7970 = vadd.f32 %v7737, %v7848
      %v7971 = vadd.f32 %v7738, %v7853
      %v7972 = vadd.f32 %v7739, %v7858
      %v7973 = vadd.f32 %v7740, %v7863
      %v7974 = vadd.f32 %v7741, %v7868
      %v7975 = vadd.f32 %v7742, %v7873
      %v7976 = vadd.f32 %v7743, %v7878
      %v7977 = vadd.f32 %v7744, %v7883
      %v7978 = vadd.f32 %v7745, %v7888
      %v7979 = vadd.f32 %v7746, %v7893
      %v7980 = vadd.f32 %v7747, %v7898
      %v7981 = vadd.f32 %v7748, %v7903
      %v7982 = vadd.f32 %v7749, %v7908
      %v7983 = vadd.f32 %v7750, %v7913
      %v7984 = vadd.f32 %v7751, %v7918
      %v7985 = vadd.f32 %v7752, %v7923
      %v7986 = vadd.f32 %v7753, %v7928
      %v7987 = vadd.f32 %v7754, %v7933
      %v7988 = vadd.f32 %v7755, %v7938
      %v7989 = vadd.f32 %v7756, %v7943
      %v7990 = vadd.f32 %v7757, %v7948
      %v7991 = vadd.f32 %v7758, %v7953
      %v7992 = vadd.f32 %v7759, %v7958
      %v7993 = vadd.f32 %v7760, %v7963
      %7994 = vmatprep.subr.mxu0 0.0
      %7995 = vmatpush1.msra.mxu0 %v5770
      %7996 = vmatprep.subr.mxu0 0.0
      %7997 = vmatpush1.msra.mxu0 %v5771
      %7998 = vmatprep.subr.mxu0 0.0
      %7999 = vmatpush1.msra.mxu0 %v5772
      %8000 = vmatprep.subr.mxu0 0.0
      %8001 = vmatpush1.msra.mxu0 %v5773
      %8002 = vmatprep.subr.mxu0 0.0
      %8003 = vmatpush1.msra.mxu0 0.0
      %8004 = vmatprep.subr.mxu0 0.0
      %8005 = vmatpush1.msra.mxu0 0.0
      %8006 = vmatprep.subr.mxu0 0.0
      %8007 = vmatpush1.msra.mxu0 0.0
      %8008 = vmatprep.subr.mxu0 0.0
      %8009 = vmatpush1.msra.mxu0 0.0
      %8010 = vmatprep.subr.mxu0 0.0
      %8011 = vmatpush1.msra.mxu0 0.0
      %8012 = vmatprep.subr.mxu0 0.0
      %8013 = vmatpush1.msra.mxu0 0.0
      %8014 = vmatprep.subr.mxu0 0.0
      %8015 = vmatpush1.msra.mxu0 0.0
      %8016 = vmatprep.subr.mxu0 0.0
      %8017 = vmatpush1.msra.mxu0 0.0
      %8018 = vmatprep.subr.mxu0 0.0
      %8019 = vmatpush1.msra.mxu0 0.0
      %8020 = vmatprep.subr.mxu0 0.0
      %8021 = vmatpush1.msra.mxu0 0.0
      %8022 = vmatprep.subr.mxu0 0.0
      %8023 = vmatpush1.msra.mxu0 0.0
      %8024 = vmatprep.subr.mxu0 0.0
      %8025 = vmatpush1.msra.mxu0 0.0
      %8026 = vmatprep.subr.mxu0 0.0
      %8027 = vmatpush1.msra.mxu0 0.0
      %8028 = vmatprep.subr.mxu0 0.0
      %8029 = vmatpush1.msra.mxu0 0.0
      %8030 = vmatprep.subr.mxu0 0.0
      %8031 = vmatpush1.msra.mxu0 0.0
      %8032 = vmatprep.subr.mxu0 0.0
      %8033 = vmatpush1.msra.mxu0 0.0
      %8034 = vmatprep.subr.mxu0 0.0
      %8035 = vmatpush1.msra.mxu0 0.0
      %8036 = vmatprep.subr.mxu0 0.0
      %8037 = vmatpush1.msra.mxu0 0.0
      %8038 = vmatprep.subr.mxu0 0.0
      %8039 = vmatpush1.msra.mxu0 0.0
      %8040 = vmatprep.subr.mxu0 0.0
      %8041 = vmatpush1.msra.mxu0 0.0
      %8042 = vmatprep.subr.mxu0 0.0
      %8043 = vmatpush1.msra.mxu0 0.0
      %8044 = vmatprep.subr.mxu0 0.0
      %8045 = vmatpush1.msra.mxu0 0.0
      %8046 = vmatprep.subr.mxu0 0.0
      %8047 = vmatpush1.msra.mxu0 0.0
      %8048 = vmatprep.subr.mxu0 0.0
      %8049 = vmatpush1.msra.mxu0 0.0
      %8050 = vmatprep.subr.mxu0 0.0
      %8051 = vmatpush1.msra.mxu0 0.0
      %8052 = vmatprep.subr.mxu0 0.0
      %8053 = vmatpush1.msra.mxu0 0.0
      %8054 = vmatprep.subr.mxu0 0.0
      %8055 = vmatpush1.msra.mxu0 0.0
      %8056 = vmatprep.subr.mxu0 0.0
      %8057 = vmatpush1.msra.mxu0 0.0
      %8058 = vmatprep.mubr.f32.mxu0 0.0
      %8059 = vmatmul.mubr.f32.gmra.mrb[0].mxu0 %v6473
      %v8060 = vpop.f32.mrb[0].mxu0
      %v8061 = vadd.f32 0.0, %v8060
      %v8062 = vpop.f32.mrb[0].mxu0
      %8063 = vmatprep.mubr.f32.mxu0 0.0
      %8064 = vmatmul.mubr.f32.gmra.mrb[0].mxu0 %v6476
      %v8065 = vpop.f32.mrb[0].mxu0
      %v8066 = vadd.f32 0.0, %v8065
      %v8067 = vpop.f32.mrb[0].mxu0
      %8068 = vmatprep.mubr.f32.mxu0 0.0
      %8069 = vmatmul.mubr.f32.gmra.mrb[0].mxu0 %v6479
      %v8070 = vpop.f32.mrb[0].mxu0
      %v8071 = vadd.f32 0.0, %v8070
      %v8072 = vpop.f32.mrb[0].mxu0
      %8073 = vmatprep.mubr.f32.mxu0 0.0
      %8074 = vmatmul.mubr.f32.gmra.mrb[0].mxu0 %v6482
      %v8075 = vpop.f32.mrb[0].mxu0
      %v8076 = vadd.f32 0.0, %v8075
      %v8077 = vpop.f32.mrb[0].mxu0
      %8078 = vmatprep.mubr.f32.mxu0 0.0
      %8079 = vmatmul.mubr.f32.gmra.mrb[0].mxu0 %v6485
      %v8080 = vpop.f32.mrb[0].mxu0
      %v8081 = vadd.f32 0.0, %v8080
      %v8082 = vpop.f32.mrb[0].mxu0
      %8083 = vmatprep.mubr.f32.mxu0 0.0
      %8084 = vmatmul.mubr.f32.gmra.mrb[0].mxu0 %v6488
      %v8085 = vpop.f32.mrb[0].mxu0
      %v8086 = vadd.f32 0.0, %v8085
      %v8087 = vpop.f32.mrb[0].mxu0
      %8088 = vmatprep.mubr.f32.mxu0 0.0
      %8089 = vmatmul.mubr.f32.gmra.mrb[0].mxu0 %v6491
      %v8090 = vpop.f32.mrb[0].mxu0
      %v8091 = vadd.f32 0.0, %v8090
      %v8092 = vpop.f32.mrb[0].mxu0
      %8093 = vmatprep.mubr.f32.mxu0 0.0
      %8094 = vmatmul.mubr.f32.gmra.mrb[0].mxu0 %v6494
      %v8095 = vpop.f32.mrb[0].mxu0
      %v8096 = vadd.f32 0.0, %v8095
      %v8097 = vpop.f32.mrb[0].mxu0
      %8098 = vmatprep.mubr.f32.mxu0 0.0
      %8099 = vmatmul.mubr.f32.gmra.mrb[0].mxu0 %v6497
      %v8100 = vpop.f32.mrb[0].mxu0
      %v8101 = vadd.f32 0.0, %v8100
      %v8102 = vpop.f32.mrb[0].mxu0
      %8103 = vmatprep.mubr.f32.mxu0 0.0
      %8104 = vmatmul.mubr.f32.gmra.mrb[0].mxu0 %v6500
      %v8105 = vpop.f32.mrb[0].mxu0
      %v8106 = vadd.f32 0.0, %v8105
      %v8107 = vpop.f32.mrb[0].mxu0
      %8108 = vmatprep.mubr.f32.mxu0 0.0
      %8109 = vmatmul.mubr.f32.gmra.mrb[0].mxu0 %v6503
      %v8110 = vpop.f32.mrb[0].mxu0
      %v8111 = vadd.f32 0.0, %v8110
      %v8112 = vpop.f32.mrb[0].mxu0
      %8113 = vmatprep.mubr.f32.mxu0 0.0
      %8114 = vmatmul.mubr.f32.gmra.mrb[0].mxu0 %v6506
      %v8115 = vpop.f32.mrb[0].mxu0
      %v8116 = vadd.f32 0.0, %v8115
      %v8117 = vpop.f32.mrb[0].mxu0
      %8118 = vmatprep.mubr.f32.mxu0 0.0
      %8119 = vmatmul.mubr.f32.gmra.mrb[0].mxu0 %v6509
      %v8120 = vpop.f32.mrb[0].mxu0
      %v8121 = vadd.f32 0.0, %v8120
      %v8122 = vpop.f32.mrb[0].mxu0
      %8123 = vmatprep.mubr.f32.mxu0 0.0
      %8124 = vmatmul.mubr.f32.gmra.mrb[0].mxu0 %v6512
      %v8125 = vpop.f32.mrb[0].mxu0
      %v8126 = vadd.f32 0.0, %v8125
      %v8127 = vpop.f32.mrb[0].mxu0
      %8128 = vmatprep.mubr.f32.mxu0 0.0
      %8129 = vmatmul.mubr.f32.gmra.mrb[0].mxu0 %v6515
      %v8130 = vpop.f32.mrb[0].mxu0
      %v8131 = vadd.f32 0.0, %v8130
      %v8132 = vpop.f32.mrb[0].mxu0
      %8133 = vmatprep.mubr.f32.mxu0 0.0
      %8134 = vmatmul.mubr.f32.gmra.mrb[0].mxu0 %v6518
      %v8135 = vpop.f32.mrb[0].mxu0
      %v8136 = vadd.f32 0.0, %v8135
      %v8137 = vpop.f32.mrb[0].mxu0
      %8138 = vmatprep.mubr.f32.mxu0 0.0
      %8139 = vmatmul.mubr.f32.gmra.mrb[0].mxu0 %v6521
      %v8140 = vpop.f32.mrb[0].mxu0
      %v8141 = vadd.f32 0.0, %v8140
      %v8142 = vpop.f32.mrb[0].mxu0
      %8143 = vmatprep.mubr.f32.mxu0 0.0
      %8144 = vmatmul.mubr.f32.gmra.mrb[0].mxu0 %v6524
      %v8145 = vpop.f32.mrb[0].mxu0
      %v8146 = vadd.f32 0.0, %v8145
      %v8147 = vpop.f32.mrb[0].mxu0
      %8148 = vmatprep.mubr.f32.mxu0 0.0
      %8149 = vmatmul.mubr.f32.gmra.mrb[0].mxu0 %v6527
      %v8150 = vpop.f32.mrb[0].mxu0
      %v8151 = vadd.f32 0.0, %v8150
      %v8152 = vpop.f32.mrb[0].mxu0
      %8153 = vmatprep.mubr.f32.mxu0 0.0
      %8154 = vmatmul.mubr.f32.gmra.mrb[0].mxu0 %v6530
      %v8155 = vpop.f32.mrb[0].mxu0
      %v8156 = vadd.f32 0.0, %v8155
      %v8157 = vpop.f32.mrb[0].mxu0
      %8158 = vmatprep.mubr.f32.mxu0 0.0
      %8159 = vmatmul.mubr.f32.gmra.mrb[0].mxu0 %v6533
      %v8160 = vpop.f32.mrb[0].mxu0
      %v8161 = vadd.f32 0.0, %v8160
      %v8162 = vpop.f32.mrb[0].mxu0
      %8163 = vmatprep.mubr.f32.mxu0 0.0
      %8164 = vmatmul.mubr.f32.gmra.mrb[0].mxu0 %v6536
      %v8165 = vpop.f32.mrb[0].mxu0
      %v8166 = vadd.f32 0.0, %v8165
      %v8167 = vpop.f32.mrb[0].mxu0
      %8168 = vmatprep.mubr.f32.mxu0 0.0
      %8169 = vmatmul.mubr.f32.gmra.mrb[0].mxu0 %v6539
      %v8170 = vpop.f32.mrb[0].mxu0
      %v8171 = vadd.f32 0.0, %v8170
      %v8172 = vpop.f32.mrb[0].mxu0
      %8173 = vmatprep.mubr.f32.mxu0 0.0
      %8174 = vmatmul.mubr.f32.gmra.mrb[0].mxu0 %v6542
      %v8175 = vpop.f32.mrb[0].mxu0
      %v8176 = vadd.f32 0.0, %v8175
      %v8177 = vpop.f32.mrb[0].mxu0
      %8178 = vmatprep.mubr.f32.mxu0 0.0
      %8179 = vmatmul.mubr.f32.gmra.mrb[0].mxu0 %v6545
      %v8180 = vpop.f32.mrb[0].mxu0
      %v8181 = vadd.f32 0.0, %v8180
      %v8182 = vpop.f32.mrb[0].mxu0
      %8183 = vmatprep.mubr.f32.mxu0 0.0
      %8184 = vmatmul.mubr.f32.gmra.mrb[0].mxu0 %v6548
      %v8185 = vpop.f32.mrb[0].mxu0
      %v8186 = vadd.f32 0.0, %v8185
      %v8187 = vpop.f32.mrb[0].mxu0
      %8188 = vmatprep.mubr.f32.mxu0 0.0
      %8189 = vmatmul.mubr.f32.gmra.mrb[0].mxu0 %v6551
      %v8190 = vpop.f32.mrb[0].mxu0
      %v8191 = vadd.f32 0.0, %v8190
      %v8192 = vpop.f32.mrb[0].mxu0
      %8193 = vmatprep.mubr.f32.mxu0 0.0
      %8194 = vmatmul.mubr.f32.gmra.mrb[0].mxu0 %v6554
      %v8195 = vpop.f32.mrb[0].mxu0
      %v8196 = vadd.f32 0.0, %v8195
      %v8197 = vpop.f32.mrb[0].mxu0
      %8198 = vdwg.mxu0
      %v8199 = vadd.f32 %v7966, %v8061
      %v8200 = vadd.f32 %v7967, %v8066
      %v8201 = vadd.f32 %v7968, %v8071
      %v8202 = vadd.f32 %v7969, %v8076
      %v8203 = vadd.f32 %v7970, %v8081
      %v8204 = vadd.f32 %v7971, %v8086
      %v8205 = vadd.f32 %v7972, %v8091
      %v8206 = vadd.f32 %v7973, %v8096
      %v8207 = vadd.f32 %v7974, %v8101
      %v8208 = vadd.f32 %v7975, %v8106
      %v8209 = vadd.f32 %v7976, %v8111
      %v8210 = vadd.f32 %v7977, %v8116
      %v8211 = vadd.f32 %v7978, %v8121
      %v8212 = vadd.f32 %v7979, %v8126
      %v8213 = vadd.f32 %v7980, %v8131
      %v8214 = vadd.f32 %v7981, %v8136
      %v8215 = vadd.f32 %v7982, %v8141
      %v8216 = vadd.f32 %v7983, %v8146
      %v8217 = vadd.f32 %v7984, %v8151
      %v8218 = vadd.f32 %v7985, %v8156
      %v8219 = vadd.f32 %v7986, %v8161
      %v8220 = vadd.f32 %v7987, %v8166
      %v8221 = vadd.f32 %v7988, %v8171
      %v8222 = vadd.f32 %v7989, %v8176
      %v8223 = vadd.f32 %v7990, %v8181
      %v8224 = vadd.f32 %v7991, %v8186
      %v8225 = vadd.f32 %v7992, %v8191
      %v8226 = vadd.f32 %v7993, %v8196
      %v8227 = vld [vmem:[#allocation2 + $0x10] sm:$0xff]
      %v8228 = vld [vmem:[#allocation2 + $0x18] sm:$0xff]
      %v8229 = vld [vmem:[#allocation2 + $0x20] sm:$0xff]
      %v8230 = vld [vmem:[#allocation2 + $0x28] sm:$0xff]
      %v8231 = vld [vmem:[#allocation2 + $0x30] sm:$0xff]
      %v8232 = vld [vmem:[#allocation2 + $0x38] sm:$0xff]
      %v8233 = vld [vmem:[#allocation2 + $0x40] sm:$0xff]
      %v8234 = vld [vmem:[#allocation2 + $0x48] sm:$0xff]
      %v8235 = vld [vmem:[#allocation2 + $0x50] sm:$0xff]
      %v8236 = vld [vmem:[#allocation2 + $0x58] sm:$0xff]
      %v8237 = vld [vmem:[#allocation2 + $0x60] sm:$0xff]
      %v8238 = vld [vmem:[#allocation2 + $0x68] sm:$0xff]
      %v8239 = vld [vmem:[#allocation2 + $0x70] sm:$0xff]
      %v8240 = vld [vmem:[#allocation2 + $0x78] sm:$0xff]
      %v8241 = vld [vmem:[#allocation2 + $0x80] sm:$0xff]
      %v8242 = vld [vmem:[#allocation2 + $0x88] sm:$0xff]
      %v8243 = vld [vmem:[#allocation2 + $0x90] sm:$0xff]
      %v8244 = vld [vmem:[#allocation2 + $0x98] sm:$0xff]
      %v8245 = vld [vmem:[#allocation2 + $0xa0] sm:$0xff]
      %v8246 = vld [vmem:[#allocation2 + $0xa8] sm:$0xff]
      %v8247 = vld [vmem:[#allocation2 + $0xb0] sm:$0xff]
      %v8248 = vld [vmem:[#allocation2 + $0xb8] sm:$0xff]
      %v8249 = vld [vmem:[#allocation2 + $0xc0] sm:$0xff]
      %v8250 = vld [vmem:[#allocation2 + $0xc8] sm:$0xff]
      %v8251 = vld [vmem:[#allocation2 + $0xd0] sm:$0xff]
      %v8252 = vld [vmem:[#allocation2 + $0xd8] sm:$0xff]
      %v8253 = vld [vmem:[#allocation2 + $0xe0] sm:$0xff]
      %v8254 = vld [vmem:[#allocation2 + $0xe8] sm:$0xff]
      %v8256 = vsel %vm1284, %v8227, 0
      %v8259 = vsel %vm1284, %v8228, 0
      %v8262 = vsel %vm1284, %v8229, 0
      %v8265 = vsel %vm1284, %v8230, 0
      %v8268 = vsel %vm1284, %v8231, 0
      %v8271 = vsel %vm1284, %v8232, 0
      %v8274 = vsel %vm1284, %v8233, 0
      %v8277 = vsel %vm1284, %v8234, 0
      %v8280 = vsel %vm1284, %v8235, 0
      %v8283 = vsel %vm1284, %v8236, 0
      %v8286 = vsel %vm1284, %v8237, 0
      %v8289 = vsel %vm1284, %v8238, 0
      %v8292 = vsel %vm1284, %v8239, 0
      %v8295 = vsel %vm1284, %v8240, 0
      %v8298 = vsel %vm1284, %v8241, 0
      %v8301 = vsel %vm1284, %v8242, 0
      %v8304 = vsel %vm1284, %v8243, 0
      %v8307 = vsel %vm1284, %v8244, 0
      %v8310 = vsel %vm1284, %v8245, 0
      %v8313 = vsel %vm1284, %v8246, 0
      %v8316 = vsel %vm1284, %v8247, 0
      %v8319 = vsel %vm1284, %v8248, 0
      %v8322 = vsel %vm1284, %v8249, 0
      %v8325 = vsel %vm1284, %v8250, 0
      %v8328 = vsel %vm1284, %v8251, 0
      %v8331 = vsel %vm1284, %v8252, 0
      %v8334 = vsel %vm1284, %v8253, 0
      %v8337 = vsel %vm1284, %v8254, 0
      %8339 = vmatprep.subr.mxu0 0.0
      %8340 = vmatpush1.msra.mxu0 %v6119
      %8341 = vmatprep.subr.mxu0 0.0
      %8342 = vmatpush1.msra.mxu0 %v6120
      %8343 = vmatprep.subr.mxu0 0.0
      %8344 = vmatpush1.msra.mxu0 %v6121
      %8345 = vmatprep.subr.mxu0 0.0
      %8346 = vmatpush1.msra.mxu0 %v6122
      %8347 = vmatprep.subr.mxu0 0.0
      %8348 = vmatpush1.msra.mxu0 0.0
      %8349 = vmatprep.subr.mxu0 0.0
      %8350 = vmatpush1.msra.mxu0 0.0
      %8351 = vmatprep.subr.mxu0 0.0
      %8352 = vmatpush1.msra.mxu0 0.0
      %8353 = vmatprep.subr.mxu0 0.0
      %8354 = vmatpush1.msra.mxu0 0.0
      %8355 = vmatprep.subr.mxu0 0.0
      %8356 = vmatpush1.msra.mxu0 0.0
      %8357 = vmatprep.subr.mxu0 0.0
      %8358 = vmatpush1.msra.mxu0 0.0
      %8359 = vmatprep.subr.mxu0 0.0
      %8360 = vmatpush1.msra.mxu0 0.0
      %8361 = vmatprep.subr.mxu0 0.0
      %8362 = vmatpush1.msra.mxu0 0.0
      %8363 = vmatprep.subr.mxu0 0.0
      %8364 = vmatpush1.msra.mxu0 0.0
      %8365 = vmatprep.subr.mxu0 0.0
      %8366 = vmatpush1.msra.mxu0 0.0
      %8367 = vmatprep.subr.mxu0 0.0
      %8368 = vmatpush1.msra.mxu0 0.0
      %8369 = vmatprep.subr.mxu0 0.0
      %8370 = vmatpush1.msra.mxu0 0.0
      %8371 = vmatprep.subr.mxu0 0.0
      %8372 = vmatpush1.msra.mxu0 0.0
      %8373 = vmatprep.subr.mxu0 0.0
      %8374 = vmatpush1.msra.mxu0 0.0
      %8375 = vmatprep.subr.mxu0 0.0
      %8376 = vmatpush1.msra.mxu0 0.0
      %8377 = vmatprep.subr.mxu0 0.0
      %8378 = vmatpush1.msra.mxu0 0.0
      %8379 = vmatprep.subr.mxu0 0.0
      %8380 = vmatpush1.msra.mxu0 0.0
      %8381 = vmatprep.subr.mxu0 0.0
      %8382 = vmatpush1.msra.mxu0 0.0
      %8383 = vmatprep.subr.mxu0 0.0
      %8384 = vmatpush1.msra.mxu0 0.0
      %8385 = vmatprep.subr.mxu0 0.0
      %8386 = vmatpush1.msra.mxu0 0.0
      %8387 = vmatprep.subr.mxu0 0.0
      %8388 = vmatpush1.msra.mxu0 0.0
      %8389 = vmatprep.subr.mxu0 0.0
      %8390 = vmatpush1.msra.mxu0 0.0
      %8391 = vmatprep.subr.mxu0 0.0
      %8392 = vmatpush1.msra.mxu0 0.0
      %8393 = vmatprep.subr.mxu0 0.0
      %8394 = vmatpush1.msra.mxu0 0.0
      %8395 = vmatprep.subr.mxu0 0.0
      %8396 = vmatpush1.msra.mxu0 0.0
      %8397 = vmatprep.subr.mxu0 0.0
      %8398 = vmatpush1.msra.mxu0 0.0
      %8399 = vmatprep.subr.mxu0 0.0
      %8400 = vmatpush1.msra.mxu0 0.0
      %8401 = vmatprep.subr.mxu0 0.0
      %8402 = vmatpush1.msra.mxu0 0.0
      %8403 = vmatprep.mubr.f32.mxu0 0.0
      %8404 = vmatmul.mubr.f32.gmra.mrb[0].mxu0 %v8256
      %v8405 = vpop.f32.mrb[0].mxu0
      %v8406 = vadd.f32 0.0, %v8405
      %v8407 = vpop.f32.mrb[0].mxu0
      %8408 = vmatprep.mubr.f32.mxu0 0.0
      %8409 = vmatmul.mubr.f32.gmra.mrb[0].mxu0 %v8259
      %v8410 = vpop.f32.mrb[0].mxu0
      %v8411 = vadd.f32 0.0, %v8410
      %v8412 = vpop.f32.mrb[0].mxu0
      %8413 = vmatprep.mubr.f32.mxu0 0.0
      %8414 = vmatmul.mubr.f32.gmra.mrb[0].mxu0 %v8262
      %v8415 = vpop.f32.mrb[0].mxu0
      %v8416 = vadd.f32 0.0, %v8415
      %v8417 = vpop.f32.mrb[0].mxu0
      %8418 = vmatprep.mubr.f32.mxu0 0.0
      %8419 = vmatmul.mubr.f32.gmra.mrb[0].mxu0 %v8265
      %v8420 = vpop.f32.mrb[0].mxu0
      %v8421 = vadd.f32 0.0, %v8420
      %v8422 = vpop.f32.mrb[0].mxu0
      %8423 = vmatprep.mubr.f32.mxu0 0.0
      %8424 = vmatmul.mubr.f32.gmra.mrb[0].mxu0 %v8268
      %v8425 = vpop.f32.mrb[0].mxu0
      %v8426 = vadd.f32 0.0, %v8425
      %v8427 = vpop.f32.mrb[0].mxu0
      %8428 = vmatprep.mubr.f32.mxu0 0.0
      %8429 = vmatmul.mubr.f32.gmra.mrb[0].mxu0 %v8271
      %v8430 = vpop.f32.mrb[0].mxu0
      %v8431 = vadd.f32 0.0, %v8430
      %v8432 = vpop.f32.mrb[0].mxu0
      %8433 = vmatprep.mubr.f32.mxu0 0.0
      %8434 = vmatmul.mubr.f32.gmra.mrb[0].mxu0 %v8274
      %v8435 = vpop.f32.mrb[0].mxu0
      %v8436 = vadd.f32 0.0, %v8435
      %v8437 = vpop.f32.mrb[0].mxu0
      %8438 = vmatprep.mubr.f32.mxu0 0.0
      %8439 = vmatmul.mubr.f32.gmra.mrb[0].mxu0 %v8277
      %v8440 = vpop.f32.mrb[0].mxu0
      %v8441 = vadd.f32 0.0, %v8440
      %v8442 = vpop.f32.mrb[0].mxu0
      %8443 = vmatprep.mubr.f32.mxu0 0.0
      %8444 = vmatmul.mubr.f32.gmra.mrb[0].mxu0 %v8280
      %v8445 = vpop.f32.mrb[0].mxu0
      %v8446 = vadd.f32 0.0, %v8445
      %v8447 = vpop.f32.mrb[0].mxu0
      %8448 = vmatprep.mubr.f32.mxu0 0.0
      %8449 = vmatmul.mubr.f32.gmra.mrb[0].mxu0 %v8283
      %v8450 = vpop.f32.mrb[0].mxu0
      %v8451 = vadd.f32 0.0, %v8450
      %v8452 = vpop.f32.mrb[0].mxu0
      %8453 = vmatprep.mubr.f32.mxu0 0.0
      %8454 = vmatmul.mubr.f32.gmra.mrb[0].mxu0 %v8286
      %v8455 = vpop.f32.mrb[0].mxu0
      %v8456 = vadd.f32 0.0, %v8455
      %v8457 = vpop.f32.mrb[0].mxu0
      %8458 = vmatprep.mubr.f32.mxu0 0.0
      %8459 = vmatmul.mubr.f32.gmra.mrb[0].mxu0 %v8289
      %v8460 = vpop.f32.mrb[0].mxu0
      %v8461 = vadd.f32 0.0, %v8460
      %v8462 = vpop.f32.mrb[0].mxu0
      %8463 = vmatprep.mubr.f32.mxu0 0.0
      %8464 = vmatmul.mubr.f32.gmra.mrb[0].mxu0 %v8292
      %v8465 = vpop.f32.mrb[0].mxu0
      %v8466 = vadd.f32 0.0, %v8465
      %v8467 = vpop.f32.mrb[0].mxu0
      %8468 = vmatprep.mubr.f32.mxu0 0.0
      %8469 = vmatmul.mubr.f32.gmra.mrb[0].mxu0 %v8295
      %v8470 = vpop.f32.mrb[0].mxu0
      %v8471 = vadd.f32 0.0, %v8470
      %v8472 = vpop.f32.mrb[0].mxu0
      %8473 = vmatprep.mubr.f32.mxu0 0.0
      %8474 = vmatmul.mubr.f32.gmra.mrb[0].mxu0 %v8298
      %v8475 = vpop.f32.mrb[0].mxu0
      %v8476 = vadd.f32 0.0, %v8475
      %v8477 = vpop.f32.mrb[0].mxu0
      %8478 = vmatprep.mubr.f32.mxu0 0.0
      %8479 = vmatmul.mubr.f32.gmra.mrb[0].mxu0 %v8301
      %v8480 = vpop.f32.mrb[0].mxu0
      %v8481 = vadd.f32 0.0, %v8480
      %v8482 = vpop.f32.mrb[0].mxu0
      %8483 = vmatprep.mubr.f32.mxu0 0.0
      %8484 = vmatmul.mubr.f32.gmra.mrb[0].mxu0 %v8304
      %v8485 = vpop.f32.mrb[0].mxu0
      %v8486 = vadd.f32 0.0, %v8485
      %v8487 = vpop.f32.mrb[0].mxu0
      %8488 = vmatprep.mubr.f32.mxu0 0.0
      %8489 = vmatmul.mubr.f32.gmra.mrb[0].mxu0 %v8307
      %v8490 = vpop.f32.mrb[0].mxu0
      %v8491 = vadd.f32 0.0, %v8490
      %v8492 = vpop.f32.mrb[0].mxu0
      %8493 = vmatprep.mubr.f32.mxu0 0.0
      %8494 = vmatmul.mubr.f32.gmra.mrb[0].mxu0 %v8310
      %v8495 = vpop.f32.mrb[0].mxu0
      %v8496 = vadd.f32 0.0, %v8495
      %v8497 = vpop.f32.mrb[0].mxu0
      %8498 = vmatprep.mubr.f32.mxu0 0.0
      %8499 = vmatmul.mubr.f32.gmra.mrb[0].mxu0 %v8313
      %v8500 = vpop.f32.mrb[0].mxu0
      %v8501 = vadd.f32 0.0, %v8500
      %v8502 = vpop.f32.mrb[0].mxu0
      %8503 = vmatprep.mubr.f32.mxu0 0.0
      %8504 = vmatmul.mubr.f32.gmra.mrb[0].mxu0 %v8316
      %v8505 = vpop.f32.mrb[0].mxu0
      %v8506 = vadd.f32 0.0, %v8505
      %v8507 = vpop.f32.mrb[0].mxu0
      %8508 = vmatprep.mubr.f32.mxu0 0.0
      %8509 = vmatmul.mubr.f32.gmra.mrb[0].mxu0 %v8319
      %v8510 = vpop.f32.mrb[0].mxu0
      %v8511 = vadd.f32 0.0, %v8510
      %v8512 = vpop.f32.mrb[0].mxu0
      %8513 = vmatprep.mubr.f32.mxu0 0.0
      %8514 = vmatmul.mubr.f32.gmra.mrb[0].mxu0 %v8322
      %v8515 = vpop.f32.mrb[0].mxu0
      %v8516 = vadd.f32 0.0, %v8515
      %v8517 = vpop.f32.mrb[0].mxu0
      %8518 = vmatprep.mubr.f32.mxu0 0.0
      %8519 = vmatmul.mubr.f32.gmra.mrb[0].mxu0 %v8325
      %v8520 = vpop.f32.mrb[0].mxu0
      %v8521 = vadd.f32 0.0, %v8520
      %v8522 = vpop.f32.mrb[0].mxu0
      %8523 = vmatprep.mubr.f32.mxu0 0.0
      %8524 = vmatmul.mubr.f32.gmra.mrb[0].mxu0 %v8328
      %v8525 = vpop.f32.mrb[0].mxu0
      %v8526 = vadd.f32 0.0, %v8525
      %v8527 = vpop.f32.mrb[0].mxu0
      %8528 = vmatprep.mubr.f32.mxu0 0.0
      %8529 = vmatmul.mubr.f32.gmra.mrb[0].mxu0 %v8331
      %v8530 = vpop.f32.mrb[0].mxu0
      %v8531 = vadd.f32 0.0, %v8530
      %v8532 = vpop.f32.mrb[0].mxu0
      %8533 = vmatprep.mubr.f32.mxu0 0.0
      %8534 = vmatmul.mubr.f32.gmra.mrb[0].mxu0 %v8334
      %v8535 = vpop.f32.mrb[0].mxu0
      %v8536 = vadd.f32 0.0, %v8535
      %v8537 = vpop.f32.mrb[0].mxu0
      %8538 = vmatprep.mubr.f32.mxu0 0.0
      %8539 = vmatmul.mubr.f32.gmra.mrb[0].mxu0 %v8337
      %v8540 = vpop.f32.mrb[0].mxu0
      %v8541 = vadd.f32 0.0, %v8540
      %v8542 = vpop.f32.mrb[0].mxu0
      %8543 = vdwg.mxu0
      %v8544 = vadd.f32 %v8199, %v8406
      %v8545 = vadd.f32 %v8200, %v8411
      %v8546 = vadd.f32 %v8201, %v8416
      %v8547 = vadd.f32 %v8202, %v8421
      %v8548 = vadd.f32 %v8203, %v8426
      %v8549 = vadd.f32 %v8204, %v8431
      %v8550 = vadd.f32 %v8205, %v8436
      %v8551 = vadd.f32 %v8206, %v8441
      %v8552 = vadd.f32 %v8207, %v8446
      %v8553 = vadd.f32 %v8208, %v8451
      %v8554 = vadd.f32 %v8209, %v8456
      %v8555 = vadd.f32 %v8210, %v8461
      %v8556 = vadd.f32 %v8211, %v8466
      %v8557 = vadd.f32 %v8212, %v8471
      %v8558 = vadd.f32 %v8213, %v8476
      %v8559 = vadd.f32 %v8214, %v8481
      %v8560 = vadd.f32 %v8215, %v8486
      %v8561 = vadd.f32 %v8216, %v8491
      %v8562 = vadd.f32 %v8217, %v8496
      %v8563 = vadd.f32 %v8218, %v8501
      %v8564 = vadd.f32 %v8219, %v8506
      %v8565 = vadd.f32 %v8220, %v8511
      %v8566 = vadd.f32 %v8221, %v8516
      %v8567 = vadd.f32 %v8222, %v8521
      %v8568 = vadd.f32 %v8223, %v8526
      %v8569 = vadd.f32 %v8224, %v8531
      %v8570 = vadd.f32 %v8225, %v8536
      %v8571 = vadd.f32 %v8226, %v8541
      %v8572 = vld [vmem:[#allocation2 + $0x100] sm:$0xff]
      %v8573 = vld [vmem:[#allocation2 + $0x108] sm:$0xff]
      %v8574 = vld [vmem:[#allocation2 + $0x110] sm:$0xff]
      %v8575 = vld [vmem:[#allocation2 + $0x118] sm:$0xff]
      %v8576 = vld [vmem:[#allocation2 + $0x120] sm:$0xff]
      %v8577 = vld [vmem:[#allocation2 + $0x128] sm:$0xff]
      %v8578 = vld [vmem:[#allocation2 + $0x130] sm:$0xff]
      %v8579 = vld [vmem:[#allocation2 + $0x138] sm:$0xff]
      %v8580 = vld [vmem:[#allocation2 + $0x140] sm:$0xff]
      %v8581 = vld [vmem:[#allocation2 + $0x148] sm:$0xff]
      %v8582 = vld [vmem:[#allocation2 + $0x150] sm:$0xff]
      %v8583 = vld [vmem:[#allocation2 + $0x158] sm:$0xff]
      %v8584 = vld [vmem:[#allocation2 + $0x160] sm:$0xff]
      %v8585 = vld [vmem:[#allocation2 + $0x168] sm:$0xff]
      %v8586 = vld [vmem:[#allocation2 + $0x170] sm:$0xff]
      %v8587 = vld [vmem:[#allocation2 + $0x178] sm:$0xff]
      %v8588 = vld [vmem:[#allocation2 + $0x180] sm:$0xff]
      %v8589 = vld [vmem:[#allocation2 + $0x188] sm:$0xff]
      %v8590 = vld [vmem:[#allocation2 + $0x190] sm:$0xff]
      %v8591 = vld [vmem:[#allocation2 + $0x198] sm:$0xff]
      %v8592 = vld [vmem:[#allocation2 + $0x1a0] sm:$0xff]
      %v8593 = vld [vmem:[#allocation2 + $0x1a8] sm:$0xff]
      %v8594 = vld [vmem:[#allocation2 + $0x1b0] sm:$0xff]
      %v8595 = vld [vmem:[#allocation2 + $0x1b8] sm:$0xff]
      %v8596 = vld [vmem:[#allocation2 + $0x1c0] sm:$0xff]
      %v8597 = vld [vmem:[#allocation2 + $0x1c8] sm:$0xff]
      %v8598 = vld [vmem:[#allocation2 + $0x1d0] sm:$0xff]
      %v8599 = vld [vmem:[#allocation2 + $0x1d8] sm:$0xff]
      %v8601 = vsel %vm1284, %v8572, 0
      %v8604 = vsel %vm1284, %v8573, 0
      %v8607 = vsel %vm1284, %v8574, 0
      %v8610 = vsel %vm1284, %v8575, 0
      %v8613 = vsel %vm1284, %v8576, 0
      %v8616 = vsel %vm1284, %v8577, 0
      %v8619 = vsel %vm1284, %v8578, 0
      %v8622 = vsel %vm1284, %v8579, 0
      %v8625 = vsel %vm1284, %v8580, 0
      %v8628 = vsel %vm1284, %v8581, 0
      %v8631 = vsel %vm1284, %v8582, 0
      %v8634 = vsel %vm1284, %v8583, 0
      %v8637 = vsel %vm1284, %v8584, 0
      %v8640 = vsel %vm1284, %v8585, 0
      %v8643 = vsel %vm1284, %v8586, 0
      %v8646 = vsel %vm1284, %v8587, 0
      %v8649 = vsel %vm1284, %v8588, 0
      %v8652 = vsel %vm1284, %v8589, 0
      %v8655 = vsel %vm1284, %v8590, 0
      %v8658 = vsel %vm1284, %v8591, 0
      %v8661 = vsel %vm1284, %v8592, 0
      %v8664 = vsel %vm1284, %v8593, 0
      %v8667 = vsel %vm1284, %v8594, 0
      %v8670 = vsel %vm1284, %v8595, 0
      %v8673 = vsel %vm1284, %v8596, 0
      %v8676 = vsel %vm1284, %v8597, 0
      %v8679 = vsel %vm1284, %v8598, 0
      %v8682 = vsel %vm1284, %v8599, 0
      %8684 = vmatprep.subr.mxu0 0.0
      %8685 = vmatpush1.msra.mxu0 %v6468
      %8686 = vmatprep.subr.mxu0 0.0
      %8687 = vmatpush1.msra.mxu0 %v6469
      %8688 = vmatprep.subr.mxu0 0.0
      %8689 = vmatpush1.msra.mxu0 %v6470
      %8690 = vmatprep.subr.mxu0 0.0
      %8691 = vmatpush1.msra.mxu0 %v6471
      %8692 = vmatprep.subr.mxu0 0.0
      %8693 = vmatpush1.msra.mxu0 0.0
      %8694 = vmatprep.subr.mxu0 0.0
      %8695 = vmatpush1.msra.mxu0 0.0
      %8696 = vmatprep.subr.mxu0 0.0
      %8697 = vmatpush1.msra.mxu0 0.0
      %8698 = vmatprep.subr.mxu0 0.0
      %8699 = vmatpush1.msra.mxu0 0.0
      %8700 = vmatprep.subr.mxu0 0.0
      %8701 = vmatpush1.msra.mxu0 0.0
      %8702 = vmatprep.subr.mxu0 0.0
      %8703 = vmatpush1.msra.mxu0 0.0
      %8704 = vmatprep.subr.mxu0 0.0
      %8705 = vmatpush1.msra.mxu0 0.0
      %8706 = vmatprep.subr.mxu0 0.0
      %8707 = vmatpush1.msra.mxu0 0.0
      %8708 = vmatprep.subr.mxu0 0.0
      %8709 = vmatpush1.msra.mxu0 0.0
      %8710 = vmatprep.subr.mxu0 0.0
      %8711 = vmatpush1.msra.mxu0 0.0
      %8712 = vmatprep.subr.mxu0 0.0
      %8713 = vmatpush1.msra.mxu0 0.0
      %8714 = vmatprep.subr.mxu0 0.0
      %8715 = vmatpush1.msra.mxu0 0.0
      %8716 = vmatprep.subr.mxu0 0.0
      %8717 = vmatpush1.msra.mxu0 0.0
      %8718 = vmatprep.subr.mxu0 0.0
      %8719 = vmatpush1.msra.mxu0 0.0
      %8720 = vmatprep.subr.mxu0 0.0
      %8721 = vmatpush1.msra.mxu0 0.0
      %8722 = vmatprep.subr.mxu0 0.0
      %8723 = vmatpush1.msra.mxu0 0.0
      %8724 = vmatprep.subr.mxu0 0.0
      %8725 = vmatpush1.msra.mxu0 0.0
      %8726 = vmatprep.subr.mxu0 0.0
      %8727 = vmatpush1.msra.mxu0 0.0
      %8728 = vmatprep.subr.mxu0 0.0
      %8729 = vmatpush1.msra.mxu0 0.0
      %8730 = vmatprep.subr.mxu0 0.0
      %8731 = vmatpush1.msra.mxu0 0.0
      %8732 = vmatprep.subr.mxu0 0.0
      %8733 = vmatpush1.msra.mxu0 0.0
      %8734 = vmatprep.subr.mxu0 0.0
      %8735 = vmatpush1.msra.mxu0 0.0
      %8736 = vmatprep.subr.mxu0 0.0
      %8737 = vmatpush1.msra.mxu0 0.0
      %8738 = vmatprep.subr.mxu0 0.0
      %8739 = vmatpush1.msra.mxu0 0.0
      %8740 = vmatprep.subr.mxu0 0.0
      %8741 = vmatpush1.msra.mxu0 0.0
      %8742 = vmatprep.subr.mxu0 0.0
      %8743 = vmatpush1.msra.mxu0 0.0
      %8744 = vmatprep.subr.mxu0 0.0
      %8745 = vmatpush1.msra.mxu0 0.0
      %8746 = vmatprep.subr.mxu0 0.0
      %8747 = vmatpush1.msra.mxu0 0.0
      %8748 = vmatprep.mubr.f32.mxu0 0.0
      %8749 = vmatmul.mubr.f32.gmra.mrb[0].mxu0 %v8601
      %v8750 = vpop.f32.mrb[0].mxu0
      %v8751 = vadd.f32 0.0, %v8750
      %v8752 = vpop.f32.mrb[0].mxu0
      %8753 = vmatprep.mubr.f32.mxu0 0.0
      %8754 = vmatmul.mubr.f32.gmra.mrb[0].mxu0 %v8604
      %v8755 = vpop.f32.mrb[0].mxu0
      %v8756 = vadd.f32 0.0, %v8755
      %v8757 = vpop.f32.mrb[0].mxu0
      %8758 = vmatprep.mubr.f32.mxu0 0.0
      %8759 = vmatmul.mubr.f32.gmra.mrb[0].mxu0 %v8607
      %v8760 = vpop.f32.mrb[0].mxu0
      %v8761 = vadd.f32 0.0, %v8760
      %v8762 = vpop.f32.mrb[0].mxu0
      %8763 = vmatprep.mubr.f32.mxu0 0.0
      %8764 = vmatmul.mubr.f32.gmra.mrb[0].mxu0 %v8610
      %v8765 = vpop.f32.mrb[0].mxu0
      %v8766 = vadd.f32 0.0, %v8765
      %v8767 = vpop.f32.mrb[0].mxu0
      %8768 = vmatprep.mubr.f32.mxu0 0.0
      %8769 = vmatmul.mubr.f32.gmra.mrb[0].mxu0 %v8613
      %v8770 = vpop.f32.mrb[0].mxu0
      %v8771 = vadd.f32 0.0, %v8770
      %v8772 = vpop.f32.mrb[0].mxu0
      %8773 = vmatprep.mubr.f32.mxu0 0.0
      %8774 = vmatmul.mubr.f32.gmra.mrb[0].mxu0 %v8616
      %v8775 = vpop.f32.mrb[0].mxu0
      %v8776 = vadd.f32 0.0, %v8775
      %v8777 = vpop.f32.mrb[0].mxu0
      %8778 = vmatprep.mubr.f32.mxu0 0.0
      %8779 = vmatmul.mubr.f32.gmra.mrb[0].mxu0 %v8619
      %v8780 = vpop.f32.mrb[0].mxu0
      %v8781 = vadd.f32 0.0, %v8780
      %v8782 = vpop.f32.mrb[0].mxu0
      %8783 = vmatprep.mubr.f32.mxu0 0.0
      %8784 = vmatmul.mubr.f32.gmra.mrb[0].mxu0 %v8622
      %v8785 = vpop.f32.mrb[0].mxu0
      %v8786 = vadd.f32 0.0, %v8785
      %v8787 = vpop.f32.mrb[0].mxu0
      %8788 = vmatprep.mubr.f32.mxu0 0.0
      %8789 = vmatmul.mubr.f32.gmra.mrb[0].mxu0 %v8625
      %v8790 = vpop.f32.mrb[0].mxu0
      %v8791 = vadd.f32 0.0, %v8790
      %v8792 = vpop.f32.mrb[0].mxu0
      %8793 = vmatprep.mubr.f32.mxu0 0.0
      %8794 = vmatmul.mubr.f32.gmra.mrb[0].mxu0 %v8628
      %v8795 = vpop.f32.mrb[0].mxu0
      %v8796 = vadd.f32 0.0, %v8795
      %v8797 = vpop.f32.mrb[0].mxu0
      %8798 = vmatprep.mubr.f32.mxu0 0.0
      %8799 = vmatmul.mubr.f32.gmra.mrb[0].mxu0 %v8631
      %v8800 = vpop.f32.mrb[0].mxu0
      %v8801 = vadd.f32 0.0, %v8800
      %v8802 = vpop.f32.mrb[0].mxu0
      %8803 = vmatprep.mubr.f32.mxu0 0.0
      %8804 = vmatmul.mubr.f32.gmra.mrb[0].mxu0 %v8634
      %v8805 = vpop.f32.mrb[0].mxu0
      %v8806 = vadd.f32 0.0, %v8805
      %v8807 = vpop.f32.mrb[0].mxu0
      %8808 = vmatprep.mubr.f32.mxu0 0.0
      %8809 = vmatmul.mubr.f32.gmra.mrb[0].mxu0 %v8637
      %v8810 = vpop.f32.mrb[0].mxu0
      %v8811 = vadd.f32 0.0, %v8810
      %v8812 = vpop.f32.mrb[0].mxu0
      %8813 = vmatprep.mubr.f32.mxu0 0.0
      %8814 = vmatmul.mubr.f32.gmra.mrb[0].mxu0 %v8640
      %v8815 = vpop.f32.mrb[0].mxu0
      %v8816 = vadd.f32 0.0, %v8815
      %v8817 = vpop.f32.mrb[0].mxu0
      %8818 = vmatprep.mubr.f32.mxu0 0.0
      %8819 = vmatmul.mubr.f32.gmra.mrb[0].mxu0 %v8643
      %v8820 = vpop.f32.mrb[0].mxu0
      %v8821 = vadd.f32 0.0, %v8820
      %v8822 = vpop.f32.mrb[0].mxu0
      %8823 = vmatprep.mubr.f32.mxu0 0.0
      %8824 = vmatmul.mubr.f32.gmra.mrb[0].mxu0 %v8646
      %v8825 = vpop.f32.mrb[0].mxu0
      %v8826 = vadd.f32 0.0, %v8825
      %v8827 = vpop.f32.mrb[0].mxu0
      %8828 = vmatprep.mubr.f32.mxu0 0.0
      %8829 = vmatmul.mubr.f32.gmra.mrb[0].mxu0 %v8649
      %v8830 = vpop.f32.mrb[0].mxu0
      %v8831 = vadd.f32 0.0, %v8830
      %v8832 = vpop.f32.mrb[0].mxu0
      %8833 = vmatprep.mubr.f32.mxu0 0.0
      %8834 = vmatmul.mubr.f32.gmra.mrb[0].mxu0 %v8652
      %v8835 = vpop.f32.mrb[0].mxu0
      %v8836 = vadd.f32 0.0, %v8835
      %v8837 = vpop.f32.mrb[0].mxu0
      %8838 = vmatprep.mubr.f32.mxu0 0.0
      %8839 = vmatmul.mubr.f32.gmra.mrb[0].mxu0 %v8655
      %v8840 = vpop.f32.mrb[0].mxu0
      %v8841 = vadd.f32 0.0, %v8840
      %v8842 = vpop.f32.mrb[0].mxu0
      %8843 = vmatprep.mubr.f32.mxu0 0.0
      %8844 = vmatmul.mubr.f32.gmra.mrb[0].mxu0 %v8658
      %v8845 = vpop.f32.mrb[0].mxu0
      %v8846 = vadd.f32 0.0, %v8845
      %v8847 = vpop.f32.mrb[0].mxu0
      %8848 = vmatprep.mubr.f32.mxu0 0.0
      %8849 = vmatmul.mubr.f32.gmra.mrb[0].mxu0 %v8661
      %v8850 = vpop.f32.mrb[0].mxu0
      %v8851 = vadd.f32 0.0, %v8850
      %v8852 = vpop.f32.mrb[0].mxu0
      %8853 = vmatprep.mubr.f32.mxu0 0.0
      %8854 = vmatmul.mubr.f32.gmra.mrb[0].mxu0 %v8664
      %v8855 = vpop.f32.mrb[0].mxu0
      %v8856 = vadd.f32 0.0, %v8855
      %v8857 = vpop.f32.mrb[0].mxu0
      %8858 = vmatprep.mubr.f32.mxu0 0.0
      %8859 = vmatmul.mubr.f32.gmra.mrb[0].mxu0 %v8667
      %v8860 = vpop.f32.mrb[0].mxu0
      %v8861 = vadd.f32 0.0, %v8860
      %v8862 = vpop.f32.mrb[0].mxu0
      %8863 = vmatprep.mubr.f32.mxu0 0.0
      %8864 = vmatmul.mubr.f32.gmra.mrb[0].mxu0 %v8670
      %v8865 = vpop.f32.mrb[0].mxu0
      %v8866 = vadd.f32 0.0, %v8865
      %v8867 = vpop.f32.mrb[0].mxu0
      %8868 = vmatprep.mubr.f32.mxu0 0.0
      %8869 = vmatmul.mubr.f32.gmra.mrb[0].mxu0 %v8673
      %v8870 = vpop.f32.mrb[0].mxu0
      %v8871 = vadd.f32 0.0, %v8870
      %v8872 = vpop.f32.mrb[0].mxu0
      %8873 = vmatprep.mubr.f32.mxu0 0.0
      %8874 = vmatmul.mubr.f32.gmra.mrb[0].mxu0 %v8676
      %v8875 = vpop.f32.mrb[0].mxu0
      %v8876 = vadd.f32 0.0, %v8875
      %v8877 = vpop.f32.mrb[0].mxu0
      %8878 = vmatprep.mubr.f32.mxu0 0.0
      %8879 = vmatmul.mubr.f32.gmra.mrb[0].mxu0 %v8679
      %v8880 = vpop.f32.mrb[0].mxu0
      %v8881 = vadd.f32 0.0, %v8880
      %v8882 = vpop.f32.mrb[0].mxu0
      %8883 = vmatprep.mubr.f32.mxu0 0.0
      %8884 = vmatmul.mubr.f32.gmra.mrb[0].mxu0 %v8682
      %v8885 = vpop.f32.mrb[0].mxu0
      %v8886 = vadd.f32 0.0, %v8885
      %v8887 = vpop.f32.mrb[0].mxu0
      %8888 = vdwg.mxu0
      %v8889 = vadd.f32 %v8544, %v8751
      %v8890 = vadd.f32 %v8545, %v8756
      %v8891 = vadd.f32 %v8546, %v8761
      %v8892 = vadd.f32 %v8547, %v8766
      %v8893 = vadd.f32 %v8548, %v8771
      %v8894 = vadd.f32 %v8549, %v8776
      %v8895 = vadd.f32 %v8550, %v8781
      %v8896 = vadd.f32 %v8551, %v8786
      %v8897 = vadd.f32 %v8552, %v8791
      %v8898 = vadd.f32 %v8553, %v8796
      %v8899 = vadd.f32 %v8554, %v8801
      %v8900 = vadd.f32 %v8555, %v8806
      %v8901 = vadd.f32 %v8556, %v8811
      %v8902 = vadd.f32 %v8557, %v8816
      %v8903 = vadd.f32 %v8558, %v8821
      %v8904 = vadd.f32 %v8559, %v8826
      %v8905 = vadd.f32 %v8560, %v8831
      %v8906 = vadd.f32 %v8561, %v8836
      %v8907 = vadd.f32 %v8562, %v8841
      %v8908 = vadd.f32 %v8563, %v8846
      %v8909 = vadd.f32 %v8564, %v8851
      %v8910 = vadd.f32 %v8565, %v8856
      %v8911 = vadd.f32 %v8566, %v8861
      %v8912 = vadd.f32 %v8567, %v8866
      %v8913 = vadd.f32 %v8568, %v8871
      %v8914 = vadd.f32 %v8569, %v8876
      %v8915 = vadd.f32 %v8570, %v8881
      %v8916 = vadd.f32 %v8571, %v8886
      %v8917 = vmul.f32 %v8889, %v6793
      %v8918 = vmul.f32 %v8890, %v6793
      %v8919 = vmul.f32 %v8891, %v6793
      %v8920 = vmul.f32 %v8892, %v6793
      %v8921 = vmul.f32 %v8893, %v6793
      %v8922 = vmul.f32 %v8894, %v6793
      %v8923 = vmul.f32 %v8895, %v6793
      %v8924 = vmul.f32 %v8896, %v6793
      %v8925 = vmul.f32 %v8897, %v6793
      %v8926 = vmul.f32 %v8898, %v6793
      %v8927 = vmul.f32 %v8899, %v6793
      %v8928 = vmul.f32 %v8900, %v6793
      %v8929 = vmul.f32 %v8901, %v6793
      %v8930 = vmul.f32 %v8902, %v6793
      %v8931 = vmul.f32 %v8903, %v6793
      %v8932 = vmul.f32 %v8904, %v6793
      %v8933 = vmul.f32 %v8905, %v6793
      %v8934 = vmul.f32 %v8906, %v6793
      %v8935 = vmul.f32 %v8907, %v6793
      %v8936 = vmul.f32 %v8908, %v6793
      %v8937 = vmul.f32 %v8909, %v6793
      %v8938 = vmul.f32 %v8910, %v6793
      %v8939 = vmul.f32 %v8911, %v6793
      %v8940 = vmul.f32 %v8912, %v6793
      %v8941 = vmul.f32 %v8913, %v6793
      %v8942 = vmul.f32 %v8914, %v6793
      %v8943 = vmul.f32 %v8915, %v6793
      %v8944 = vmul.f32 %v8916, %v6793
      %v8945 = vadd.f32 %v8917, %v6827
      %v8946 = vadd.f32 %v8918, %v6827
      %v8947 = vadd.f32 %v8919, %v6827
      %v8948 = vadd.f32 %v8920, %v6827
      %v8949 = vadd.f32 %v8921, %v6827
      %v8950 = vadd.f32 %v8922, %v6827
      %v8951 = vadd.f32 %v8923, %v6827
      %v8952 = vadd.f32 %v8924, %v6827
      %v8953 = vadd.f32 %v8925, %v6827
      %v8954 = vadd.f32 %v8926, %v6827
      %v8955 = vadd.f32 %v8927, %v6827
      %v8956 = vadd.f32 %v8928, %v6827
      %v8957 = vadd.f32 %v8929, %v6827
      %v8958 = vadd.f32 %v8930, %v6827
      %v8959 = vadd.f32 %v8931, %v6827
      %v8960 = vadd.f32 %v8932, %v6827
      %v8961 = vadd.f32 %v8933, %v6827
      %v8962 = vadd.f32 %v8934, %v6827
      %v8963 = vadd.f32 %v8935, %v6827
      %v8964 = vadd.f32 %v8936, %v6827
      %v8965 = vadd.f32 %v8937, %v6827
      %v8966 = vadd.f32 %v8938, %v6827
      %v8967 = vadd.f32 %v8939, %v6827
      %v8968 = vadd.f32 %v8940, %v6827
      %v8969 = vadd.f32 %v8941, %v6827
      %v8970 = vadd.f32 %v8942, %v6827
      %v8971 = vadd.f32 %v8943, %v6827
      %v8972 = vadd.f32 %v8944, %v6827
      %v8973 = vmax.f32 %v8945, 0.0
      %v8974 = vmax.f32 %v8946, 0.0
      %v8975 = vmax.f32 %v8947, 0.0
      %v8976 = vmax.f32 %v8948, 0.0
      %v8977 = vmax.f32 %v8949, 0.0
      %v8978 = vmax.f32 %v8950, 0.0
      %v8979 = vmax.f32 %v8951, 0.0
      %v8980 = vmax.f32 %v8952, 0.0
      %v8981 = vmax.f32 %v8953, 0.0
      %v8982 = vmax.f32 %v8954, 0.0
      %v8983 = vmax.f32 %v8955, 0.0
      %v8984 = vmax.f32 %v8956, 0.0
      %v8985 = vmax.f32 %v8957, 0.0
      %v8986 = vmax.f32 %v8958, 0.0
      %v8987 = vmax.f32 %v8959, 0.0
      %v8988 = vmax.f32 %v8960, 0.0
      %v8989 = vmax.f32 %v8961, 0.0
      %v8990 = vmax.f32 %v8962, 0.0
      %v8991 = vmax.f32 %v8963, 0.0
      %v8992 = vmax.f32 %v8964, 0.0
      %v8993 = vmax.f32 %v8965, 0.0
      %v8994 = vmax.f32 %v8966, 0.0
      %v8995 = vmax.f32 %v8967, 0.0
      %v8996 = vmax.f32 %v8968, 0.0
      %v8997 = vmax.f32 %v8969, 0.0
      %v8998 = vmax.f32 %v8970, 0.0
      %v8999 = vmax.f32 %v8971, 0.0
      %v9000 = vmax.f32 %v8972, 0.0
      %v9001 = vmax.f32 %v6857, %v8973
      %v9002 = vmax.f32 %v6858, %v8974
      %v9003 = vmax.f32 %v6859, %v8975
      %v9004 = vmax.f32 %v6860, %v8976
      %v9005 = vmax.f32 %v6861, %v8977
      %v9006 = vmax.f32 %v6862, %v8978
      %v9007 = vmax.f32 %v6863, %v8979
      %v9008 = vmax.f32 %v6864, %v8980
      %v9009 = vmax.f32 %v6865, %v8981
      %v9010 = vmax.f32 %v6866, %v8982
      %v9011 = vmax.f32 %v6867, %v8983
      %v9012 = vmax.f32 %v6868, %v8984
      %v9013 = vmax.f32 %v6869, %v8985
      %v9014 = vmax.f32 %v6870, %v8986
      %v9015 = vmax.f32 %v6871, %v8987
      %v9016 = vmax.f32 %v6872, %v8988
      %v9017 = vmax.f32 %v6873, %v8989
      %v9018 = vmax.f32 %v6874, %v8990
      %v9019 = vmax.f32 %v6875, %v8991
      %v9020 = vmax.f32 %v6876, %v8992
      %v9021 = vmax.f32 %v6877, %v8993
      %v9022 = vmax.f32 %v6878, %v8994
      %v9023 = vmax.f32 %v6879, %v8995
      %v9024 = vmax.f32 %v6880, %v8996
      %v9025 = vmax.f32 %v6881, %v8997
      %v9026 = vmax.f32 %v6882, %v8998
      %v9027 = vmax.f32 %v6883, %v8999
      %v9028 = vmax.f32 %v6884, %v9000
      %v9029 = vld [vmem:[%s7] sm:$0xff]
      %v9030 = vld [vmem:[%s7 + $0x8] sm:$0xff]
      %v9031 = vld [vmem:[%s7 + $0x10] sm:$0xff]
      %v9032 = vld [vmem:[%s7 + $0x18] sm:$0xff]
      %v9033 = vld [vmem:[%s7 + $0x20] sm:$0xff]
      %v9034 = vld [vmem:[%s7 + $0x28] sm:$0xff]
      %v9035 = vld [vmem:[%s7 + $0x30] sm:$0xff]
      %v9036 = vld [vmem:[%s7 + $0x38] sm:$0xff]
      %v9038 = vsel %vm1284, %v9002, 0
      %9040 = vmatprep.subr.mxu0 0.0
      %9041 = vmatpush1.msra.mxu0 %v9033
      %9042 = vmatprep.subr.mxu0 0.0
      %9043 = vmatpush1.msra.mxu0 %v9034
      %9044 = vmatprep.subr.mxu0 0.0
      %9045 = vmatpush1.msra.mxu0 %v9035
      %9046 = vmatprep.subr.mxu0 0.0
      %9047 = vmatpush1.msra.mxu0 %v9036
      %9048 = vmatprep.subr.mxu0 0.0
      %9049 = vmatpush1.msra.mxu0 0.0
      %9050 = vmatprep.subr.mxu0 0.0
      %9051 = vmatpush1.msra.mxu0 0.0
      %9052 = vmatprep.subr.mxu0 0.0
      %9053 = vmatpush1.msra.mxu0 0.0
      %9054 = vmatprep.subr.mxu0 0.0
      %9055 = vmatpush1.msra.mxu0 0.0
      %9056 = vmatprep.subr.mxu0 0.0
      %9057 = vmatpush1.msra.mxu0 0.0
      %9058 = vmatprep.subr.mxu0 0.0
      %9059 = vmatpush1.msra.mxu0 0.0
      %9060 = vmatprep.subr.mxu0 0.0
      %9061 = vmatpush1.msra.mxu0 0.0
      %9062 = vmatprep.subr.mxu0 0.0
      %9063 = vmatpush1.msra.mxu0 0.0
      %9064 = vmatprep.subr.mxu0 0.0
      %9065 = vmatpush1.msra.mxu0 0.0
      %9066 = vmatprep.subr.mxu0 0.0
      %9067 = vmatpush1.msra.mxu0 0.0
      %9068 = vmatprep.subr.mxu0 0.0
      %9069 = vmatpush1.msra.mxu0 0.0
      %9070 = vmatprep.subr.mxu0 0.0
      %9071 = vmatpush1.msra.mxu0 0.0
      %9072 = vmatprep.subr.mxu0 0.0
      %9073 = vmatpush1.msra.mxu0 0.0
      %9074 = vmatprep.subr.mxu0 0.0
      %9075 = vmatpush1.msra.mxu0 0.0
      %9076 = vmatprep.subr.mxu0 0.0
      %9077 = vmatpush1.msra.mxu0 0.0
      %9078 = vmatprep.subr.mxu0 0.0
      %9079 = vmatpush1.msra.mxu0 0.0
      %9080 = vmatprep.subr.mxu0 0.0
      %9081 = vmatpush1.msra.mxu0 0.0
      %9082 = vmatprep.subr.mxu0 0.0
      %9083 = vmatpush1.msra.mxu0 0.0
      %9084 = vmatprep.subr.mxu0 0.0
      %9085 = vmatpush1.msra.mxu0 0.0
      %9086 = vmatprep.subr.mxu0 0.0
      %9087 = vmatpush1.msra.mxu0 0.0
      %9088 = vmatprep.subr.mxu0 0.0
      %9089 = vmatpush1.msra.mxu0 0.0
      %9090 = vmatprep.subr.mxu0 0.0
      %9091 = vmatpush1.msra.mxu0 0.0
      %9092 = vmatprep.subr.mxu0 0.0
      %9093 = vmatpush1.msra.mxu0 0.0
      %9094 = vmatprep.subr.mxu0 0.0
      %9095 = vmatpush1.msra.mxu0 0.0
      %9096 = vmatprep.subr.mxu0 0.0
      %9097 = vmatpush1.msra.mxu0 0.0
      %9098 = vmatprep.subr.mxu0 0.0
      %9099 = vmatpush1.msra.mxu0 0.0
      %9100 = vmatprep.subr.mxu0 0.0
      %9101 = vmatpush1.msra.mxu0 0.0
      %9102 = vmatprep.subr.mxu0 0.0
      %9103 = vmatpush1.msra.mxu0 0.0
      %9104 = vmatprep.mubr.f32.mxu0 0.0
      %9105 = vmatmul.mubr.f32.gmra.mrb[0].mxu0 %v9038
      %v9106 = vpop.f32.mrb[0].mxu0
      %v9107 = vadd.f32 0.0, %v9106
      %v9108 = vpop.f32.mrb[0].mxu0
      %9109 = vdwg.mxu0
      %v9111 = vsel %vm1284, %v9001, 0
      %9113 = vmatprep.subr.mxu0 0.0
      %9114 = vmatpush1.msra.mxu0 %v9029
      %9115 = vmatprep.subr.mxu0 0.0
      %9116 = vmatpush1.msra.mxu0 %v9030
      %9117 = vmatprep.subr.mxu0 0.0
      %9118 = vmatpush1.msra.mxu0 %v9031
      %9119 = vmatprep.subr.mxu0 0.0
      %9120 = vmatpush1.msra.mxu0 %v9032
      %9121 = vmatprep.subr.mxu0 0.0
      %9122 = vmatpush1.msra.mxu0 0.0
      %9123 = vmatprep.subr.mxu0 0.0
      %9124 = vmatpush1.msra.mxu0 0.0
      %9125 = vmatprep.subr.mxu0 0.0
      %9126 = vmatpush1.msra.mxu0 0.0
      %9127 = vmatprep.subr.mxu0 0.0
      %9128 = vmatpush1.msra.mxu0 0.0
      %9129 = vmatprep.subr.mxu0 0.0
      %9130 = vmatpush1.msra.mxu0 0.0
      %9131 = vmatprep.subr.mxu0 0.0
      %9132 = vmatpush1.msra.mxu0 0.0
      %9133 = vmatprep.subr.mxu0 0.0
      %9134 = vmatpush1.msra.mxu0 0.0
      %9135 = vmatprep.subr.mxu0 0.0
      %9136 = vmatpush1.msra.mxu0 0.0
      %9137 = vmatprep.subr.mxu0 0.0
      %9138 = vmatpush1.msra.mxu0 0.0
      %9139 = vmatprep.subr.mxu0 0.0
      %9140 = vmatpush1.msra.mxu0 0.0
      %9141 = vmatprep.subr.mxu0 0.0
      %9142 = vmatpush1.msra.mxu0 0.0
      %9143 = vmatprep.subr.mxu0 0.0
      %9144 = vmatpush1.msra.mxu0 0.0
      %9145 = vmatprep.subr.mxu0 0.0
      %9146 = vmatpush1.msra.mxu0 0.0
      %9147 = vmatprep.subr.mxu0 0.0
      %9148 = vmatpush1.msra.mxu0 0.0
      %9149 = vmatprep.subr.mxu0 0.0
      %9150 = vmatpush1.msra.mxu0 0.0
      %9151 = vmatprep.subr.mxu0 0.0
      %9152 = vmatpush1.msra.mxu0 0.0
      %9153 = vmatprep.subr.mxu0 0.0
      %9154 = vmatpush1.msra.mxu0 0.0
      %9155 = vmatprep.subr.mxu0 0.0
      %9156 = vmatpush1.msra.mxu0 0.0
      %9157 = vmatprep.subr.mxu0 0.0
      %9158 = vmatpush1.msra.mxu0 0.0
      %9159 = vmatprep.subr.mxu0 0.0
      %9160 = vmatpush1.msra.mxu0 0.0
      %9161 = vmatprep.subr.mxu0 0.0
      %9162 = vmatpush1.msra.mxu0 0.0
      %9163 = vmatprep.subr.mxu0 0.0
      %9164 = vmatpush1.msra.mxu0 0.0
      %9165 = vmatprep.subr.mxu0 0.0
      %9166 = vmatpush1.msra.mxu0 0.0
      %9167 = vmatprep.subr.mxu0 0.0
      %9168 = vmatpush1.msra.mxu0 0.0
      %9169 = vmatprep.subr.mxu0 0.0
      %9170 = vmatpush1.msra.mxu0 0.0
      %9171 = vmatprep.subr.mxu0 0.0
      %9172 = vmatpush1.msra.mxu0 0.0
      %9173 = vmatprep.subr.mxu0 0.0
      %9174 = vmatpush1.msra.mxu0 0.0
      %9175 = vmatprep.subr.mxu0 0.0
      %9176 = vmatpush1.msra.mxu0 0.0
      %9177 = vmatprep.mubr.f32.mxu0 0.0
      %9178 = vmatmul.mubr.f32.gmra.mrb[0].mxu0 %v9111
      %v9179 = vpop.f32.mrb[0].mxu0
      %v9180 = vadd.f32 %v9107, %v9179
      %v9181 = vpop.f32.mrb[0].mxu0
      %9182 = vdwg.mxu0
      %v9183 = vld [vmem:[%s7 + $0x40] sm:$0xff]
      %v9184 = vld [vmem:[%s7 + $0x48] sm:$0xff]
      %v9185 = vld [vmem:[%s7 + $0x50] sm:$0xff]
      %v9186 = vld [vmem:[%s7 + $0x58] sm:$0xff]
      %v9188 = vsel %vm1284, %v9003, 0
      %9190 = vmatprep.subr.mxu0 0.0
      %9191 = vmatpush1.msra.mxu0 %v9183
      %9192 = vmatprep.subr.mxu0 0.0
      %9193 = vmatpush1.msra.mxu0 %v9184
      %9194 = vmatprep.subr.mxu0 0.0
      %9195 = vmatpush1.msra.mxu0 %v9185
      %9196 = vmatprep.subr.mxu0 0.0
      %9197 = vmatpush1.msra.mxu0 %v9186
      %9198 = vmatprep.subr.mxu0 0.0
      %9199 = vmatpush1.msra.mxu0 0.0
      %9200 = vmatprep.subr.mxu0 0.0
      %9201 = vmatpush1.msra.mxu0 0.0
      %9202 = vmatprep.subr.mxu0 0.0
      %9203 = vmatpush1.msra.mxu0 0.0
      %9204 = vmatprep.subr.mxu0 0.0
      %9205 = vmatpush1.msra.mxu0 0.0
      %9206 = vmatprep.subr.mxu0 0.0
      %9207 = vmatpush1.msra.mxu0 0.0
      %9208 = vmatprep.subr.mxu0 0.0
      %9209 = vmatpush1.msra.mxu0 0.0
      %9210 = vmatprep.subr.mxu0 0.0
      %9211 = vmatpush1.msra.mxu0 0.0
      %9212 = vmatprep.subr.mxu0 0.0
      %9213 = vmatpush1.msra.mxu0 0.0
      %9214 = vmatprep.subr.mxu0 0.0
      %9215 = vmatpush1.msra.mxu0 0.0
      %9216 = vmatprep.subr.mxu0 0.0
      %9217 = vmatpush1.msra.mxu0 0.0
      %9218 = vmatprep.subr.mxu0 0.0
      %9219 = vmatpush1.msra.mxu0 0.0
      %9220 = vmatprep.subr.mxu0 0.0
      %9221 = vmatpush1.msra.mxu0 0.0
      %9222 = vmatprep.subr.mxu0 0.0
      %9223 = vmatpush1.msra.mxu0 0.0
      %9224 = vmatprep.subr.mxu0 0.0
      %9225 = vmatpush1.msra.mxu0 0.0
      %9226 = vmatprep.subr.mxu0 0.0
      %9227 = vmatpush1.msra.mxu0 0.0
      %9228 = vmatprep.subr.mxu0 0.0
      %9229 = vmatpush1.msra.mxu0 0.0
      %9230 = vmatprep.subr.mxu0 0.0
      %9231 = vmatpush1.msra.mxu0 0.0
      %9232 = vmatprep.subr.mxu0 0.0
      %9233 = vmatpush1.msra.mxu0 0.0
      %9234 = vmatprep.subr.mxu0 0.0
      %9235 = vmatpush1.msra.mxu0 0.0
      %9236 = vmatprep.subr.mxu0 0.0
      %9237 = vmatpush1.msra.mxu0 0.0
      %9238 = vmatprep.subr.mxu0 0.0
      %9239 = vmatpush1.msra.mxu0 0.0
      %9240 = vmatprep.subr.mxu0 0.0
      %9241 = vmatpush1.msra.mxu0 0.0
      %9242 = vmatprep.subr.mxu0 0.0
      %9243 = vmatpush1.msra.mxu0 0.0
      %9244 = vmatprep.subr.mxu0 0.0
      %9245 = vmatpush1.msra.mxu0 0.0
      %9246 = vmatprep.subr.mxu0 0.0
      %9247 = vmatpush1.msra.mxu0 0.0
      %9248 = vmatprep.subr.mxu0 0.0
      %9249 = vmatpush1.msra.mxu0 0.0
      %9250 = vmatprep.subr.mxu0 0.0
      %9251 = vmatpush1.msra.mxu0 0.0
      %9252 = vmatprep.subr.mxu0 0.0
      %9253 = vmatpush1.msra.mxu0 0.0
      %9254 = vmatprep.mubr.f32.mxu0 0.0
      %9255 = vmatmul.mubr.f32.gmra.mrb[0].mxu0 %v9188
      %v9256 = vpop.f32.mrb[0].mxu0
      %v9257 = vadd.f32 0.0, %v9256
      %v9258 = vpop.f32.mrb[0].mxu0
      %9259 = vdwg.mxu0
      %v9260 = vadd.f32 %v9180, %v9257
      %v9261 = vld [vmem:[%s7 + $0x60] sm:$0xff]
      %v9262 = vld [vmem:[%s7 + $0x68] sm:$0xff]
      %v9263 = vld [vmem:[%s7 + $0x70] sm:$0xff]
      %v9264 = vld [vmem:[%s7 + $0x78] sm:$0xff]
      %v9266 = vsel %vm1284, %v9004, 0
      %9268 = vmatprep.subr.mxu0 0.0
      %9269 = vmatpush1.msra.mxu0 %v9261
      %9270 = vmatprep.subr.mxu0 0.0
      %9271 = vmatpush1.msra.mxu0 %v9262
      %9272 = vmatprep.subr.mxu0 0.0
      %9273 = vmatpush1.msra.mxu0 %v9263
      %9274 = vmatprep.subr.mxu0 0.0
      %9275 = vmatpush1.msra.mxu0 %v9264
      %9276 = vmatprep.subr.mxu0 0.0
      %9277 = vmatpush1.msra.mxu0 0.0
      %9278 = vmatprep.subr.mxu0 0.0
      %9279 = vmatpush1.msra.mxu0 0.0
      %9280 = vmatprep.subr.mxu0 0.0
      %9281 = vmatpush1.msra.mxu0 0.0
      %9282 = vmatprep.subr.mxu0 0.0
      %9283 = vmatpush1.msra.mxu0 0.0
      %9284 = vmatprep.subr.mxu0 0.0
      %9285 = vmatpush1.msra.mxu0 0.0
      %9286 = vmatprep.subr.mxu0 0.0
      %9287 = vmatpush1.msra.mxu0 0.0
      %9288 = vmatprep.subr.mxu0 0.0
      %9289 = vmatpush1.msra.mxu0 0.0
      %9290 = vmatprep.subr.mxu0 0.0
      %9291 = vmatpush1.msra.mxu0 0.0
      %9292 = vmatprep.subr.mxu0 0.0
      %9293 = vmatpush1.msra.mxu0 0.0
      %9294 = vmatprep.subr.mxu0 0.0
      %9295 = vmatpush1.msra.mxu0 0.0
      %9296 = vmatprep.subr.mxu0 0.0
      %9297 = vmatpush1.msra.mxu0 0.0
      %9298 = vmatprep.subr.mxu0 0.0
      %9299 = vmatpush1.msra.mxu0 0.0
      %9300 = vmatprep.subr.mxu0 0.0
      %9301 = vmatpush1.msra.mxu0 0.0
      %9302 = vmatprep.subr.mxu0 0.0
      %9303 = vmatpush1.msra.mxu0 0.0
      %9304 = vmatprep.subr.mxu0 0.0
      %9305 = vmatpush1.msra.mxu0 0.0
      %9306 = vmatprep.subr.mxu0 0.0
      %9307 = vmatpush1.msra.mxu0 0.0
      %9308 = vmatprep.subr.mxu0 0.0
      %9309 = vmatpush1.msra.mxu0 0.0
      %9310 = vmatprep.subr.mxu0 0.0
      %9311 = vmatpush1.msra.mxu0 0.0
      %9312 = vmatprep.subr.mxu0 0.0
      %9313 = vmatpush1.msra.mxu0 0.0
      %9314 = vmatprep.subr.mxu0 0.0
      %9315 = vmatpush1.msra.mxu0 0.0
      %9316 = vmatprep.subr.mxu0 0.0
      %9317 = vmatpush1.msra.mxu0 0.0
      %9318 = vmatprep.subr.mxu0 0.0
      %9319 = vmatpush1.msra.mxu0 0.0
      %9320 = vmatprep.subr.mxu0 0.0
      %9321 = vmatpush1.msra.mxu0 0.0
      %9322 = vmatprep.subr.mxu0 0.0
      %9323 = vmatpush1.msra.mxu0 0.0
      %9324 = vmatprep.subr.mxu0 0.0
      %9325 = vmatpush1.msra.mxu0 0.0
      %9326 = vmatprep.subr.mxu0 0.0
      %9327 = vmatpush1.msra.mxu0 0.0
      %9328 = vmatprep.subr.mxu0 0.0
      %9329 = vmatpush1.msra.mxu0 0.0
      %9330 = vmatprep.subr.mxu0 0.0
      %9331 = vmatpush1.msra.mxu0 0.0
      %9332 = vmatprep.mubr.f32.mxu0 0.0
      %9333 = vmatmul.mubr.f32.gmra.mrb[0].mxu0 %v9266
      %v9334 = vpop.f32.mrb[0].mxu0
      %v9335 = vadd.f32 0.0, %v9334
      %v9336 = vpop.f32.mrb[0].mxu0
      %9337 = vdwg.mxu0
      %v9338 = vadd.f32 %v9260, %v9335
      %v9339 = vld [vmem:[%s7 + $0x80] sm:$0xff]
      %v9340 = vld [vmem:[%s7 + $0x88] sm:$0xff]
      %v9341 = vld [vmem:[%s7 + $0x90] sm:$0xff]
      %v9342 = vld [vmem:[%s7 + $0x98] sm:$0xff]
      %v9344 = vsel %vm1284, %v9005, 0
      %9346 = vmatprep.subr.mxu0 0.0
      %9347 = vmatpush1.msra.mxu0 %v9339
      %9348 = vmatprep.subr.mxu0 0.0
      %9349 = vmatpush1.msra.mxu0 %v9340
      %9350 = vmatprep.subr.mxu0 0.0
      %9351 = vmatpush1.msra.mxu0 %v9341
      %9352 = vmatprep.subr.mxu0 0.0
      %9353 = vmatpush1.msra.mxu0 %v9342
      %9354 = vmatprep.subr.mxu0 0.0
      %9355 = vmatpush1.msra.mxu0 0.0
      %9356 = vmatprep.subr.mxu0 0.0
      %9357 = vmatpush1.msra.mxu0 0.0
      %9358 = vmatprep.subr.mxu0 0.0
      %9359 = vmatpush1.msra.mxu0 0.0
      %9360 = vmatprep.subr.mxu0 0.0
      %9361 = vmatpush1.msra.mxu0 0.0
      %9362 = vmatprep.subr.mxu0 0.0
      %9363 = vmatpush1.msra.mxu0 0.0
      %9364 = vmatprep.subr.mxu0 0.0
      %9365 = vmatpush1.msra.mxu0 0.0
      %9366 = vmatprep.subr.mxu0 0.0
      %9367 = vmatpush1.msra.mxu0 0.0
      %9368 = vmatprep.subr.mxu0 0.0
      %9369 = vmatpush1.msra.mxu0 0.0
      %9370 = vmatprep.subr.mxu0 0.0
      %9371 = vmatpush1.msra.mxu0 0.0
      %9372 = vmatprep.subr.mxu0 0.0
      %9373 = vmatpush1.msra.mxu0 0.0
      %9374 = vmatprep.subr.mxu0 0.0
      %9375 = vmatpush1.msra.mxu0 0.0
      %9376 = vmatprep.subr.mxu0 0.0
      %9377 = vmatpush1.msra.mxu0 0.0
      %9378 = vmatprep.subr.mxu0 0.0
      %9379 = vmatpush1.msra.mxu0 0.0
      %9380 = vmatprep.subr.mxu0 0.0
      %9381 = vmatpush1.msra.mxu0 0.0
      %9382 = vmatprep.subr.mxu0 0.0
      %9383 = vmatpush1.msra.mxu0 0.0
      %9384 = vmatprep.subr.mxu0 0.0
      %9385 = vmatpush1.msra.mxu0 0.0
      %9386 = vmatprep.subr.mxu0 0.0
      %9387 = vmatpush1.msra.mxu0 0.0
      %9388 = vmatprep.subr.mxu0 0.0
      %9389 = vmatpush1.msra.mxu0 0.0
      %9390 = vmatprep.subr.mxu0 0.0
      %9391 = vmatpush1.msra.mxu0 0.0
      %9392 = vmatprep.subr.mxu0 0.0
      %9393 = vmatpush1.msra.mxu0 0.0
      %9394 = vmatprep.subr.mxu0 0.0
      %9395 = vmatpush1.msra.mxu0 0.0
      %9396 = vmatprep.subr.mxu0 0.0
      %9397 = vmatpush1.msra.mxu0 0.0
      %9398 = vmatprep.subr.mxu0 0.0
      %9399 = vmatpush1.msra.mxu0 0.0
      %9400 = vmatprep.subr.mxu0 0.0
      %9401 = vmatpush1.msra.mxu0 0.0
      %9402 = vmatprep.subr.mxu0 0.0
      %9403 = vmatpush1.msra.mxu0 0.0
      %9404 = vmatprep.subr.mxu0 0.0
      %9405 = vmatpush1.msra.mxu0 0.0
      %9406 = vmatprep.subr.mxu0 0.0
      %9407 = vmatpush1.msra.mxu0 0.0
      %9408 = vmatprep.subr.mxu0 0.0
      %9409 = vmatpush1.msra.mxu0 0.0
      %9410 = vmatprep.mubr.f32.mxu0 0.0
      %9411 = vmatmul.mubr.f32.gmra.mrb[0].mxu0 %v9344
      %v9412 = vpop.f32.mrb[0].mxu0
      %v9413 = vadd.f32 0.0, %v9412
      %v9414 = vpop.f32.mrb[0].mxu0
      %9415 = vdwg.mxu0
      %v9416 = vadd.f32 %v9338, %v9413
      %v9417 = vld [vmem:[%s7 + $0xa0] sm:$0xff]
      %v9418 = vld [vmem:[%s7 + $0xa8] sm:$0xff]
      %v9419 = vld [vmem:[%s7 + $0xb0] sm:$0xff]
      %v9420 = vld [vmem:[%s7 + $0xb8] sm:$0xff]
      %v9422 = vsel %vm1284, %v9006, 0
      %9424 = vmatprep.subr.mxu0 0.0
      %9425 = vmatpush1.msra.mxu0 %v9417
      %9426 = vmatprep.subr.mxu0 0.0
      %9427 = vmatpush1.msra.mxu0 %v9418
      %9428 = vmatprep.subr.mxu0 0.0
      %9429 = vmatpush1.msra.mxu0 %v9419
      %9430 = vmatprep.subr.mxu0 0.0
      %9431 = vmatpush1.msra.mxu0 %v9420
      %9432 = vmatprep.subr.mxu0 0.0
      %9433 = vmatpush1.msra.mxu0 0.0
      %9434 = vmatprep.subr.mxu0 0.0
      %9435 = vmatpush1.msra.mxu0 0.0
      %9436 = vmatprep.subr.mxu0 0.0
      %9437 = vmatpush1.msra.mxu0 0.0
      %9438 = vmatprep.subr.mxu0 0.0
      %9439 = vmatpush1.msra.mxu0 0.0
      %9440 = vmatprep.subr.mxu0 0.0
      %9441 = vmatpush1.msra.mxu0 0.0
      %9442 = vmatprep.subr.mxu0 0.0
      %9443 = vmatpush1.msra.mxu0 0.0
      %9444 = vmatprep.subr.mxu0 0.0
      %9445 = vmatpush1.msra.mxu0 0.0
      %9446 = vmatprep.subr.mxu0 0.0
      %9447 = vmatpush1.msra.mxu0 0.0
      %9448 = vmatprep.subr.mxu0 0.0
      %9449 = vmatpush1.msra.mxu0 0.0
      %9450 = vmatprep.subr.mxu0 0.0
      %9451 = vmatpush1.msra.mxu0 0.0
      %9452 = vmatprep.subr.mxu0 0.0
      %9453 = vmatpush1.msra.mxu0 0.0
      %9454 = vmatprep.subr.mxu0 0.0
      %9455 = vmatpush1.msra.mxu0 0.0
      %9456 = vmatprep.subr.mxu0 0.0
      %9457 = vmatpush1.msra.mxu0 0.0
      %9458 = vmatprep.subr.mxu0 0.0
      %9459 = vmatpush1.msra.mxu0 0.0
      %9460 = vmatprep.subr.mxu0 0.0
      %9461 = vmatpush1.msra.mxu0 0.0
      %9462 = vmatprep.subr.mxu0 0.0
      %9463 = vmatpush1.msra.mxu0 0.0
      %9464 = vmatprep.subr.mxu0 0.0
      %9465 = vmatpush1.msra.mxu0 0.0
      %9466 = vmatprep.subr.mxu0 0.0
      %9467 = vmatpush1.msra.mxu0 0.0
      %9468 = vmatprep.subr.mxu0 0.0
      %9469 = vmatpush1.msra.mxu0 0.0
      %9470 = vmatprep.subr.mxu0 0.0
      %9471 = vmatpush1.msra.mxu0 0.0
      %9472 = vmatprep.subr.mxu0 0.0
      %9473 = vmatpush1.msra.mxu0 0.0
      %9474 = vmatprep.subr.mxu0 0.0
      %9475 = vmatpush1.msra.mxu0 0.0
      %9476 = vmatprep.subr.mxu0 0.0
      %9477 = vmatpush1.msra.mxu0 0.0
      %9478 = vmatprep.subr.mxu0 0.0
      %9479 = vmatpush1.msra.mxu0 0.0
      %9480 = vmatprep.subr.mxu0 0.0
      %9481 = vmatpush1.msra.mxu0 0.0
      %9482 = vmatprep.subr.mxu0 0.0
      %9483 = vmatpush1.msra.mxu0 0.0
      %9484 = vmatprep.subr.mxu0 0.0
      %9485 = vmatpush1.msra.mxu0 0.0
      %9486 = vmatprep.subr.mxu0 0.0
      %9487 = vmatpush1.msra.mxu0 0.0
      %9488 = vmatprep.mubr.f32.mxu0 0.0
      %9489 = vmatmul.mubr.f32.gmra.mrb[0].mxu0 %v9422
      %v9490 = vpop.f32.mrb[0].mxu0
      %v9491 = vadd.f32 0.0, %v9490
      %v9492 = vpop.f32.mrb[0].mxu0
      %9493 = vdwg.mxu0
      %v9494 = vadd.f32 %v9416, %v9491
      %v9495 = vld [vmem:[%s7 + $0xc0] sm:$0xff]
      %v9496 = vld [vmem:[%s7 + $0xc8] sm:$0xff]
      %v9497 = vld [vmem:[%s7 + $0xd0] sm:$0xff]
      %v9498 = vld [vmem:[%s7 + $0xd8] sm:$0xff]
      %v9500 = vsel %vm1284, %v9007, 0
      %9502 = vmatprep.subr.mxu0 0.0
      %9503 = vmatpush1.msra.mxu0 %v9495
      %9504 = vmatprep.subr.mxu0 0.0
      %9505 = vmatpush1.msra.mxu0 %v9496
      %9506 = vmatprep.subr.mxu0 0.0
      %9507 = vmatpush1.msra.mxu0 %v9497
      %9508 = vmatprep.subr.mxu0 0.0
      %9509 = vmatpush1.msra.mxu0 %v9498
      %9510 = vmatprep.subr.mxu0 0.0
      %9511 = vmatpush1.msra.mxu0 0.0
      %9512 = vmatprep.subr.mxu0 0.0
      %9513 = vmatpush1.msra.mxu0 0.0
      %9514 = vmatprep.subr.mxu0 0.0
      %9515 = vmatpush1.msra.mxu0 0.0
      %9516 = vmatprep.subr.mxu0 0.0
      %9517 = vmatpush1.msra.mxu0 0.0
      %9518 = vmatprep.subr.mxu0 0.0
      %9519 = vmatpush1.msra.mxu0 0.0
      %9520 = vmatprep.subr.mxu0 0.0
      %9521 = vmatpush1.msra.mxu0 0.0
      %9522 = vmatprep.subr.mxu0 0.0
      %9523 = vmatpush1.msra.mxu0 0.0
      %9524 = vmatprep.subr.mxu0 0.0
      %9525 = vmatpush1.msra.mxu0 0.0
      %9526 = vmatprep.subr.mxu0 0.0
      %9527 = vmatpush1.msra.mxu0 0.0
      %9528 = vmatprep.subr.mxu0 0.0
      %9529 = vmatpush1.msra.mxu0 0.0
      %9530 = vmatprep.subr.mxu0 0.0
      %9531 = vmatpush1.msra.mxu0 0.0
      %9532 = vmatprep.subr.mxu0 0.0
      %9533 = vmatpush1.msra.mxu0 0.0
      %9534 = vmatprep.subr.mxu0 0.0
      %9535 = vmatpush1.msra.mxu0 0.0
      %9536 = vmatprep.subr.mxu0 0.0
      %9537 = vmatpush1.msra.mxu0 0.0
      %9538 = vmatprep.subr.mxu0 0.0
      %9539 = vmatpush1.msra.mxu0 0.0
      %9540 = vmatprep.subr.mxu0 0.0
      %9541 = vmatpush1.msra.mxu0 0.0
      %9542 = vmatprep.subr.mxu0 0.0
      %9543 = vmatpush1.msra.mxu0 0.0
      %9544 = vmatprep.subr.mxu0 0.0
      %9545 = vmatpush1.msra.mxu0 0.0
      %9546 = vmatprep.subr.mxu0 0.0
      %9547 = vmatpush1.msra.mxu0 0.0
      %9548 = vmatprep.subr.mxu0 0.0
      %9549 = vmatpush1.msra.mxu0 0.0
      %9550 = vmatprep.subr.mxu0 0.0
      %9551 = vmatpush1.msra.mxu0 0.0
      %9552 = vmatprep.subr.mxu0 0.0
      %9553 = vmatpush1.msra.mxu0 0.0
      %9554 = vmatprep.subr.mxu0 0.0
      %9555 = vmatpush1.msra.mxu0 0.0
      %9556 = vmatprep.subr.mxu0 0.0
      %9557 = vmatpush1.msra.mxu0 0.0
      %9558 = vmatprep.subr.mxu0 0.0
      %9559 = vmatpush1.msra.mxu0 0.0
      %9560 = vmatprep.subr.mxu0 0.0
      %9561 = vmatpush1.msra.mxu0 0.0
      %9562 = vmatprep.subr.mxu0 0.0
      %9563 = vmatpush1.msra.mxu0 0.0
      %9564 = vmatprep.subr.mxu0 0.0
      %9565 = vmatpush1.msra.mxu0 0.0
      %9566 = vmatprep.mubr.f32.mxu0 0.0
      %9567 = vmatmul.mubr.f32.gmra.mrb[0].mxu0 %v9500
      %v9568 = vpop.f32.mrb[0].mxu0
      %v9569 = vadd.f32 0.0, %v9568
      %v9570 = vpop.f32.mrb[0].mxu0
      %9571 = vdwg.mxu0
      %v9572 = vadd.f32 %v9494, %v9569
      %v9573 = vld [vmem:[%s7 + $0xe0] sm:$0xff]
      %v9574 = vld [vmem:[%s7 + $0xe8] sm:$0xff]
      %v9575 = vld [vmem:[%s7 + $0xf0] sm:$0xff]
      %v9576 = vld [vmem:[%s7 + $0xf8] sm:$0xff]
      %v9578 = vsel %vm1284, %v9008, 0
      %9580 = vmatprep.subr.mxu0 0.0
      %9581 = vmatpush1.msra.mxu0 %v9573
      %9582 = vmatprep.subr.mxu0 0.0
      %9583 = vmatpush1.msra.mxu0 %v9574
      %9584 = vmatprep.subr.mxu0 0.0
      %9585 = vmatpush1.msra.mxu0 %v9575
      %9586 = vmatprep.subr.mxu0 0.0
      %9587 = vmatpush1.msra.mxu0 %v9576
      %9588 = vmatprep.subr.mxu0 0.0
      %9589 = vmatpush1.msra.mxu0 0.0
      %9590 = vmatprep.subr.mxu0 0.0
      %9591 = vmatpush1.msra.mxu0 0.0
      %9592 = vmatprep.subr.mxu0 0.0
      %9593 = vmatpush1.msra.mxu0 0.0
      %9594 = vmatprep.subr.mxu0 0.0
      %9595 = vmatpush1.msra.mxu0 0.0
      %9596 = vmatprep.subr.mxu0 0.0
      %9597 = vmatpush1.msra.mxu0 0.0
      %9598 = vmatprep.subr.mxu0 0.0
      %9599 = vmatpush1.msra.mxu0 0.0
      %9600 = vmatprep.subr.mxu0 0.0
      %9601 = vmatpush1.msra.mxu0 0.0
      %9602 = vmatprep.subr.mxu0 0.0
      %9603 = vmatpush1.msra.mxu0 0.0
      %9604 = vmatprep.subr.mxu0 0.0
      %9605 = vmatpush1.msra.mxu0 0.0
      %9606 = vmatprep.subr.mxu0 0.0
      %9607 = vmatpush1.msra.mxu0 0.0
      %9608 = vmatprep.subr.mxu0 0.0
      %9609 = vmatpush1.msra.mxu0 0.0
      %9610 = vmatprep.subr.mxu0 0.0
      %9611 = vmatpush1.msra.mxu0 0.0
      %9612 = vmatprep.subr.mxu0 0.0
      %9613 = vmatpush1.msra.mxu0 0.0
      %9614 = vmatprep.subr.mxu0 0.0
      %9615 = vmatpush1.msra.mxu0 0.0
      %9616 = vmatprep.subr.mxu0 0.0
      %9617 = vmatpush1.msra.mxu0 0.0
      %9618 = vmatprep.subr.mxu0 0.0
      %9619 = vmatpush1.msra.mxu0 0.0
      %9620 = vmatprep.subr.mxu0 0.0
      %9621 = vmatpush1.msra.mxu0 0.0
      %9622 = vmatprep.subr.mxu0 0.0
      %9623 = vmatpush1.msra.mxu0 0.0
      %9624 = vmatprep.subr.mxu0 0.0
      %9625 = vmatpush1.msra.mxu0 0.0
      %9626 = vmatprep.subr.mxu0 0.0
      %9627 = vmatpush1.msra.mxu0 0.0
      %9628 = vmatprep.subr.mxu0 0.0
      %9629 = vmatpush1.msra.mxu0 0.0
      %9630 = vmatprep.subr.mxu0 0.0
      %9631 = vmatpush1.msra.mxu0 0.0
      %9632 = vmatprep.subr.mxu0 0.0
      %9633 = vmatpush1.msra.mxu0 0.0
      %9634 = vmatprep.subr.mxu0 0.0
      %9635 = vmatpush1.msra.mxu0 0.0
      %9636 = vmatprep.subr.mxu0 0.0
      %9637 = vmatpush1.msra.mxu0 0.0
      %9638 = vmatprep.subr.mxu0 0.0
      %9639 = vmatpush1.msra.mxu0 0.0
      %9640 = vmatprep.subr.mxu0 0.0
      %9641 = vmatpush1.msra.mxu0 0.0
      %9642 = vmatprep.subr.mxu0 0.0
      %9643 = vmatpush1.msra.mxu0 0.0
      %9644 = vmatprep.mubr.f32.mxu0 0.0
      %9645 = vmatmul.mubr.f32.gmra.mrb[0].mxu0 %v9578
      %v9646 = vpop.f32.mrb[0].mxu0
      %v9647 = vadd.f32 0.0, %v9646
      %v9648 = vpop.f32.mrb[0].mxu0
      %9649 = vdwg.mxu0
      %v9650 = vadd.f32 %v9572, %v9647
      %v9651 = vld [vmem:[%s7 + $0x100] sm:$0xff]
      %v9652 = vld [vmem:[%s7 + $0x108] sm:$0xff]
      %v9653 = vld [vmem:[%s7 + $0x110] sm:$0xff]
      %v9654 = vld [vmem:[%s7 + $0x118] sm:$0xff]
      %v9656 = vsel %vm1284, %v9009, 0
      %9658 = vmatprep.subr.mxu0 0.0
      %9659 = vmatpush1.msra.mxu0 %v9651
      %9660 = vmatprep.subr.mxu0 0.0
      %9661 = vmatpush1.msra.mxu0 %v9652
      %9662 = vmatprep.subr.mxu0 0.0
      %9663 = vmatpush1.msra.mxu0 %v9653
      %9664 = vmatprep.subr.mxu0 0.0
      %9665 = vmatpush1.msra.mxu0 %v9654
      %9666 = vmatprep.subr.mxu0 0.0
      %9667 = vmatpush1.msra.mxu0 0.0
      %9668 = vmatprep.subr.mxu0 0.0
      %9669 = vmatpush1.msra.mxu0 0.0
      %9670 = vmatprep.subr.mxu0 0.0
      %9671 = vmatpush1.msra.mxu0 0.0
      %9672 = vmatprep.subr.mxu0 0.0
      %9673 = vmatpush1.msra.mxu0 0.0
      %9674 = vmatprep.subr.mxu0 0.0
      %9675 = vmatpush1.msra.mxu0 0.0
      %9676 = vmatprep.subr.mxu0 0.0
      %9677 = vmatpush1.msra.mxu0 0.0
      %9678 = vmatprep.subr.mxu0 0.0
      %9679 = vmatpush1.msra.mxu0 0.0
      %9680 = vmatprep.subr.mxu0 0.0
      %9681 = vmatpush1.msra.mxu0 0.0
      %9682 = vmatprep.subr.mxu0 0.0
      %9683 = vmatpush1.msra.mxu0 0.0
      %9684 = vmatprep.subr.mxu0 0.0
      %9685 = vmatpush1.msra.mxu0 0.0
      %9686 = vmatprep.subr.mxu0 0.0
      %9687 = vmatpush1.msra.mxu0 0.0
      %9688 = vmatprep.subr.mxu0 0.0
      %9689 = vmatpush1.msra.mxu0 0.0
      %9690 = vmatprep.subr.mxu0 0.0
      %9691 = vmatpush1.msra.mxu0 0.0
      %9692 = vmatprep.subr.mxu0 0.0
      %9693 = vmatpush1.msra.mxu0 0.0
      %9694 = vmatprep.subr.mxu0 0.0
      %9695 = vmatpush1.msra.mxu0 0.0
      %9696 = vmatprep.subr.mxu0 0.0
      %9697 = vmatpush1.msra.mxu0 0.0
      %9698 = vmatprep.subr.mxu0 0.0
      %9699 = vmatpush1.msra.mxu0 0.0
      %9700 = vmatprep.subr.mxu0 0.0
      %9701 = vmatpush1.msra.mxu0 0.0
      %9702 = vmatprep.subr.mxu0 0.0
      %9703 = vmatpush1.msra.mxu0 0.0
      %9704 = vmatprep.subr.mxu0 0.0
      %9705 = vmatpush1.msra.mxu0 0.0
      %9706 = vmatprep.subr.mxu0 0.0
      %9707 = vmatpush1.msra.mxu0 0.0
      %9708 = vmatprep.subr.mxu0 0.0
      %9709 = vmatpush1.msra.mxu0 0.0
      %9710 = vmatprep.subr.mxu0 0.0
      %9711 = vmatpush1.msra.mxu0 0.0
      %9712 = vmatprep.subr.mxu0 0.0
      %9713 = vmatpush1.msra.mxu0 0.0
      %9714 = vmatprep.subr.mxu0 0.0
      %9715 = vmatpush1.msra.mxu0 0.0
      %9716 = vmatprep.subr.mxu0 0.0
      %9717 = vmatpush1.msra.mxu0 0.0
      %9718 = vmatprep.subr.mxu0 0.0
      %9719 = vmatpush1.msra.mxu0 0.0
      %9720 = vmatprep.subr.mxu0 0.0
      %9721 = vmatpush1.msra.mxu0 0.0
      %9722 = vmatprep.mubr.f32.mxu0 0.0
      %9723 = vmatmul.mubr.f32.gmra.mrb[0].mxu0 %v9656
      %v9724 = vpop.f32.mrb[0].mxu0
      %v9725 = vadd.f32 0.0, %v9724
      %v9726 = vpop.f32.mrb[0].mxu0
      %9727 = vdwg.mxu0
      %v9728 = vadd.f32 %v9650, %v9725
      %v9729 = vld [vmem:[%s7 + $0x120] sm:$0xff]
      %v9730 = vld [vmem:[%s7 + $0x128] sm:$0xff]
      %v9731 = vld [vmem:[%s7 + $0x130] sm:$0xff]
      %v9732 = vld [vmem:[%s7 + $0x138] sm:$0xff]
      %v9734 = vsel %vm1284, %v9010, 0
      %9736 = vmatprep.subr.mxu0 0.0
      %9737 = vmatpush1.msra.mxu0 %v9729
      %9738 = vmatprep.subr.mxu0 0.0
      %9739 = vmatpush1.msra.mxu0 %v9730
      %9740 = vmatprep.subr.mxu0 0.0
      %9741 = vmatpush1.msra.mxu0 %v9731
      %9742 = vmatprep.subr.mxu0 0.0
      %9743 = vmatpush1.msra.mxu0 %v9732
      %9744 = vmatprep.subr.mxu0 0.0
      %9745 = vmatpush1.msra.mxu0 0.0
      %9746 = vmatprep.subr.mxu0 0.0
      %9747 = vmatpush1.msra.mxu0 0.0
      %9748 = vmatprep.subr.mxu0 0.0
      %9749 = vmatpush1.msra.mxu0 0.0
      %9750 = vmatprep.subr.mxu0 0.0
      %9751 = vmatpush1.msra.mxu0 0.0
      %9752 = vmatprep.subr.mxu0 0.0
      %9753 = vmatpush1.msra.mxu0 0.0
      %9754 = vmatprep.subr.mxu0 0.0
      %9755 = vmatpush1.msra.mxu0 0.0
      %9756 = vmatprep.subr.mxu0 0.0
      %9757 = vmatpush1.msra.mxu0 0.0
      %9758 = vmatprep.subr.mxu0 0.0
      %9759 = vmatpush1.msra.mxu0 0.0
      %9760 = vmatprep.subr.mxu0 0.0
      %9761 = vmatpush1.msra.mxu0 0.0
      %9762 = vmatprep.subr.mxu0 0.0
      %9763 = vmatpush1.msra.mxu0 0.0
      %9764 = vmatprep.subr.mxu0 0.0
      %9765 = vmatpush1.msra.mxu0 0.0
      %9766 = vmatprep.subr.mxu0 0.0
      %9767 = vmatpush1.msra.mxu0 0.0
      %9768 = vmatprep.subr.mxu0 0.0
      %9769 = vmatpush1.msra.mxu0 0.0
      %9770 = vmatprep.subr.mxu0 0.0
      %9771 = vmatpush1.msra.mxu0 0.0
      %9772 = vmatprep.subr.mxu0 0.0
      %9773 = vmatpush1.msra.mxu0 0.0
      %9774 = vmatprep.subr.mxu0 0.0
      %9775 = vmatpush1.msra.mxu0 0.0
      %9776 = vmatprep.subr.mxu0 0.0
      %9777 = vmatpush1.msra.mxu0 0.0
      %9778 = vmatprep.subr.mxu0 0.0
      %9779 = vmatpush1.msra.mxu0 0.0
      %9780 = vmatprep.subr.mxu0 0.0
      %9781 = vmatpush1.msra.mxu0 0.0
      %9782 = vmatprep.subr.mxu0 0.0
      %9783 = vmatpush1.msra.mxu0 0.0
      %9784 = vmatprep.subr.mxu0 0.0
      %9785 = vmatpush1.msra.mxu0 0.0
      %9786 = vmatprep.subr.mxu0 0.0
      %9787 = vmatpush1.msra.mxu0 0.0
      %9788 = vmatprep.subr.mxu0 0.0
      %9789 = vmatpush1.msra.mxu0 0.0
      %9790 = vmatprep.subr.mxu0 0.0
      %9791 = vmatpush1.msra.mxu0 0.0
      %9792 = vmatprep.subr.mxu0 0.0
      %9793 = vmatpush1.msra.mxu0 0.0
      %9794 = vmatprep.subr.mxu0 0.0
      %9795 = vmatpush1.msra.mxu0 0.0
      %9796 = vmatprep.subr.mxu0 0.0
      %9797 = vmatpush1.msra.mxu0 0.0
      %9798 = vmatprep.subr.mxu0 0.0
      %9799 = vmatpush1.msra.mxu0 0.0
      %9800 = vmatprep.mubr.f32.mxu0 0.0
      %9801 = vmatmul.mubr.f32.gmra.mrb[0].mxu0 %v9734
      %v9802 = vpop.f32.mrb[0].mxu0
      %v9803 = vadd.f32 0.0, %v9802
      %v9804 = vpop.f32.mrb[0].mxu0
      %9805 = vdwg.mxu0
      %v9806 = vadd.f32 %v9728, %v9803
      %v9807 = vld [vmem:[%s7 + $0x140] sm:$0xff]
      %v9808 = vld [vmem:[%s7 + $0x148] sm:$0xff]
      %v9809 = vld [vmem:[%s7 + $0x150] sm:$0xff]
      %v9810 = vld [vmem:[%s7 + $0x158] sm:$0xff]
      %v9812 = vsel %vm1284, %v9011, 0
      %9814 = vmatprep.subr.mxu0 0.0
      %9815 = vmatpush1.msra.mxu0 %v9807
      %9816 = vmatprep.subr.mxu0 0.0
      %9817 = vmatpush1.msra.mxu0 %v9808
      %9818 = vmatprep.subr.mxu0 0.0
      %9819 = vmatpush1.msra.mxu0 %v9809
      %9820 = vmatprep.subr.mxu0 0.0
      %9821 = vmatpush1.msra.mxu0 %v9810
      %9822 = vmatprep.subr.mxu0 0.0
      %9823 = vmatpush1.msra.mxu0 0.0
      %9824 = vmatprep.subr.mxu0 0.0
      %9825 = vmatpush1.msra.mxu0 0.0
      %9826 = vmatprep.subr.mxu0 0.0
      %9827 = vmatpush1.msra.mxu0 0.0
      %9828 = vmatprep.subr.mxu0 0.0
      %9829 = vmatpush1.msra.mxu0 0.0
      %9830 = vmatprep.subr.mxu0 0.0
      %9831 = vmatpush1.msra.mxu0 0.0
      %9832 = vmatprep.subr.mxu0 0.0
      %9833 = vmatpush1.msra.mxu0 0.0
      %9834 = vmatprep.subr.mxu0 0.0
      %9835 = vmatpush1.msra.mxu0 0.0
      %9836 = vmatprep.subr.mxu0 0.0
      %9837 = vmatpush1.msra.mxu0 0.0
      %9838 = vmatprep.subr.mxu0 0.0
      %9839 = vmatpush1.msra.mxu0 0.0
      %9840 = vmatprep.subr.mxu0 0.0
      %9841 = vmatpush1.msra.mxu0 0.0
      %9842 = vmatprep.subr.mxu0 0.0
      %9843 = vmatpush1.msra.mxu0 0.0
      %9844 = vmatprep.subr.mxu0 0.0
      %9845 = vmatpush1.msra.mxu0 0.0
      %9846 = vmatprep.subr.mxu0 0.0
      %9847 = vmatpush1.msra.mxu0 0.0
      %9848 = vmatprep.subr.mxu0 0.0
      %9849 = vmatpush1.msra.mxu0 0.0
      %9850 = vmatprep.subr.mxu0 0.0
      %9851 = vmatpush1.msra.mxu0 0.0
      %9852 = vmatprep.subr.mxu0 0.0
      %9853 = vmatpush1.msra.mxu0 0.0
      %9854 = vmatprep.subr.mxu0 0.0
      %9855 = vmatpush1.msra.mxu0 0.0
      %9856 = vmatprep.subr.mxu0 0.0
      %9857 = vmatpush1.msra.mxu0 0.0
      %9858 = vmatprep.subr.mxu0 0.0
      %9859 = vmatpush1.msra.mxu0 0.0
      %9860 = vmatprep.subr.mxu0 0.0
      %9861 = vmatpush1.msra.mxu0 0.0
      %9862 = vmatprep.subr.mxu0 0.0
      %9863 = vmatpush1.msra.mxu0 0.0
      %9864 = vmatprep.subr.mxu0 0.0
      %9865 = vmatpush1.msra.mxu0 0.0
      %9866 = vmatprep.subr.mxu0 0.0
      %9867 = vmatpush1.msra.mxu0 0.0
      %9868 = vmatprep.subr.mxu0 0.0
      %9869 = vmatpush1.msra.mxu0 0.0
      %9870 = vmatprep.subr.mxu0 0.0
      %9871 = vmatpush1.msra.mxu0 0.0
      %9872 = vmatprep.subr.mxu0 0.0
      %9873 = vmatpush1.msra.mxu0 0.0
      %9874 = vmatprep.subr.mxu0 0.0
      %9875 = vmatpush1.msra.mxu0 0.0
      %9876 = vmatprep.subr.mxu0 0.0
      %9877 = vmatpush1.msra.mxu0 0.0
      %9878 = vmatprep.mubr.f32.mxu0 0.0
      %9879 = vmatmul.mubr.f32.gmra.mrb[0].mxu0 %v9812
      %v9880 = vpop.f32.mrb[0].mxu0
      %v9881 = vadd.f32 0.0, %v9880
      %v9882 = vpop.f32.mrb[0].mxu0
      %9883 = vdwg.mxu0
      %v9884 = vadd.f32 %v9806, %v9881
      %v9885 = vld [vmem:[%s7 + $0x160] sm:$0xff]
      %v9886 = vld [vmem:[%s7 + $0x168] sm:$0xff]
      %v9887 = vld [vmem:[%s7 + $0x170] sm:$0xff]
      %v9888 = vld [vmem:[%s7 + $0x178] sm:$0xff]
      %v9890 = vsel %vm1284, %v9012, 0
      %9892 = vmatprep.subr.mxu0 0.0
      %9893 = vmatpush1.msra.mxu0 %v9885
      %9894 = vmatprep.subr.mxu0 0.0
      %9895 = vmatpush1.msra.mxu0 %v9886
      %9896 = vmatprep.subr.mxu0 0.0
      %9897 = vmatpush1.msra.mxu0 %v9887
      %9898 = vmatprep.subr.mxu0 0.0
      %9899 = vmatpush1.msra.mxu0 %v9888
      %9900 = vmatprep.subr.mxu0 0.0
      %9901 = vmatpush1.msra.mxu0 0.0
      %9902 = vmatprep.subr.mxu0 0.0
      %9903 = vmatpush1.msra.mxu0 0.0
      %9904 = vmatprep.subr.mxu0 0.0
      %9905 = vmatpush1.msra.mxu0 0.0
      %9906 = vmatprep.subr.mxu0 0.0
      %9907 = vmatpush1.msra.mxu0 0.0
      %9908 = vmatprep.subr.mxu0 0.0
      %9909 = vmatpush1.msra.mxu0 0.0
      %9910 = vmatprep.subr.mxu0 0.0
      %9911 = vmatpush1.msra.mxu0 0.0
      %9912 = vmatprep.subr.mxu0 0.0
      %9913 = vmatpush1.msra.mxu0 0.0
      %9914 = vmatprep.subr.mxu0 0.0
      %9915 = vmatpush1.msra.mxu0 0.0
      %9916 = vmatprep.subr.mxu0 0.0
      %9917 = vmatpush1.msra.mxu0 0.0
      %9918 = vmatprep.subr.mxu0 0.0
      %9919 = vmatpush1.msra.mxu0 0.0
      %9920 = vmatprep.subr.mxu0 0.0
      %9921 = vmatpush1.msra.mxu0 0.0
      %9922 = vmatprep.subr.mxu0 0.0
      %9923 = vmatpush1.msra.mxu0 0.0
      %9924 = vmatprep.subr.mxu0 0.0
      %9925 = vmatpush1.msra.mxu0 0.0
      %9926 = vmatprep.subr.mxu0 0.0
      %9927 = vmatpush1.msra.mxu0 0.0
      %9928 = vmatprep.subr.mxu0 0.0
      %9929 = vmatpush1.msra.mxu0 0.0
      %9930 = vmatprep.subr.mxu0 0.0
      %9931 = vmatpush1.msra.mxu0 0.0
      %9932 = vmatprep.subr.mxu0 0.0
      %9933 = vmatpush1.msra.mxu0 0.0
      %9934 = vmatprep.subr.mxu0 0.0
      %9935 = vmatpush1.msra.mxu0 0.0
      %9936 = vmatprep.subr.mxu0 0.0
      %9937 = vmatpush1.msra.mxu0 0.0
      %9938 = vmatprep.subr.mxu0 0.0
      %9939 = vmatpush1.msra.mxu0 0.0
      %9940 = vmatprep.subr.mxu0 0.0
      %9941 = vmatpush1.msra.mxu0 0.0
      %9942 = vmatprep.subr.mxu0 0.0
      %9943 = vmatpush1.msra.mxu0 0.0
      %9944 = vmatprep.subr.mxu0 0.0
      %9945 = vmatpush1.msra.mxu0 0.0
      %9946 = vmatprep.subr.mxu0 0.0
      %9947 = vmatpush1.msra.mxu0 0.0
      %9948 = vmatprep.subr.mxu0 0.0
      %9949 = vmatpush1.msra.mxu0 0.0
      %9950 = vmatprep.subr.mxu0 0.0
      %9951 = vmatpush1.msra.mxu0 0.0
      %9952 = vmatprep.subr.mxu0 0.0
      %9953 = vmatpush1.msra.mxu0 0.0
      %9954 = vmatprep.subr.mxu0 0.0
      %9955 = vmatpush1.msra.mxu0 0.0
      %9956 = vmatprep.mubr.f32.mxu0 0.0
      %9957 = vmatmul.mubr.f32.gmra.mrb[0].mxu0 %v9890
      %v9958 = vpop.f32.mrb[0].mxu0
      %v9959 = vadd.f32 0.0, %v9958
      %v9960 = vpop.f32.mrb[0].mxu0
      %9961 = vdwg.mxu0
      %v9962 = vadd.f32 %v9884, %v9959
      %v9963 = vld [vmem:[%s7 + $0x180] sm:$0xff]
      %v9964 = vld [vmem:[%s7 + $0x188] sm:$0xff]
      %v9965 = vld [vmem:[%s7 + $0x190] sm:$0xff]
      %v9966 = vld [vmem:[%s7 + $0x198] sm:$0xff]
      %v9968 = vsel %vm1284, %v9013, 0
      %9970 = vmatprep.subr.mxu0 0.0
      %9971 = vmatpush1.msra.mxu0 %v9963
      %9972 = vmatprep.subr.mxu0 0.0
      %9973 = vmatpush1.msra.mxu0 %v9964
      %9974 = vmatprep.subr.mxu0 0.0
      %9975 = vmatpush1.msra.mxu0 %v9965
      %9976 = vmatprep.subr.mxu0 0.0
      %9977 = vmatpush1.msra.mxu0 %v9966
      %9978 = vmatprep.subr.mxu0 0.0
      %9979 = vmatpush1.msra.mxu0 0.0
      %9980 = vmatprep.subr.mxu0 0.0
      %9981 = vmatpush1.msra.mxu0 0.0
      %9982 = vmatprep.subr.mxu0 0.0
      %9983 = vmatpush1.msra.mxu0 0.0
      %9984 = vmatprep.subr.mxu0 0.0
      %9985 = vmatpush1.msra.mxu0 0.0
      %9986 = vmatprep.subr.mxu0 0.0
      %9987 = vmatpush1.msra.mxu0 0.0
      %9988 = vmatprep.subr.mxu0 0.0
      %9989 = vmatpush1.msra.mxu0 0.0
      %9990 = vmatprep.subr.mxu0 0.0
      %9991 = vmatpush1.msra.mxu0 0.0
      %9992 = vmatprep.subr.mxu0 0.0
      %9993 = vmatpush1.msra.mxu0 0.0
      %9994 = vmatprep.subr.mxu0 0.0
      %9995 = vmatpush1.msra.mxu0 0.0
      %9996 = vmatprep.subr.mxu0 0.0
      %9997 = vmatpush1.msra.mxu0 0.0
      %9998 = vmatprep.subr.mxu0 0.0
      %9999 = vmatpush1.msra.mxu0 0.0
      %10000 = vmatprep.subr.mxu0 0.0
      %10001 = vmatpush1.msra.mxu0 0.0
      %10002 = vmatprep.subr.mxu0 0.0
      %10003 = vmatpush1.msra.mxu0 0.0
      %10004 = vmatprep.subr.mxu0 0.0
      %10005 = vmatpush1.msra.mxu0 0.0
      %10006 = vmatprep.subr.mxu0 0.0
      %10007 = vmatpush1.msra.mxu0 0.0
      %10008 = vmatprep.subr.mxu0 0.0
      %10009 = vmatpush1.msra.mxu0 0.0
      %10010 = vmatprep.subr.mxu0 0.0
      %10011 = vmatpush1.msra.mxu0 0.0
      %10012 = vmatprep.subr.mxu0 0.0
      %10013 = vmatpush1.msra.mxu0 0.0
      %10014 = vmatprep.subr.mxu0 0.0
      %10015 = vmatpush1.msra.mxu0 0.0
      %10016 = vmatprep.subr.mxu0 0.0
      %10017 = vmatpush1.msra.mxu0 0.0
      %10018 = vmatprep.subr.mxu0 0.0
      %10019 = vmatpush1.msra.mxu0 0.0
      %10020 = vmatprep.subr.mxu0 0.0
      %10021 = vmatpush1.msra.mxu0 0.0
      %10022 = vmatprep.subr.mxu0 0.0
      %10023 = vmatpush1.msra.mxu0 0.0
      %10024 = vmatprep.subr.mxu0 0.0
      %10025 = vmatpush1.msra.mxu0 0.0
      %10026 = vmatprep.subr.mxu0 0.0
      %10027 = vmatpush1.msra.mxu0 0.0
      %10028 = vmatprep.subr.mxu0 0.0
      %10029 = vmatpush1.msra.mxu0 0.0
      %10030 = vmatprep.subr.mxu0 0.0
      %10031 = vmatpush1.msra.mxu0 0.0
      %10032 = vmatprep.subr.mxu0 0.0
      %10033 = vmatpush1.msra.mxu0 0.0
      %10034 = vmatprep.mubr.f32.mxu0 0.0
      %10035 = vmatmul.mubr.f32.gmra.mrb[0].mxu0 %v9968
      %v10036 = vpop.f32.mrb[0].mxu0
      %v10037 = vadd.f32 0.0, %v10036
      %v10038 = vpop.f32.mrb[0].mxu0
      %10039 = vdwg.mxu0
      %v10040 = vadd.f32 %v9962, %v10037
      %v10041 = vld [vmem:[%s7 + $0x1a0] sm:$0xff]
      %v10042 = vld [vmem:[%s7 + $0x1a8] sm:$0xff]
      %v10043 = vld [vmem:[%s7 + $0x1b0] sm:$0xff]
      %v10044 = vld [vmem:[%s7 + $0x1b8] sm:$0xff]
      %v10046 = vsel %vm1284, %v9014, 0
      %10048 = vmatprep.subr.mxu0 0.0
      %10049 = vmatpush1.msra.mxu0 %v10041
      %10050 = vmatprep.subr.mxu0 0.0
      %10051 = vmatpush1.msra.mxu0 %v10042
      %10052 = vmatprep.subr.mxu0 0.0
      %10053 = vmatpush1.msra.mxu0 %v10043
      %10054 = vmatprep.subr.mxu0 0.0
      %10055 = vmatpush1.msra.mxu0 %v10044
      %10056 = vmatprep.subr.mxu0 0.0
      %10057 = vmatpush1.msra.mxu0 0.0
      %10058 = vmatprep.subr.mxu0 0.0
      %10059 = vmatpush1.msra.mxu0 0.0
      %10060 = vmatprep.subr.mxu0 0.0
      %10061 = vmatpush1.msra.mxu0 0.0
      %10062 = vmatprep.subr.mxu0 0.0
      %10063 = vmatpush1.msra.mxu0 0.0
      %10064 = vmatprep.subr.mxu0 0.0
      %10065 = vmatpush1.msra.mxu0 0.0
      %10066 = vmatprep.subr.mxu0 0.0
      %10067 = vmatpush1.msra.mxu0 0.0
      %10068 = vmatprep.subr.mxu0 0.0
      %10069 = vmatpush1.msra.mxu0 0.0
      %10070 = vmatprep.subr.mxu0 0.0
      %10071 = vmatpush1.msra.mxu0 0.0
      %10072 = vmatprep.subr.mxu0 0.0
      %10073 = vmatpush1.msra.mxu0 0.0
      %10074 = vmatprep.subr.mxu0 0.0
      %10075 = vmatpush1.msra.mxu0 0.0
      %10076 = vmatprep.subr.mxu0 0.0
      %10077 = vmatpush1.msra.mxu0 0.0
      %10078 = vmatprep.subr.mxu0 0.0
      %10079 = vmatpush1.msra.mxu0 0.0
      %10080 = vmatprep.subr.mxu0 0.0
      %10081 = vmatpush1.msra.mxu0 0.0
      %10082 = vmatprep.subr.mxu0 0.0
      %10083 = vmatpush1.msra.mxu0 0.0
      %10084 = vmatprep.subr.mxu0 0.0
      %10085 = vmatpush1.msra.mxu0 0.0
      %10086 = vmatprep.subr.mxu0 0.0
      %10087 = vmatpush1.msra.mxu0 0.0
      %10088 = vmatprep.subr.mxu0 0.0
      %10089 = vmatpush1.msra.mxu0 0.0
      %10090 = vmatprep.subr.mxu0 0.0
      %10091 = vmatpush1.msra.mxu0 0.0
      %10092 = vmatprep.subr.mxu0 0.0
      %10093 = vmatpush1.msra.mxu0 0.0
      %10094 = vmatprep.subr.mxu0 0.0
      %10095 = vmatpush1.msra.mxu0 0.0
      %10096 = vmatprep.subr.mxu0 0.0
      %10097 = vmatpush1.msra.mxu0 0.0
      %10098 = vmatprep.subr.mxu0 0.0
      %10099 = vmatpush1.msra.mxu0 0.0
      %10100 = vmatprep.subr.mxu0 0.0
      %10101 = vmatpush1.msra.mxu0 0.0
      %10102 = vmatprep.subr.mxu0 0.0
      %10103 = vmatpush1.msra.mxu0 0.0
      %10104 = vmatprep.subr.mxu0 0.0
      %10105 = vmatpush1.msra.mxu0 0.0
      %10106 = vmatprep.subr.mxu0 0.0
      %10107 = vmatpush1.msra.mxu0 0.0
      %10108 = vmatprep.subr.mxu0 0.0
      %10109 = vmatpush1.msra.mxu0 0.0
      %10110 = vmatprep.subr.mxu0 0.0
      %10111 = vmatpush1.msra.mxu0 0.0
      %10112 = vmatprep.mubr.f32.mxu0 0.0
      %10113 = vmatmul.mubr.f32.gmra.mrb[0].mxu0 %v10046
      %v10114 = vpop.f32.mrb[0].mxu0
      %v10115 = vadd.f32 0.0, %v10114
      %v10116 = vpop.f32.mrb[0].mxu0
      %10117 = vdwg.mxu0
      %v10118 = vadd.f32 %v10040, %v10115
      %v10119 = vld [vmem:[%s7 + $0x1c0] sm:$0xff]
      %v10120 = vld [vmem:[%s7 + $0x1c8] sm:$0xff]
      %v10121 = vld [vmem:[%s7 + $0x1d0] sm:$0xff]
      %v10122 = vld [vmem:[%s7 + $0x1d8] sm:$0xff]
      %v10124 = vsel %vm1284, %v9015, 0
      %10126 = vmatprep.subr.mxu0 0.0
      %10127 = vmatpush1.msra.mxu0 %v10119
      %10128 = vmatprep.subr.mxu0 0.0
      %10129 = vmatpush1.msra.mxu0 %v10120
      %10130 = vmatprep.subr.mxu0 0.0
      %10131 = vmatpush1.msra.mxu0 %v10121
      %10132 = vmatprep.subr.mxu0 0.0
      %10133 = vmatpush1.msra.mxu0 %v10122
      %10134 = vmatprep.subr.mxu0 0.0
      %10135 = vmatpush1.msra.mxu0 0.0
      %10136 = vmatprep.subr.mxu0 0.0
      %10137 = vmatpush1.msra.mxu0 0.0
      %10138 = vmatprep.subr.mxu0 0.0
      %10139 = vmatpush1.msra.mxu0 0.0
      %10140 = vmatprep.subr.mxu0 0.0
      %10141 = vmatpush1.msra.mxu0 0.0
      %10142 = vmatprep.subr.mxu0 0.0
      %10143 = vmatpush1.msra.mxu0 0.0
      %10144 = vmatprep.subr.mxu0 0.0
      %10145 = vmatpush1.msra.mxu0 0.0
      %10146 = vmatprep.subr.mxu0 0.0
      %10147 = vmatpush1.msra.mxu0 0.0
      %10148 = vmatprep.subr.mxu0 0.0
      %10149 = vmatpush1.msra.mxu0 0.0
      %10150 = vmatprep.subr.mxu0 0.0
      %10151 = vmatpush1.msra.mxu0 0.0
      %10152 = vmatprep.subr.mxu0 0.0
      %10153 = vmatpush1.msra.mxu0 0.0
      %10154 = vmatprep.subr.mxu0 0.0
      %10155 = vmatpush1.msra.mxu0 0.0
      %10156 = vmatprep.subr.mxu0 0.0
      %10157 = vmatpush1.msra.mxu0 0.0
      %10158 = vmatprep.subr.mxu0 0.0
      %10159 = vmatpush1.msra.mxu0 0.0
      %10160 = vmatprep.subr.mxu0 0.0
      %10161 = vmatpush1.msra.mxu0 0.0
      %10162 = vmatprep.subr.mxu0 0.0
      %10163 = vmatpush1.msra.mxu0 0.0
      %10164 = vmatprep.subr.mxu0 0.0
      %10165 = vmatpush1.msra.mxu0 0.0
      %10166 = vmatprep.subr.mxu0 0.0
      %10167 = vmatpush1.msra.mxu0 0.0
      %10168 = vmatprep.subr.mxu0 0.0
      %10169 = vmatpush1.msra.mxu0 0.0
      %10170 = vmatprep.subr.mxu0 0.0
      %10171 = vmatpush1.msra.mxu0 0.0
      %10172 = vmatprep.subr.mxu0 0.0
      %10173 = vmatpush1.msra.mxu0 0.0
      %10174 = vmatprep.subr.mxu0 0.0
      %10175 = vmatpush1.msra.mxu0 0.0
      %10176 = vmatprep.subr.mxu0 0.0
      %10177 = vmatpush1.msra.mxu0 0.0
      %10178 = vmatprep.subr.mxu0 0.0
      %10179 = vmatpush1.msra.mxu0 0.0
      %10180 = vmatprep.subr.mxu0 0.0
      %10181 = vmatpush1.msra.mxu0 0.0
      %10182 = vmatprep.subr.mxu0 0.0
      %10183 = vmatpush1.msra.mxu0 0.0
      %10184 = vmatprep.subr.mxu0 0.0
      %10185 = vmatpush1.msra.mxu0 0.0
      %10186 = vmatprep.subr.mxu0 0.0
      %10187 = vmatpush1.msra.mxu0 0.0
      %10188 = vmatprep.subr.mxu0 0.0
      %10189 = vmatpush1.msra.mxu0 0.0
      %10190 = vmatprep.mubr.f32.mxu0 0.0
      %10191 = vmatmul.mubr.f32.gmra.mrb[0].mxu0 %v10124
      %v10192 = vpop.f32.mrb[0].mxu0
      %v10193 = vadd.f32 0.0, %v10192
      %v10194 = vpop.f32.mrb[0].mxu0
      %10195 = vdwg.mxu0
      %v10196 = vadd.f32 %v10118, %v10193
      %v10197 = vld [vmem:[%s7 + $0x1e0] sm:$0xff]
      %v10198 = vld [vmem:[%s7 + $0x1e8] sm:$0xff]
      %v10199 = vld [vmem:[%s7 + $0x1f0] sm:$0xff]
      %v10200 = vld [vmem:[%s7 + $0x1f8] sm:$0xff]
      %v10202 = vsel %vm1284, %v9016, 0
      %10204 = vmatprep.subr.mxu0 0.0
      %10205 = vmatpush1.msra.mxu0 %v10197
      %10206 = vmatprep.subr.mxu0 0.0
      %10207 = vmatpush1.msra.mxu0 %v10198
      %10208 = vmatprep.subr.mxu0 0.0
      %10209 = vmatpush1.msra.mxu0 %v10199
      %10210 = vmatprep.subr.mxu0 0.0
      %10211 = vmatpush1.msra.mxu0 %v10200
      %10212 = vmatprep.subr.mxu0 0.0
      %10213 = vmatpush1.msra.mxu0 0.0
      %10214 = vmatprep.subr.mxu0 0.0
      %10215 = vmatpush1.msra.mxu0 0.0
      %10216 = vmatprep.subr.mxu0 0.0
      %10217 = vmatpush1.msra.mxu0 0.0
      %10218 = vmatprep.subr.mxu0 0.0
      %10219 = vmatpush1.msra.mxu0 0.0
      %10220 = vmatprep.subr.mxu0 0.0
      %10221 = vmatpush1.msra.mxu0 0.0
      %10222 = vmatprep.subr.mxu0 0.0
      %10223 = vmatpush1.msra.mxu0 0.0
      %10224 = vmatprep.subr.mxu0 0.0
      %10225 = vmatpush1.msra.mxu0 0.0
      %10226 = vmatprep.subr.mxu0 0.0
      %10227 = vmatpush1.msra.mxu0 0.0
      %10228 = vmatprep.subr.mxu0 0.0
      %10229 = vmatpush1.msra.mxu0 0.0
      %10230 = vmatprep.subr.mxu0 0.0
      %10231 = vmatpush1.msra.mxu0 0.0
      %10232 = vmatprep.subr.mxu0 0.0
      %10233 = vmatpush1.msra.mxu0 0.0
      %10234 = vmatprep.subr.mxu0 0.0
      %10235 = vmatpush1.msra.mxu0 0.0
      %10236 = vmatprep.subr.mxu0 0.0
      %10237 = vmatpush1.msra.mxu0 0.0
      %10238 = vmatprep.subr.mxu0 0.0
      %10239 = vmatpush1.msra.mxu0 0.0
      %10240 = vmatprep.subr.mxu0 0.0
      %10241 = vmatpush1.msra.mxu0 0.0
      %10242 = vmatprep.subr.mxu0 0.0
      %10243 = vmatpush1.msra.mxu0 0.0
      %10244 = vmatprep.subr.mxu0 0.0
      %10245 = vmatpush1.msra.mxu0 0.0
      %10246 = vmatprep.subr.mxu0 0.0
      %10247 = vmatpush1.msra.mxu0 0.0
      %10248 = vmatprep.subr.mxu0 0.0
      %10249 = vmatpush1.msra.mxu0 0.0
      %10250 = vmatprep.subr.mxu0 0.0
      %10251 = vmatpush1.msra.mxu0 0.0
      %10252 = vmatprep.subr.mxu0 0.0
      %10253 = vmatpush1.msra.mxu0 0.0
      %10254 = vmatprep.subr.mxu0 0.0
      %10255 = vmatpush1.msra.mxu0 0.0
      %10256 = vmatprep.subr.mxu0 0.0
      %10257 = vmatpush1.msra.mxu0 0.0
      %10258 = vmatprep.subr.mxu0 0.0
      %10259 = vmatpush1.msra.mxu0 0.0
      %10260 = vmatprep.subr.mxu0 0.0
      %10261 = vmatpush1.msra.mxu0 0.0
      %10262 = vmatprep.subr.mxu0 0.0
      %10263 = vmatpush1.msra.mxu0 0.0
      %10264 = vmatprep.subr.mxu0 0.0
      %10265 = vmatpush1.msra.mxu0 0.0
      %10266 = vmatprep.subr.mxu0 0.0
      %10267 = vmatpush1.msra.mxu0 0.0
      %10268 = vmatprep.mubr.f32.mxu0 0.0
      %10269 = vmatmul.mubr.f32.gmra.mrb[0].mxu0 %v10202
      %v10270 = vpop.f32.mrb[0].mxu0
      %v10271 = vadd.f32 0.0, %v10270
      %v10272 = vpop.f32.mrb[0].mxu0
      %10273 = vdwg.mxu0
      %v10274 = vadd.f32 %v10196, %v10271
      %v10275 = vld [vmem:[%s7 + $0x200] sm:$0xff]
      %v10276 = vld [vmem:[%s7 + $0x208] sm:$0xff]
      %v10277 = vld [vmem:[%s7 + $0x210] sm:$0xff]
      %v10278 = vld [vmem:[%s7 + $0x218] sm:$0xff]
      %v10280 = vsel %vm1284, %v9017, 0
      %10282 = vmatprep.subr.mxu0 0.0
      %10283 = vmatpush1.msra.mxu0 %v10275
      %10284 = vmatprep.subr.mxu0 0.0
      %10285 = vmatpush1.msra.mxu0 %v10276
      %10286 = vmatprep.subr.mxu0 0.0
      %10287 = vmatpush1.msra.mxu0 %v10277
      %10288 = vmatprep.subr.mxu0 0.0
      %10289 = vmatpush1.msra.mxu0 %v10278
      %10290 = vmatprep.subr.mxu0 0.0
      %10291 = vmatpush1.msra.mxu0 0.0
      %10292 = vmatprep.subr.mxu0 0.0
      %10293 = vmatpush1.msra.mxu0 0.0
      %10294 = vmatprep.subr.mxu0 0.0
      %10295 = vmatpush1.msra.mxu0 0.0
      %10296 = vmatprep.subr.mxu0 0.0
      %10297 = vmatpush1.msra.mxu0 0.0
      %10298 = vmatprep.subr.mxu0 0.0
      %10299 = vmatpush1.msra.mxu0 0.0
      %10300 = vmatprep.subr.mxu0 0.0
      %10301 = vmatpush1.msra.mxu0 0.0
      %10302 = vmatprep.subr.mxu0 0.0
      %10303 = vmatpush1.msra.mxu0 0.0
      %10304 = vmatprep.subr.mxu0 0.0
      %10305 = vmatpush1.msra.mxu0 0.0
      %10306 = vmatprep.subr.mxu0 0.0
      %10307 = vmatpush1.msra.mxu0 0.0
      %10308 = vmatprep.subr.mxu0 0.0
      %10309 = vmatpush1.msra.mxu0 0.0
      %10310 = vmatprep.subr.mxu0 0.0
      %10311 = vmatpush1.msra.mxu0 0.0
      %10312 = vmatprep.subr.mxu0 0.0
      %10313 = vmatpush1.msra.mxu0 0.0
      %10314 = vmatprep.subr.mxu0 0.0
      %10315 = vmatpush1.msra.mxu0 0.0
      %10316 = vmatprep.subr.mxu0 0.0
      %10317 = vmatpush1.msra.mxu0 0.0
      %10318 = vmatprep.subr.mxu0 0.0
      %10319 = vmatpush1.msra.mxu0 0.0
      %10320 = vmatprep.subr.mxu0 0.0
      %10321 = vmatpush1.msra.mxu0 0.0
      %10322 = vmatprep.subr.mxu0 0.0
      %10323 = vmatpush1.msra.mxu0 0.0
      %10324 = vmatprep.subr.mxu0 0.0
      %10325 = vmatpush1.msra.mxu0 0.0
      %10326 = vmatprep.subr.mxu0 0.0
      %10327 = vmatpush1.msra.mxu0 0.0
      %10328 = vmatprep.subr.mxu0 0.0
      %10329 = vmatpush1.msra.mxu0 0.0
      %10330 = vmatprep.subr.mxu0 0.0
      %10331 = vmatpush1.msra.mxu0 0.0
      %10332 = vmatprep.subr.mxu0 0.0
      %10333 = vmatpush1.msra.mxu0 0.0
      %10334 = vmatprep.subr.mxu0 0.0
      %10335 = vmatpush1.msra.mxu0 0.0
      %10336 = vmatprep.subr.mxu0 0.0
      %10337 = vmatpush1.msra.mxu0 0.0
      %10338 = vmatprep.subr.mxu0 0.0
      %10339 = vmatpush1.msra.mxu0 0.0
      %10340 = vmatprep.subr.mxu0 0.0
      %10341 = vmatpush1.msra.mxu0 0.0
      %10342 = vmatprep.subr.mxu0 0.0
      %10343 = vmatpush1.msra.mxu0 0.0
      %10344 = vmatprep.subr.mxu0 0.0
      %10345 = vmatpush1.msra.mxu0 0.0
      %10346 = vmatprep.mubr.f32.mxu0 0.0
      %10347 = vmatmul.mubr.f32.gmra.mrb[0].mxu0 %v10280
      %v10348 = vpop.f32.mrb[0].mxu0
      %v10349 = vadd.f32 0.0, %v10348
      %v10350 = vpop.f32.mrb[0].mxu0
      %10351 = vdwg.mxu0
      %v10352 = vadd.f32 %v10274, %v10349
      %v10353 = vld [vmem:[%s7 + $0x220] sm:$0xff]
      %v10354 = vld [vmem:[%s7 + $0x228] sm:$0xff]
      %v10355 = vld [vmem:[%s7 + $0x230] sm:$0xff]
      %v10356 = vld [vmem:[%s7 + $0x238] sm:$0xff]
      %v10358 = vsel %vm1284, %v9018, 0
      %10360 = vmatprep.subr.mxu0 0.0
      %10361 = vmatpush1.msra.mxu0 %v10353
      %10362 = vmatprep.subr.mxu0 0.0
      %10363 = vmatpush1.msra.mxu0 %v10354
      %10364 = vmatprep.subr.mxu0 0.0
      %10365 = vmatpush1.msra.mxu0 %v10355
      %10366 = vmatprep.subr.mxu0 0.0
      %10367 = vmatpush1.msra.mxu0 %v10356
      %10368 = vmatprep.subr.mxu0 0.0
      %10369 = vmatpush1.msra.mxu0 0.0
      %10370 = vmatprep.subr.mxu0 0.0
      %10371 = vmatpush1.msra.mxu0 0.0
      %10372 = vmatprep.subr.mxu0 0.0
      %10373 = vmatpush1.msra.mxu0 0.0
      %10374 = vmatprep.subr.mxu0 0.0
      %10375 = vmatpush1.msra.mxu0 0.0
      %10376 = vmatprep.subr.mxu0 0.0
      %10377 = vmatpush1.msra.mxu0 0.0
      %10378 = vmatprep.subr.mxu0 0.0
      %10379 = vmatpush1.msra.mxu0 0.0
      %10380 = vmatprep.subr.mxu0 0.0
      %10381 = vmatpush1.msra.mxu0 0.0
      %10382 = vmatprep.subr.mxu0 0.0
      %10383 = vmatpush1.msra.mxu0 0.0
      %10384 = vmatprep.subr.mxu0 0.0
      %10385 = vmatpush1.msra.mxu0 0.0
      %10386 = vmatprep.subr.mxu0 0.0
      %10387 = vmatpush1.msra.mxu0 0.0
      %10388 = vmatprep.subr.mxu0 0.0
      %10389 = vmatpush1.msra.mxu0 0.0
      %10390 = vmatprep.subr.mxu0 0.0
      %10391 = vmatpush1.msra.mxu0 0.0
      %10392 = vmatprep.subr.mxu0 0.0
      %10393 = vmatpush1.msra.mxu0 0.0
      %10394 = vmatprep.subr.mxu0 0.0
      %10395 = vmatpush1.msra.mxu0 0.0
      %10396 = vmatprep.subr.mxu0 0.0
      %10397 = vmatpush1.msra.mxu0 0.0
      %10398 = vmatprep.subr.mxu0 0.0
      %10399 = vmatpush1.msra.mxu0 0.0
      %10400 = vmatprep.subr.mxu0 0.0
      %10401 = vmatpush1.msra.mxu0 0.0
      %10402 = vmatprep.subr.mxu0 0.0
      %10403 = vmatpush1.msra.mxu0 0.0
      %10404 = vmatprep.subr.mxu0 0.0
      %10405 = vmatpush1.msra.mxu0 0.0
      %10406 = vmatprep.subr.mxu0 0.0
      %10407 = vmatpush1.msra.mxu0 0.0
      %10408 = vmatprep.subr.mxu0 0.0
      %10409 = vmatpush1.msra.mxu0 0.0
      %10410 = vmatprep.subr.mxu0 0.0
      %10411 = vmatpush1.msra.mxu0 0.0
      %10412 = vmatprep.subr.mxu0 0.0
      %10413 = vmatpush1.msra.mxu0 0.0
      %10414 = vmatprep.subr.mxu0 0.0
      %10415 = vmatpush1.msra.mxu0 0.0
      %10416 = vmatprep.subr.mxu0 0.0
      %10417 = vmatpush1.msra.mxu0 0.0
      %10418 = vmatprep.subr.mxu0 0.0
      %10419 = vmatpush1.msra.mxu0 0.0
      %10420 = vmatprep.subr.mxu0 0.0
      %10421 = vmatpush1.msra.mxu0 0.0
      %10422 = vmatprep.subr.mxu0 0.0
      %10423 = vmatpush1.msra.mxu0 0.0
      %10424 = vmatprep.mubr.f32.mxu0 0.0
      %10425 = vmatmul.mubr.f32.gmra.mrb[0].mxu0 %v10358
      %v10426 = vpop.f32.mrb[0].mxu0
      %v10427 = vadd.f32 0.0, %v10426
      %v10428 = vpop.f32.mrb[0].mxu0
      %10429 = vdwg.mxu0
      %v10430 = vadd.f32 %v10352, %v10427
      %v10431 = vld [vmem:[%s7 + $0x240] sm:$0xff]
      %v10432 = vld [vmem:[%s7 + $0x248] sm:$0xff]
      %v10433 = vld [vmem:[%s7 + $0x250] sm:$0xff]
      %v10434 = vld [vmem:[%s7 + $0x258] sm:$0xff]
      %v10436 = vsel %vm1284, %v9019, 0
      %10438 = vmatprep.subr.mxu0 0.0
      %10439 = vmatpush1.msra.mxu0 %v10431
      %10440 = vmatprep.subr.mxu0 0.0
      %10441 = vmatpush1.msra.mxu0 %v10432
      %10442 = vmatprep.subr.mxu0 0.0
      %10443 = vmatpush1.msra.mxu0 %v10433
      %10444 = vmatprep.subr.mxu0 0.0
      %10445 = vmatpush1.msra.mxu0 %v10434
      %10446 = vmatprep.subr.mxu0 0.0
      %10447 = vmatpush1.msra.mxu0 0.0
      %10448 = vmatprep.subr.mxu0 0.0
      %10449 = vmatpush1.msra.mxu0 0.0
      %10450 = vmatprep.subr.mxu0 0.0
      %10451 = vmatpush1.msra.mxu0 0.0
      %10452 = vmatprep.subr.mxu0 0.0
      %10453 = vmatpush1.msra.mxu0 0.0
      %10454 = vmatprep.subr.mxu0 0.0
      %10455 = vmatpush1.msra.mxu0 0.0
      %10456 = vmatprep.subr.mxu0 0.0
      %10457 = vmatpush1.msra.mxu0 0.0
      %10458 = vmatprep.subr.mxu0 0.0
      %10459 = vmatpush1.msra.mxu0 0.0
      %10460 = vmatprep.subr.mxu0 0.0
      %10461 = vmatpush1.msra.mxu0 0.0
      %10462 = vmatprep.subr.mxu0 0.0
      %10463 = vmatpush1.msra.mxu0 0.0
      %10464 = vmatprep.subr.mxu0 0.0
      %10465 = vmatpush1.msra.mxu0 0.0
      %10466 = vmatprep.subr.mxu0 0.0
      %10467 = vmatpush1.msra.mxu0 0.0
      %10468 = vmatprep.subr.mxu0 0.0
      %10469 = vmatpush1.msra.mxu0 0.0
      %10470 = vmatprep.subr.mxu0 0.0
      %10471 = vmatpush1.msra.mxu0 0.0
      %10472 = vmatprep.subr.mxu0 0.0
      %10473 = vmatpush1.msra.mxu0 0.0
      %10474 = vmatprep.subr.mxu0 0.0
      %10475 = vmatpush1.msra.mxu0 0.0
      %10476 = vmatprep.subr.mxu0 0.0
      %10477 = vmatpush1.msra.mxu0 0.0
      %10478 = vmatprep.subr.mxu0 0.0
      %10479 = vmatpush1.msra.mxu0 0.0
      %10480 = vmatprep.subr.mxu0 0.0
      %10481 = vmatpush1.msra.mxu0 0.0
      %10482 = vmatprep.subr.mxu0 0.0
      %10483 = vmatpush1.msra.mxu0 0.0
      %10484 = vmatprep.subr.mxu0 0.0
      %10485 = vmatpush1.msra.mxu0 0.0
      %10486 = vmatprep.subr.mxu0 0.0
      %10487 = vmatpush1.msra.mxu0 0.0
      %10488 = vmatprep.subr.mxu0 0.0
      %10489 = vmatpush1.msra.mxu0 0.0
      %10490 = vmatprep.subr.mxu0 0.0
      %10491 = vmatpush1.msra.mxu0 0.0
      %10492 = vmatprep.subr.mxu0 0.0
      %10493 = vmatpush1.msra.mxu0 0.0
      %10494 = vmatprep.subr.mxu0 0.0
      %10495 = vmatpush1.msra.mxu0 0.0
      %10496 = vmatprep.subr.mxu0 0.0
      %10497 = vmatpush1.msra.mxu0 0.0
      %10498 = vmatprep.subr.mxu0 0.0
      %10499 = vmatpush1.msra.mxu0 0.0
      %10500 = vmatprep.subr.mxu0 0.0
      %10501 = vmatpush1.msra.mxu0 0.0
      %10502 = vmatprep.mubr.f32.mxu0 0.0
      %10503 = vmatmul.mubr.f32.gmra.mrb[0].mxu0 %v10436
      %v10504 = vpop.f32.mrb[0].mxu0
      %v10505 = vadd.f32 0.0, %v10504
      %v10506 = vpop.f32.mrb[0].mxu0
      %10507 = vdwg.mxu0
      %v10508 = vadd.f32 %v10430, %v10505
      %v10509 = vld [vmem:[%s7 + $0x260] sm:$0xff]
      %v10510 = vld [vmem:[%s7 + $0x268] sm:$0xff]
      %v10511 = vld [vmem:[%s7 + $0x270] sm:$0xff]
      %v10512 = vld [vmem:[%s7 + $0x278] sm:$0xff]
      %v10514 = vsel %vm1284, %v9020, 0
      %10516 = vmatprep.subr.mxu0 0.0
      %10517 = vmatpush1.msra.mxu0 %v10509
      %10518 = vmatprep.subr.mxu0 0.0
      %10519 = vmatpush1.msra.mxu0 %v10510
      %10520 = vmatprep.subr.mxu0 0.0
      %10521 = vmatpush1.msra.mxu0 %v10511
      %10522 = vmatprep.subr.mxu0 0.0
      %10523 = vmatpush1.msra.mxu0 %v10512
      %10524 = vmatprep.subr.mxu0 0.0
      %10525 = vmatpush1.msra.mxu0 0.0
      %10526 = vmatprep.subr.mxu0 0.0
      %10527 = vmatpush1.msra.mxu0 0.0
      %10528 = vmatprep.subr.mxu0 0.0
      %10529 = vmatpush1.msra.mxu0 0.0
      %10530 = vmatprep.subr.mxu0 0.0
      %10531 = vmatpush1.msra.mxu0 0.0
      %10532 = vmatprep.subr.mxu0 0.0
      %10533 = vmatpush1.msra.mxu0 0.0
      %10534 = vmatprep.subr.mxu0 0.0
      %10535 = vmatpush1.msra.mxu0 0.0
      %10536 = vmatprep.subr.mxu0 0.0
      %10537 = vmatpush1.msra.mxu0 0.0
      %10538 = vmatprep.subr.mxu0 0.0
      %10539 = vmatpush1.msra.mxu0 0.0
      %10540 = vmatprep.subr.mxu0 0.0
      %10541 = vmatpush1.msra.mxu0 0.0
      %10542 = vmatprep.subr.mxu0 0.0
      %10543 = vmatpush1.msra.mxu0 0.0
      %10544 = vmatprep.subr.mxu0 0.0
      %10545 = vmatpush1.msra.mxu0 0.0
      %10546 = vmatprep.subr.mxu0 0.0
      %10547 = vmatpush1.msra.mxu0 0.0
      %10548 = vmatprep.subr.mxu0 0.0
      %10549 = vmatpush1.msra.mxu0 0.0
      %10550 = vmatprep.subr.mxu0 0.0
      %10551 = vmatpush1.msra.mxu0 0.0
      %10552 = vmatprep.subr.mxu0 0.0
      %10553 = vmatpush1.msra.mxu0 0.0
      %10554 = vmatprep.subr.mxu0 0.0
      %10555 = vmatpush1.msra.mxu0 0.0
      %10556 = vmatprep.subr.mxu0 0.0
      %10557 = vmatpush1.msra.mxu0 0.0
      %10558 = vmatprep.subr.mxu0 0.0
      %10559 = vmatpush1.msra.mxu0 0.0
      %10560 = vmatprep.subr.mxu0 0.0
      %10561 = vmatpush1.msra.mxu0 0.0
      %10562 = vmatprep.subr.mxu0 0.0
      %10563 = vmatpush1.msra.mxu0 0.0
      %10564 = vmatprep.subr.mxu0 0.0
      %10565 = vmatpush1.msra.mxu0 0.0
      %10566 = vmatprep.subr.mxu0 0.0
      %10567 = vmatpush1.msra.mxu0 0.0
      %10568 = vmatprep.subr.mxu0 0.0
      %10569 = vmatpush1.msra.mxu0 0.0
      %10570 = vmatprep.subr.mxu0 0.0
      %10571 = vmatpush1.msra.mxu0 0.0
      %10572 = vmatprep.subr.mxu0 0.0
      %10573 = vmatpush1.msra.mxu0 0.0
      %10574 = vmatprep.subr.mxu0 0.0
      %10575 = vmatpush1.msra.mxu0 0.0
      %10576 = vmatprep.subr.mxu0 0.0
      %10577 = vmatpush1.msra.mxu0 0.0
      %10578 = vmatprep.subr.mxu0 0.0
      %10579 = vmatpush1.msra.mxu0 0.0
      %10580 = vmatprep.mubr.f32.mxu0 0.0
      %10581 = vmatmul.mubr.f32.gmra.mrb[0].mxu0 %v10514
      %v10582 = vpop.f32.mrb[0].mxu0
      %v10583 = vadd.f32 0.0, %v10582
      %v10584 = vpop.f32.mrb[0].mxu0
      %10585 = vdwg.mxu0
      %v10586 = vadd.f32 %v10508, %v10583
      %v10587 = vld [vmem:[%s7 + $0x280] sm:$0xff]
      %v10588 = vld [vmem:[%s7 + $0x288] sm:$0xff]
      %v10589 = vld [vmem:[%s7 + $0x290] sm:$0xff]
      %v10590 = vld [vmem:[%s7 + $0x298] sm:$0xff]
      %v10592 = vsel %vm1284, %v9021, 0
      %10594 = vmatprep.subr.mxu0 0.0
      %10595 = vmatpush1.msra.mxu0 %v10587
      %10596 = vmatprep.subr.mxu0 0.0
      %10597 = vmatpush1.msra.mxu0 %v10588
      %10598 = vmatprep.subr.mxu0 0.0
      %10599 = vmatpush1.msra.mxu0 %v10589
      %10600 = vmatprep.subr.mxu0 0.0
      %10601 = vmatpush1.msra.mxu0 %v10590
      %10602 = vmatprep.subr.mxu0 0.0
      %10603 = vmatpush1.msra.mxu0 0.0
      %10604 = vmatprep.subr.mxu0 0.0
      %10605 = vmatpush1.msra.mxu0 0.0
      %10606 = vmatprep.subr.mxu0 0.0
      %10607 = vmatpush1.msra.mxu0 0.0
      %10608 = vmatprep.subr.mxu0 0.0
      %10609 = vmatpush1.msra.mxu0 0.0
      %10610 = vmatprep.subr.mxu0 0.0
      %10611 = vmatpush1.msra.mxu0 0.0
      %10612 = vmatprep.subr.mxu0 0.0
      %10613 = vmatpush1.msra.mxu0 0.0
      %10614 = vmatprep.subr.mxu0 0.0
      %10615 = vmatpush1.msra.mxu0 0.0
      %10616 = vmatprep.subr.mxu0 0.0
      %10617 = vmatpush1.msra.mxu0 0.0
      %10618 = vmatprep.subr.mxu0 0.0
      %10619 = vmatpush1.msra.mxu0 0.0
      %10620 = vmatprep.subr.mxu0 0.0
      %10621 = vmatpush1.msra.mxu0 0.0
      %10622 = vmatprep.subr.mxu0 0.0
      %10623 = vmatpush1.msra.mxu0 0.0
      %10624 = vmatprep.subr.mxu0 0.0
      %10625 = vmatpush1.msra.mxu0 0.0
      %10626 = vmatprep.subr.mxu0 0.0
      %10627 = vmatpush1.msra.mxu0 0.0
      %10628 = vmatprep.subr.mxu0 0.0
      %10629 = vmatpush1.msra.mxu0 0.0
      %10630 = vmatprep.subr.mxu0 0.0
      %10631 = vmatpush1.msra.mxu0 0.0
      %10632 = vmatprep.subr.mxu0 0.0
      %10633 = vmatpush1.msra.mxu0 0.0
      %10634 = vmatprep.subr.mxu0 0.0
      %10635 = vmatpush1.msra.mxu0 0.0
      %10636 = vmatprep.subr.mxu0 0.0
      %10637 = vmatpush1.msra.mxu0 0.0
      %10638 = vmatprep.subr.mxu0 0.0
      %10639 = vmatpush1.msra.mxu0 0.0
      %10640 = vmatprep.subr.mxu0 0.0
      %10641 = vmatpush1.msra.mxu0 0.0
      %10642 = vmatprep.subr.mxu0 0.0
      %10643 = vmatpush1.msra.mxu0 0.0
      %10644 = vmatprep.subr.mxu0 0.0
      %10645 = vmatpush1.msra.mxu0 0.0
      %10646 = vmatprep.subr.mxu0 0.0
      %10647 = vmatpush1.msra.mxu0 0.0
      %10648 = vmatprep.subr.mxu0 0.0
      %10649 = vmatpush1.msra.mxu0 0.0
      %10650 = vmatprep.subr.mxu0 0.0
      %10651 = vmatpush1.msra.mxu0 0.0
      %10652 = vmatprep.subr.mxu0 0.0
      %10653 = vmatpush1.msra.mxu0 0.0
      %10654 = vmatprep.subr.mxu0 0.0
      %10655 = vmatpush1.msra.mxu0 0.0
      %10656 = vmatprep.subr.mxu0 0.0
      %10657 = vmatpush1.msra.mxu0 0.0
      %10658 = vmatprep.mubr.f32.mxu0 0.0
      %10659 = vmatmul.mubr.f32.gmra.mrb[0].mxu0 %v10592
      %v10660 = vpop.f32.mrb[0].mxu0
      %v10661 = vadd.f32 0.0, %v10660
      %v10662 = vpop.f32.mrb[0].mxu0
      %10663 = vdwg.mxu0
      %v10664 = vadd.f32 %v10586, %v10661
      %v10665 = vld [vmem:[%s7 + $0x2a0] sm:$0xff]
      %v10666 = vld [vmem:[%s7 + $0x2a8] sm:$0xff]
      %v10667 = vld [vmem:[%s7 + $0x2b0] sm:$0xff]
      %v10668 = vld [vmem:[%s7 + $0x2b8] sm:$0xff]
      %v10670 = vsel %vm1284, %v9022, 0
      %10672 = vmatprep.subr.mxu0 0.0
      %10673 = vmatpush1.msra.mxu0 %v10665
      %10674 = vmatprep.subr.mxu0 0.0
      %10675 = vmatpush1.msra.mxu0 %v10666
      %10676 = vmatprep.subr.mxu0 0.0
      %10677 = vmatpush1.msra.mxu0 %v10667
      %10678 = vmatprep.subr.mxu0 0.0
      %10679 = vmatpush1.msra.mxu0 %v10668
      %10680 = vmatprep.subr.mxu0 0.0
      %10681 = vmatpush1.msra.mxu0 0.0
      %10682 = vmatprep.subr.mxu0 0.0
      %10683 = vmatpush1.msra.mxu0 0.0
      %10684 = vmatprep.subr.mxu0 0.0
      %10685 = vmatpush1.msra.mxu0 0.0
      %10686 = vmatprep.subr.mxu0 0.0
      %10687 = vmatpush1.msra.mxu0 0.0
      %10688 = vmatprep.subr.mxu0 0.0
      %10689 = vmatpush1.msra.mxu0 0.0
      %10690 = vmatprep.subr.mxu0 0.0
      %10691 = vmatpush1.msra.mxu0 0.0
      %10692 = vmatprep.subr.mxu0 0.0
      %10693 = vmatpush1.msra.mxu0 0.0
      %10694 = vmatprep.subr.mxu0 0.0
      %10695 = vmatpush1.msra.mxu0 0.0
      %10696 = vmatprep.subr.mxu0 0.0
      %10697 = vmatpush1.msra.mxu0 0.0
      %10698 = vmatprep.subr.mxu0 0.0
      %10699 = vmatpush1.msra.mxu0 0.0
      %10700 = vmatprep.subr.mxu0 0.0
      %10701 = vmatpush1.msra.mxu0 0.0
      %10702 = vmatprep.subr.mxu0 0.0
      %10703 = vmatpush1.msra.mxu0 0.0
      %10704 = vmatprep.subr.mxu0 0.0
      %10705 = vmatpush1.msra.mxu0 0.0
      %10706 = vmatprep.subr.mxu0 0.0
      %10707 = vmatpush1.msra.mxu0 0.0
      %10708 = vmatprep.subr.mxu0 0.0
      %10709 = vmatpush1.msra.mxu0 0.0
      %10710 = vmatprep.subr.mxu0 0.0
      %10711 = vmatpush1.msra.mxu0 0.0
      %10712 = vmatprep.subr.mxu0 0.0
      %10713 = vmatpush1.msra.mxu0 0.0
      %10714 = vmatprep.subr.mxu0 0.0
      %10715 = vmatpush1.msra.mxu0 0.0
      %10716 = vmatprep.subr.mxu0 0.0
      %10717 = vmatpush1.msra.mxu0 0.0
      %10718 = vmatprep.subr.mxu0 0.0
      %10719 = vmatpush1.msra.mxu0 0.0
      %10720 = vmatprep.subr.mxu0 0.0
      %10721 = vmatpush1.msra.mxu0 0.0
      %10722 = vmatprep.subr.mxu0 0.0
      %10723 = vmatpush1.msra.mxu0 0.0
      %10724 = vmatprep.subr.mxu0 0.0
      %10725 = vmatpush1.msra.mxu0 0.0
      %10726 = vmatprep.subr.mxu0 0.0
      %10727 = vmatpush1.msra.mxu0 0.0
      %10728 = vmatprep.subr.mxu0 0.0
      %10729 = vmatpush1.msra.mxu0 0.0
      %10730 = vmatprep.subr.mxu0 0.0
      %10731 = vmatpush1.msra.mxu0 0.0
      %10732 = vmatprep.subr.mxu0 0.0
      %10733 = vmatpush1.msra.mxu0 0.0
      %10734 = vmatprep.subr.mxu0 0.0
      %10735 = vmatpush1.msra.mxu0 0.0
      %10736 = vmatprep.mubr.f32.mxu0 0.0
      %10737 = vmatmul.mubr.f32.gmra.mrb[0].mxu0 %v10670
      %v10738 = vpop.f32.mrb[0].mxu0
      %v10739 = vadd.f32 0.0, %v10738
      %v10740 = vpop.f32.mrb[0].mxu0
      %10741 = vdwg.mxu0
      %v10742 = vadd.f32 %v10664, %v10739
      %v10743 = vld [vmem:[%s7 + $0x2c0] sm:$0xff]
      %v10744 = vld [vmem:[%s7 + $0x2c8] sm:$0xff]
      %v10745 = vld [vmem:[%s7 + $0x2d0] sm:$0xff]
      %v10746 = vld [vmem:[%s7 + $0x2d8] sm:$0xff]
      %v10748 = vsel %vm1284, %v9023, 0
      %10750 = vmatprep.subr.mxu0 0.0
      %10751 = vmatpush1.msra.mxu0 %v10743
      %10752 = vmatprep.subr.mxu0 0.0
      %10753 = vmatpush1.msra.mxu0 %v10744
      %10754 = vmatprep.subr.mxu0 0.0
      %10755 = vmatpush1.msra.mxu0 %v10745
      %10756 = vmatprep.subr.mxu0 0.0
      %10757 = vmatpush1.msra.mxu0 %v10746
      %10758 = vmatprep.subr.mxu0 0.0
      %10759 = vmatpush1.msra.mxu0 0.0
      %10760 = vmatprep.subr.mxu0 0.0
      %10761 = vmatpush1.msra.mxu0 0.0
      %10762 = vmatprep.subr.mxu0 0.0
      %10763 = vmatpush1.msra.mxu0 0.0
      %10764 = vmatprep.subr.mxu0 0.0
      %10765 = vmatpush1.msra.mxu0 0.0
      %10766 = vmatprep.subr.mxu0 0.0
      %10767 = vmatpush1.msra.mxu0 0.0
      %10768 = vmatprep.subr.mxu0 0.0
      %10769 = vmatpush1.msra.mxu0 0.0
      %10770 = vmatprep.subr.mxu0 0.0
      %10771 = vmatpush1.msra.mxu0 0.0
      %10772 = vmatprep.subr.mxu0 0.0
      %10773 = vmatpush1.msra.mxu0 0.0
      %10774 = vmatprep.subr.mxu0 0.0
      %10775 = vmatpush1.msra.mxu0 0.0
      %10776 = vmatprep.subr.mxu0 0.0
      %10777 = vmatpush1.msra.mxu0 0.0
      %10778 = vmatprep.subr.mxu0 0.0
      %10779 = vmatpush1.msra.mxu0 0.0
      %10780 = vmatprep.subr.mxu0 0.0
      %10781 = vmatpush1.msra.mxu0 0.0
      %10782 = vmatprep.subr.mxu0 0.0
      %10783 = vmatpush1.msra.mxu0 0.0
      %10784 = vmatprep.subr.mxu0 0.0
      %10785 = vmatpush1.msra.mxu0 0.0
      %10786 = vmatprep.subr.mxu0 0.0
      %10787 = vmatpush1.msra.mxu0 0.0
      %10788 = vmatprep.subr.mxu0 0.0
      %10789 = vmatpush1.msra.mxu0 0.0
      %10790 = vmatprep.subr.mxu0 0.0
      %10791 = vmatpush1.msra.mxu0 0.0
      %10792 = vmatprep.subr.mxu0 0.0
      %10793 = vmatpush1.msra.mxu0 0.0
      %10794 = vmatprep.subr.mxu0 0.0
      %10795 = vmatpush1.msra.mxu0 0.0
      %10796 = vmatprep.subr.mxu0 0.0
      %10797 = vmatpush1.msra.mxu0 0.0
      %10798 = vmatprep.subr.mxu0 0.0
      %10799 = vmatpush1.msra.mxu0 0.0
      %10800 = vmatprep.subr.mxu0 0.0
      %10801 = vmatpush1.msra.mxu0 0.0
      %10802 = vmatprep.subr.mxu0 0.0
      %10803 = vmatpush1.msra.mxu0 0.0
      %10804 = vmatprep.subr.mxu0 0.0
      %10805 = vmatpush1.msra.mxu0 0.0
      %10806 = vmatprep.subr.mxu0 0.0
      %10807 = vmatpush1.msra.mxu0 0.0
      %10808 = vmatprep.subr.mxu0 0.0
      %10809 = vmatpush1.msra.mxu0 0.0
      %10810 = vmatprep.subr.mxu0 0.0
      %10811 = vmatpush1.msra.mxu0 0.0
      %10812 = vmatprep.subr.mxu0 0.0
      %10813 = vmatpush1.msra.mxu0 0.0
      %10814 = vmatprep.mubr.f32.mxu0 0.0
      %10815 = vmatmul.mubr.f32.gmra.mrb[0].mxu0 %v10748
      %v10816 = vpop.f32.mrb[0].mxu0
      %v10817 = vadd.f32 0.0, %v10816
      %v10818 = vpop.f32.mrb[0].mxu0
      %10819 = vdwg.mxu0
      %v10820 = vadd.f32 %v10742, %v10817
      %v10821 = vld [vmem:[%s7 + $0x2e0] sm:$0xff]
      %v10822 = vld [vmem:[%s7 + $0x2e8] sm:$0xff]
      %v10823 = vld [vmem:[%s7 + $0x2f0] sm:$0xff]
      %v10824 = vld [vmem:[%s7 + $0x2f8] sm:$0xff]
      %v10826 = vsel %vm1284, %v9024, 0
      %10828 = vmatprep.subr.mxu0 0.0
      %10829 = vmatpush1.msra.mxu0 %v10821
      %10830 = vmatprep.subr.mxu0 0.0
      %10831 = vmatpush1.msra.mxu0 %v10822
      %10832 = vmatprep.subr.mxu0 0.0
      %10833 = vmatpush1.msra.mxu0 %v10823
      %10834 = vmatprep.subr.mxu0 0.0
      %10835 = vmatpush1.msra.mxu0 %v10824
      %10836 = vmatprep.subr.mxu0 0.0
      %10837 = vmatpush1.msra.mxu0 0.0
      %10838 = vmatprep.subr.mxu0 0.0
      %10839 = vmatpush1.msra.mxu0 0.0
      %10840 = vmatprep.subr.mxu0 0.0
      %10841 = vmatpush1.msra.mxu0 0.0
      %10842 = vmatprep.subr.mxu0 0.0
      %10843 = vmatpush1.msra.mxu0 0.0
      %10844 = vmatprep.subr.mxu0 0.0
      %10845 = vmatpush1.msra.mxu0 0.0
      %10846 = vmatprep.subr.mxu0 0.0
      %10847 = vmatpush1.msra.mxu0 0.0
      %10848 = vmatprep.subr.mxu0 0.0
      %10849 = vmatpush1.msra.mxu0 0.0
      %10850 = vmatprep.subr.mxu0 0.0
      %10851 = vmatpush1.msra.mxu0 0.0
      %10852 = vmatprep.subr.mxu0 0.0
      %10853 = vmatpush1.msra.mxu0 0.0
      %10854 = vmatprep.subr.mxu0 0.0
      %10855 = vmatpush1.msra.mxu0 0.0
      %10856 = vmatprep.subr.mxu0 0.0
      %10857 = vmatpush1.msra.mxu0 0.0
      %10858 = vmatprep.subr.mxu0 0.0
      %10859 = vmatpush1.msra.mxu0 0.0
      %10860 = vmatprep.subr.mxu0 0.0
      %10861 = vmatpush1.msra.mxu0 0.0
      %10862 = vmatprep.subr.mxu0 0.0
      %10863 = vmatpush1.msra.mxu0 0.0
      %10864 = vmatprep.subr.mxu0 0.0
      %10865 = vmatpush1.msra.mxu0 0.0
      %10866 = vmatprep.subr.mxu0 0.0
      %10867 = vmatpush1.msra.mxu0 0.0
      %10868 = vmatprep.subr.mxu0 0.0
      %10869 = vmatpush1.msra.mxu0 0.0
      %10870 = vmatprep.subr.mxu0 0.0
      %10871 = vmatpush1.msra.mxu0 0.0
      %10872 = vmatprep.subr.mxu0 0.0
      %10873 = vmatpush1.msra.mxu0 0.0
      %10874 = vmatprep.subr.mxu0 0.0
      %10875 = vmatpush1.msra.mxu0 0.0
      %10876 = vmatprep.subr.mxu0 0.0
      %10877 = vmatpush1.msra.mxu0 0.0
      %10878 = vmatprep.subr.mxu0 0.0
      %10879 = vmatpush1.msra.mxu0 0.0
      %10880 = vmatprep.subr.mxu0 0.0
      %10881 = vmatpush1.msra.mxu0 0.0
      %10882 = vmatprep.subr.mxu0 0.0
      %10883 = vmatpush1.msra.mxu0 0.0
      %10884 = vmatprep.subr.mxu0 0.0
      %10885 = vmatpush1.msra.mxu0 0.0
      %10886 = vmatprep.subr.mxu0 0.0
      %10887 = vmatpush1.msra.mxu0 0.0
      %10888 = vmatprep.subr.mxu0 0.0
      %10889 = vmatpush1.msra.mxu0 0.0
      %10890 = vmatprep.subr.mxu0 0.0
      %10891 = vmatpush1.msra.mxu0 0.0
      %10892 = vmatprep.mubr.f32.mxu0 0.0
      %10893 = vmatmul.mubr.f32.gmra.mrb[0].mxu0 %v10826
      %v10894 = vpop.f32.mrb[0].mxu0
      %v10895 = vadd.f32 0.0, %v10894
      %v10896 = vpop.f32.mrb[0].mxu0
      %10897 = vdwg.mxu0
      %v10898 = vadd.f32 %v10820, %v10895
      %v10899 = vld [vmem:[%s7 + $0x300] sm:$0xff]
      %v10900 = vld [vmem:[%s7 + $0x308] sm:$0xff]
      %v10901 = vld [vmem:[%s7 + $0x310] sm:$0xff]
      %v10902 = vld [vmem:[%s7 + $0x318] sm:$0xff]
      %v10904 = vsel %vm1284, %v9025, 0
      %10906 = vmatprep.subr.mxu0 0.0
      %10907 = vmatpush1.msra.mxu0 %v10899
      %10908 = vmatprep.subr.mxu0 0.0
      %10909 = vmatpush1.msra.mxu0 %v10900
      %10910 = vmatprep.subr.mxu0 0.0
      %10911 = vmatpush1.msra.mxu0 %v10901
      %10912 = vmatprep.subr.mxu0 0.0
      %10913 = vmatpush1.msra.mxu0 %v10902
      %10914 = vmatprep.subr.mxu0 0.0
      %10915 = vmatpush1.msra.mxu0 0.0
      %10916 = vmatprep.subr.mxu0 0.0
      %10917 = vmatpush1.msra.mxu0 0.0
      %10918 = vmatprep.subr.mxu0 0.0
      %10919 = vmatpush1.msra.mxu0 0.0
      %10920 = vmatprep.subr.mxu0 0.0
      %10921 = vmatpush1.msra.mxu0 0.0
      %10922 = vmatprep.subr.mxu0 0.0
      %10923 = vmatpush1.msra.mxu0 0.0
      %10924 = vmatprep.subr.mxu0 0.0
      %10925 = vmatpush1.msra.mxu0 0.0
      %10926 = vmatprep.subr.mxu0 0.0
      %10927 = vmatpush1.msra.mxu0 0.0
      %10928 = vmatprep.subr.mxu0 0.0
      %10929 = vmatpush1.msra.mxu0 0.0
      %10930 = vmatprep.subr.mxu0 0.0
      %10931 = vmatpush1.msra.mxu0 0.0
      %10932 = vmatprep.subr.mxu0 0.0
      %10933 = vmatpush1.msra.mxu0 0.0
      %10934 = vmatprep.subr.mxu0 0.0
      %10935 = vmatpush1.msra.mxu0 0.0
      %10936 = vmatprep.subr.mxu0 0.0
      %10937 = vmatpush1.msra.mxu0 0.0
      %10938 = vmatprep.subr.mxu0 0.0
      %10939 = vmatpush1.msra.mxu0 0.0
      %10940 = vmatprep.subr.mxu0 0.0
      %10941 = vmatpush1.msra.mxu0 0.0
      %10942 = vmatprep.subr.mxu0 0.0
      %10943 = vmatpush1.msra.mxu0 0.0
      %10944 = vmatprep.subr.mxu0 0.0
      %10945 = vmatpush1.msra.mxu0 0.0
      %10946 = vmatprep.subr.mxu0 0.0
      %10947 = vmatpush1.msra.mxu0 0.0
      %10948 = vmatprep.subr.mxu0 0.0
      %10949 = vmatpush1.msra.mxu0 0.0
      %10950 = vmatprep.subr.mxu0 0.0
      %10951 = vmatpush1.msra.mxu0 0.0
      %10952 = vmatprep.subr.mxu0 0.0
      %10953 = vmatpush1.msra.mxu0 0.0
      %10954 = vmatprep.subr.mxu0 0.0
      %10955 = vmatpush1.msra.mxu0 0.0
      %10956 = vmatprep.subr.mxu0 0.0
      %10957 = vmatpush1.msra.mxu0 0.0
      %10958 = vmatprep.subr.mxu0 0.0
      %10959 = vmatpush1.msra.mxu0 0.0
      %10960 = vmatprep.subr.mxu0 0.0
      %10961 = vmatpush1.msra.mxu0 0.0
      %10962 = vmatprep.subr.mxu0 0.0
      %10963 = vmatpush1.msra.mxu0 0.0
      %10964 = vmatprep.subr.mxu0 0.0
      %10965 = vmatpush1.msra.mxu0 0.0
      %10966 = vmatprep.subr.mxu0 0.0
      %10967 = vmatpush1.msra.mxu0 0.0
      %10968 = vmatprep.subr.mxu0 0.0
      %10969 = vmatpush1.msra.mxu0 0.0
      %10970 = vmatprep.mubr.f32.mxu0 0.0
      %10971 = vmatmul.mubr.f32.gmra.mrb[0].mxu0 %v10904
      %v10972 = vpop.f32.mrb[0].mxu0
      %v10973 = vadd.f32 0.0, %v10972
      %v10974 = vpop.f32.mrb[0].mxu0
      %10975 = vdwg.mxu0
      %v10976 = vadd.f32 %v10898, %v10973
      %v10977 = vld [vmem:[%s7 + $0x320] sm:$0xff]
      %v10978 = vld [vmem:[%s7 + $0x328] sm:$0xff]
      %v10979 = vld [vmem:[%s7 + $0x330] sm:$0xff]
      %v10980 = vld [vmem:[%s7 + $0x338] sm:$0xff]
      %v10982 = vsel %vm1284, %v9026, 0
      %10984 = vmatprep.subr.mxu0 0.0
      %10985 = vmatpush1.msra.mxu0 %v10977
      %10986 = vmatprep.subr.mxu0 0.0
      %10987 = vmatpush1.msra.mxu0 %v10978
      %10988 = vmatprep.subr.mxu0 0.0
      %10989 = vmatpush1.msra.mxu0 %v10979
      %10990 = vmatprep.subr.mxu0 0.0
      %10991 = vmatpush1.msra.mxu0 %v10980
      %10992 = vmatprep.subr.mxu0 0.0
      %10993 = vmatpush1.msra.mxu0 0.0
      %10994 = vmatprep.subr.mxu0 0.0
      %10995 = vmatpush1.msra.mxu0 0.0
      %10996 = vmatprep.subr.mxu0 0.0
      %10997 = vmatpush1.msra.mxu0 0.0
      %10998 = vmatprep.subr.mxu0 0.0
      %10999 = vmatpush1.msra.mxu0 0.0
      %11000 = vmatprep.subr.mxu0 0.0
      %11001 = vmatpush1.msra.mxu0 0.0
      %11002 = vmatprep.subr.mxu0 0.0
      %11003 = vmatpush1.msra.mxu0 0.0
      %11004 = vmatprep.subr.mxu0 0.0
      %11005 = vmatpush1.msra.mxu0 0.0
      %11006 = vmatprep.subr.mxu0 0.0
      %11007 = vmatpush1.msra.mxu0 0.0
      %11008 = vmatprep.subr.mxu0 0.0
      %11009 = vmatpush1.msra.mxu0 0.0
      %11010 = vmatprep.subr.mxu0 0.0
      %11011 = vmatpush1.msra.mxu0 0.0
      %11012 = vmatprep.subr.mxu0 0.0
      %11013 = vmatpush1.msra.mxu0 0.0
      %11014 = vmatprep.subr.mxu0 0.0
      %11015 = vmatpush1.msra.mxu0 0.0
      %11016 = vmatprep.subr.mxu0 0.0
      %11017 = vmatpush1.msra.mxu0 0.0
      %11018 = vmatprep.subr.mxu0 0.0
      %11019 = vmatpush1.msra.mxu0 0.0
      %11020 = vmatprep.subr.mxu0 0.0
      %11021 = vmatpush1.msra.mxu0 0.0
      %11022 = vmatprep.subr.mxu0 0.0
      %11023 = vmatpush1.msra.mxu0 0.0
      %11024 = vmatprep.subr.mxu0 0.0
      %11025 = vmatpush1.msra.mxu0 0.0
      %11026 = vmatprep.subr.mxu0 0.0
      %11027 = vmatpush1.msra.mxu0 0.0
      %11028 = vmatprep.subr.mxu0 0.0
      %11029 = vmatpush1.msra.mxu0 0.0
      %11030 = vmatprep.subr.mxu0 0.0
      %11031 = vmatpush1.msra.mxu0 0.0
      %11032 = vmatprep.subr.mxu0 0.0
      %11033 = vmatpush1.msra.mxu0 0.0
      %11034 = vmatprep.subr.mxu0 0.0
      %11035 = vmatpush1.msra.mxu0 0.0
      %11036 = vmatprep.subr.mxu0 0.0
      %11037 = vmatpush1.msra.mxu0 0.0
      %11038 = vmatprep.subr.mxu0 0.0
      %11039 = vmatpush1.msra.mxu0 0.0
      %11040 = vmatprep.subr.mxu0 0.0
      %11041 = vmatpush1.msra.mxu0 0.0
      %11042 = vmatprep.subr.mxu0 0.0
      %11043 = vmatpush1.msra.mxu0 0.0
      %11044 = vmatprep.subr.mxu0 0.0
      %11045 = vmatpush1.msra.mxu0 0.0
      %11046 = vmatprep.subr.mxu0 0.0
      %11047 = vmatpush1.msra.mxu0 0.0
      %11048 = vmatprep.mubr.f32.mxu0 0.0
      %11049 = vmatmul.mubr.f32.gmra.mrb[0].mxu0 %v10982
      %v11050 = vpop.f32.mrb[0].mxu0
      %v11051 = vadd.f32 0.0, %v11050
      %v11052 = vpop.f32.mrb[0].mxu0
      %11053 = vdwg.mxu0
      %v11054 = vadd.f32 %v10976, %v11051
      %v11055 = vld [vmem:[%s7 + $0x340] sm:$0xff]
      %v11056 = vld [vmem:[%s7 + $0x348] sm:$0xff]
      %v11057 = vld [vmem:[%s7 + $0x350] sm:$0xff]
      %v11058 = vld [vmem:[%s7 + $0x358] sm:$0xff]
      %v11060 = vsel %vm1284, %v9027, 0
      %11062 = vmatprep.subr.mxu0 0.0
      %11063 = vmatpush1.msra.mxu0 %v11055
      %11064 = vmatprep.subr.mxu0 0.0
      %11065 = vmatpush1.msra.mxu0 %v11056
      %11066 = vmatprep.subr.mxu0 0.0
      %11067 = vmatpush1.msra.mxu0 %v11057
      %11068 = vmatprep.subr.mxu0 0.0
      %11069 = vmatpush1.msra.mxu0 %v11058
      %11070 = vmatprep.subr.mxu0 0.0
      %11071 = vmatpush1.msra.mxu0 0.0
      %11072 = vmatprep.subr.mxu0 0.0
      %11073 = vmatpush1.msra.mxu0 0.0
      %11074 = vmatprep.subr.mxu0 0.0
      %11075 = vmatpush1.msra.mxu0 0.0
      %11076 = vmatprep.subr.mxu0 0.0
      %11077 = vmatpush1.msra.mxu0 0.0
      %11078 = vmatprep.subr.mxu0 0.0
      %11079 = vmatpush1.msra.mxu0 0.0
      %11080 = vmatprep.subr.mxu0 0.0
      %11081 = vmatpush1.msra.mxu0 0.0
      %11082 = vmatprep.subr.mxu0 0.0
      %11083 = vmatpush1.msra.mxu0 0.0
      %11084 = vmatprep.subr.mxu0 0.0
      %11085 = vmatpush1.msra.mxu0 0.0
      %11086 = vmatprep.subr.mxu0 0.0
      %11087 = vmatpush1.msra.mxu0 0.0
      %11088 = vmatprep.subr.mxu0 0.0
      %11089 = vmatpush1.msra.mxu0 0.0
      %11090 = vmatprep.subr.mxu0 0.0
      %11091 = vmatpush1.msra.mxu0 0.0
      %11092 = vmatprep.subr.mxu0 0.0
      %11093 = vmatpush1.msra.mxu0 0.0
      %11094 = vmatprep.subr.mxu0 0.0
      %11095 = vmatpush1.msra.mxu0 0.0
      %11096 = vmatprep.subr.mxu0 0.0
      %11097 = vmatpush1.msra.mxu0 0.0
      %11098 = vmatprep.subr.mxu0 0.0
      %11099 = vmatpush1.msra.mxu0 0.0
      %11100 = vmatprep.subr.mxu0 0.0
      %11101 = vmatpush1.msra.mxu0 0.0
      %11102 = vmatprep.subr.mxu0 0.0
      %11103 = vmatpush1.msra.mxu0 0.0
      %11104 = vmatprep.subr.mxu0 0.0
      %11105 = vmatpush1.msra.mxu0 0.0
      %11106 = vmatprep.subr.mxu0 0.0
      %11107 = vmatpush1.msra.mxu0 0.0
      %11108 = vmatprep.subr.mxu0 0.0
      %11109 = vmatpush1.msra.mxu0 0.0
      %11110 = vmatprep.subr.mxu0 0.0
      %11111 = vmatpush1.msra.mxu0 0.0
      %11112 = vmatprep.subr.mxu0 0.0
      %11113 = vmatpush1.msra.mxu0 0.0
      %11114 = vmatprep.subr.mxu0 0.0
      %11115 = vmatpush1.msra.mxu0 0.0
      %11116 = vmatprep.subr.mxu0 0.0
      %11117 = vmatpush1.msra.mxu0 0.0
      %11118 = vmatprep.subr.mxu0 0.0
      %11119 = vmatpush1.msra.mxu0 0.0
      %11120 = vmatprep.subr.mxu0 0.0
      %11121 = vmatpush1.msra.mxu0 0.0
      %11122 = vmatprep.subr.mxu0 0.0
      %11123 = vmatpush1.msra.mxu0 0.0
      %11124 = vmatprep.subr.mxu0 0.0
      %11125 = vmatpush1.msra.mxu0 0.0
      %11126 = vmatprep.mubr.f32.mxu0 0.0
      %11127 = vmatmul.mubr.f32.gmra.mrb[0].mxu0 %v11060
      %v11128 = vpop.f32.mrb[0].mxu0
      %v11129 = vadd.f32 0.0, %v11128
      %v11130 = vpop.f32.mrb[0].mxu0
      %11131 = vdwg.mxu0
      %v11132 = vadd.f32 %v11054, %v11129
      %v11133 = vld [vmem:[%s7 + $0x360] sm:$0xff]
      %v11134 = vld [vmem:[%s7 + $0x368] sm:$0xff]
      %v11135 = vld [vmem:[%s7 + $0x370] sm:$0xff]
      %v11136 = vld [vmem:[%s7 + $0x378] sm:$0xff]
      %v11138 = vsel %vm1284, %v9028, 0
      %11140 = vmatprep.subr.mxu0 0.0
      %11141 = vmatpush1.msra.mxu0 %v11133
      %11142 = vmatprep.subr.mxu0 0.0
      %11143 = vmatpush1.msra.mxu0 %v11134
      %11144 = vmatprep.subr.mxu0 0.0
      %11145 = vmatpush1.msra.mxu0 %v11135
      %11146 = vmatprep.subr.mxu0 0.0
      %11147 = vmatpush1.msra.mxu0 %v11136
      %11148 = vmatprep.subr.mxu0 0.0
      %11149 = vmatpush1.msra.mxu0 0.0
      %11150 = vmatprep.subr.mxu0 0.0
      %11151 = vmatpush1.msra.mxu0 0.0
      %11152 = vmatprep.subr.mxu0 0.0
      %11153 = vmatpush1.msra.mxu0 0.0
      %11154 = vmatprep.subr.mxu0 0.0
      %11155 = vmatpush1.msra.mxu0 0.0
      %11156 = vmatprep.subr.mxu0 0.0
      %11157 = vmatpush1.msra.mxu0 0.0
      %11158 = vmatprep.subr.mxu0 0.0
      %11159 = vmatpush1.msra.mxu0 0.0
      %11160 = vmatprep.subr.mxu0 0.0
      %11161 = vmatpush1.msra.mxu0 0.0
      %11162 = vmatprep.subr.mxu0 0.0
      %11163 = vmatpush1.msra.mxu0 0.0
      %11164 = vmatprep.subr.mxu0 0.0
      %11165 = vmatpush1.msra.mxu0 0.0
      %11166 = vmatprep.subr.mxu0 0.0
      %11167 = vmatpush1.msra.mxu0 0.0
      %11168 = vmatprep.subr.mxu0 0.0
      %11169 = vmatpush1.msra.mxu0 0.0
      %11170 = vmatprep.subr.mxu0 0.0
      %11171 = vmatpush1.msra.mxu0 0.0
      %11172 = vmatprep.subr.mxu0 0.0
      %11173 = vmatpush1.msra.mxu0 0.0
      %11174 = vmatprep.subr.mxu0 0.0
      %11175 = vmatpush1.msra.mxu0 0.0
      %11176 = vmatprep.subr.mxu0 0.0
      %11177 = vmatpush1.msra.mxu0 0.0
      %11178 = vmatprep.subr.mxu0 0.0
      %11179 = vmatpush1.msra.mxu0 0.0
      %11180 = vmatprep.subr.mxu0 0.0
      %11181 = vmatpush1.msra.mxu0 0.0
      %11182 = vmatprep.subr.mxu0 0.0
      %11183 = vmatpush1.msra.mxu0 0.0
      %11184 = vmatprep.subr.mxu0 0.0
      %11185 = vmatpush1.msra.mxu0 0.0
      %11186 = vmatprep.subr.mxu0 0.0
      %11187 = vmatpush1.msra.mxu0 0.0
      %11188 = vmatprep.subr.mxu0 0.0
      %11189 = vmatpush1.msra.mxu0 0.0
      %11190 = vmatprep.subr.mxu0 0.0
      %11191 = vmatpush1.msra.mxu0 0.0
      %11192 = vmatprep.subr.mxu0 0.0
      %11193 = vmatpush1.msra.mxu0 0.0
      %11194 = vmatprep.subr.mxu0 0.0
      %11195 = vmatpush1.msra.mxu0 0.0
      %11196 = vmatprep.subr.mxu0 0.0
      %11197 = vmatpush1.msra.mxu0 0.0
      %11198 = vmatprep.subr.mxu0 0.0
      %11199 = vmatpush1.msra.mxu0 0.0
      %11200 = vmatprep.subr.mxu0 0.0
      %11201 = vmatpush1.msra.mxu0 0.0
      %11202 = vmatprep.subr.mxu0 0.0
      %11203 = vmatpush1.msra.mxu0 0.0
      %11204 = vmatprep.mubr.f32.mxu0 0.0
      %11205 = vmatmul.mubr.f32.gmra.mrb[0].mxu0 %v11138
      %v11206 = vpop.f32.mrb[0].mxu0
      %v11207 = vadd.f32 0.0, %v11206
      %v11208 = vpop.f32.mrb[0].mxu0
      %11209 = vdwg.mxu0
      %v11210 = vadd.f32 %v11132, %v11207
      %v11211 = vld [vmem:[%s8] sm:$0x1]
      %v11213 = vlaneseq
      %v11214 = vshrl.u32 %v11213, 7
      %v11215 = vsub.s32 0, %v11214
      %v11216 = vrot.slane %v11211, %v11215
      %v11218 = vadd.f32 %v11210, %v11216
      %v11219 = vld [vmem:[%s9] sm:$0xff]
      %v11220 = vld [vmem:[%s9 + $0x8] sm:$0xff]
      %v11221 = vld [vmem:[%s9 + $0x10] sm:$0xff]
      %v11222 = vld [vmem:[%s9 + $0x18] sm:$0xff]
      %v11223 = vld [vmem:[%s9 + $0x20] sm:$0xff]
      %v11224 = vld [vmem:[%s9 + $0x28] sm:$0xff]
      %v11225 = vld [vmem:[%s9 + $0x30] sm:$0xff]
      %v11226 = vld [vmem:[%s9 + $0x38] sm:$0xf]
      %v11227 = vld [vmem:[%s10] sm:$0x1]
      %v11229 = vlaneseq
      %v11230 = vshrl.u32 %v11229, 7
      %v11231 = vsub.s32 0, %v11230
      %v11232 = vrot.slane %v11227, %v11231
      %vm11234 = vcmask 490496
      %v11236 = vsel %vm11234, %v11218, 0
      %vm11238 = vcmask 1043456
      %v11240 = vsel %vm11238, %v11226, 0
      %11242 = vmatprep.subr.mxu0 0.0
      %11243 = vmatpush1.msra.mxu0 %v11219
      %11244 = vmatprep.subr.mxu0 0.0
      %11245 = vmatpush1.msra.mxu0 %v11220
      %11246 = vmatprep.subr.mxu0 0.0
      %11247 = vmatpush1.msra.mxu0 %v11221
      %11248 = vmatprep.subr.mxu0 0.0
      %11249 = vmatpush1.msra.mxu0 %v11222
      %11250 = vmatprep.subr.mxu0 0.0
      %11251 = vmatpush1.msra.mxu0 %v11223
      %11252 = vmatprep.subr.mxu0 0.0
      %11253 = vmatpush1.msra.mxu0 %v11224
      %11254 = vmatprep.subr.mxu0 0.0
      %11255 = vmatpush1.msra.mxu0 %v11225
      %11256 = vmatprep.subr.mxu0 0.0
      %11257 = vmatpush1.msra.mxu0 %v11240
      %11258 = vmatprep.subr.mxu0 0.0
      %11259 = vmatpush1.msra.mxu0 0.0
      %11260 = vmatprep.subr.mxu0 0.0
      %11261 = vmatpush1.msra.mxu0 0.0
      %11262 = vmatprep.subr.mxu0 0.0
      %11263 = vmatpush1.msra.mxu0 0.0
      %11264 = vmatprep.subr.mxu0 0.0
      %11265 = vmatpush1.msra.mxu0 0.0
      %11266 = vmatprep.subr.mxu0 0.0
      %11267 = vmatpush1.msra.mxu0 0.0
      %11268 = vmatprep.subr.mxu0 0.0
      %11269 = vmatpush1.msra.mxu0 0.0
      %11270 = vmatprep.subr.mxu0 0.0
      %11271 = vmatpush1.msra.mxu0 0.0
      %11272 = vmatprep.subr.mxu0 0.0
      %11273 = vmatpush1.msra.mxu0 0.0
      %11274 = vmatprep.subr.mxu0 0.0
      %11275 = vmatpush1.msra.mxu0 0.0
      %11276 = vmatprep.subr.mxu0 0.0
      %11277 = vmatpush1.msra.mxu0 0.0
      %11278 = vmatprep.subr.mxu0 0.0
      %11279 = vmatpush1.msra.mxu0 0.0
      %11280 = vmatprep.subr.mxu0 0.0
      %11281 = vmatpush1.msra.mxu0 0.0
      %11282 = vmatprep.subr.mxu0 0.0
      %11283 = vmatpush1.msra.mxu0 0.0
      %11284 = vmatprep.subr.mxu0 0.0
      %11285 = vmatpush1.msra.mxu0 0.0
      %11286 = vmatprep.subr.mxu0 0.0
      %11287 = vmatpush1.msra.mxu0 0.0
      %11288 = vmatprep.subr.mxu0 0.0
      %11289 = vmatpush1.msra.mxu0 0.0
      %11290 = vmatprep.subr.mxu0 0.0
      %11291 = vmatpush1.msra.mxu0 0.0
      %11292 = vmatprep.subr.mxu0 0.0
      %11293 = vmatpush1.msra.mxu0 0.0
      %11294 = vmatprep.subr.mxu0 0.0
      %11295 = vmatpush1.msra.mxu0 0.0
      %11296 = vmatprep.subr.mxu0 0.0
      %11297 = vmatpush1.msra.mxu0 0.0
      %11298 = vmatprep.subr.mxu0 0.0
      %11299 = vmatpush1.msra.mxu0 0.0
      %11300 = vmatprep.subr.mxu0 0.0
      %11301 = vmatpush1.msra.mxu0 0.0
      %11302 = vmatprep.subr.mxu0 0.0
      %11303 = vmatpush1.msra.mxu0 0.0
      %11304 = vmatprep.subr.mxu0 0.0
      %11305 = vmatpush1.msra.mxu0 0.0
      %11306 = vmatprep.mubr.f32.mxu0 0.0
      %11307 = vmatmul.mubr.f32.gmra.mrb[0].mxu0 %v11236
      %v11308 = vpop.f32.mrb[0].mxu0
      %v11309 = vadd.f32 %v11232, %v11308
      %v11310 = vpop.f32.mrb[0].mxu0
      %11311 = vdwg.mxu0
      %vm11312 = vcmask 23552
      %11313 = vst.msk [vmem:[%s386] sm:$0xff] %vm11312, %v11309
      %p11314 = scmp.lt.s32.totalorder %s22, 1
      %s11315 = scalar_select %p11314, %s22, 1
      %s11316 = smul.addr %s11315, 8
      %s11317 = scalar_lea.vmem %s11, %s11316
      // Predicated region
      $region65: #{cnn1d_forward.1} parent=63 // pred_check
        %p11318 = pneg %p276
      $region66: #{cnn1d_forward.1} parent=63 // pred_check_branch
        %11320 = sbr.rel (%p11318) target = $region68
      $region67: #{cnn1d_forward.1} parent=63 // pred_region
        _
      $region68: #{cnn1d_forward.1} parent=63 // pred_fallthru
        _
    $region64: #{cnn1d_forward.1} parent=5 // pred_fallthru
      _
    %p11321 = scmp.le.s32.totalorder 2, %s17
    // Predicated region
    $region69: #{cnn1d_forward.1} parent=5 // pred_check
      %p11322 = pneg %p11321
    $region70: #{cnn1d_forward.1} parent=5 // pred_check_branch
      %11324 = sbr.rel (%p11322) target = $region72
    $region71: #{cnn1d_forward.1} parent=5 // pred_region
      %s11325 = ssub.s32 %s17, 2
      // Predicated region
      $region73: #{cnn1d_forward.1} parent=71 // pred_check
        %p11326 = pneg %p282
      $region74: #{cnn1d_forward.1} parent=71 // pred_check_branch
        %11328 = sbr.rel (%p11326) target = $region76
      $region75: #{cnn1d_forward.1} parent=71 // pred_region
        %p11329 = scmp.lt.s32.totalorder %s23, 1
        %s11330 = scalar_select %p11329, %s23, 1
        %s11331 = smul.addr %s11330, 8
        %s11332 = scalar_lea.vmem %s11, %s11331
      $region76: #{cnn1d_forward.1} parent=71 // pred_fallthru
        _
    $region72: #{cnn1d_forward.1} parent=5 // pred_fallthru
      _
  $region6: #{cnn1d_forward.1} parent=0 // loop_footer
    %s21 = sadd.s32 1, %s17
  $region7: #{cnn1d_forward.1} parent=0 // loop_footer_branch
    %16 = sbr.rel target = $region3
  $region8: #{cnn1d_forward.1} parent=0 // loop_exit
    _

</llo_original>
